<compile_context>
chip_gen: v6e
topology: v6e:2x2x1
jax: 0.10.0
libtpu: 0.0.40
codegen_flags: <defaults>
</compile_context>

<pallas_src>
import functools

import jax
import jax.numpy as jnp
from jax.experimental import pallas as pl
from jax.experimental.pallas import tpu as pltpu


def _vq_kernel(x_ref, embt_ref, emb_ref, esq_ref,
               q_ref, res_ref, idx_ref, cnt_ref, sse_ref,
               sse_acc, *, n_valid, tn, steps, padded):
    p = pl.program_id(0)                      # parallel slice
    i = pl.program_id(1)                      # reduction ("arbitrary") axis
    last = pl.num_programs(1) - 1

    x_in = x_ref[...]                         # (tn, D), native dtype
    emb_in = emb_ref[...]                     # (M, D),  native dtype
    M = emb_in.shape[0]

    # argmin_j ||x - e_j||^2 == argmin_j (||e_j||^2 - 2 x.e_j)
    # (row-constant ||x||^2 dropped; tie-break order unchanged)
    xe = jnp.dot(x_in, embt_ref[...],
                 preferred_element_type=jnp.float32)          # (tn, M)  MXU
    dist = esq_ref[...] - 2.0 * xe                            # (tn, M)

    # First-match argmin.  NOTE: if a distance were NaN, `dist == dmin`
    # matches nothing and idx would become M (enc all-zero, q == 0); fine for
    # clean inputs.
    code_iota = jax.lax.broadcasted_iota(jnp.int32, dist.shape, 1)
    dmin = jnp.min(dist, axis=1, keepdims=True)
    idx = jnp.min(jnp.where(dist == dmin, code_iota, M), axis=1)   # (tn,)

    # one-hot gather on the MXU, built directly in the codebook dtype
    enc = (code_iota == idx[:, None]).astype(emb_in.dtype)         # (tn, M)
    q = jnp.dot(enc, emb_in, preferred_element_type=jnp.float32)   # (tn, D)

    diff = x_in.astype(jnp.float32) - q                            # (tn, D)

    q_ref[...] = q.astype(q_ref.dtype)
    res_ref[...] = diff.astype(res_ref.dtype)
    idx_ref[...] = idx[None, None, :].astype(jnp.int32)   # lane-dense store

    # valid-row masking (only traced when rows were padded)
    if padded:
        row0 = (p * steps + i) * tn
        row_lane = row0 + jax.lax.broadcasted_iota(jnp.int32, (1, tn), 1)
        ones_row = (row_lane < n_valid).astype(enc.dtype)          # (1, tn)
        row_sub = row0 + jax.lax.broadcasted_iota(jnp.int32, (tn, 1), 0)
        diff_sq = diff * diff * (row_sub < n_valid).astype(jnp.float32)
    else:
        ones_row = jnp.ones((1, tn), enc.dtype)
        diff_sq = diff * diff

    # accumulators, resident across the reduction axis
    @pl.when(i == 0)
    def _():
        cnt_ref[...] = jnp.zeros_like(cnt_ref)
        sse_acc[...] = jnp.zeros_like(sse_acc)

    # per-code counts on the MXU (column reduce would hit the busy XLU)
    cnt_ref[...] += jnp.dot(ones_row, enc,
                            preferred_element_type=jnp.float32)[None]
    sse_acc[...] += diff_sq                  # pure VPU elementwise accumulate

    @pl.when(i == last)
    def _():
        sse_ref[...] = jnp.sum(sse_acc[...]).reshape(1, 1, 1)


@functools.partial(jax.jit,
                   static_argnames=("commitment_cost", "tile_n", "cores"))
def vq_embedding_ema_forward(x, embedding, commitment_cost=0.25,
                             tile_n=512, cores=2):
    B, T, D = x.shape
    M, D2 = embedding.shape
    assert D == D2
    N = B * T

    # --- static tiling: fix P first, then pick the biggest legal row tile ---
    P = max(1, cores)
    tn = min(tile_n, -(-N // P))              # ceil(N / P), capped by tile_n
    tn = max(8, ((tn + 7) // 8) * 8)          # sublane multiple of 8
    K = -(-N // (P * tn))                     # reduction steps per slice
    N_pad = P * K * tn
    padded = N_pad != N
    num_tiles = P * K

    x_flat = x.reshape(N, D)
    if padded:
        x_flat = jnp.pad(x_flat, ((0, N_pad - N), (0, 0)))

    # grid-invariant codebook prep, hoisted out of the kernel:
    emb_t = embedding.T                                            # (D, M)
    e_sq = jnp.sum(embedding.astype(jnp.float32) ** 2, axis=1)[None, :]  # (1,M)

    kernel = functools.partial(_vq_kernel, n_valid=N, tn=tn, steps=K,
                               padded=padded)

    q_flat, res_flat, idx3d, counts, sse = pl.pallas_call(
        kernel,
        out_shape=(
            jax.ShapeDtypeStruct((N_pad, D), x.dtype),             # quantized
            jax.ShapeDtypeStruct((N_pad, D), x.dtype),             # residual
            jax.ShapeDtypeStruct((num_tiles, 1, tn), jnp.int32),   # indices
            jax.ShapeDtypeStruct((P, 1, M), jnp.float32),          # counts
            jax.ShapeDtypeStruct((P, 1, 1), jnp.float32),          # SSE
        ),
        grid_spec=pltpu.PrefetchScalarGridSpec(
            num_scalar_prefetch=0,
            grid=(P, K),
            in_specs=[
                pl.BlockSpec((tn, D), lambda p, i: (p * K + i, 0)),  # x tile
                pl.BlockSpec((D, M), lambda p, i: (0, 0)),           # emb^T
                pl.BlockSpec((M, D), lambda p, i: (0, 0)),           # emb
                pl.BlockSpec((1, M), lambda p, i: (0, 0)),           # ||e||^2
            ],
            out_specs=[
                pl.BlockSpec((tn, D), lambda p, i: (p * K + i, 0)),
                pl.BlockSpec((tn, D), lambda p, i: (p * K + i, 0)),
                pl.BlockSpec((1, 1, tn), lambda p, i: (p * K + i, 0, 0)),
                pl.BlockSpec((1, 1, M), lambda p, i: (p, 0, 0)),   # accumulator
                pl.BlockSpec((1, 1, 1), lambda p, i: (p, 0, 0)),   # accumulator
            ],
            scratch_shapes=[pltpu.VMEM((tn, D), jnp.float32)],     # SSE scratch
        ),
        compiler_params=pltpu.CompilerParams(
            dimension_semantics=("parallel", "arbitrary"),
            vmem_limit_bytes=32 * 1024 * 1024,
        ),
    )(x_flat, emb_t, embedding, e_sq)

    if padded:
        q_flat = q_flat[:N]
        res_flat = res_flat[:N]
        idx_flat = idx3d.reshape(N_pad)[:N]
    else:
        idx_flat = idx3d.reshape(N)

    quantized = q_flat.reshape(B, T, D)
    residual = res_flat.reshape(B, T, D)
    indices = idx_flat.reshape(B, T)

    counts_total = jnp.sum(counts, axis=(0, 1))              # (M,)
    sse_total = jnp.sum(sse)

    e_latent_loss = sse_total / jnp.float32(N * D)           # F.mse_loss (mean)
    loss = commitment_cost * e_latent_loss
    avg_probs = counts_total / jnp.float32(N)                # mean of one-hots
    perplexity = jnp.exp(-jnp.sum(avg_probs * jnp.log(avg_probs + 1e-10)))
    # straight-through: forward value of `quantized` is unchanged (x + (q-x) = q)
    return quantized, residual, loss, perplexity, indices


def _reference(x, embedding, commitment_cost=0.25):
    B, T, D = x.shape
    M = embedding.shape[0]
    x_flat = x.reshape(-1, D)
    dist = (jnp.sum(embedding ** 2, axis=1)[None, :]
            + jnp.sum(x_flat ** 2, axis=1, keepdims=True)
            - 2.0 * x_flat @ embedding.T)
    idx = jnp.argmin(dist, axis=-1)
    enc = jax.nn.one_hot(idx, M, dtype=jnp.float32)
    q = embedding[idx].reshape(B, T, D)
    loss = commitment_cost * jnp.mean((x - q) ** 2)
    residual = x - q
    avg_probs = jnp.mean(enc, axis=0)
    perplexity = jnp.exp(-jnp.sum(avg_probs * jnp.log(avg_probs + 1e-10)))
    return q, residual, loss, perplexity, idx.reshape(B, T)


def _check(x, embedding):
    out = jax.block_until_ready(vq_embedding_ema_forward(x, embedding))
    q, res, loss, ppl, idx = out
    q_r, res_r, loss_r, ppl_r, idx_r = _reference(x, embedding)
    assert jnp.allclose(q, q_r, atol=1e-5), "quantized mismatch"
    assert jnp.allclose(res, res_r, atol=1e-5), "residual mismatch"
    assert jnp.allclose(loss, loss_r, atol=1e-6), "loss mismatch"
    assert jnp.allclose(ppl, ppl_r, atol=1e-3), "perplexity mismatch"
    assert jnp.array_equal(idx, idx_r), "indices mismatch"


if __name__ == "__main__":
    # module config
    n_embeddings, embedding_dim = 128, 64

    key = jax.random.PRNGKey(0)
    k_emb, k_x1, k_x2 = jax.random.split(key, 3)
    init_bound = 1.0 / 512
    embedding = jax.random.uniform(
        k_emb, (n_embeddings, embedding_dim), jnp.float32,
        minval=-init_bound, maxval=init_bound)

    # main case: N = 1024 rows -> grid collapses to (P=2, K=1), tn = 512
    x1 = jax.random.normal(k_x1, (2, 512, embedding_dim), jnp.float32) * 0.01
    _check(x1, embedding)

    # ragged case: N = 200 rows -> exercises the padded / masked path
    x2 = jax.random.normal(k_x2, (2, 100, embedding_dim), jnp.float32) * 0.01
    _check(x2, embedding)

    print("KERNEL_OK")
</pallas_src>

<mosaic_0001>
module attributes {stable_mosaic.version = 11 : i64} {
  func.func @_vq_kernel(%arg0: i32, %arg1: i32, %arg2: memref<512x64xf32, #tpu.memory_space<vmem>>, %arg3: memref<64x128xf32, #tpu.memory_space<vmem>>, %arg4: memref<128x64xf32, #tpu.memory_space<vmem>>, %arg5: memref<1x128xf32, #tpu.memory_space<vmem>>, %arg6: memref<512x64xf32, #tpu.memory_space<vmem>>, %arg7: memref<512x64xf32, #tpu.memory_space<vmem>>, %arg8: memref<1x1x512xi32, #tpu.memory_space<vmem>>, %arg9: memref<1x1x128xf32, #tpu.memory_space<vmem>>, %arg10: memref<1x1x1xf32, #tpu.memory_space<vmem>>, %arg11: memref<512x64xf32, #tpu.memory_space<vmem>>) attributes {dimension_semantics = [#tpu.dimension_semantics<parallel>, #tpu.dimension_semantics<arbitrary>], iteration_bounds = array<i64: 2, 1>, scalar_prefetch = 0 : i64, scratch_operands = 1 : i64, tpu.core_type = #tpu.core_type<tc>, window_params = [{transform_indices = @transform_0, window_bounds = array<i64: 512, 64>}, {pipeline_mode = #tpu.pipeline_mode<synchronous>, transform_indices = @transform_1, window_bounds = array<i64: 64, 128>}, {pipeline_mode = #tpu.pipeline_mode<synchronous>, transform_indices = @transform_2, window_bounds = array<i64: 128, 64>}, {pipeline_mode = #tpu.pipeline_mode<synchronous>, transform_indices = @transform_3, window_bounds = array<i64: 1, 128>}, {transform_indices = @transform_4, window_bounds = array<i64: 512, 64>}, {transform_indices = @transform_5, window_bounds = array<i64: 512, 64>}, {transform_indices = @transform_6, window_bounds = array<i64: 1, 1, 512>}, {transform_indices = @transform_7, window_bounds = array<i64: 1, 1, 128>}, {transform_indices = @transform_8, window_bounds = array<i64: 1, 1, 1>}]} {
    %c0 = arith.constant 0 : index
    %c0_0 = arith.constant 0 : index
    %0 = vector.load %arg2[%c0, %c0_0] : memref<512x64xf32, #tpu.memory_space<vmem>>, vector<512x64xf32>
    %c0_1 = arith.constant 0 : index
    %c0_2 = arith.constant 0 : index
    %1 = vector.load %arg4[%c0_1, %c0_2] : memref<128x64xf32, #tpu.memory_space<vmem>>, vector<128x64xf32>
    %c0_3 = arith.constant 0 : index
    %c0_4 = arith.constant 0 : index
    %2 = vector.load %arg3[%c0_3, %c0_4] : memref<64x128xf32, #tpu.memory_space<vmem>>, vector<64x128xf32>
    %cst = arith.constant dense<0.000000e+00> : vector<512x128xf32>
    %3 = tpu.matmul %0, %2, %cst {dimension_numbers = #tpu.dot_dimension_numbers<[1], [0], [0], [1], [0, 0, 1, 1], [], []>} : vector<512x64xf32>, vector<64x128xf32>, vector<512x128xf32> -> vector<512x128xf32>
    %c0_5 = arith.constant 0 : index
    %c0_6 = arith.constant 0 : index
    %4 = vector.load %arg5[%c0_5, %c0_6] : memref<1x128xf32, #tpu.memory_space<vmem>>, vector<1x128xf32>
    %cst_7 = arith.constant 2.000000e+00 : f32
    %5 = vector.broadcast %cst_7 : f32 to vector<512x128xf32>
    %6 = arith.mulf %5, %3 : vector<512x128xf32>
    %7 = vector.broadcast %4 : vector<1x128xf32> to vector<512x128xf32>
    %8 = arith.subf %7, %6 : vector<512x128xf32>
    %9 = tpu.iota {dimensions = array<i32: 1>} : vector<512x128xi32>
    %cst_8 = arith.constant dense<0x7F800000> : vector<512xf32>
    %10 = vector.multi_reduction <minimumf>, %8, %cst_8 [1] : vector<512x128xf32> to vector<512xf32>
    %11 = vector.shape_cast %10 : vector<512xf32> to vector<512x1xf32>
    %12 = vector.broadcast %11 : vector<512x1xf32> to vector<512x128xf32>
    %13 = arith.cmpf oeq, %8, %12 : vector<512x128xf32>
    %c128_i32 = arith.constant 128 : i32
    %14 = vector.broadcast %c128_i32 : i32 to vector<512x128xi32>
    %15 = arith.select %13, %9, %14 : vector<512x128xi1>, vector<512x128xi32>
    %cst_9 = arith.constant dense<2147483647> : vector<512xi32>
    %16 = vector.multi_reduction <minsi>, %15, %cst_9 [1] : vector<512x128xi32> to vector<512xi32>
    %17 = vector.shape_cast %16 : vector<512xi32> to vector<512x1xi32>
    %18 = vector.broadcast %17 : vector<512x1xi32> to vector<512x128xi32>
    %19 = arith.cmpi eq, %9, %18 : vector<512x128xi32>
    %20 = arith.extui %19 : vector<512x128xi1> to vector<512x128xi32>
    %21 = arith.sitofp %20 : vector<512x128xi32> to vector<512x128xf32>
    %cst_10 = arith.constant dense<0.000000e+00> : vector<512x64xf32>
    %22 = tpu.matmul %21, %1, %cst_10 {dimension_numbers = #tpu.dot_dimension_numbers<[1], [0], [0], [1], [0, 0, 1, 1], [], []>} : vector<512x128xf32>, vector<128x64xf32>, vector<512x64xf32> -> vector<512x64xf32>
    %23 = arith.subf %0, %22 : vector<512x64xf32>
    %c0_11 = arith.constant 0 : index
    %c0_12 = arith.constant 0 : index
    %24 = vector.load %arg6[%c0_11, %c0_12] : memref<512x64xf32, #tpu.memory_space<vmem>>, vector<512x64xf32>
    tpu.vector_store %arg6[%c0_11, %c0_12], %22 {strides = array<i32>} : memref<512x64xf32, #tpu.memory_space<vmem>>, vector<512x64xf32>,
    %c0_13 = arith.constant 0 : index
    %c0_14 = arith.constant 0 : index
    %25 = vector.load %arg7[%c0_13, %c0_14] : memref<512x64xf32, #tpu.memory_space<vmem>>, vector<512x64xf32>
    tpu.vector_store %arg7[%c0_13, %c0_14], %23 {strides = array<i32>} : memref<512x64xf32, #tpu.memory_space<vmem>>, vector<512x64xf32>,
    %26 = vector.shape_cast %16 : vector<512xi32> to vector<1x1x512xi32>
    %c0_15 = arith.constant 0 : index
    %c0_16 = arith.constant 0 : index
    %c0_17 = arith.constant 0 : index
    %27 = vector.load %arg8[%c0_15, %c0_16, %c0_17] : memref<1x1x512xi32, #tpu.memory_space<vmem>>, vector<1x1x512xi32>
    tpu.vector_store %arg8[%c0_15, %c0_16, %c0_17], %26 {strides = array<i32>} : memref<1x1x512xi32, #tpu.memory_space<vmem>>, vector<1x1x512xi32>,
    %cst_18 = arith.constant 1.000000e+00 : f32
    %28 = vector.broadcast %cst_18 : f32 to vector<1x512xf32>
    %29 = arith.mulf %23, %23 : vector<512x64xf32>
    %c0_i32 = arith.constant 0 : i32
    %30 = arith.cmpi eq, %arg1, %c0_i32 : i32
    %31 = arith.extui %30 : i1 to i32
    %c0_i32_19 = arith.constant 0 : i32
    %32 = arith.cmpi ne, %31, %c0_i32_19 : i32
    scf.if %32 {
      %cst_33 = arith.constant 0.000000e+00 : f32
      %44 = vector.broadcast %cst_33 : f32 to vector<1x1x128xf32>
      %c0_34 = arith.constant 0 : index
      %c0_35 = arith.constant 0 : index
      %c0_36 = arith.constant 0 : index
      %45 = vector.load %arg9[%c0_34, %c0_35, %c0_36] : memref<1x1x128xf32, #tpu.memory_space<vmem>>, vector<1x1x128xf32>
      tpu.vector_store %arg9[%c0_34, %c0_35, %c0_36], %44 {strides = array<i32>} : memref<1x1x128xf32, #tpu.memory_space<vmem>>, vector<1x1x128xf32>,
      %cst_37 = arith.constant 0.000000e+00 : f32
      %46 = vector.broadcast %cst_37 : f32 to vector<512x64xf32>
      %c0_38 = arith.constant 0 : index
      %c0_39 = arith.constant 0 : index
      %47 = vector.load %arg11[%c0_38, %c0_39] : memref<512x64xf32, #tpu.memory_space<vmem>>, vector<512x64xf32>
      tpu.vector_store %arg11[%c0_38, %c0_39], %46 {strides = array<i32>} : memref<512x64xf32, #tpu.memory_space<vmem>>, vector<512x64xf32>,
    } else {
    }
    %c0_20 = arith.constant 0 : index
    %c0_21 = arith.constant 0 : index
    %c0_22 = arith.constant 0 : index
    %33 = vector.load %arg9[%c0_20, %c0_21, %c0_22] : memref<1x1x128xf32, #tpu.memory_space<vmem>>, vector<1x1x128xf32>
    %cst_23 = arith.constant dense<0.000000e+00> : vector<1x128xf32>
    %34 = tpu.matmul %28, %21, %cst_23 {dimension_numbers = #tpu.dot_dimension_numbers<[1], [0], [0], [1], [0, 0, 1, 1], [], []>} : vector<1x512xf32>, vector<512x128xf32>, vector<1x128xf32> -> vector<1x128xf32>
    %35 = vector.shape_cast %34 : vector<1x128xf32> to vector<1x1x128xf32>
    %36 = arith.addf %33, %35 : vector<1x1x128xf32>
    %c0_24 = arith.constant 0 : index
    %c0_25 = arith.constant 0 : index
    %c0_26 = arith.constant 0 : index
    %37 = vector.load %arg9[%c0_24, %c0_25, %c0_26] : memref<1x1x128xf32, #tpu.memory_space<vmem>>, vector<1x1x128xf32>
    tpu.vector_store %arg9[%c0_24, %c0_25, %c0_26], %36 {strides = array<i32>} : memref<1x1x128xf32, #tpu.memory_space<vmem>>, vector<1x1x128xf32>,
    %c0_27 = arith.constant 0 : index
    %c0_28 = arith.constant 0 : index
    %38 = vector.load %arg11[%c0_27, %c0_28] : memref<512x64xf32, #tpu.memory_space<vmem>>, vector<512x64xf32>
    %39 = arith.addf %38, %29 : vector<512x64xf32>
    %c0_29 = arith.constant 0 : index
    %c0_30 = arith.constant 0 : index
    %40 = vector.load %arg11[%c0_29, %c0_30] : memref<512x64xf32, #tpu.memory_space<vmem>>, vector<512x64xf32>
    tpu.vector_store %arg11[%c0_29, %c0_30], %39 {strides = array<i32>} : memref<512x64xf32, #tpu.memory_space<vmem>>, vector<512x64xf32>,
    %c0_i32_31 = arith.constant 0 : i32
    %41 = arith.cmpi eq, %arg1, %c0_i32_31 : i32
    %42 = arith.extui %41 : i1 to i32
    %c0_i32_32 = arith.constant 0 : i32
    %43 = arith.cmpi ne, %42, %c0_i32_32 : i32
    scf.if %43 {
      %c0_33 = arith.constant 0 : index
      %c0_34 = arith.constant 0 : index
      %44 = vector.load %arg11[%c0_33, %c0_34] : memref<512x64xf32, #tpu.memory_space<vmem>>, vector<512x64xf32>
      %45 = vector.shape_cast %44 : vector<512x64xf32> to vector<1x512x64xf32>
      %cst_35 = arith.constant dense<0.000000e+00> : vector<1xf32>
      %46 = vector.multi_reduction <add>, %45, %cst_35 [1, 2] : vector<1x512x64xf32> to vector<1xf32>
      %47 = vector.shape_cast %46 : vector<1xf32> to vector<1x1x1xf32>
      %48 = vector.extract %47[0, 0, 0] : f32 from vector<1x1x1xf32>
      %49 = vector.broadcast %48 : f32 to vector<1x1x1xf32>
      %c0_36 = arith.constant 0 : index
      %c0_37 = arith.constant 0 : index
      %c0_38 = arith.constant 0 : index
      %50 = vector.load %arg10[%c0_36, %c0_37, %c0_38] : memref<1x1x1xf32, #tpu.memory_space<vmem>>, vector<1x1x1xf32>
      tpu.vector_store %arg10[%c0_36, %c0_37, %c0_38], %49 {strides = array<i32>} : memref<1x1x1xf32, #tpu.memory_space<vmem>>, vector<1x1x1xf32>,
    } else {
    }
    return
  }
  func.func @transform_0(%arg0: i32, %arg1: i32) -> (i32, i32) {
    %c1_i32 = arith.constant 1 : i32
    %0 = arith.muli %arg0, %c1_i32 : i32
    %1 = arith.addi %0, %arg1 : i32
    %c0_i32 = arith.constant 0 : i32
    %c0_i32_0 = arith.constant 0 : i32
    return %1, %c0_i32 : i32, i32
  }
  func.func @transform_1(%arg0: i32, %arg1: i32) -> (i32, i32) {
    %c0_i32 = arith.constant 0 : i32
    %c0_i32_0 = arith.constant 0 : i32
    %c0_i32_1 = arith.constant 0 : i32
    return %c0_i32, %c0_i32_0 : i32, i32
  }
  func.func @transform_2(%arg0: i32, %arg1: i32) -> (i32, i32) {
    %c0_i32 = arith.constant 0 : i32
    %c0_i32_0 = arith.constant 0 : i32
    %c0_i32_1 = arith.constant 0 : i32
    return %c0_i32, %c0_i32_0 : i32, i32
  }
  func.func @transform_3(%arg0: i32, %arg1: i32) -> (i32, i32) {
    %c0_i32 = arith.constant 0 : i32
    %c0_i32_0 = arith.constant 0 : i32
    %c0_i32_1 = arith.constant 0 : i32
    return %c0_i32, %c0_i32_0 : i32, i32
  }
  func.func @transform_4(%arg0: i32, %arg1: i32) -> (i32, i32) {
    %c1_i32 = arith.constant 1 : i32
    %0 = arith.muli %arg0, %c1_i32 : i32
    %1 = arith.addi %0, %arg1 : i32
    %c0_i32 = arith.constant 0 : i32
    %c0_i32_0 = arith.constant 0 : i32
    return %1, %c0_i32 : i32, i32
  }
  func.func @transform_5(%arg0: i32, %arg1: i32) -> (i32, i32) {
    %c1_i32 = arith.constant 1 : i32
    %0 = arith.muli %arg0, %c1_i32 : i32
    %1 = arith.addi %0, %arg1 : i32
    %c0_i32 = arith.constant 0 : i32
    %c0_i32_0 = arith.constant 0 : i32
    return %1, %c0_i32 : i32, i32
  }
  func.func @transform_6(%arg0: i32, %arg1: i32) -> (i32, i32, i32) {
    %c1_i32 = arith.constant 1 : i32
    %0 = arith.muli %arg0, %c1_i32 : i32
    %1 = arith.addi %0, %arg1 : i32
    %c0_i32 = arith.constant 0 : i32
    %c0_i32_0 = arith.constant 0 : i32
    %c0_i32_1 = arith.constant 0 : i32
    return %1, %c0_i32, %c0_i32_0 : i32, i32, i32
  }
  func.func @transform_7(%arg0: i32, %arg1: i32) -> (i32, i32, i32) {
    %c0_i32 = arith.constant 0 : i32
    %c0_i32_0 = arith.constant 0 : i32
    %c0_i32_1 = arith.constant 0 : i32
    return %arg0, %c0_i32, %c0_i32_0 : i32, i32, i32
  }
  func.func @transform_8(%arg0: i32, %arg1: i32) -> (i32, i32, i32) {
    %c0_i32 = arith.constant 0 : i32
    %c0_i32_0 = arith.constant 0 : i32
    %c0_i32_1 = arith.constant 0 : i32
    return %arg0, %c0_i32, %c0_i32_0 : i32, i32, i32
  }
}

</mosaic_0001>

<llo_original>
// kernel: vq_embedding_ema_forward.1
$region0: #{vq_embedding_ema_forward.1}
  #allocation0 [shape = 'u32[]', space=smem, size = 0x4, offset = 0x4, fixed_abs, tag = 'smem constant byte address 0x4 - core index']
  #allocation1 [shape = 'u32[144,128]{1,0:T(1,128)}', space=vmem, size = 0x12000, scoped, tag = 'internal scratch']
  #allocation2 [shape = 'f32[512,64]{1,0:T(8,128)}', space=vmem, size = 0x40000, scoped, tag = 'scratch operand']
  %s0 = inlined_call_operand.vmem [shape: f32[1024,64], index: 0, kind: input, shape index: {}]
  %s1 = inlined_call_operand.vmem [shape: f32[64,128], index: 1, kind: input, shape index: {}]
  %s2 = inlined_call_operand.vmem [shape: f32[128,64], index: 2, kind: input, shape index: {}]
  %s3 = inlined_call_operand.vmem [shape: f32[1,128], index: 3, kind: input, shape index: {}]
  %s4 = inlined_call_operand.vmem [shape: f32[1024,64], index: 4, kind: output, shape index: {0}]
  %s5 = inlined_call_operand.vmem [shape: f32[1024,64], index: 5, kind: output, shape index: {1}]
  %s6 = inlined_call_operand.vmem [shape: s32[2,1,512], index: 6, kind: output, shape index: {2}]
  %s7 = inlined_call_operand.vmem [shape: f32[2,1,128], index: 7, kind: output, shape index: {3}]
  %s8 = inlined_call_operand.vmem [shape: f32[2,1,1], index: 8, kind: output, shape index: {4}]
  %9 = xla_tuple %s4, %s5, %s6, %s7, %s8
  %s10 = sld [smem:[#allocation0]]
  $region89: #{vq_embedding_ema_forward.1} parent=0
    _
  %s12 = ssub.s32 1, %s10
  %s13 = scalar_select 0, %s12, %s10
  loop: start=0, step=1, limit=4
  $region2: #{vq_embedding_ema_forward.1} parent=0 // loop_pre_header
    _
  $region3: #{vq_embedding_ema_forward.1} parent=0 // loop_header
    %s15 = sphi 0, %s19
    %p16 = scmp.ge.s32.totalorder %s15, 4
    %s22 = sphi 0, %s34
    %s23 = sphi 0, %s30
    %s24 = sphi 0, %s22
    %s25 = sphi 0, %s23
    %s26 = sphi 0, %s24
    %s27 = sphi 0, %s25
    %s39 = sphi 0, %s41
    %s42 = sphi 0, %s39
    %s43 = sphi 0, %s42
    %s59 = sphi 0, %s43
    %s63 = sphi 0, %s63
    %s65 = sphi 0, %s63
    %s66 = sphi 0, %s65
    %s80 = sphi 0, %s66
    %s84 = sphi 0, %s84
    %s86 = sphi 0, %s84
    %s87 = sphi 0, %s86
    %s101 = sphi 0, %s87
    %s105 = sphi 0, %s105
    %s107 = sphi 0, %s105
    %s108 = sphi 0, %s107
    %s122 = sphi 0, %s108
    %s130 = sphi 0, %s132
    %s133 = sphi 0, %s130
    %s134 = sphi 0, %s133
    %s150 = sphi 0, %s134
    %s158 = sphi 0, %s160
    %s161 = sphi 0, %s158
    %s162 = sphi 0, %s161
    %s178 = sphi 0, %s162
    %s186 = sphi 0, %s188
    %s189 = sphi 0, %s186
    %s190 = sphi 0, %s189
    %s206 = sphi 0, %s190
    %s212 = sphi 0, %s214
    %s215 = sphi 0, %s212
    %s216 = sphi 0, %s215
    %s232 = sphi 0, %s216
    %s238 = sphi 0, %s240
    %s241 = sphi 0, %s238
    %s242 = sphi 0, %s241
    %s258 = sphi 0, %s242
  $region4: #{vq_embedding_ema_forward.1} parent=0 // loop_header_branch
    %18 = sbr.rel (%p16) target = $region8
  $region5: #{vq_embedding_ema_forward.1} parent=0 // loop_body
    %s20 = ssub.s32 %s15, 1
    %s21 = ssub.s32 %s15, 2
    %s28 = sadd.s32 1, %s23
    %p29 = scmp.ge.s32.totalorder %s28, 1
    %s30 = scalar_select %p29, 0, %s28
    %s31 = sadd.s32 1, %s22
    %s32 = scalar_select %p29, %s31, %s22
    %p33 = scmp.ge.s32.totalorder %s32, 2
    %s34 = scalar_select %p33, 0, %s32
    %s35 = sadd.s32 %s22, %s23
    %s36 = sadd.s32 %s34, %s30
    %s37 = ssub.s32 %s35, %s36
    %p38 = scmp.eq.s32.totalorder %s37, 0
    %s40 = sadd.s32 %s39, 1
    %s41 = scalar_select %p38, %s39, %s40
    %p44 = pneg %p38
    %p45 = scmp.eq.s32.totalorder %s15, 1
    %p46 = por %p44, %p45
    %p47 = scmp.ne.s32.totalorder %s39, %s42
    %p48 = scmp.eq.s32.totalorder %s15, 0
    %p49 = por %p47, %p48
    %p50 = scmp.ne.s32.totalorder %s39, %s42
    %p51 = scmp.eq.s32.totalorder %s20, 1
    %p52 = por %p50, %p51
    %p53 = scmp.ne.s32.totalorder %s42, %s43
    %p54 = scmp.eq.s32.totalorder %s20, 0
    %p55 = por %p53, %p54
    %p56 = scmp.ne.s32.totalorder %s42, %s43
    %p57 = scmp.eq.s32.totalorder %s21, 1
    %p58 = por %p56, %p57
    %p60 = scmp.ne.s32.totalorder %s43, %s59
    %p61 = scmp.eq.s32.totalorder %s21, 0
    %p62 = por %p60, %p61
    %s64 = sadd.s32 %s63, 1
    %p67 = scmp.eq.s32.totalorder %s15, 1
    %p68 = scmp.ne.s32.totalorder %s63, %s65
    %p69 = scmp.eq.s32.totalorder %s15, 0
    %p70 = por %p68, %p69
    %p71 = scmp.ne.s32.totalorder %s63, %s65
    %p72 = scmp.eq.s32.totalorder %s20, 1
    %p73 = por %p71, %p72
    %p74 = scmp.ne.s32.totalorder %s65, %s66
    %p75 = scmp.eq.s32.totalorder %s20, 0
    %p76 = por %p74, %p75
    %p77 = scmp.ne.s32.totalorder %s65, %s66
    %p78 = scmp.eq.s32.totalorder %s21, 1
    %p79 = por %p77, %p78
    %p81 = scmp.ne.s32.totalorder %s66, %s80
    %p82 = scmp.eq.s32.totalorder %s21, 0
    %p83 = por %p81, %p82
    %s85 = sadd.s32 %s84, 1
    %p88 = scmp.eq.s32.totalorder %s15, 1
    %p89 = scmp.ne.s32.totalorder %s84, %s86
    %p90 = scmp.eq.s32.totalorder %s15, 0
    %p91 = por %p89, %p90
    %p92 = scmp.ne.s32.totalorder %s84, %s86
    %p93 = scmp.eq.s32.totalorder %s20, 1
    %p94 = por %p92, %p93
    %p95 = scmp.ne.s32.totalorder %s86, %s87
    %p96 = scmp.eq.s32.totalorder %s20, 0
    %p97 = por %p95, %p96
    %p98 = scmp.ne.s32.totalorder %s86, %s87
    %p99 = scmp.eq.s32.totalorder %s21, 1
    %p100 = por %p98, %p99
    %p102 = scmp.ne.s32.totalorder %s87, %s101
    %p103 = scmp.eq.s32.totalorder %s21, 0
    %p104 = por %p102, %p103
    %s106 = sadd.s32 %s105, 1
    %p109 = scmp.eq.s32.totalorder %s15, 1
    %p110 = scmp.ne.s32.totalorder %s105, %s107
    %p111 = scmp.eq.s32.totalorder %s15, 0
    %p112 = por %p110, %p111
    %p113 = scmp.ne.s32.totalorder %s105, %s107
    %p114 = scmp.eq.s32.totalorder %s20, 1
    %p115 = por %p113, %p114
    %p116 = scmp.ne.s32.totalorder %s107, %s108
    %p117 = scmp.eq.s32.totalorder %s20, 0
    %p118 = por %p116, %p117
    %p119 = scmp.ne.s32.totalorder %s107, %s108
    %p120 = scmp.eq.s32.totalorder %s21, 1
    %p121 = por %p119, %p120
    %p123 = scmp.ne.s32.totalorder %s108, %s122
    %p124 = scmp.eq.s32.totalorder %s21, 0
    %p125 = por %p123, %p124
    %s126 = sadd.s32 %s22, %s23
    %s127 = sadd.s32 %s34, %s30
    %s128 = ssub.s32 %s126, %s127
    %p129 = scmp.eq.s32.totalorder %s128, 0
    %s131 = sadd.s32 %s130, 1
    %s132 = scalar_select %p129, %s130, %s131
    %p135 = pneg %p129
    %p136 = scmp.eq.s32.totalorder %s15, 1
    %p137 = por %p135, %p136
    %p138 = scmp.ne.s32.totalorder %s130, %s133
    %p139 = scmp.eq.s32.totalorder %s15, 0
    %p140 = por %p138, %p139
    %p141 = scmp.ne.s32.totalorder %s130, %s133
    %p142 = scmp.eq.s32.totalorder %s20, 1
    %p143 = por %p141, %p142
    %p144 = scmp.ne.s32.totalorder %s133, %s134
    %p145 = scmp.eq.s32.totalorder %s20, 0
    %p146 = por %p144, %p145
    %p147 = scmp.ne.s32.totalorder %s133, %s134
    %p148 = scmp.eq.s32.totalorder %s21, 1
    %p149 = por %p147, %p148
    %p151 = scmp.ne.s32.totalorder %s134, %s150
    %p152 = scmp.eq.s32.totalorder %s21, 0
    %p153 = por %p151, %p152
    %s154 = sadd.s32 %s22, %s23
    %s155 = sadd.s32 %s34, %s30
    %s156 = ssub.s32 %s154, %s155
    %p157 = scmp.eq.s32.totalorder %s156, 0
    %s159 = sadd.s32 %s158, 1
    %s160 = scalar_select %p157, %s158, %s159
    %p163 = pneg %p157
    %p164 = scmp.eq.s32.totalorder %s15, 1
    %p165 = por %p163, %p164
    %p166 = scmp.ne.s32.totalorder %s158, %s161
    %p167 = scmp.eq.s32.totalorder %s15, 0
    %p168 = por %p166, %p167
    %p169 = scmp.ne.s32.totalorder %s158, %s161
    %p170 = scmp.eq.s32.totalorder %s20, 1
    %p171 = por %p169, %p170
    %p172 = scmp.ne.s32.totalorder %s161, %s162
    %p173 = scmp.eq.s32.totalorder %s20, 0
    %p174 = por %p172, %p173
    %p175 = scmp.ne.s32.totalorder %s161, %s162
    %p176 = scmp.eq.s32.totalorder %s21, 1
    %p177 = por %p175, %p176
    %p179 = scmp.ne.s32.totalorder %s162, %s178
    %p180 = scmp.eq.s32.totalorder %s21, 0
    %p181 = por %p179, %p180
    %s182 = sadd.s32 %s22, %s23
    %s183 = sadd.s32 %s34, %s30
    %s184 = ssub.s32 %s182, %s183
    %p185 = scmp.eq.s32.totalorder %s184, 0
    %s187 = sadd.s32 %s186, 1
    %s188 = scalar_select %p185, %s186, %s187
    %p191 = pneg %p185
    %p192 = scmp.eq.s32.totalorder %s15, 1
    %p193 = por %p191, %p192
    %p194 = scmp.ne.s32.totalorder %s186, %s189
    %p195 = scmp.eq.s32.totalorder %s15, 0
    %p196 = por %p194, %p195
    %p197 = scmp.ne.s32.totalorder %s186, %s189
    %p198 = scmp.eq.s32.totalorder %s20, 1
    %p199 = por %p197, %p198
    %p200 = scmp.ne.s32.totalorder %s189, %s190
    %p201 = scmp.eq.s32.totalorder %s20, 0
    %p202 = por %p200, %p201
    %p203 = scmp.ne.s32.totalorder %s189, %s190
    %p204 = scmp.eq.s32.totalorder %s21, 1
    %p205 = por %p203, %p204
    %p207 = scmp.ne.s32.totalorder %s190, %s206
    %p208 = scmp.eq.s32.totalorder %s21, 0
    %p209 = por %p207, %p208
    %s210 = ssub.s32 %s22, %s34
    %p211 = scmp.eq.s32.totalorder %s210, 0
    %s213 = sadd.s32 %s212, 1
    %s214 = scalar_select %p211, %s212, %s213
    %p217 = pneg %p211
    %p218 = scmp.eq.s32.totalorder %s15, 1
    %p219 = por %p217, %p218
    %p220 = scmp.ne.s32.totalorder %s212, %s215
    %p221 = scmp.eq.s32.totalorder %s15, 0
    %p222 = por %p220, %p221
    %p223 = scmp.ne.s32.totalorder %s212, %s215
    %p224 = scmp.eq.s32.totalorder %s20, 1
    %p225 = por %p223, %p224
    %p226 = scmp.ne.s32.totalorder %s215, %s216
    %p227 = scmp.eq.s32.totalorder %s20, 0
    %p228 = por %p226, %p227
    %p229 = scmp.ne.s32.totalorder %s215, %s216
    %p230 = scmp.eq.s32.totalorder %s21, 1
    %p231 = por %p229, %p230
    %p233 = scmp.ne.s32.totalorder %s216, %s232
    %p234 = scmp.eq.s32.totalorder %s21, 0
    %p235 = por %p233, %p234
    %s236 = ssub.s32 %s22, %s34
    %p237 = scmp.eq.s32.totalorder %s236, 0
    %s239 = sadd.s32 %s238, 1
    %s240 = scalar_select %p237, %s238, %s239
    %p243 = pneg %p237
    %p244 = scmp.eq.s32.totalorder %s15, 1
    %p245 = por %p243, %p244
    %p246 = scmp.ne.s32.totalorder %s238, %s241
    %p247 = scmp.eq.s32.totalorder %s15, 0
    %p248 = por %p246, %p247
    %p249 = scmp.ne.s32.totalorder %s238, %s241
    %p250 = scmp.eq.s32.totalorder %s20, 1
    %p251 = por %p249, %p250
    %p252 = scmp.ne.s32.totalorder %s241, %s242
    %p253 = scmp.eq.s32.totalorder %s20, 0
    %p254 = por %p252, %p253
    %p255 = scmp.ne.s32.totalorder %s241, %s242
    %p256 = scmp.eq.s32.totalorder %s21, 1
    %p257 = por %p255, %p256
    %p259 = scmp.ne.s32.totalorder %s242, %s258
    %p260 = scmp.eq.s32.totalorder %s21, 0
    %p261 = por %p259, %p260
    %p262 = scmp.le.s32.totalorder 1, %s15
    %p263 = scmp.lt.s32.totalorder %s15, 3
    %p264 = pnand %p262, %p263
    %p265 = pneg %p264
    // Predicated region
    $region9: #{vq_embedding_ema_forward.1} parent=5 // pred_check
      _
    $region10: #{vq_embedding_ema_forward.1} parent=5 // pred_check_branch
      %267 = sbr.rel (%p264) target = $region12
    $region11: #{vq_embedding_ema_forward.1} parent=5 // pred_region
      %s268 = ssub.s32 %s15, 1
      // Predicated region
      $region13: #{vq_embedding_ema_forward.1} parent=11 // pred_check
        %p269 = pneg %p76
      $region14: #{vq_embedding_ema_forward.1} parent=11 // pred_check_branch
        %271 = sbr.rel (%p269) target = $region16
      $region15: #{vq_embedding_ema_forward.1} parent=11 // pred_region
        _
      $region16: #{vq_embedding_ema_forward.1} parent=11 // pred_fallthru
        _
      // Predicated region
      $region17: #{vq_embedding_ema_forward.1} parent=11 // pred_check
        %p272 = pneg %p97
      $region18: #{vq_embedding_ema_forward.1} parent=11 // pred_check_branch
        %274 = sbr.rel (%p272) target = $region20
      $region19: #{vq_embedding_ema_forward.1} parent=11 // pred_region
        _
      $region20: #{vq_embedding_ema_forward.1} parent=11 // pred_fallthru
        _
      // Predicated region
      $region21: #{vq_embedding_ema_forward.1} parent=11 // pred_check
        %p275 = pneg %p118
      $region22: #{vq_embedding_ema_forward.1} parent=11 // pred_check_branch
        %277 = sbr.rel (%p275) target = $region24
      $region23: #{vq_embedding_ema_forward.1} parent=11 // pred_region
        _
      $region24: #{vq_embedding_ema_forward.1} parent=11 // pred_fallthru
        _
    $region12: #{vq_embedding_ema_forward.1} parent=5 // pred_fallthru
      _
    %p278 = scmp.lt.s32.totalorder %s15, 2
    // Predicated region
    $region25: #{vq_embedding_ema_forward.1} parent=5 // pred_check
      %p279 = pneg %p278
    $region26: #{vq_embedding_ema_forward.1} parent=5 // pred_check_branch
      %281 = sbr.rel (%p279) target = $region28
    $region27: #{vq_embedding_ema_forward.1} parent=5 // pred_region
      // Predicated region
      $region29: #{vq_embedding_ema_forward.1} parent=27 // pred_check
        %p282 = pneg %p49
      $region30: #{vq_embedding_ema_forward.1} parent=27 // pred_check_branch
        %284 = sbr.rel (%p282) target = $region32
      $region31: #{vq_embedding_ema_forward.1} parent=27 // pred_region
        %s285 = sadd.s32 %s22, %s23
        %s286 = smul.u32 64, %s285
        %p287 = scmp.lt.s32.totalorder %s286, 127
        %s288 = scalar_select %p287, %s286, 127
        %s289 = smul.addr %s288, 8
        %s290 = scalar_lea.vmem %s0, %s289
        %s291 = sadd.s32 %s22, %s23
        %s292 = smul.u32 64, %s291
      $region32: #{vq_embedding_ema_forward.1} parent=27 // pred_fallthru
        _
    $region28: #{vq_embedding_ema_forward.1} parent=5 // pred_fallthru
      _
    %p293 = scmp.le.s32.totalorder 1, %s15
    %p294 = scmp.lt.s32.totalorder %s15, 3
    %p295 = pnand %p293, %p294
    %p296 = pneg %p295
    // Predicated region
    $region33: #{vq_embedding_ema_forward.1} parent=5 // pred_check
      _
    $region34: #{vq_embedding_ema_forward.1} parent=5 // pred_check_branch
      %298 = sbr.rel (%p295) target = $region36
    $region35: #{vq_embedding_ema_forward.1} parent=5 // pred_region
      %s299 = ssub.s32 %s15, 1
      %s300 = sadd.s32 %s24, %s25
      %s301 = smul.u32 64, %s300
      %p302 = scmp.lt.s32.totalorder %s301, 127
      %s303 = scalar_select %p302, %s301, 127
      %s304 = smul.addr %s303, 8
      %s305 = scalar_lea.vmem %s0, %s304
      %p306 = pneg %p55
      %p307 = pneg %p52
      %p308 = pneg %p76
      %p309 = pneg %p73
      %p310 = pneg %p97
      %p311 = pneg %p94
      %p312 = pneg %p118
      %p313 = pneg %p115
      %p314 = pneg %p146
      %p315 = pneg %p143
      %s316 = sadd.s32 %s24, %s25
      %s317 = smul.u32 64, %s316
      %p318 = scmp.lt.s32.totalorder %s317, 127
      %s319 = scalar_select %p318, %s317, 127
      %s320 = smul.addr %s319, 8
      %s321 = scalar_lea.vmem %s4, %s320
      %p322 = pneg %p174
      %p323 = pneg %p171
      %s324 = sadd.s32 %s24, %s25
      %s325 = smul.u32 64, %s324
      %p326 = scmp.lt.s32.totalorder %s325, 127
      %s327 = scalar_select %p326, %s325, 127
      %s328 = smul.addr %s327, 8
      %s329 = scalar_lea.vmem %s5, %s328
      %p330 = pneg %p202
      %p331 = pneg %p199
      %s332 = sadd.s32 %s24, %s25
      %p333 = scmp.lt.s32.totalorder %s332, 1
      %s334 = scalar_select %p333, %s332, 1
      %s335 = smul.addr %s334, 4
      %s336 = scalar_lea.vmem %s6, %s335
      %p337 = pneg %p228
      %p338 = pneg %p225
      %p339 = scmp.lt.s32.totalorder %s24, 1
      %s340 = scalar_select %p339, %s24, 1
      %s341 = scalar_lea.vmem %s7, %s340
      %p342 = pneg %p254
      %p343 = pneg %p251
      %p344 = scmp.lt.s32.totalorder %s24, 1
      %s345 = scalar_select %p344, %s24, 1
      %s346 = scalar_lea.vmem %s8, %s345
      %s347 = sadd.s32 %s24, %s25
      %s348 = smul.u32 64, %s347
      %p349 = scmp.lt.s32.totalorder %s348, 127
      %s350 = scalar_select %p349, %s348, 127
      %s351 = smul.addr %s350, 8
      %s352 = scalar_lea.vmem %s0, %s351
      %s353 = sadd.s32 %s24, %s25
      %s354 = smul.u32 64, %s353
      %s355 = sadd.s32 %s24, %s25
      %s356 = smul.u32 64, %s355
      %p357 = scmp.lt.s32.totalorder %s356, 127
      %s358 = scalar_select %p357, %s356, 127
      %s359 = smul.addr %s358, 8
      %s360 = scalar_lea.vmem %s4, %s359
      %s361 = sadd.s32 %s24, %s25
      %s362 = smul.u32 64, %s361
      %s363 = sadd.s32 %s24, %s25
      %s364 = smul.u32 64, %s363
      %p365 = scmp.lt.s32.totalorder %s364, 127
      %s366 = scalar_select %p365, %s364, 127
      %s367 = smul.addr %s366, 8
      %s368 = scalar_lea.vmem %s5, %s367
      %s369 = sadd.s32 %s24, %s25
      %s370 = smul.u32 64, %s369
      %s371 = sadd.s32 %s24, %s25
      %p372 = scmp.lt.s32.totalorder %s371, 1
      %s373 = scalar_select %p372, %s371, 1
      %s374 = smul.addr %s373, 4
      %s375 = scalar_lea.vmem %s6, %s374
      %s376 = sadd.s32 %s24, %s25
      %p377 = scmp.lt.s32.totalorder %s24, 1
      %s378 = scalar_select %p377, %s24, 1
      %s379 = scalar_lea.vmem %s7, %s378
      %p380 = scmp.lt.s32.totalorder %s24, 1
      %s381 = scalar_select %p380, %s24, 1
      %s382 = scalar_lea.vmem %s8, %s381
      %v383 = vld [vmem:[%s352] sm:$0xff]
      %v384 = vld [vmem:[%s352 + $0x8] sm:$0xff]
      %v385 = vld [vmem:[%s352 + $0x10] sm:$0xff]
      %v386 = vld [vmem:[%s352 + $0x18] sm:$0xff]
      %v387 = vld [vmem:[%s352 + $0x20] sm:$0xff]
      %v388 = vld [vmem:[%s352 + $0x28] sm:$0xff]
      %v389 = vld [vmem:[%s352 + $0x30] sm:$0xff]
      %v390 = vld [vmem:[%s352 + $0x38] sm:$0xff]
      %v391 = vld [vmem:[%s352 + $0x40] sm:$0xff]
      %v392 = vld [vmem:[%s352 + $0x48] sm:$0xff]
      %v393 = vld [vmem:[%s352 + $0x50] sm:$0xff]
      %v394 = vld [vmem:[%s352 + $0x58] sm:$0xff]
      %v395 = vld [vmem:[%s352 + $0x60] sm:$0xff]
      %v396 = vld [vmem:[%s352 + $0x68] sm:$0xff]
      %v397 = vld [vmem:[%s352 + $0x70] sm:$0xff]
      %v398 = vld [vmem:[%s352 + $0x78] sm:$0xff]
      %v399 = vld [vmem:[%s352 + $0x80] sm:$0xff]
      %v400 = vld [vmem:[%s352 + $0x88] sm:$0xff]
      %v401 = vld [vmem:[%s352 + $0x90] sm:$0xff]
      %v402 = vld [vmem:[%s352 + $0x98] sm:$0xff]
      %v403 = vld [vmem:[%s352 + $0xa0] sm:$0xff]
      %v404 = vld [vmem:[%s352 + $0xa8] sm:$0xff]
      %v405 = vld [vmem:[%s352 + $0xb0] sm:$0xff]
      %v406 = vld [vmem:[%s352 + $0xb8] sm:$0xff]
      %v407 = vld [vmem:[%s352 + $0xc0] sm:$0xff]
      %v408 = vld [vmem:[%s352 + $0xc8] sm:$0xff]
      %v409 = vld [vmem:[%s352 + $0xd0] sm:$0xff]
      %v410 = vld [vmem:[%s352 + $0xd8] sm:$0xff]
      %v411 = vld [vmem:[%s352 + $0xe0] sm:$0xff]
      %v412 = vld [vmem:[%s352 + $0xe8] sm:$0xff]
      %v413 = vld [vmem:[%s352 + $0xf0] sm:$0xff]
      %v414 = vld [vmem:[%s352 + $0xf8] sm:$0xff]
      %v415 = vld [vmem:[%s352 + $0x100] sm:$0xff]
      %v416 = vld [vmem:[%s352 + $0x108] sm:$0xff]
      %v417 = vld [vmem:[%s352 + $0x110] sm:$0xff]
      %v418 = vld [vmem:[%s352 + $0x118] sm:$0xff]
      %v419 = vld [vmem:[%s352 + $0x120] sm:$0xff]
      %v420 = vld [vmem:[%s352 + $0x128] sm:$0xff]
      %v421 = vld [vmem:[%s352 + $0x130] sm:$0xff]
      %v422 = vld [vmem:[%s352 + $0x138] sm:$0xff]
      %v423 = vld [vmem:[%s352 + $0x140] sm:$0xff]
      %v424 = vld [vmem:[%s352 + $0x148] sm:$0xff]
      %v425 = vld [vmem:[%s352 + $0x150] sm:$0xff]
      %v426 = vld [vmem:[%s352 + $0x158] sm:$0xff]
      %v427 = vld [vmem:[%s352 + $0x160] sm:$0xff]
      %v428 = vld [vmem:[%s352 + $0x168] sm:$0xff]
      %v429 = vld [vmem:[%s352 + $0x170] sm:$0xff]
      %v430 = vld [vmem:[%s352 + $0x178] sm:$0xff]
      %v431 = vld [vmem:[%s352 + $0x180] sm:$0xff]
      %v432 = vld [vmem:[%s352 + $0x188] sm:$0xff]
      %v433 = vld [vmem:[%s352 + $0x190] sm:$0xff]
      %v434 = vld [vmem:[%s352 + $0x198] sm:$0xff]
      %v435 = vld [vmem:[%s352 + $0x1a0] sm:$0xff]
      %v436 = vld [vmem:[%s352 + $0x1a8] sm:$0xff]
      %v437 = vld [vmem:[%s352 + $0x1b0] sm:$0xff]
      %v438 = vld [vmem:[%s352 + $0x1b8] sm:$0xff]
      %v439 = vld [vmem:[%s352 + $0x1c0] sm:$0xff]
      %v440 = vld [vmem:[%s352 + $0x1c8] sm:$0xff]
      %v441 = vld [vmem:[%s352 + $0x1d0] sm:$0xff]
      %v442 = vld [vmem:[%s352 + $0x1d8] sm:$0xff]
      %v443 = vld [vmem:[%s352 + $0x1e0] sm:$0xff]
      %v444 = vld [vmem:[%s352 + $0x1e8] sm:$0xff]
      %v445 = vld [vmem:[%s352 + $0x1f0] sm:$0xff]
      %v446 = vld [vmem:[%s352 + $0x1f8] sm:$0xff]
      %v447 = vld [vmem:[%s2] sm:$0xff]
      %v448 = vld [vmem:[%s2 + $0x8] sm:$0xff]
      %v449 = vld [vmem:[%s2 + $0x10] sm:$0xff]
      %v450 = vld [vmem:[%s2 + $0x18] sm:$0xff]
      %v451 = vld [vmem:[%s2 + $0x20] sm:$0xff]
      %v452 = vld [vmem:[%s2 + $0x28] sm:$0xff]
      %v453 = vld [vmem:[%s2 + $0x30] sm:$0xff]
      %v454 = vld [vmem:[%s2 + $0x38] sm:$0xff]
      %v455 = vld [vmem:[%s2 + $0x40] sm:$0xff]
      %v456 = vld [vmem:[%s2 + $0x48] sm:$0xff]
      %v457 = vld [vmem:[%s2 + $0x50] sm:$0xff]
      %v458 = vld [vmem:[%s2 + $0x58] sm:$0xff]
      %v459 = vld [vmem:[%s2 + $0x60] sm:$0xff]
      %v460 = vld [vmem:[%s2 + $0x68] sm:$0xff]
      %v461 = vld [vmem:[%s2 + $0x70] sm:$0xff]
      %v462 = vld [vmem:[%s2 + $0x78] sm:$0xff]
      %v463 = vld [vmem:[%s1] sm:$0xff]
      %v464 = vld [vmem:[%s1 + $0x8] sm:$0xff]
      %v465 = vld [vmem:[%s1 + $0x10] sm:$0xff]
      %v466 = vld [vmem:[%s1 + $0x18] sm:$0xff]
      %v467 = vld [vmem:[%s1 + $0x20] sm:$0xff]
      %v468 = vld [vmem:[%s1 + $0x28] sm:$0xff]
      %v469 = vld [vmem:[%s1 + $0x30] sm:$0xff]
      %v470 = vld [vmem:[%s1 + $0x38] sm:$0xff]
      %vm471 = vcmask 523264
      %v473 = vsel %vm471, %v383, 0
      %v476 = vsel %vm471, %v384, 0
      %v479 = vsel %vm471, %v385, 0
      %v482 = vsel %vm471, %v386, 0
      %v485 = vsel %vm471, %v387, 0
      %v488 = vsel %vm471, %v388, 0
      %v491 = vsel %vm471, %v389, 0
      %v494 = vsel %vm471, %v390, 0
      %v497 = vsel %vm471, %v391, 0
      %v500 = vsel %vm471, %v392, 0
      %v503 = vsel %vm471, %v393, 0
      %v506 = vsel %vm471, %v394, 0
      %v509 = vsel %vm471, %v395, 0
      %v512 = vsel %vm471, %v396, 0
      %v515 = vsel %vm471, %v397, 0
      %v518 = vsel %vm471, %v398, 0
      %v521 = vsel %vm471, %v399, 0
      %v524 = vsel %vm471, %v400, 0
      %v527 = vsel %vm471, %v401, 0
      %v530 = vsel %vm471, %v402, 0
      %v533 = vsel %vm471, %v403, 0
      %v536 = vsel %vm471, %v404, 0
      %v539 = vsel %vm471, %v405, 0
      %v542 = vsel %vm471, %v406, 0
      %v545 = vsel %vm471, %v407, 0
      %v548 = vsel %vm471, %v408, 0
      %v551 = vsel %vm471, %v409, 0
      %v554 = vsel %vm471, %v410, 0
      %v557 = vsel %vm471, %v411, 0
      %v560 = vsel %vm471, %v412, 0
      %v563 = vsel %vm471, %v413, 0
      %v566 = vsel %vm471, %v414, 0
      %v569 = vsel %vm471, %v415, 0
      %v572 = vsel %vm471, %v416, 0
      %v575 = vsel %vm471, %v417, 0
      %v578 = vsel %vm471, %v418, 0
      %v581 = vsel %vm471, %v419, 0
      %v584 = vsel %vm471, %v420, 0
      %v587 = vsel %vm471, %v421, 0
      %v590 = vsel %vm471, %v422, 0
      %v593 = vsel %vm471, %v423, 0
      %v596 = vsel %vm471, %v424, 0
      %v599 = vsel %vm471, %v425, 0
      %v602 = vsel %vm471, %v426, 0
      %v605 = vsel %vm471, %v427, 0
      %v608 = vsel %vm471, %v428, 0
      %v611 = vsel %vm471, %v429, 0
      %v614 = vsel %vm471, %v430, 0
      %v617 = vsel %vm471, %v431, 0
      %v620 = vsel %vm471, %v432, 0
      %v623 = vsel %vm471, %v433, 0
      %v626 = vsel %vm471, %v434, 0
      %v629 = vsel %vm471, %v435, 0
      %v632 = vsel %vm471, %v436, 0
      %v635 = vsel %vm471, %v437, 0
      %v638 = vsel %vm471, %v438, 0
      %v641 = vsel %vm471, %v439, 0
      %v644 = vsel %vm471, %v440, 0
      %v647 = vsel %vm471, %v441, 0
      %v650 = vsel %vm471, %v442, 0
      %v653 = vsel %vm471, %v443, 0
      %v656 = vsel %vm471, %v444, 0
      %v659 = vsel %vm471, %v445, 0
      %v662 = vsel %vm471, %v446, 0
      %664 = vmatprep.subr.mxu0 0.0
      %665 = vmatpush1.msra.mxu0 0.0
      %666 = vmatprep.subr.mxu0 0.0
      %667 = vmatpush1.msra.mxu0 0.0
      %668 = vmatprep.subr.mxu0 0.0
      %669 = vmatpush1.msra.mxu0 0.0
      %670 = vmatprep.subr.mxu0 0.0
      %671 = vmatpush1.msra.mxu0 0.0
      %672 = vmatprep.subr.mxu0 0.0
      %673 = vmatpush1.msra.mxu0 0.0
      %674 = vmatprep.subr.mxu0 0.0
      %675 = vmatpush1.msra.mxu0 0.0
      %676 = vmatprep.subr.mxu0 0.0
      %677 = vmatpush1.msra.mxu0 0.0
      %678 = vmatprep.subr.mxu0 0.0
      %679 = vmatpush1.msra.mxu0 0.0
      %680 = vmatprep.subr.mxu0 0.0
      %681 = vmatpush1.msra.mxu0 %v470
      %682 = vmatprep.subr.mxu0 0.0
      %683 = vmatpush1.msra.mxu0 %v469
      %684 = vmatprep.subr.mxu0 0.0
      %685 = vmatpush1.msra.mxu0 %v468
      %686 = vmatprep.subr.mxu0 0.0
      %687 = vmatpush1.msra.mxu0 %v467
      %688 = vmatprep.subr.mxu0 0.0
      %689 = vmatpush1.msra.mxu0 %v466
      %690 = vmatprep.subr.mxu0 0.0
      %691 = vmatpush1.msra.mxu0 %v465
      %692 = vmatprep.subr.mxu0 0.0
      %693 = vmatpush1.msra.mxu0 %v464
      %694 = vmatprep.subr.mxu0 0.0
      %695 = vmatpush1.msra.mxu0 %v463
      %696 = vmatprep.subr.mxu0 0.0
      %697 = vmatpush2.msra.mxu0 0.0
      %698 = vmatprep.subr.mxu0 0.0
      %699 = vmatpush2.msra.mxu0 0.0
      %700 = vmatprep.subr.mxu0 0.0
      %701 = vmatpush2.msra.mxu0 0.0
      %702 = vmatprep.subr.mxu0 0.0
      %703 = vmatpush2.msra.mxu0 0.0
      %704 = vmatprep.subr.mxu0 0.0
      %705 = vmatpush2.msra.mxu0 0.0
      %706 = vmatprep.subr.mxu0 0.0
      %707 = vmatpush2.msra.mxu0 0.0
      %708 = vmatprep.subr.mxu0 0.0
      %709 = vmatpush2.msra.mxu0 0.0
      %710 = vmatprep.subr.mxu0 0.0
      %711 = vmatpush2.msra.mxu0 0.0
      %712 = vmatprep.subr.mxu0 0.0
      %713 = vmatpush2.msra.mxu0 0.0
      %714 = vmatprep.subr.mxu0 0.0
      %715 = vmatpush2.msra.mxu0 0.0
      %716 = vmatprep.subr.mxu0 0.0
      %717 = vmatpush2.msra.mxu0 0.0
      %718 = vmatprep.subr.mxu0 0.0
      %719 = vmatpush2.msra.mxu0 0.0
      %720 = vmatprep.subr.mxu0 0.0
      %721 = vmatpush2.msra.mxu0 0.0
      %722 = vmatprep.subr.mxu0 0.0
      %723 = vmatpush2.msra.mxu0 0.0
      %724 = vmatprep.subr.mxu0 0.0
      %725 = vmatpush2.msra.mxu0 0.0
      %726 = vmatprep.subr.mxu0 0.0
      %727 = vmatpush2.msra.mxu0 0.0
      %728 = vmatprep.mubr.f32.mxu0 0.0
      %729 = vmatmul.mubr.f32.gmra.mxu0 %v473
      %v730 = vpop.f32.mrf.mxu0
      %v731 = vadd.f32 0.0, %v730
      %v732 = vpop.f32.mrf.mxu0
      %733 = vmatprep.mubr.f32.mxu0 0.0
      %734 = vmatmul.mubr.f32.gmra.mxu0 %v476
      %v735 = vpop.f32.mrf.mxu0
      %v736 = vadd.f32 0.0, %v735
      %v737 = vpop.f32.mrf.mxu0
      %738 = vmatprep.mubr.f32.mxu0 0.0
      %739 = vmatmul.mubr.f32.gmra.mxu0 %v479
      %v740 = vpop.f32.mrf.mxu0
      %v741 = vadd.f32 0.0, %v740
      %v742 = vpop.f32.mrf.mxu0
      %743 = vmatprep.mubr.f32.mxu0 0.0
      %744 = vmatmul.mubr.f32.gmra.mxu0 %v482
      %v745 = vpop.f32.mrf.mxu0
      %v746 = vadd.f32 0.0, %v745
      %v747 = vpop.f32.mrf.mxu0
      %748 = vmatprep.mubr.f32.mxu0 0.0
      %749 = vmatmul.mubr.f32.gmra.mxu0 %v485
      %v750 = vpop.f32.mrf.mxu0
      %v751 = vadd.f32 0.0, %v750
      %v752 = vpop.f32.mrf.mxu0
      %753 = vmatprep.mubr.f32.mxu0 0.0
      %754 = vmatmul.mubr.f32.gmra.mxu0 %v488
      %v755 = vpop.f32.mrf.mxu0
      %v756 = vadd.f32 0.0, %v755
      %v757 = vpop.f32.mrf.mxu0
      %758 = vmatprep.mubr.f32.mxu0 0.0
      %759 = vmatmul.mubr.f32.gmra.mxu0 %v491
      %v760 = vpop.f32.mrf.mxu0
      %v761 = vadd.f32 0.0, %v760
      %v762 = vpop.f32.mrf.mxu0
      %763 = vmatprep.mubr.f32.mxu0 0.0
      %764 = vmatmul.mubr.f32.gmra.mxu0 %v494
      %v765 = vpop.f32.mrf.mxu0
      %v766 = vadd.f32 0.0, %v765
      %v767 = vpop.f32.mrf.mxu0
      %768 = vmatprep.mubr.f32.mxu0 0.0
      %769 = vmatmul.mubr.f32.gmra.mxu0 %v497
      %v770 = vpop.f32.mrf.mxu0
      %v771 = vadd.f32 0.0, %v770
      %v772 = vpop.f32.mrf.mxu0
      %773 = vmatprep.mubr.f32.mxu0 0.0
      %774 = vmatmul.mubr.f32.gmra.mxu0 %v500
      %v775 = vpop.f32.mrf.mxu0
      %v776 = vadd.f32 0.0, %v775
      %v777 = vpop.f32.mrf.mxu0
      %778 = vmatprep.mubr.f32.mxu0 0.0
      %779 = vmatmul.mubr.f32.gmra.mxu0 %v503
      %v780 = vpop.f32.mrf.mxu0
      %v781 = vadd.f32 0.0, %v780
      %v782 = vpop.f32.mrf.mxu0
      %783 = vmatprep.mubr.f32.mxu0 0.0
      %784 = vmatmul.mubr.f32.gmra.mxu0 %v506
      %v785 = vpop.f32.mrf.mxu0
      %v786 = vadd.f32 0.0, %v785
      %v787 = vpop.f32.mrf.mxu0
      %788 = vmatprep.mubr.f32.mxu0 0.0
      %789 = vmatmul.mubr.f32.gmra.mxu0 %v509
      %v790 = vpop.f32.mrf.mxu0
      %v791 = vadd.f32 0.0, %v790
      %v792 = vpop.f32.mrf.mxu0
      %793 = vmatprep.mubr.f32.mxu0 0.0
      %794 = vmatmul.mubr.f32.gmra.mxu0 %v512
      %v795 = vpop.f32.mrf.mxu0
      %v796 = vadd.f32 0.0, %v795
      %v797 = vpop.f32.mrf.mxu0
      %798 = vmatprep.mubr.f32.mxu0 0.0
      %799 = vmatmul.mubr.f32.gmra.mxu0 %v515
      %v800 = vpop.f32.mrf.mxu0
      %v801 = vadd.f32 0.0, %v800
      %v802 = vpop.f32.mrf.mxu0
      %803 = vmatprep.mubr.f32.mxu0 0.0
      %804 = vmatmul.mubr.f32.gmra.mxu0 %v518
      %v805 = vpop.f32.mrf.mxu0
      %v806 = vadd.f32 0.0, %v805
      %v807 = vpop.f32.mrf.mxu0
      %808 = vmatprep.mubr.f32.mxu0 0.0
      %809 = vmatmul.mubr.f32.gmra.mxu0 %v521
      %v810 = vpop.f32.mrf.mxu0
      %v811 = vadd.f32 0.0, %v810
      %v812 = vpop.f32.mrf.mxu0
      %813 = vmatprep.mubr.f32.mxu0 0.0
      %814 = vmatmul.mubr.f32.gmra.mxu0 %v524
      %v815 = vpop.f32.mrf.mxu0
      %v816 = vadd.f32 0.0, %v815
      %v817 = vpop.f32.mrf.mxu0
      %818 = vmatprep.mubr.f32.mxu0 0.0
      %819 = vmatmul.mubr.f32.gmra.mxu0 %v527
      %v820 = vpop.f32.mrf.mxu0
      %v821 = vadd.f32 0.0, %v820
      %v822 = vpop.f32.mrf.mxu0
      %823 = vmatprep.mubr.f32.mxu0 0.0
      %824 = vmatmul.mubr.f32.gmra.mxu0 %v530
      %v825 = vpop.f32.mrf.mxu0
      %v826 = vadd.f32 0.0, %v825
      %v827 = vpop.f32.mrf.mxu0
      %828 = vmatprep.mubr.f32.mxu0 0.0
      %829 = vmatmul.mubr.f32.gmra.mxu0 %v533
      %v830 = vpop.f32.mrf.mxu0
      %v831 = vadd.f32 0.0, %v830
      %v832 = vpop.f32.mrf.mxu0
      %833 = vmatprep.mubr.f32.mxu0 0.0
      %834 = vmatmul.mubr.f32.gmra.mxu0 %v536
      %v835 = vpop.f32.mrf.mxu0
      %v836 = vadd.f32 0.0, %v835
      %v837 = vpop.f32.mrf.mxu0
      %838 = vmatprep.mubr.f32.mxu0 0.0
      %839 = vmatmul.mubr.f32.gmra.mxu0 %v539
      %v840 = vpop.f32.mrf.mxu0
      %v841 = vadd.f32 0.0, %v840
      %v842 = vpop.f32.mrf.mxu0
      %843 = vmatprep.mubr.f32.mxu0 0.0
      %844 = vmatmul.mubr.f32.gmra.mxu0 %v542
      %v845 = vpop.f32.mrf.mxu0
      %v846 = vadd.f32 0.0, %v845
      %v847 = vpop.f32.mrf.mxu0
      %848 = vmatprep.mubr.f32.mxu0 0.0
      %849 = vmatmul.mubr.f32.gmra.mxu0 %v545
      %v850 = vpop.f32.mrf.mxu0
      %v851 = vadd.f32 0.0, %v850
      %v852 = vpop.f32.mrf.mxu0
      %853 = vmatprep.mubr.f32.mxu0 0.0
      %854 = vmatmul.mubr.f32.gmra.mxu0 %v548
      %v855 = vpop.f32.mrf.mxu0
      %v856 = vadd.f32 0.0, %v855
      %v857 = vpop.f32.mrf.mxu0
      %858 = vmatprep.mubr.f32.mxu0 0.0
      %859 = vmatmul.mubr.f32.gmra.mxu0 %v551
      %v860 = vpop.f32.mrf.mxu0
      %v861 = vadd.f32 0.0, %v860
      %v862 = vpop.f32.mrf.mxu0
      %863 = vmatprep.mubr.f32.mxu0 0.0
      %864 = vmatmul.mubr.f32.gmra.mxu0 %v554
      %v865 = vpop.f32.mrf.mxu0
      %v866 = vadd.f32 0.0, %v865
      %v867 = vpop.f32.mrf.mxu0
      %868 = vmatprep.mubr.f32.mxu0 0.0
      %869 = vmatmul.mubr.f32.gmra.mxu0 %v557
      %v870 = vpop.f32.mrf.mxu0
      %v871 = vadd.f32 0.0, %v870
      %v872 = vpop.f32.mrf.mxu0
      %873 = vmatprep.mubr.f32.mxu0 0.0
      %874 = vmatmul.mubr.f32.gmra.mxu0 %v560
      %v875 = vpop.f32.mrf.mxu0
      %v876 = vadd.f32 0.0, %v875
      %v877 = vpop.f32.mrf.mxu0
      %878 = vmatprep.mubr.f32.mxu0 0.0
      %879 = vmatmul.mubr.f32.gmra.mxu0 %v563
      %v880 = vpop.f32.mrf.mxu0
      %v881 = vadd.f32 0.0, %v880
      %v882 = vpop.f32.mrf.mxu0
      %883 = vmatprep.mubr.f32.mxu0 0.0
      %884 = vmatmul.mubr.f32.gmra.mxu0 %v566
      %v885 = vpop.f32.mrf.mxu0
      %v886 = vadd.f32 0.0, %v885
      %v887 = vpop.f32.mrf.mxu0
      %888 = vmatprep.mubr.f32.mxu0 0.0
      %889 = vmatmul.mubr.f32.gmra.mxu0 %v569
      %v890 = vpop.f32.mrf.mxu0
      %v891 = vadd.f32 0.0, %v890
      %v892 = vpop.f32.mrf.mxu0
      %893 = vmatprep.mubr.f32.mxu0 0.0
      %894 = vmatmul.mubr.f32.gmra.mxu0 %v572
      %v895 = vpop.f32.mrf.mxu0
      %v896 = vadd.f32 0.0, %v895
      %v897 = vpop.f32.mrf.mxu0
      %898 = vmatprep.mubr.f32.mxu0 0.0
      %899 = vmatmul.mubr.f32.gmra.mxu0 %v575
      %v900 = vpop.f32.mrf.mxu0
      %v901 = vadd.f32 0.0, %v900
      %v902 = vpop.f32.mrf.mxu0
      %903 = vmatprep.mubr.f32.mxu0 0.0
      %904 = vmatmul.mubr.f32.gmra.mxu0 %v578
      %v905 = vpop.f32.mrf.mxu0
      %v906 = vadd.f32 0.0, %v905
      %v907 = vpop.f32.mrf.mxu0
      %908 = vmatprep.mubr.f32.mxu0 0.0
      %909 = vmatmul.mubr.f32.gmra.mxu0 %v581
      %v910 = vpop.f32.mrf.mxu0
      %v911 = vadd.f32 0.0, %v910
      %v912 = vpop.f32.mrf.mxu0
      %913 = vmatprep.mubr.f32.mxu0 0.0
      %914 = vmatmul.mubr.f32.gmra.mxu0 %v584
      %v915 = vpop.f32.mrf.mxu0
      %v916 = vadd.f32 0.0, %v915
      %v917 = vpop.f32.mrf.mxu0
      %918 = vmatprep.mubr.f32.mxu0 0.0
      %919 = vmatmul.mubr.f32.gmra.mxu0 %v587
      %v920 = vpop.f32.mrf.mxu0
      %v921 = vadd.f32 0.0, %v920
      %v922 = vpop.f32.mrf.mxu0
      %923 = vmatprep.mubr.f32.mxu0 0.0
      %924 = vmatmul.mubr.f32.gmra.mxu0 %v590
      %v925 = vpop.f32.mrf.mxu0
      %v926 = vadd.f32 0.0, %v925
      %v927 = vpop.f32.mrf.mxu0
      %928 = vmatprep.mubr.f32.mxu0 0.0
      %929 = vmatmul.mubr.f32.gmra.mxu0 %v593
      %v930 = vpop.f32.mrf.mxu0
      %v931 = vadd.f32 0.0, %v930
      %v932 = vpop.f32.mrf.mxu0
      %933 = vmatprep.mubr.f32.mxu0 0.0
      %934 = vmatmul.mubr.f32.gmra.mxu0 %v596
      %v935 = vpop.f32.mrf.mxu0
      %v936 = vadd.f32 0.0, %v935
      %v937 = vpop.f32.mrf.mxu0
      %938 = vmatprep.mubr.f32.mxu0 0.0
      %939 = vmatmul.mubr.f32.gmra.mxu0 %v599
      %v940 = vpop.f32.mrf.mxu0
      %v941 = vadd.f32 0.0, %v940
      %v942 = vpop.f32.mrf.mxu0
      %943 = vmatprep.mubr.f32.mxu0 0.0
      %944 = vmatmul.mubr.f32.gmra.mxu0 %v602
      %v945 = vpop.f32.mrf.mxu0
      %v946 = vadd.f32 0.0, %v945
      %v947 = vpop.f32.mrf.mxu0
      %948 = vmatprep.mubr.f32.mxu0 0.0
      %949 = vmatmul.mubr.f32.gmra.mxu0 %v605
      %v950 = vpop.f32.mrf.mxu0
      %v951 = vadd.f32 0.0, %v950
      %v952 = vpop.f32.mrf.mxu0
      %953 = vmatprep.mubr.f32.mxu0 0.0
      %954 = vmatmul.mubr.f32.gmra.mxu0 %v608
      %v955 = vpop.f32.mrf.mxu0
      %v956 = vadd.f32 0.0, %v955
      %v957 = vpop.f32.mrf.mxu0
      %958 = vmatprep.mubr.f32.mxu0 0.0
      %959 = vmatmul.mubr.f32.gmra.mxu0 %v611
      %v960 = vpop.f32.mrf.mxu0
      %v961 = vadd.f32 0.0, %v960
      %v962 = vpop.f32.mrf.mxu0
      %963 = vmatprep.mubr.f32.mxu0 0.0
      %964 = vmatmul.mubr.f32.gmra.mxu0 %v614
      %v965 = vpop.f32.mrf.mxu0
      %v966 = vadd.f32 0.0, %v965
      %v967 = vpop.f32.mrf.mxu0
      %968 = vmatprep.mubr.f32.mxu0 0.0
      %969 = vmatmul.mubr.f32.gmra.mxu0 %v617
      %v970 = vpop.f32.mrf.mxu0
      %v971 = vadd.f32 0.0, %v970
      %v972 = vpop.f32.mrf.mxu0
      %973 = vmatprep.mubr.f32.mxu0 0.0
      %974 = vmatmul.mubr.f32.gmra.mxu0 %v620
      %v975 = vpop.f32.mrf.mxu0
      %v976 = vadd.f32 0.0, %v975
      %v977 = vpop.f32.mrf.mxu0
      %978 = vmatprep.mubr.f32.mxu0 0.0
      %979 = vmatmul.mubr.f32.gmra.mxu0 %v623
      %v980 = vpop.f32.mrf.mxu0
      %v981 = vadd.f32 0.0, %v980
      %v982 = vpop.f32.mrf.mxu0
      %983 = vmatprep.mubr.f32.mxu0 0.0
      %984 = vmatmul.mubr.f32.gmra.mxu0 %v626
      %v985 = vpop.f32.mrf.mxu0
      %v986 = vadd.f32 0.0, %v985
      %v987 = vpop.f32.mrf.mxu0
      %988 = vmatprep.mubr.f32.mxu0 0.0
      %989 = vmatmul.mubr.f32.gmra.mxu0 %v629
      %v990 = vpop.f32.mrf.mxu0
      %v991 = vadd.f32 0.0, %v990
      %v992 = vpop.f32.mrf.mxu0
      %993 = vmatprep.mubr.f32.mxu0 0.0
      %994 = vmatmul.mubr.f32.gmra.mxu0 %v632
      %v995 = vpop.f32.mrf.mxu0
      %v996 = vadd.f32 0.0, %v995
      %v997 = vpop.f32.mrf.mxu0
      %998 = vmatprep.mubr.f32.mxu0 0.0
      %999 = vmatmul.mubr.f32.gmra.mxu0 %v635
      %v1000 = vpop.f32.mrf.mxu0
      %v1001 = vadd.f32 0.0, %v1000
      %v1002 = vpop.f32.mrf.mxu0
      %1003 = vmatprep.mubr.f32.mxu0 0.0
      %1004 = vmatmul.mubr.f32.gmra.mxu0 %v638
      %v1005 = vpop.f32.mrf.mxu0
      %v1006 = vadd.f32 0.0, %v1005
      %v1007 = vpop.f32.mrf.mxu0
      %1008 = vmatprep.mubr.f32.mxu0 0.0
      %1009 = vmatmul.mubr.f32.gmra.mxu0 %v641
      %v1010 = vpop.f32.mrf.mxu0
      %v1011 = vadd.f32 0.0, %v1010
      %v1012 = vpop.f32.mrf.mxu0
      %1013 = vmatprep.mubr.f32.mxu0 0.0
      %1014 = vmatmul.mubr.f32.gmra.mxu0 %v644
      %v1015 = vpop.f32.mrf.mxu0
      %v1016 = vadd.f32 0.0, %v1015
      %v1017 = vpop.f32.mrf.mxu0
      %1018 = vmatprep.mubr.f32.mxu0 0.0
      %1019 = vmatmul.mubr.f32.gmra.mxu0 %v647
      %v1020 = vpop.f32.mrf.mxu0
      %v1021 = vadd.f32 0.0, %v1020
      %v1022 = vpop.f32.mrf.mxu0
      %1023 = vmatprep.mubr.f32.mxu0 0.0
      %1024 = vmatmul.mubr.f32.gmra.mxu0 %v650
      %v1025 = vpop.f32.mrf.mxu0
      %v1026 = vadd.f32 0.0, %v1025
      %v1027 = vpop.f32.mrf.mxu0
      %1028 = vmatprep.mubr.f32.mxu0 0.0
      %1029 = vmatmul.mubr.f32.gmra.mxu0 %v653
      %v1030 = vpop.f32.mrf.mxu0
      %v1031 = vadd.f32 0.0, %v1030
      %v1032 = vpop.f32.mrf.mxu0
      %1033 = vmatprep.mubr.f32.mxu0 0.0
      %1034 = vmatmul.mubr.f32.gmra.mxu0 %v656
      %v1035 = vpop.f32.mrf.mxu0
      %v1036 = vadd.f32 0.0, %v1035
      %v1037 = vpop.f32.mrf.mxu0
      %1038 = vmatprep.mubr.f32.mxu0 0.0
      %1039 = vmatmul.mubr.f32.gmra.mxu0 %v659
      %v1040 = vpop.f32.mrf.mxu0
      %v1041 = vadd.f32 0.0, %v1040
      %v1042 = vpop.f32.mrf.mxu0
      %1043 = vmatprep.mubr.f32.mxu0 0.0
      %1044 = vmatmul.mubr.f32.gmra.mxu0 %v662
      %v1045 = vpop.f32.mrf.mxu0
      %v1046 = vadd.f32 0.0, %v1045
      %v1047 = vpop.f32.mrf.mxu0
      %1048 = vdwg.mxu0
      %v1049 = vld [vmem:[%s3] sm:$0x1]
      %v1050 = vmul.f32 %v731, 2.0
      %v1051 = vmul.f32 %v736, 2.0
      %v1052 = vmul.f32 %v741, 2.0
      %v1053 = vmul.f32 %v746, 2.0
      %v1054 = vmul.f32 %v751, 2.0
      %v1055 = vmul.f32 %v756, 2.0
      %v1056 = vmul.f32 %v761, 2.0
      %v1057 = vmul.f32 %v766, 2.0
      %v1058 = vmul.f32 %v771, 2.0
      %v1059 = vmul.f32 %v776, 2.0
      %v1060 = vmul.f32 %v781, 2.0
      %v1061 = vmul.f32 %v786, 2.0
      %v1062 = vmul.f32 %v791, 2.0
      %v1063 = vmul.f32 %v796, 2.0
      %v1064 = vmul.f32 %v801, 2.0
      %v1065 = vmul.f32 %v806, 2.0
      %v1066 = vmul.f32 %v811, 2.0
      %v1067 = vmul.f32 %v816, 2.0
      %v1068 = vmul.f32 %v821, 2.0
      %v1069 = vmul.f32 %v826, 2.0
      %v1070 = vmul.f32 %v831, 2.0
      %v1071 = vmul.f32 %v836, 2.0
      %v1072 = vmul.f32 %v841, 2.0
      %v1073 = vmul.f32 %v846, 2.0
      %v1074 = vmul.f32 %v851, 2.0
      %v1075 = vmul.f32 %v856, 2.0
      %v1076 = vmul.f32 %v861, 2.0
      %v1077 = vmul.f32 %v866, 2.0
      %v1078 = vmul.f32 %v871, 2.0
      %v1079 = vmul.f32 %v876, 2.0
      %v1080 = vmul.f32 %v881, 2.0
      %v1081 = vmul.f32 %v886, 2.0
      %v1082 = vmul.f32 %v891, 2.0
      %v1083 = vmul.f32 %v896, 2.0
      %v1084 = vmul.f32 %v901, 2.0
      %v1085 = vmul.f32 %v906, 2.0
      %v1086 = vmul.f32 %v911, 2.0
      %v1087 = vmul.f32 %v916, 2.0
      %v1088 = vmul.f32 %v921, 2.0
      %v1089 = vmul.f32 %v926, 2.0
      %v1090 = vmul.f32 %v931, 2.0
      %v1091 = vmul.f32 %v936, 2.0
      %v1092 = vmul.f32 %v941, 2.0
      %v1093 = vmul.f32 %v946, 2.0
      %v1094 = vmul.f32 %v951, 2.0
      %v1095 = vmul.f32 %v956, 2.0
      %v1096 = vmul.f32 %v961, 2.0
      %v1097 = vmul.f32 %v966, 2.0
      %v1098 = vmul.f32 %v971, 2.0
      %v1099 = vmul.f32 %v976, 2.0
      %v1100 = vmul.f32 %v981, 2.0
      %v1101 = vmul.f32 %v986, 2.0
      %v1102 = vmul.f32 %v991, 2.0
      %v1103 = vmul.f32 %v996, 2.0
      %v1104 = vmul.f32 %v1001, 2.0
      %v1105 = vmul.f32 %v1006, 2.0
      %v1106 = vmul.f32 %v1011, 2.0
      %v1107 = vmul.f32 %v1016, 2.0
      %v1108 = vmul.f32 %v1021, 2.0
      %v1109 = vmul.f32 %v1026, 2.0
      %v1110 = vmul.f32 %v1031, 2.0
      %v1111 = vmul.f32 %v1036, 2.0
      %v1112 = vmul.f32 %v1041, 2.0
      %v1113 = vmul.f32 %v1046, 2.0
      %v1115 = vlaneseq
      %v1116 = vshrl.u32 %v1115, 7
      %v1117 = vsub.s32 0, %v1116
      %v1118 = vrot.slane %v1049, %v1117
      %v1120 = vsub.f32 %v1118, %v1050
      %v1121 = vsub.f32 %v1118, %v1051
      %v1122 = vsub.f32 %v1118, %v1052
      %v1123 = vsub.f32 %v1118, %v1053
      %v1124 = vsub.f32 %v1118, %v1054
      %v1125 = vsub.f32 %v1118, %v1055
      %v1126 = vsub.f32 %v1118, %v1056
      %v1127 = vsub.f32 %v1118, %v1057
      %v1128 = vsub.f32 %v1118, %v1058
      %v1129 = vsub.f32 %v1118, %v1059
      %v1130 = vsub.f32 %v1118, %v1060
      %v1131 = vsub.f32 %v1118, %v1061
      %v1132 = vsub.f32 %v1118, %v1062
      %v1133 = vsub.f32 %v1118, %v1063
      %v1134 = vsub.f32 %v1118, %v1064
      %v1135 = vsub.f32 %v1118, %v1065
      %v1136 = vsub.f32 %v1118, %v1066
      %v1137 = vsub.f32 %v1118, %v1067
      %v1138 = vsub.f32 %v1118, %v1068
      %v1139 = vsub.f32 %v1118, %v1069
      %v1140 = vsub.f32 %v1118, %v1070
      %v1141 = vsub.f32 %v1118, %v1071
      %v1142 = vsub.f32 %v1118, %v1072
      %v1143 = vsub.f32 %v1118, %v1073
      %v1144 = vsub.f32 %v1118, %v1074
      %v1145 = vsub.f32 %v1118, %v1075
      %v1146 = vsub.f32 %v1118, %v1076
      %v1147 = vsub.f32 %v1118, %v1077
      %v1148 = vsub.f32 %v1118, %v1078
      %v1149 = vsub.f32 %v1118, %v1079
      %v1150 = vsub.f32 %v1118, %v1080
      %v1151 = vsub.f32 %v1118, %v1081
      %v1152 = vsub.f32 %v1118, %v1082
      %v1153 = vsub.f32 %v1118, %v1083
      %v1154 = vsub.f32 %v1118, %v1084
      %v1155 = vsub.f32 %v1118, %v1085
      %v1156 = vsub.f32 %v1118, %v1086
      %v1157 = vsub.f32 %v1118, %v1087
      %v1158 = vsub.f32 %v1118, %v1088
      %v1159 = vsub.f32 %v1118, %v1089
      %v1160 = vsub.f32 %v1118, %v1090
      %v1161 = vsub.f32 %v1118, %v1091
      %v1162 = vsub.f32 %v1118, %v1092
      %v1163 = vsub.f32 %v1118, %v1093
      %v1164 = vsub.f32 %v1118, %v1094
      %v1165 = vsub.f32 %v1118, %v1095
      %v1166 = vsub.f32 %v1118, %v1096
      %v1167 = vsub.f32 %v1118, %v1097
      %v1168 = vsub.f32 %v1118, %v1098
      %v1169 = vsub.f32 %v1118, %v1099
      %v1170 = vsub.f32 %v1118, %v1100
      %v1171 = vsub.f32 %v1118, %v1101
      %v1172 = vsub.f32 %v1118, %v1102
      %v1173 = vsub.f32 %v1118, %v1103
      %v1174 = vsub.f32 %v1118, %v1104
      %v1175 = vsub.f32 %v1118, %v1105
      %v1176 = vsub.f32 %v1118, %v1106
      %v1177 = vsub.f32 %v1118, %v1107
      %v1178 = vsub.f32 %v1118, %v1108
      %v1179 = vsub.f32 %v1118, %v1109
      %v1180 = vsub.f32 %v1118, %v1110
      %v1181 = vsub.f32 %v1118, %v1111
      %v1182 = vsub.f32 %v1118, %v1112
      %v1183 = vsub.f32 %v1118, %v1113
      %v1184 = vlaneseq
      %v1185 = vand.u32 %v1184, 127
      %1186 = vmin.xlane.f32.xlu0 %v1120
      %v1187 = vpop.xlane.xlu0 %1186
      %1188 = vmin.xlane.f32.xlu0 %v1121
      %v1189 = vpop.xlane.xlu0 %1188
      %1190 = vmin.xlane.f32.xlu0 %v1122
      %v1191 = vpop.xlane.xlu0 %1190
      %1192 = vmin.xlane.f32.xlu0 %v1123
      %v1193 = vpop.xlane.xlu0 %1192
      %1194 = vmin.xlane.f32.xlu0 %v1124
      %v1195 = vpop.xlane.xlu0 %1194
      %1196 = vmin.xlane.f32.xlu0 %v1125
      %v1197 = vpop.xlane.xlu0 %1196
      %1198 = vmin.xlane.f32.xlu0 %v1126
      %v1199 = vpop.xlane.xlu0 %1198
      %1200 = vmin.xlane.f32.xlu0 %v1127
      %v1201 = vpop.xlane.xlu0 %1200
      %1202 = vmin.xlane.f32.xlu0 %v1128
      %v1203 = vpop.xlane.xlu0 %1202
      %1204 = vmin.xlane.f32.xlu0 %v1129
      %v1205 = vpop.xlane.xlu0 %1204
      %1206 = vmin.xlane.f32.xlu0 %v1130
      %v1207 = vpop.xlane.xlu0 %1206
      %1208 = vmin.xlane.f32.xlu0 %v1131
      %v1209 = vpop.xlane.xlu0 %1208
      %1210 = vmin.xlane.f32.xlu0 %v1132
      %v1211 = vpop.xlane.xlu0 %1210
      %1212 = vmin.xlane.f32.xlu0 %v1133
      %v1213 = vpop.xlane.xlu0 %1212
      %1214 = vmin.xlane.f32.xlu0 %v1134
      %v1215 = vpop.xlane.xlu0 %1214
      %1216 = vmin.xlane.f32.xlu0 %v1135
      %v1217 = vpop.xlane.xlu0 %1216
      %1218 = vmin.xlane.f32.xlu0 %v1136
      %v1219 = vpop.xlane.xlu0 %1218
      %1220 = vmin.xlane.f32.xlu0 %v1137
      %v1221 = vpop.xlane.xlu0 %1220
      %1222 = vmin.xlane.f32.xlu0 %v1138
      %v1223 = vpop.xlane.xlu0 %1222
      %1224 = vmin.xlane.f32.xlu0 %v1139
      %v1225 = vpop.xlane.xlu0 %1224
      %1226 = vmin.xlane.f32.xlu0 %v1140
      %v1227 = vpop.xlane.xlu0 %1226
      %1228 = vmin.xlane.f32.xlu0 %v1141
      %v1229 = vpop.xlane.xlu0 %1228
      %1230 = vmin.xlane.f32.xlu0 %v1142
      %v1231 = vpop.xlane.xlu0 %1230
      %1232 = vmin.xlane.f32.xlu0 %v1143
      %v1233 = vpop.xlane.xlu0 %1232
      %1234 = vmin.xlane.f32.xlu0 %v1144
      %v1235 = vpop.xlane.xlu0 %1234
      %1236 = vmin.xlane.f32.xlu0 %v1145
      %v1237 = vpop.xlane.xlu0 %1236
      %1238 = vmin.xlane.f32.xlu0 %v1146
      %v1239 = vpop.xlane.xlu0 %1238
      %1240 = vmin.xlane.f32.xlu0 %v1147
      %v1241 = vpop.xlane.xlu0 %1240
      %1242 = vmin.xlane.f32.xlu0 %v1148
      %v1243 = vpop.xlane.xlu0 %1242
      %1244 = vmin.xlane.f32.xlu0 %v1149
      %v1245 = vpop.xlane.xlu0 %1244
      %1246 = vmin.xlane.f32.xlu0 %v1150
      %v1247 = vpop.xlane.xlu0 %1246
      %1248 = vmin.xlane.f32.xlu0 %v1151
      %v1249 = vpop.xlane.xlu0 %1248
      %1250 = vmin.xlane.f32.xlu0 %v1152
      %v1251 = vpop.xlane.xlu0 %1250
      %1252 = vmin.xlane.f32.xlu0 %v1153
      %v1253 = vpop.xlane.xlu0 %1252
      %1254 = vmin.xlane.f32.xlu0 %v1154
      %v1255 = vpop.xlane.xlu0 %1254
      %1256 = vmin.xlane.f32.xlu0 %v1155
      %v1257 = vpop.xlane.xlu0 %1256
      %1258 = vmin.xlane.f32.xlu0 %v1156
      %v1259 = vpop.xlane.xlu0 %1258
      %1260 = vmin.xlane.f32.xlu0 %v1157
      %v1261 = vpop.xlane.xlu0 %1260
      %1262 = vmin.xlane.f32.xlu0 %v1158
      %v1263 = vpop.xlane.xlu0 %1262
      %1264 = vmin.xlane.f32.xlu0 %v1159
      %v1265 = vpop.xlane.xlu0 %1264
      %1266 = vmin.xlane.f32.xlu0 %v1160
      %v1267 = vpop.xlane.xlu0 %1266
      %1268 = vmin.xlane.f32.xlu0 %v1161
      %v1269 = vpop.xlane.xlu0 %1268
      %1270 = vmin.xlane.f32.xlu0 %v1162
      %v1271 = vpop.xlane.xlu0 %1270
      %1272 = vmin.xlane.f32.xlu0 %v1163
      %v1273 = vpop.xlane.xlu0 %1272
      %1274 = vmin.xlane.f32.xlu0 %v1164
      %v1275 = vpop.xlane.xlu0 %1274
      %1276 = vmin.xlane.f32.xlu0 %v1165
      %v1277 = vpop.xlane.xlu0 %1276
      %1278 = vmin.xlane.f32.xlu0 %v1166
      %v1279 = vpop.xlane.xlu0 %1278
      %1280 = vmin.xlane.f32.xlu0 %v1167
      %v1281 = vpop.xlane.xlu0 %1280
      %1282 = vmin.xlane.f32.xlu0 %v1168
      %v1283 = vpop.xlane.xlu0 %1282
      %1284 = vmin.xlane.f32.xlu0 %v1169
      %v1285 = vpop.xlane.xlu0 %1284
      %1286 = vmin.xlane.f32.xlu0 %v1170
      %v1287 = vpop.xlane.xlu0 %1286
      %1288 = vmin.xlane.f32.xlu0 %v1171
      %v1289 = vpop.xlane.xlu0 %1288
      %1290 = vmin.xlane.f32.xlu0 %v1172
      %v1291 = vpop.xlane.xlu0 %1290
      %1292 = vmin.xlane.f32.xlu0 %v1173
      %v1293 = vpop.xlane.xlu0 %1292
      %1294 = vmin.xlane.f32.xlu0 %v1174
      %v1295 = vpop.xlane.xlu0 %1294
      %1296 = vmin.xlane.f32.xlu0 %v1175
      %v1297 = vpop.xlane.xlu0 %1296
      %1298 = vmin.xlane.f32.xlu0 %v1176
      %v1299 = vpop.xlane.xlu0 %1298
      %1300 = vmin.xlane.f32.xlu0 %v1177
      %v1301 = vpop.xlane.xlu0 %1300
      %1302 = vmin.xlane.f32.xlu0 %v1178
      %v1303 = vpop.xlane.xlu0 %1302
      %1304 = vmin.xlane.f32.xlu0 %v1179
      %v1305 = vpop.xlane.xlu0 %1304
      %1306 = vmin.xlane.f32.xlu0 %v1180
      %v1307 = vpop.xlane.xlu0 %1306
      %1308 = vmin.xlane.f32.xlu0 %v1181
      %v1309 = vpop.xlane.xlu0 %1308
      %1310 = vmin.xlane.f32.xlu0 %v1182
      %v1311 = vpop.xlane.xlu0 %1310
      %1312 = vmin.xlane.f32.xlu0 %v1183
      %v1313 = vpop.xlane.xlu0 %1312
      %vm1314 = vcmp.eq.f32.partialorder %v1120, %v1187
      %vm1315 = vcmp.eq.f32.partialorder %v1121, %v1189
      %vm1316 = vcmp.eq.f32.partialorder %v1122, %v1191
      %vm1317 = vcmp.eq.f32.partialorder %v1123, %v1193
      %vm1318 = vcmp.eq.f32.partialorder %v1124, %v1195
      %vm1319 = vcmp.eq.f32.partialorder %v1125, %v1197
      %vm1320 = vcmp.eq.f32.partialorder %v1126, %v1199
      %vm1321 = vcmp.eq.f32.partialorder %v1127, %v1201
      %vm1322 = vcmp.eq.f32.partialorder %v1128, %v1203
      %vm1323 = vcmp.eq.f32.partialorder %v1129, %v1205
      %vm1324 = vcmp.eq.f32.partialorder %v1130, %v1207
      %vm1325 = vcmp.eq.f32.partialorder %v1131, %v1209
      %vm1326 = vcmp.eq.f32.partialorder %v1132, %v1211
      %vm1327 = vcmp.eq.f32.partialorder %v1133, %v1213
      %vm1328 = vcmp.eq.f32.partialorder %v1134, %v1215
      %vm1329 = vcmp.eq.f32.partialorder %v1135, %v1217
      %vm1330 = vcmp.eq.f32.partialorder %v1136, %v1219
      %vm1331 = vcmp.eq.f32.partialorder %v1137, %v1221
      %vm1332 = vcmp.eq.f32.partialorder %v1138, %v1223
      %vm1333 = vcmp.eq.f32.partialorder %v1139, %v1225
      %vm1334 = vcmp.eq.f32.partialorder %v1140, %v1227
      %vm1335 = vcmp.eq.f32.partialorder %v1141, %v1229
      %vm1336 = vcmp.eq.f32.partialorder %v1142, %v1231
      %vm1337 = vcmp.eq.f32.partialorder %v1143, %v1233
      %vm1338 = vcmp.eq.f32.partialorder %v1144, %v1235
      %vm1339 = vcmp.eq.f32.partialorder %v1145, %v1237
      %vm1340 = vcmp.eq.f32.partialorder %v1146, %v1239
      %vm1341 = vcmp.eq.f32.partialorder %v1147, %v1241
      %vm1342 = vcmp.eq.f32.partialorder %v1148, %v1243
      %vm1343 = vcmp.eq.f32.partialorder %v1149, %v1245
      %vm1344 = vcmp.eq.f32.partialorder %v1150, %v1247
      %vm1345 = vcmp.eq.f32.partialorder %v1151, %v1249
      %vm1346 = vcmp.eq.f32.partialorder %v1152, %v1251
      %vm1347 = vcmp.eq.f32.partialorder %v1153, %v1253
      %vm1348 = vcmp.eq.f32.partialorder %v1154, %v1255
      %vm1349 = vcmp.eq.f32.partialorder %v1155, %v1257
      %vm1350 = vcmp.eq.f32.partialorder %v1156, %v1259
      %vm1351 = vcmp.eq.f32.partialorder %v1157, %v1261
      %vm1352 = vcmp.eq.f32.partialorder %v1158, %v1263
      %vm1353 = vcmp.eq.f32.partialorder %v1159, %v1265
      %vm1354 = vcmp.eq.f32.partialorder %v1160, %v1267
      %vm1355 = vcmp.eq.f32.partialorder %v1161, %v1269
      %vm1356 = vcmp.eq.f32.partialorder %v1162, %v1271
      %vm1357 = vcmp.eq.f32.partialorder %v1163, %v1273
      %vm1358 = vcmp.eq.f32.partialorder %v1164, %v1275
      %vm1359 = vcmp.eq.f32.partialorder %v1165, %v1277
      %vm1360 = vcmp.eq.f32.partialorder %v1166, %v1279
      %vm1361 = vcmp.eq.f32.partialorder %v1167, %v1281
      %vm1362 = vcmp.eq.f32.partialorder %v1168, %v1283
      %vm1363 = vcmp.eq.f32.partialorder %v1169, %v1285
      %vm1364 = vcmp.eq.f32.partialorder %v1170, %v1287
      %vm1365 = vcmp.eq.f32.partialorder %v1171, %v1289
      %vm1366 = vcmp.eq.f32.partialorder %v1172, %v1291
      %vm1367 = vcmp.eq.f32.partialorder %v1173, %v1293
      %vm1368 = vcmp.eq.f32.partialorder %v1174, %v1295
      %vm1369 = vcmp.eq.f32.partialorder %v1175, %v1297
      %vm1370 = vcmp.eq.f32.partialorder %v1176, %v1299
      %vm1371 = vcmp.eq.f32.partialorder %v1177, %v1301
      %vm1372 = vcmp.eq.f32.partialorder %v1178, %v1303
      %vm1373 = vcmp.eq.f32.partialorder %v1179, %v1305
      %vm1374 = vcmp.eq.f32.partialorder %v1180, %v1307
      %vm1375 = vcmp.eq.f32.partialorder %v1181, %v1309
      %vm1376 = vcmp.eq.f32.partialorder %v1182, %v1311
      %vm1377 = vcmp.eq.f32.partialorder %v1183, %v1313
      %v1378 = vsel %vm1314, %v1185, 128
      %v1379 = vsel %vm1315, %v1185, 128
      %v1380 = vsel %vm1316, %v1185, 128
      %v1381 = vsel %vm1317, %v1185, 128
      %v1382 = vsel %vm1318, %v1185, 128
      %v1383 = vsel %vm1319, %v1185, 128
      %v1384 = vsel %vm1320, %v1185, 128
      %v1385 = vsel %vm1321, %v1185, 128
      %v1386 = vsel %vm1322, %v1185, 128
      %v1387 = vsel %vm1323, %v1185, 128
      %v1388 = vsel %vm1324, %v1185, 128
      %v1389 = vsel %vm1325, %v1185, 128
      %v1390 = vsel %vm1326, %v1185, 128
      %v1391 = vsel %vm1327, %v1185, 128
      %v1392 = vsel %vm1328, %v1185, 128
      %v1393 = vsel %vm1329, %v1185, 128
      %v1394 = vsel %vm1330, %v1185, 128
      %v1395 = vsel %vm1331, %v1185, 128
      %v1396 = vsel %vm1332, %v1185, 128
      %v1397 = vsel %vm1333, %v1185, 128
      %v1398 = vsel %vm1334, %v1185, 128
      %v1399 = vsel %vm1335, %v1185, 128
      %v1400 = vsel %vm1336, %v1185, 128
      %v1401 = vsel %vm1337, %v1185, 128
      %v1402 = vsel %vm1338, %v1185, 128
      %v1403 = vsel %vm1339, %v1185, 128
      %v1404 = vsel %vm1340, %v1185, 128
      %v1405 = vsel %vm1341, %v1185, 128
      %v1406 = vsel %vm1342, %v1185, 128
      %v1407 = vsel %vm1343, %v1185, 128
      %v1408 = vsel %vm1344, %v1185, 128
      %v1409 = vsel %vm1345, %v1185, 128
      %v1410 = vsel %vm1346, %v1185, 128
      %v1411 = vsel %vm1347, %v1185, 128
      %v1412 = vsel %vm1348, %v1185, 128
      %v1413 = vsel %vm1349, %v1185, 128
      %v1414 = vsel %vm1350, %v1185, 128
      %v1415 = vsel %vm1351, %v1185, 128
      %v1416 = vsel %vm1352, %v1185, 128
      %v1417 = vsel %vm1353, %v1185, 128
      %v1418 = vsel %vm1354, %v1185, 128
      %v1419 = vsel %vm1355, %v1185, 128
      %v1420 = vsel %vm1356, %v1185, 128
      %v1421 = vsel %vm1357, %v1185, 128
      %v1422 = vsel %vm1358, %v1185, 128
      %v1423 = vsel %vm1359, %v1185, 128
      %v1424 = vsel %vm1360, %v1185, 128
      %v1425 = vsel %vm1361, %v1185, 128
      %v1426 = vsel %vm1362, %v1185, 128
      %v1427 = vsel %vm1363, %v1185, 128
      %v1428 = vsel %vm1364, %v1185, 128
      %v1429 = vsel %vm1365, %v1185, 128
      %v1430 = vsel %vm1366, %v1185, 128
      %v1431 = vsel %vm1367, %v1185, 128
      %v1432 = vsel %vm1368, %v1185, 128
      %v1433 = vsel %vm1369, %v1185, 128
      %v1434 = vsel %vm1370, %v1185, 128
      %v1435 = vsel %vm1371, %v1185, 128
      %v1436 = vsel %vm1372, %v1185, 128
      %v1437 = vsel %vm1373, %v1185, 128
      %v1438 = vsel %vm1374, %v1185, 128
      %v1439 = vsel %vm1375, %v1185, 128
      %v1440 = vsel %vm1376, %v1185, 128
      %v1441 = vsel %vm1377, %v1185, 128
      %v1442 = vand.u32 %v1378, 65535
      %v1443 = vshra.s32 %v1378, 16
      %v1444 = vcvt.s32.f32 %v1442
      %v1445 = vcvt.s32.f32 %v1443
      %1446 = vmin.xlane.f32.xlu0 %v1445
      %v1447 = vpop.xlane.xlu0 %1446
      %vm1448 = vcmp.eq.f32.partialorder %v1445, %v1447
      %v1449 = vsel %vm1448, %v1444, inf
      %1450 = vmin.xlane.f32.xlu0 %v1449
      %v1451 = vpop.xlane.xlu0 %1450
      %v1452 = vcvt.f32.s32 %v1451
      %v1453 = vcvt.f32.s32 %v1447
      %v1454 = vshll.u32 %v1453, 16
      %v1455 = vadd.s32 %v1454, %v1452
      %v1456 = vand.u32 %v1379, 65535
      %v1457 = vshra.s32 %v1379, 16
      %v1458 = vcvt.s32.f32 %v1456
      %v1459 = vcvt.s32.f32 %v1457
      %1460 = vmin.xlane.f32.xlu0 %v1459
      %v1461 = vpop.xlane.xlu0 %1460
      %vm1462 = vcmp.eq.f32.partialorder %v1459, %v1461
      %v1463 = vsel %vm1462, %v1458, inf
      %1464 = vmin.xlane.f32.xlu0 %v1463
      %v1465 = vpop.xlane.xlu0 %1464
      %v1466 = vcvt.f32.s32 %v1465
      %v1467 = vcvt.f32.s32 %v1461
      %v1468 = vshll.u32 %v1467, 16
      %v1469 = vadd.s32 %v1468, %v1466
      %v1470 = vand.u32 %v1380, 65535
      %v1471 = vshra.s32 %v1380, 16
      %v1472 = vcvt.s32.f32 %v1470
      %v1473 = vcvt.s32.f32 %v1471
      %1474 = vmin.xlane.f32.xlu0 %v1473
      %v1475 = vpop.xlane.xlu0 %1474
      %vm1476 = vcmp.eq.f32.partialorder %v1473, %v1475
      %v1477 = vsel %vm1476, %v1472, inf
      %1478 = vmin.xlane.f32.xlu0 %v1477
      %v1479 = vpop.xlane.xlu0 %1478
      %v1480 = vcvt.f32.s32 %v1479
      %v1481 = vcvt.f32.s32 %v1475
      %v1482 = vshll.u32 %v1481, 16
      %v1483 = vadd.s32 %v1482, %v1480
      %v1484 = vand.u32 %v1381, 65535
      %v1485 = vshra.s32 %v1381, 16
      %v1486 = vcvt.s32.f32 %v1484
      %v1487 = vcvt.s32.f32 %v1485
      %1488 = vmin.xlane.f32.xlu0 %v1487
      %v1489 = vpop.xlane.xlu0 %1488
      %vm1490 = vcmp.eq.f32.partialorder %v1487, %v1489
      %v1491 = vsel %vm1490, %v1486, inf
      %1492 = vmin.xlane.f32.xlu0 %v1491
      %v1493 = vpop.xlane.xlu0 %1492
      %v1494 = vcvt.f32.s32 %v1493
      %v1495 = vcvt.f32.s32 %v1489
      %v1496 = vshll.u32 %v1495, 16
      %v1497 = vadd.s32 %v1496, %v1494
      %v1498 = vand.u32 %v1382, 65535
      %v1499 = vshra.s32 %v1382, 16
      %v1500 = vcvt.s32.f32 %v1498
      %v1501 = vcvt.s32.f32 %v1499
      %1502 = vmin.xlane.f32.xlu0 %v1501
      %v1503 = vpop.xlane.xlu0 %1502
      %vm1504 = vcmp.eq.f32.partialorder %v1501, %v1503
      %v1505 = vsel %vm1504, %v1500, inf
      %1506 = vmin.xlane.f32.xlu0 %v1505
      %v1507 = vpop.xlane.xlu0 %1506
      %v1508 = vcvt.f32.s32 %v1507
      %v1509 = vcvt.f32.s32 %v1503
      %v1510 = vshll.u32 %v1509, 16
      %v1511 = vadd.s32 %v1510, %v1508
      %v1512 = vand.u32 %v1383, 65535
      %v1513 = vshra.s32 %v1383, 16
      %v1514 = vcvt.s32.f32 %v1512
      %v1515 = vcvt.s32.f32 %v1513
      %1516 = vmin.xlane.f32.xlu0 %v1515
      %v1517 = vpop.xlane.xlu0 %1516
      %vm1518 = vcmp.eq.f32.partialorder %v1515, %v1517
      %v1519 = vsel %vm1518, %v1514, inf
      %1520 = vmin.xlane.f32.xlu0 %v1519
      %v1521 = vpop.xlane.xlu0 %1520
      %v1522 = vcvt.f32.s32 %v1521
      %v1523 = vcvt.f32.s32 %v1517
      %v1524 = vshll.u32 %v1523, 16
      %v1525 = vadd.s32 %v1524, %v1522
      %v1526 = vand.u32 %v1384, 65535
      %v1527 = vshra.s32 %v1384, 16
      %v1528 = vcvt.s32.f32 %v1526
      %v1529 = vcvt.s32.f32 %v1527
      %1530 = vmin.xlane.f32.xlu0 %v1529
      %v1531 = vpop.xlane.xlu0 %1530
      %vm1532 = vcmp.eq.f32.partialorder %v1529, %v1531
      %v1533 = vsel %vm1532, %v1528, inf
      %1534 = vmin.xlane.f32.xlu0 %v1533
      %v1535 = vpop.xlane.xlu0 %1534
      %v1536 = vcvt.f32.s32 %v1535
      %v1537 = vcvt.f32.s32 %v1531
      %v1538 = vshll.u32 %v1537, 16
      %v1539 = vadd.s32 %v1538, %v1536
      %v1540 = vand.u32 %v1385, 65535
      %v1541 = vshra.s32 %v1385, 16
      %v1542 = vcvt.s32.f32 %v1540
      %v1543 = vcvt.s32.f32 %v1541
      %1544 = vmin.xlane.f32.xlu0 %v1543
      %v1545 = vpop.xlane.xlu0 %1544
      %vm1546 = vcmp.eq.f32.partialorder %v1543, %v1545
      %v1547 = vsel %vm1546, %v1542, inf
      %1548 = vmin.xlane.f32.xlu0 %v1547
      %v1549 = vpop.xlane.xlu0 %1548
      %v1550 = vcvt.f32.s32 %v1549
      %v1551 = vcvt.f32.s32 %v1545
      %v1552 = vshll.u32 %v1551, 16
      %v1553 = vadd.s32 %v1552, %v1550
      %v1554 = vand.u32 %v1386, 65535
      %v1555 = vshra.s32 %v1386, 16
      %v1556 = vcvt.s32.f32 %v1554
      %v1557 = vcvt.s32.f32 %v1555
      %1558 = vmin.xlane.f32.xlu0 %v1557
      %v1559 = vpop.xlane.xlu0 %1558
      %vm1560 = vcmp.eq.f32.partialorder %v1557, %v1559
      %v1561 = vsel %vm1560, %v1556, inf
      %1562 = vmin.xlane.f32.xlu0 %v1561
      %v1563 = vpop.xlane.xlu0 %1562
      %v1564 = vcvt.f32.s32 %v1563
      %v1565 = vcvt.f32.s32 %v1559
      %v1566 = vshll.u32 %v1565, 16
      %v1567 = vadd.s32 %v1566, %v1564
      %v1568 = vand.u32 %v1387, 65535
      %v1569 = vshra.s32 %v1387, 16
      %v1570 = vcvt.s32.f32 %v1568
      %v1571 = vcvt.s32.f32 %v1569
      %1572 = vmin.xlane.f32.xlu0 %v1571
      %v1573 = vpop.xlane.xlu0 %1572
      %vm1574 = vcmp.eq.f32.partialorder %v1571, %v1573
      %v1575 = vsel %vm1574, %v1570, inf
      %1576 = vmin.xlane.f32.xlu0 %v1575
      %v1577 = vpop.xlane.xlu0 %1576
      %v1578 = vcvt.f32.s32 %v1577
      %v1579 = vcvt.f32.s32 %v1573
      %v1580 = vshll.u32 %v1579, 16
      %v1581 = vadd.s32 %v1580, %v1578
      %v1582 = vand.u32 %v1388, 65535
      %v1583 = vshra.s32 %v1388, 16
      %v1584 = vcvt.s32.f32 %v1582
      %v1585 = vcvt.s32.f32 %v1583
      %1586 = vmin.xlane.f32.xlu0 %v1585
      %v1587 = vpop.xlane.xlu0 %1586
      %vm1588 = vcmp.eq.f32.partialorder %v1585, %v1587
      %v1589 = vsel %vm1588, %v1584, inf
      %1590 = vmin.xlane.f32.xlu0 %v1589
      %v1591 = vpop.xlane.xlu0 %1590
      %v1592 = vcvt.f32.s32 %v1591
      %v1593 = vcvt.f32.s32 %v1587
      %v1594 = vshll.u32 %v1593, 16
      %v1595 = vadd.s32 %v1594, %v1592
      %v1596 = vand.u32 %v1389, 65535
      %v1597 = vshra.s32 %v1389, 16
      %v1598 = vcvt.s32.f32 %v1596
      %v1599 = vcvt.s32.f32 %v1597
      %1600 = vmin.xlane.f32.xlu0 %v1599
      %v1601 = vpop.xlane.xlu0 %1600
      %vm1602 = vcmp.eq.f32.partialorder %v1599, %v1601
      %v1603 = vsel %vm1602, %v1598, inf
      %1604 = vmin.xlane.f32.xlu0 %v1603
      %v1605 = vpop.xlane.xlu0 %1604
      %v1606 = vcvt.f32.s32 %v1605
      %v1607 = vcvt.f32.s32 %v1601
      %v1608 = vshll.u32 %v1607, 16
      %v1609 = vadd.s32 %v1608, %v1606
      %v1610 = vand.u32 %v1390, 65535
      %v1611 = vshra.s32 %v1390, 16
      %v1612 = vcvt.s32.f32 %v1610
      %v1613 = vcvt.s32.f32 %v1611
      %1614 = vmin.xlane.f32.xlu0 %v1613
      %v1615 = vpop.xlane.xlu0 %1614
      %vm1616 = vcmp.eq.f32.partialorder %v1613, %v1615
      %v1617 = vsel %vm1616, %v1612, inf
      %1618 = vmin.xlane.f32.xlu0 %v1617
      %v1619 = vpop.xlane.xlu0 %1618
      %v1620 = vcvt.f32.s32 %v1619
      %v1621 = vcvt.f32.s32 %v1615
      %v1622 = vshll.u32 %v1621, 16
      %v1623 = vadd.s32 %v1622, %v1620
      %v1624 = vand.u32 %v1391, 65535
      %v1625 = vshra.s32 %v1391, 16
      %v1626 = vcvt.s32.f32 %v1624
      %v1627 = vcvt.s32.f32 %v1625
      %1628 = vmin.xlane.f32.xlu0 %v1627
      %v1629 = vpop.xlane.xlu0 %1628
      %vm1630 = vcmp.eq.f32.partialorder %v1627, %v1629
      %v1631 = vsel %vm1630, %v1626, inf
      %1632 = vmin.xlane.f32.xlu0 %v1631
      %v1633 = vpop.xlane.xlu0 %1632
      %v1634 = vcvt.f32.s32 %v1633
      %v1635 = vcvt.f32.s32 %v1629
      %v1636 = vshll.u32 %v1635, 16
      %v1637 = vadd.s32 %v1636, %v1634
      %v1638 = vand.u32 %v1392, 65535
      %v1639 = vshra.s32 %v1392, 16
      %v1640 = vcvt.s32.f32 %v1638
      %v1641 = vcvt.s32.f32 %v1639
      %1642 = vmin.xlane.f32.xlu0 %v1641
      %v1643 = vpop.xlane.xlu0 %1642
      %vm1644 = vcmp.eq.f32.partialorder %v1641, %v1643
      %v1645 = vsel %vm1644, %v1640, inf
      %1646 = vmin.xlane.f32.xlu0 %v1645
      %v1647 = vpop.xlane.xlu0 %1646
      %v1648 = vcvt.f32.s32 %v1647
      %v1649 = vcvt.f32.s32 %v1643
      %v1650 = vshll.u32 %v1649, 16
      %v1651 = vadd.s32 %v1650, %v1648
      %v1652 = vand.u32 %v1393, 65535
      %v1653 = vshra.s32 %v1393, 16
      %v1654 = vcvt.s32.f32 %v1652
      %v1655 = vcvt.s32.f32 %v1653
      %1656 = vmin.xlane.f32.xlu0 %v1655
      %v1657 = vpop.xlane.xlu0 %1656
      %vm1658 = vcmp.eq.f32.partialorder %v1655, %v1657
      %v1659 = vsel %vm1658, %v1654, inf
      %1660 = vmin.xlane.f32.xlu0 %v1659
      %v1661 = vpop.xlane.xlu0 %1660
      %v1662 = vcvt.f32.s32 %v1661
      %v1663 = vcvt.f32.s32 %v1657
      %v1664 = vshll.u32 %v1663, 16
      %v1665 = vadd.s32 %v1664, %v1662
      %v1666 = vand.u32 %v1394, 65535
      %v1667 = vshra.s32 %v1394, 16
      %v1668 = vcvt.s32.f32 %v1666
      %v1669 = vcvt.s32.f32 %v1667
      %1670 = vmin.xlane.f32.xlu0 %v1669
      %v1671 = vpop.xlane.xlu0 %1670
      %vm1672 = vcmp.eq.f32.partialorder %v1669, %v1671
      %v1673 = vsel %vm1672, %v1668, inf
      %1674 = vmin.xlane.f32.xlu0 %v1673
      %v1675 = vpop.xlane.xlu0 %1674
      %v1676 = vcvt.f32.s32 %v1675
      %v1677 = vcvt.f32.s32 %v1671
      %v1678 = vshll.u32 %v1677, 16
      %v1679 = vadd.s32 %v1678, %v1676
      %v1680 = vand.u32 %v1395, 65535
      %v1681 = vshra.s32 %v1395, 16
      %v1682 = vcvt.s32.f32 %v1680
      %v1683 = vcvt.s32.f32 %v1681
      %1684 = vmin.xlane.f32.xlu0 %v1683
      %v1685 = vpop.xlane.xlu0 %1684
      %vm1686 = vcmp.eq.f32.partialorder %v1683, %v1685
      %v1687 = vsel %vm1686, %v1682, inf
      %1688 = vmin.xlane.f32.xlu0 %v1687
      %v1689 = vpop.xlane.xlu0 %1688
      %v1690 = vcvt.f32.s32 %v1689
      %v1691 = vcvt.f32.s32 %v1685
      %v1692 = vshll.u32 %v1691, 16
      %v1693 = vadd.s32 %v1692, %v1690
      %v1694 = vand.u32 %v1396, 65535
      %v1695 = vshra.s32 %v1396, 16
      %v1696 = vcvt.s32.f32 %v1694
      %v1697 = vcvt.s32.f32 %v1695
      %1698 = vmin.xlane.f32.xlu0 %v1697
      %v1699 = vpop.xlane.xlu0 %1698
      %vm1700 = vcmp.eq.f32.partialorder %v1697, %v1699
      %v1701 = vsel %vm1700, %v1696, inf
      %1702 = vmin.xlane.f32.xlu0 %v1701
      %v1703 = vpop.xlane.xlu0 %1702
      %v1704 = vcvt.f32.s32 %v1703
      %v1705 = vcvt.f32.s32 %v1699
      %v1706 = vshll.u32 %v1705, 16
      %v1707 = vadd.s32 %v1706, %v1704
      %v1708 = vand.u32 %v1397, 65535
      %v1709 = vshra.s32 %v1397, 16
      %v1710 = vcvt.s32.f32 %v1708
      %v1711 = vcvt.s32.f32 %v1709
      %1712 = vmin.xlane.f32.xlu0 %v1711
      %v1713 = vpop.xlane.xlu0 %1712
      %vm1714 = vcmp.eq.f32.partialorder %v1711, %v1713
      %v1715 = vsel %vm1714, %v1710, inf
      %1716 = vmin.xlane.f32.xlu0 %v1715
      %v1717 = vpop.xlane.xlu0 %1716
      %v1718 = vcvt.f32.s32 %v1717
      %v1719 = vcvt.f32.s32 %v1713
      %v1720 = vshll.u32 %v1719, 16
      %v1721 = vadd.s32 %v1720, %v1718
      %v1722 = vand.u32 %v1398, 65535
      %v1723 = vshra.s32 %v1398, 16
      %v1724 = vcvt.s32.f32 %v1722
      %v1725 = vcvt.s32.f32 %v1723
      %1726 = vmin.xlane.f32.xlu0 %v1725
      %v1727 = vpop.xlane.xlu0 %1726
      %vm1728 = vcmp.eq.f32.partialorder %v1725, %v1727
      %v1729 = vsel %vm1728, %v1724, inf
      %1730 = vmin.xlane.f32.xlu0 %v1729
      %v1731 = vpop.xlane.xlu0 %1730
      %v1732 = vcvt.f32.s32 %v1731
      %v1733 = vcvt.f32.s32 %v1727
      %v1734 = vshll.u32 %v1733, 16
      %v1735 = vadd.s32 %v1734, %v1732
      %v1736 = vand.u32 %v1399, 65535
      %v1737 = vshra.s32 %v1399, 16
      %v1738 = vcvt.s32.f32 %v1736
      %v1739 = vcvt.s32.f32 %v1737
      %1740 = vmin.xlane.f32.xlu0 %v1739
      %v1741 = vpop.xlane.xlu0 %1740
      %vm1742 = vcmp.eq.f32.partialorder %v1739, %v1741
      %v1743 = vsel %vm1742, %v1738, inf
      %1744 = vmin.xlane.f32.xlu0 %v1743
      %v1745 = vpop.xlane.xlu0 %1744
      %v1746 = vcvt.f32.s32 %v1745
      %v1747 = vcvt.f32.s32 %v1741
      %v1748 = vshll.u32 %v1747, 16
      %v1749 = vadd.s32 %v1748, %v1746
      %v1750 = vand.u32 %v1400, 65535
      %v1751 = vshra.s32 %v1400, 16
      %v1752 = vcvt.s32.f32 %v1750
      %v1753 = vcvt.s32.f32 %v1751
      %1754 = vmin.xlane.f32.xlu0 %v1753
      %v1755 = vpop.xlane.xlu0 %1754
      %vm1756 = vcmp.eq.f32.partialorder %v1753, %v1755
      %v1757 = vsel %vm1756, %v1752, inf
      %1758 = vmin.xlane.f32.xlu0 %v1757
      %v1759 = vpop.xlane.xlu0 %1758
      %v1760 = vcvt.f32.s32 %v1759
      %v1761 = vcvt.f32.s32 %v1755
      %v1762 = vshll.u32 %v1761, 16
      %v1763 = vadd.s32 %v1762, %v1760
      %v1764 = vand.u32 %v1401, 65535
      %v1765 = vshra.s32 %v1401, 16
      %v1766 = vcvt.s32.f32 %v1764
      %v1767 = vcvt.s32.f32 %v1765
      %1768 = vmin.xlane.f32.xlu0 %v1767
      %v1769 = vpop.xlane.xlu0 %1768
      %vm1770 = vcmp.eq.f32.partialorder %v1767, %v1769
      %v1771 = vsel %vm1770, %v1766, inf
      %1772 = vmin.xlane.f32.xlu0 %v1771
      %v1773 = vpop.xlane.xlu0 %1772
      %v1774 = vcvt.f32.s32 %v1773
      %v1775 = vcvt.f32.s32 %v1769
      %v1776 = vshll.u32 %v1775, 16
      %v1777 = vadd.s32 %v1776, %v1774
      %v1778 = vand.u32 %v1402, 65535
      %v1779 = vshra.s32 %v1402, 16
      %v1780 = vcvt.s32.f32 %v1778
      %v1781 = vcvt.s32.f32 %v1779
      %1782 = vmin.xlane.f32.xlu0 %v1781
      %v1783 = vpop.xlane.xlu0 %1782
      %vm1784 = vcmp.eq.f32.partialorder %v1781, %v1783
      %v1785 = vsel %vm1784, %v1780, inf
      %1786 = vmin.xlane.f32.xlu0 %v1785
      %v1787 = vpop.xlane.xlu0 %1786
      %v1788 = vcvt.f32.s32 %v1787
      %v1789 = vcvt.f32.s32 %v1783
      %v1790 = vshll.u32 %v1789, 16
      %v1791 = vadd.s32 %v1790, %v1788
      %v1792 = vand.u32 %v1403, 65535
      %v1793 = vshra.s32 %v1403, 16
      %v1794 = vcvt.s32.f32 %v1792
      %v1795 = vcvt.s32.f32 %v1793
      %1796 = vmin.xlane.f32.xlu0 %v1795
      %v1797 = vpop.xlane.xlu0 %1796
      %vm1798 = vcmp.eq.f32.partialorder %v1795, %v1797
      %v1799 = vsel %vm1798, %v1794, inf
      %1800 = vmin.xlane.f32.xlu0 %v1799
      %v1801 = vpop.xlane.xlu0 %1800
      %v1802 = vcvt.f32.s32 %v1801
      %v1803 = vcvt.f32.s32 %v1797
      %v1804 = vshll.u32 %v1803, 16
      %v1805 = vadd.s32 %v1804, %v1802
      %v1806 = vand.u32 %v1404, 65535
      %v1807 = vshra.s32 %v1404, 16
      %v1808 = vcvt.s32.f32 %v1806
      %v1809 = vcvt.s32.f32 %v1807
      %1810 = vmin.xlane.f32.xlu0 %v1809
      %v1811 = vpop.xlane.xlu0 %1810
      %vm1812 = vcmp.eq.f32.partialorder %v1809, %v1811
      %v1813 = vsel %vm1812, %v1808, inf
      %1814 = vmin.xlane.f32.xlu0 %v1813
      %v1815 = vpop.xlane.xlu0 %1814
      %v1816 = vcvt.f32.s32 %v1815
      %v1817 = vcvt.f32.s32 %v1811
      %v1818 = vshll.u32 %v1817, 16
      %v1819 = vadd.s32 %v1818, %v1816
      %v1820 = vand.u32 %v1405, 65535
      %v1821 = vshra.s32 %v1405, 16
      %v1822 = vcvt.s32.f32 %v1820
      %v1823 = vcvt.s32.f32 %v1821
      %1824 = vmin.xlane.f32.xlu0 %v1823
      %v1825 = vpop.xlane.xlu0 %1824
      %vm1826 = vcmp.eq.f32.partialorder %v1823, %v1825
      %v1827 = vsel %vm1826, %v1822, inf
      %1828 = vmin.xlane.f32.xlu0 %v1827
      %v1829 = vpop.xlane.xlu0 %1828
      %v1830 = vcvt.f32.s32 %v1829
      %v1831 = vcvt.f32.s32 %v1825
      %v1832 = vshll.u32 %v1831, 16
      %v1833 = vadd.s32 %v1832, %v1830
      %v1834 = vand.u32 %v1406, 65535
      %v1835 = vshra.s32 %v1406, 16
      %v1836 = vcvt.s32.f32 %v1834
      %v1837 = vcvt.s32.f32 %v1835
      %1838 = vmin.xlane.f32.xlu0 %v1837
      %v1839 = vpop.xlane.xlu0 %1838
      %vm1840 = vcmp.eq.f32.partialorder %v1837, %v1839
      %v1841 = vsel %vm1840, %v1836, inf
      %1842 = vmin.xlane.f32.xlu0 %v1841
      %v1843 = vpop.xlane.xlu0 %1842
      %v1844 = vcvt.f32.s32 %v1843
      %v1845 = vcvt.f32.s32 %v1839
      %v1846 = vshll.u32 %v1845, 16
      %v1847 = vadd.s32 %v1846, %v1844
      %v1848 = vand.u32 %v1407, 65535
      %v1849 = vshra.s32 %v1407, 16
      %v1850 = vcvt.s32.f32 %v1848
      %v1851 = vcvt.s32.f32 %v1849
      %1852 = vmin.xlane.f32.xlu0 %v1851
      %v1853 = vpop.xlane.xlu0 %1852
      %vm1854 = vcmp.eq.f32.partialorder %v1851, %v1853
      %v1855 = vsel %vm1854, %v1850, inf
      %1856 = vmin.xlane.f32.xlu0 %v1855
      %v1857 = vpop.xlane.xlu0 %1856
      %v1858 = vcvt.f32.s32 %v1857
      %v1859 = vcvt.f32.s32 %v1853
      %v1860 = vshll.u32 %v1859, 16
      %v1861 = vadd.s32 %v1860, %v1858
      %v1862 = vand.u32 %v1408, 65535
      %v1863 = vshra.s32 %v1408, 16
      %v1864 = vcvt.s32.f32 %v1862
      %v1865 = vcvt.s32.f32 %v1863
      %1866 = vmin.xlane.f32.xlu0 %v1865
      %v1867 = vpop.xlane.xlu0 %1866
      %vm1868 = vcmp.eq.f32.partialorder %v1865, %v1867
      %v1869 = vsel %vm1868, %v1864, inf
      %1870 = vmin.xlane.f32.xlu0 %v1869
      %v1871 = vpop.xlane.xlu0 %1870
      %v1872 = vcvt.f32.s32 %v1871
      %v1873 = vcvt.f32.s32 %v1867
      %v1874 = vshll.u32 %v1873, 16
      %v1875 = vadd.s32 %v1874, %v1872
      %v1876 = vand.u32 %v1409, 65535
      %v1877 = vshra.s32 %v1409, 16
      %v1878 = vcvt.s32.f32 %v1876
      %v1879 = vcvt.s32.f32 %v1877
      %1880 = vmin.xlane.f32.xlu0 %v1879
      %v1881 = vpop.xlane.xlu0 %1880
      %vm1882 = vcmp.eq.f32.partialorder %v1879, %v1881
      %v1883 = vsel %vm1882, %v1878, inf
      %1884 = vmin.xlane.f32.xlu0 %v1883
      %v1885 = vpop.xlane.xlu0 %1884
      %v1886 = vcvt.f32.s32 %v1885
      %v1887 = vcvt.f32.s32 %v1881
      %v1888 = vshll.u32 %v1887, 16
      %v1889 = vadd.s32 %v1888, %v1886
      %v1890 = vand.u32 %v1410, 65535
      %v1891 = vshra.s32 %v1410, 16
      %v1892 = vcvt.s32.f32 %v1890
      %v1893 = vcvt.s32.f32 %v1891
      %1894 = vmin.xlane.f32.xlu0 %v1893
      %v1895 = vpop.xlane.xlu0 %1894
      %vm1896 = vcmp.eq.f32.partialorder %v1893, %v1895
      %v1897 = vsel %vm1896, %v1892, inf
      %1898 = vmin.xlane.f32.xlu0 %v1897
      %v1899 = vpop.xlane.xlu0 %1898
      %v1900 = vcvt.f32.s32 %v1899
      %v1901 = vcvt.f32.s32 %v1895
      %v1902 = vshll.u32 %v1901, 16
      %v1903 = vadd.s32 %v1902, %v1900
      %v1904 = vand.u32 %v1411, 65535
      %v1905 = vshra.s32 %v1411, 16
      %v1906 = vcvt.s32.f32 %v1904
      %v1907 = vcvt.s32.f32 %v1905
      %1908 = vmin.xlane.f32.xlu0 %v1907
      %v1909 = vpop.xlane.xlu0 %1908
      %vm1910 = vcmp.eq.f32.partialorder %v1907, %v1909
      %v1911 = vsel %vm1910, %v1906, inf
      %1912 = vmin.xlane.f32.xlu0 %v1911
      %v1913 = vpop.xlane.xlu0 %1912
      %v1914 = vcvt.f32.s32 %v1913
      %v1915 = vcvt.f32.s32 %v1909
      %v1916 = vshll.u32 %v1915, 16
      %v1917 = vadd.s32 %v1916, %v1914
      %v1918 = vand.u32 %v1412, 65535
      %v1919 = vshra.s32 %v1412, 16
      %v1920 = vcvt.s32.f32 %v1918
      %v1921 = vcvt.s32.f32 %v1919
      %1922 = vmin.xlane.f32.xlu0 %v1921
      %v1923 = vpop.xlane.xlu0 %1922
      %vm1924 = vcmp.eq.f32.partialorder %v1921, %v1923
      %v1925 = vsel %vm1924, %v1920, inf
      %1926 = vmin.xlane.f32.xlu0 %v1925
      %v1927 = vpop.xlane.xlu0 %1926
      %v1928 = vcvt.f32.s32 %v1927
      %v1929 = vcvt.f32.s32 %v1923
      %v1930 = vshll.u32 %v1929, 16
      %v1931 = vadd.s32 %v1930, %v1928
      %v1932 = vand.u32 %v1413, 65535
      %v1933 = vshra.s32 %v1413, 16
      %v1934 = vcvt.s32.f32 %v1932
      %v1935 = vcvt.s32.f32 %v1933
      %1936 = vmin.xlane.f32.xlu0 %v1935
      %v1937 = vpop.xlane.xlu0 %1936
      %vm1938 = vcmp.eq.f32.partialorder %v1935, %v1937
      %v1939 = vsel %vm1938, %v1934, inf
      %1940 = vmin.xlane.f32.xlu0 %v1939
      %v1941 = vpop.xlane.xlu0 %1940
      %v1942 = vcvt.f32.s32 %v1941
      %v1943 = vcvt.f32.s32 %v1937
      %v1944 = vshll.u32 %v1943, 16
      %v1945 = vadd.s32 %v1944, %v1942
      %v1946 = vand.u32 %v1414, 65535
      %v1947 = vshra.s32 %v1414, 16
      %v1948 = vcvt.s32.f32 %v1946
      %v1949 = vcvt.s32.f32 %v1947
      %1950 = vmin.xlane.f32.xlu0 %v1949
      %v1951 = vpop.xlane.xlu0 %1950
      %vm1952 = vcmp.eq.f32.partialorder %v1949, %v1951
      %v1953 = vsel %vm1952, %v1948, inf
      %1954 = vmin.xlane.f32.xlu0 %v1953
      %v1955 = vpop.xlane.xlu0 %1954
      %v1956 = vcvt.f32.s32 %v1955
      %v1957 = vcvt.f32.s32 %v1951
      %v1958 = vshll.u32 %v1957, 16
      %v1959 = vadd.s32 %v1958, %v1956
      %v1960 = vand.u32 %v1415, 65535
      %v1961 = vshra.s32 %v1415, 16
      %v1962 = vcvt.s32.f32 %v1960
      %v1963 = vcvt.s32.f32 %v1961
      %1964 = vmin.xlane.f32.xlu0 %v1963
      %v1965 = vpop.xlane.xlu0 %1964
      %vm1966 = vcmp.eq.f32.partialorder %v1963, %v1965
      %v1967 = vsel %vm1966, %v1962, inf
      %1968 = vmin.xlane.f32.xlu0 %v1967
      %v1969 = vpop.xlane.xlu0 %1968
      %v1970 = vcvt.f32.s32 %v1969
      %v1971 = vcvt.f32.s32 %v1965
      %v1972 = vshll.u32 %v1971, 16
      %v1973 = vadd.s32 %v1972, %v1970
      %v1974 = vand.u32 %v1416, 65535
      %v1975 = vshra.s32 %v1416, 16
      %v1976 = vcvt.s32.f32 %v1974
      %v1977 = vcvt.s32.f32 %v1975
      %1978 = vmin.xlane.f32.xlu0 %v1977
      %v1979 = vpop.xlane.xlu0 %1978
      %vm1980 = vcmp.eq.f32.partialorder %v1977, %v1979
      %v1981 = vsel %vm1980, %v1976, inf
      %1982 = vmin.xlane.f32.xlu0 %v1981
      %v1983 = vpop.xlane.xlu0 %1982
      %v1984 = vcvt.f32.s32 %v1983
      %v1985 = vcvt.f32.s32 %v1979
      %v1986 = vshll.u32 %v1985, 16
      %v1987 = vadd.s32 %v1986, %v1984
      %v1988 = vand.u32 %v1417, 65535
      %v1989 = vshra.s32 %v1417, 16
      %v1990 = vcvt.s32.f32 %v1988
      %v1991 = vcvt.s32.f32 %v1989
      %1992 = vmin.xlane.f32.xlu0 %v1991
      %v1993 = vpop.xlane.xlu0 %1992
      %vm1994 = vcmp.eq.f32.partialorder %v1991, %v1993
      %v1995 = vsel %vm1994, %v1990, inf
      %1996 = vmin.xlane.f32.xlu0 %v1995
      %v1997 = vpop.xlane.xlu0 %1996
      %v1998 = vcvt.f32.s32 %v1997
      %v1999 = vcvt.f32.s32 %v1993
      %v2000 = vshll.u32 %v1999, 16
      %v2001 = vadd.s32 %v2000, %v1998
      %v2002 = vand.u32 %v1418, 65535
      %v2003 = vshra.s32 %v1418, 16
      %v2004 = vcvt.s32.f32 %v2002
      %v2005 = vcvt.s32.f32 %v2003
      %2006 = vmin.xlane.f32.xlu0 %v2005
      %v2007 = vpop.xlane.xlu0 %2006
      %vm2008 = vcmp.eq.f32.partialorder %v2005, %v2007
      %v2009 = vsel %vm2008, %v2004, inf
      %2010 = vmin.xlane.f32.xlu0 %v2009
      %v2011 = vpop.xlane.xlu0 %2010
      %v2012 = vcvt.f32.s32 %v2011
      %v2013 = vcvt.f32.s32 %v2007
      %v2014 = vshll.u32 %v2013, 16
      %v2015 = vadd.s32 %v2014, %v2012
      %v2016 = vand.u32 %v1419, 65535
      %v2017 = vshra.s32 %v1419, 16
      %v2018 = vcvt.s32.f32 %v2016
      %v2019 = vcvt.s32.f32 %v2017
      %2020 = vmin.xlane.f32.xlu0 %v2019
      %v2021 = vpop.xlane.xlu0 %2020
      %vm2022 = vcmp.eq.f32.partialorder %v2019, %v2021
      %v2023 = vsel %vm2022, %v2018, inf
      %2024 = vmin.xlane.f32.xlu0 %v2023
      %v2025 = vpop.xlane.xlu0 %2024
      %v2026 = vcvt.f32.s32 %v2025
      %v2027 = vcvt.f32.s32 %v2021
      %v2028 = vshll.u32 %v2027, 16
      %v2029 = vadd.s32 %v2028, %v2026
      %v2030 = vand.u32 %v1420, 65535
      %v2031 = vshra.s32 %v1420, 16
      %v2032 = vcvt.s32.f32 %v2030
      %v2033 = vcvt.s32.f32 %v2031
      %2034 = vmin.xlane.f32.xlu0 %v2033
      %v2035 = vpop.xlane.xlu0 %2034
      %vm2036 = vcmp.eq.f32.partialorder %v2033, %v2035
      %v2037 = vsel %vm2036, %v2032, inf
      %2038 = vmin.xlane.f32.xlu0 %v2037
      %v2039 = vpop.xlane.xlu0 %2038
      %v2040 = vcvt.f32.s32 %v2039
      %v2041 = vcvt.f32.s32 %v2035
      %v2042 = vshll.u32 %v2041, 16
      %v2043 = vadd.s32 %v2042, %v2040
      %v2044 = vand.u32 %v1421, 65535
      %v2045 = vshra.s32 %v1421, 16
      %v2046 = vcvt.s32.f32 %v2044
      %v2047 = vcvt.s32.f32 %v2045
      %2048 = vmin.xlane.f32.xlu0 %v2047
      %v2049 = vpop.xlane.xlu0 %2048
      %vm2050 = vcmp.eq.f32.partialorder %v2047, %v2049
      %v2051 = vsel %vm2050, %v2046, inf
      %2052 = vmin.xlane.f32.xlu0 %v2051
      %v2053 = vpop.xlane.xlu0 %2052
      %v2054 = vcvt.f32.s32 %v2053
      %v2055 = vcvt.f32.s32 %v2049
      %v2056 = vshll.u32 %v2055, 16
      %v2057 = vadd.s32 %v2056, %v2054
      %v2058 = vand.u32 %v1422, 65535
      %v2059 = vshra.s32 %v1422, 16
      %v2060 = vcvt.s32.f32 %v2058
      %v2061 = vcvt.s32.f32 %v2059
      %2062 = vmin.xlane.f32.xlu0 %v2061
      %v2063 = vpop.xlane.xlu0 %2062
      %vm2064 = vcmp.eq.f32.partialorder %v2061, %v2063
      %v2065 = vsel %vm2064, %v2060, inf
      %2066 = vmin.xlane.f32.xlu0 %v2065
      %v2067 = vpop.xlane.xlu0 %2066
      %v2068 = vcvt.f32.s32 %v2067
      %v2069 = vcvt.f32.s32 %v2063
      %v2070 = vshll.u32 %v2069, 16
      %v2071 = vadd.s32 %v2070, %v2068
      %v2072 = vand.u32 %v1423, 65535
      %v2073 = vshra.s32 %v1423, 16
      %v2074 = vcvt.s32.f32 %v2072
      %v2075 = vcvt.s32.f32 %v2073
      %2076 = vmin.xlane.f32.xlu0 %v2075
      %v2077 = vpop.xlane.xlu0 %2076
      %vm2078 = vcmp.eq.f32.partialorder %v2075, %v2077
      %v2079 = vsel %vm2078, %v2074, inf
      %2080 = vmin.xlane.f32.xlu0 %v2079
      %v2081 = vpop.xlane.xlu0 %2080
      %v2082 = vcvt.f32.s32 %v2081
      %v2083 = vcvt.f32.s32 %v2077
      %v2084 = vshll.u32 %v2083, 16
      %v2085 = vadd.s32 %v2084, %v2082
      %v2086 = vand.u32 %v1424, 65535
      %v2087 = vshra.s32 %v1424, 16
      %v2088 = vcvt.s32.f32 %v2086
      %v2089 = vcvt.s32.f32 %v2087
      %2090 = vmin.xlane.f32.xlu0 %v2089
      %v2091 = vpop.xlane.xlu0 %2090
      %vm2092 = vcmp.eq.f32.partialorder %v2089, %v2091
      %v2093 = vsel %vm2092, %v2088, inf
      %2094 = vmin.xlane.f32.xlu0 %v2093
      %v2095 = vpop.xlane.xlu0 %2094
      %v2096 = vcvt.f32.s32 %v2095
      %v2097 = vcvt.f32.s32 %v2091
      %v2098 = vshll.u32 %v2097, 16
      %v2099 = vadd.s32 %v2098, %v2096
      %v2100 = vand.u32 %v1425, 65535
      %v2101 = vshra.s32 %v1425, 16
      %v2102 = vcvt.s32.f32 %v2100
      %v2103 = vcvt.s32.f32 %v2101
      %2104 = vmin.xlane.f32.xlu0 %v2103
      %v2105 = vpop.xlane.xlu0 %2104
      %vm2106 = vcmp.eq.f32.partialorder %v2103, %v2105
      %v2107 = vsel %vm2106, %v2102, inf
      %2108 = vmin.xlane.f32.xlu0 %v2107
      %v2109 = vpop.xlane.xlu0 %2108
      %v2110 = vcvt.f32.s32 %v2109
      %v2111 = vcvt.f32.s32 %v2105
      %v2112 = vshll.u32 %v2111, 16
      %v2113 = vadd.s32 %v2112, %v2110
      %v2114 = vand.u32 %v1426, 65535
      %v2115 = vshra.s32 %v1426, 16
      %v2116 = vcvt.s32.f32 %v2114
      %v2117 = vcvt.s32.f32 %v2115
      %2118 = vmin.xlane.f32.xlu0 %v2117
      %v2119 = vpop.xlane.xlu0 %2118
      %vm2120 = vcmp.eq.f32.partialorder %v2117, %v2119
      %v2121 = vsel %vm2120, %v2116, inf
      %2122 = vmin.xlane.f32.xlu0 %v2121
      %v2123 = vpop.xlane.xlu0 %2122
      %v2124 = vcvt.f32.s32 %v2123
      %v2125 = vcvt.f32.s32 %v2119
      %v2126 = vshll.u32 %v2125, 16
      %v2127 = vadd.s32 %v2126, %v2124
      %v2128 = vand.u32 %v1427, 65535
      %v2129 = vshra.s32 %v1427, 16
      %v2130 = vcvt.s32.f32 %v2128
      %v2131 = vcvt.s32.f32 %v2129
      %2132 = vmin.xlane.f32.xlu0 %v2131
      %v2133 = vpop.xlane.xlu0 %2132
      %vm2134 = vcmp.eq.f32.partialorder %v2131, %v2133
      %v2135 = vsel %vm2134, %v2130, inf
      %2136 = vmin.xlane.f32.xlu0 %v2135
      %v2137 = vpop.xlane.xlu0 %2136
      %v2138 = vcvt.f32.s32 %v2137
      %v2139 = vcvt.f32.s32 %v2133
      %v2140 = vshll.u32 %v2139, 16
      %v2141 = vadd.s32 %v2140, %v2138
      %v2142 = vand.u32 %v1428, 65535
      %v2143 = vshra.s32 %v1428, 16
      %v2144 = vcvt.s32.f32 %v2142
      %v2145 = vcvt.s32.f32 %v2143
      %2146 = vmin.xlane.f32.xlu0 %v2145
      %v2147 = vpop.xlane.xlu0 %2146
      %vm2148 = vcmp.eq.f32.partialorder %v2145, %v2147
      %v2149 = vsel %vm2148, %v2144, inf
      %2150 = vmin.xlane.f32.xlu0 %v2149
      %v2151 = vpop.xlane.xlu0 %2150
      %v2152 = vcvt.f32.s32 %v2151
      %v2153 = vcvt.f32.s32 %v2147
      %v2154 = vshll.u32 %v2153, 16
      %v2155 = vadd.s32 %v2154, %v2152
      %v2156 = vand.u32 %v1429, 65535
      %v2157 = vshra.s32 %v1429, 16
      %v2158 = vcvt.s32.f32 %v2156
      %v2159 = vcvt.s32.f32 %v2157
      %2160 = vmin.xlane.f32.xlu0 %v2159
      %v2161 = vpop.xlane.xlu0 %2160
      %vm2162 = vcmp.eq.f32.partialorder %v2159, %v2161
      %v2163 = vsel %vm2162, %v2158, inf
      %2164 = vmin.xlane.f32.xlu0 %v2163
      %v2165 = vpop.xlane.xlu0 %2164
      %v2166 = vcvt.f32.s32 %v2165
      %v2167 = vcvt.f32.s32 %v2161
      %v2168 = vshll.u32 %v2167, 16
      %v2169 = vadd.s32 %v2168, %v2166
      %v2170 = vand.u32 %v1430, 65535
      %v2171 = vshra.s32 %v1430, 16
      %v2172 = vcvt.s32.f32 %v2170
      %v2173 = vcvt.s32.f32 %v2171
      %2174 = vmin.xlane.f32.xlu0 %v2173
      %v2175 = vpop.xlane.xlu0 %2174
      %vm2176 = vcmp.eq.f32.partialorder %v2173, %v2175
      %v2177 = vsel %vm2176, %v2172, inf
      %2178 = vmin.xlane.f32.xlu0 %v2177
      %v2179 = vpop.xlane.xlu0 %2178
      %v2180 = vcvt.f32.s32 %v2179
      %v2181 = vcvt.f32.s32 %v2175
      %v2182 = vshll.u32 %v2181, 16
      %v2183 = vadd.s32 %v2182, %v2180
      %v2184 = vand.u32 %v1431, 65535
      %v2185 = vshra.s32 %v1431, 16
      %v2186 = vcvt.s32.f32 %v2184
      %v2187 = vcvt.s32.f32 %v2185
      %2188 = vmin.xlane.f32.xlu0 %v2187
      %v2189 = vpop.xlane.xlu0 %2188
      %vm2190 = vcmp.eq.f32.partialorder %v2187, %v2189
      %v2191 = vsel %vm2190, %v2186, inf
      %2192 = vmin.xlane.f32.xlu0 %v2191
      %v2193 = vpop.xlane.xlu0 %2192
      %v2194 = vcvt.f32.s32 %v2193
      %v2195 = vcvt.f32.s32 %v2189
      %v2196 = vshll.u32 %v2195, 16
      %v2197 = vadd.s32 %v2196, %v2194
      %v2198 = vand.u32 %v1432, 65535
      %v2199 = vshra.s32 %v1432, 16
      %v2200 = vcvt.s32.f32 %v2198
      %v2201 = vcvt.s32.f32 %v2199
      %2202 = vmin.xlane.f32.xlu0 %v2201
      %v2203 = vpop.xlane.xlu0 %2202
      %vm2204 = vcmp.eq.f32.partialorder %v2201, %v2203
      %v2205 = vsel %vm2204, %v2200, inf
      %2206 = vmin.xlane.f32.xlu0 %v2205
      %v2207 = vpop.xlane.xlu0 %2206
      %v2208 = vcvt.f32.s32 %v2207
      %v2209 = vcvt.f32.s32 %v2203
      %v2210 = vshll.u32 %v2209, 16
      %v2211 = vadd.s32 %v2210, %v2208
      %v2212 = vand.u32 %v1433, 65535
      %v2213 = vshra.s32 %v1433, 16
      %v2214 = vcvt.s32.f32 %v2212
      %v2215 = vcvt.s32.f32 %v2213
      %2216 = vmin.xlane.f32.xlu0 %v2215
      %v2217 = vpop.xlane.xlu0 %2216
      %vm2218 = vcmp.eq.f32.partialorder %v2215, %v2217
      %v2219 = vsel %vm2218, %v2214, inf
      %2220 = vmin.xlane.f32.xlu0 %v2219
      %v2221 = vpop.xlane.xlu0 %2220
      %v2222 = vcvt.f32.s32 %v2221
      %v2223 = vcvt.f32.s32 %v2217
      %v2224 = vshll.u32 %v2223, 16
      %v2225 = vadd.s32 %v2224, %v2222
      %v2226 = vand.u32 %v1434, 65535
      %v2227 = vshra.s32 %v1434, 16
      %v2228 = vcvt.s32.f32 %v2226
      %v2229 = vcvt.s32.f32 %v2227
      %2230 = vmin.xlane.f32.xlu0 %v2229
      %v2231 = vpop.xlane.xlu0 %2230
      %vm2232 = vcmp.eq.f32.partialorder %v2229, %v2231
      %v2233 = vsel %vm2232, %v2228, inf
      %2234 = vmin.xlane.f32.xlu0 %v2233
      %v2235 = vpop.xlane.xlu0 %2234
      %v2236 = vcvt.f32.s32 %v2235
      %v2237 = vcvt.f32.s32 %v2231
      %v2238 = vshll.u32 %v2237, 16
      %v2239 = vadd.s32 %v2238, %v2236
      %v2240 = vand.u32 %v1435, 65535
      %v2241 = vshra.s32 %v1435, 16
      %v2242 = vcvt.s32.f32 %v2240
      %v2243 = vcvt.s32.f32 %v2241
      %2244 = vmin.xlane.f32.xlu0 %v2243
      %v2245 = vpop.xlane.xlu0 %2244
      %vm2246 = vcmp.eq.f32.partialorder %v2243, %v2245
      %v2247 = vsel %vm2246, %v2242, inf
      %2248 = vmin.xlane.f32.xlu0 %v2247
      %v2249 = vpop.xlane.xlu0 %2248
      %v2250 = vcvt.f32.s32 %v2249
      %v2251 = vcvt.f32.s32 %v2245
      %v2252 = vshll.u32 %v2251, 16
      %v2253 = vadd.s32 %v2252, %v2250
      %v2254 = vand.u32 %v1436, 65535
      %v2255 = vshra.s32 %v1436, 16
      %v2256 = vcvt.s32.f32 %v2254
      %v2257 = vcvt.s32.f32 %v2255
      %2258 = vmin.xlane.f32.xlu0 %v2257
      %v2259 = vpop.xlane.xlu0 %2258
      %vm2260 = vcmp.eq.f32.partialorder %v2257, %v2259
      %v2261 = vsel %vm2260, %v2256, inf
      %2262 = vmin.xlane.f32.xlu0 %v2261
      %v2263 = vpop.xlane.xlu0 %2262
      %v2264 = vcvt.f32.s32 %v2263
      %v2265 = vcvt.f32.s32 %v2259
      %v2266 = vshll.u32 %v2265, 16
      %v2267 = vadd.s32 %v2266, %v2264
      %v2268 = vand.u32 %v1437, 65535
      %v2269 = vshra.s32 %v1437, 16
      %v2270 = vcvt.s32.f32 %v2268
      %v2271 = vcvt.s32.f32 %v2269
      %2272 = vmin.xlane.f32.xlu0 %v2271
      %v2273 = vpop.xlane.xlu0 %2272
      %vm2274 = vcmp.eq.f32.partialorder %v2271, %v2273
      %v2275 = vsel %vm2274, %v2270, inf
      %2276 = vmin.xlane.f32.xlu0 %v2275
      %v2277 = vpop.xlane.xlu0 %2276
      %v2278 = vcvt.f32.s32 %v2277
      %v2279 = vcvt.f32.s32 %v2273
      %v2280 = vshll.u32 %v2279, 16
      %v2281 = vadd.s32 %v2280, %v2278
      %v2282 = vand.u32 %v1438, 65535
      %v2283 = vshra.s32 %v1438, 16
      %v2284 = vcvt.s32.f32 %v2282
      %v2285 = vcvt.s32.f32 %v2283
      %2286 = vmin.xlane.f32.xlu0 %v2285
      %v2287 = vpop.xlane.xlu0 %2286
      %vm2288 = vcmp.eq.f32.partialorder %v2285, %v2287
      %v2289 = vsel %vm2288, %v2284, inf
      %2290 = vmin.xlane.f32.xlu0 %v2289
      %v2291 = vpop.xlane.xlu0 %2290
      %v2292 = vcvt.f32.s32 %v2291
      %v2293 = vcvt.f32.s32 %v2287
      %v2294 = vshll.u32 %v2293, 16
      %v2295 = vadd.s32 %v2294, %v2292
      %v2296 = vand.u32 %v1439, 65535
      %v2297 = vshra.s32 %v1439, 16
      %v2298 = vcvt.s32.f32 %v2296
      %v2299 = vcvt.s32.f32 %v2297
      %2300 = vmin.xlane.f32.xlu0 %v2299
      %v2301 = vpop.xlane.xlu0 %2300
      %vm2302 = vcmp.eq.f32.partialorder %v2299, %v2301
      %v2303 = vsel %vm2302, %v2298, inf
      %2304 = vmin.xlane.f32.xlu0 %v2303
      %v2305 = vpop.xlane.xlu0 %2304
      %v2306 = vcvt.f32.s32 %v2305
      %v2307 = vcvt.f32.s32 %v2301
      %v2308 = vshll.u32 %v2307, 16
      %v2309 = vadd.s32 %v2308, %v2306
      %v2310 = vand.u32 %v1440, 65535
      %v2311 = vshra.s32 %v1440, 16
      %v2312 = vcvt.s32.f32 %v2310
      %v2313 = vcvt.s32.f32 %v2311
      %2314 = vmin.xlane.f32.xlu0 %v2313
      %v2315 = vpop.xlane.xlu0 %2314
      %vm2316 = vcmp.eq.f32.partialorder %v2313, %v2315
      %v2317 = vsel %vm2316, %v2312, inf
      %2318 = vmin.xlane.f32.xlu0 %v2317
      %v2319 = vpop.xlane.xlu0 %2318
      %v2320 = vcvt.f32.s32 %v2319
      %v2321 = vcvt.f32.s32 %v2315
      %v2322 = vshll.u32 %v2321, 16
      %v2323 = vadd.s32 %v2322, %v2320
      %v2324 = vand.u32 %v1441, 65535
      %v2325 = vshra.s32 %v1441, 16
      %v2326 = vcvt.s32.f32 %v2324
      %v2327 = vcvt.s32.f32 %v2325
      %2328 = vmin.xlane.f32.xlu0 %v2327
      %v2329 = vpop.xlane.xlu0 %2328
      %vm2330 = vcmp.eq.f32.partialorder %v2327, %v2329
      %v2331 = vsel %vm2330, %v2326, inf
      %2332 = vmin.xlane.f32.xlu0 %v2331
      %v2333 = vpop.xlane.xlu0 %2332
      %v2334 = vcvt.f32.s32 %v2333
      %v2335 = vcvt.f32.s32 %v2329
      %v2336 = vshll.u32 %v2335, 16
      %v2337 = vadd.s32 %v2336, %v2334
      %vm2338 = vcmp.eq.s32.totalorder %v1185, %v1455
      %vm2339 = vcmp.eq.s32.totalorder %v1185, %v1469
      %vm2340 = vcmp.eq.s32.totalorder %v1185, %v1483
      %vm2341 = vcmp.eq.s32.totalorder %v1185, %v1497
      %vm2342 = vcmp.eq.s32.totalorder %v1185, %v1511
      %vm2343 = vcmp.eq.s32.totalorder %v1185, %v1525
      %vm2344 = vcmp.eq.s32.totalorder %v1185, %v1539
      %vm2345 = vcmp.eq.s32.totalorder %v1185, %v1553
      %vm2346 = vcmp.eq.s32.totalorder %v1185, %v1567
      %vm2347 = vcmp.eq.s32.totalorder %v1185, %v1581
      %vm2348 = vcmp.eq.s32.totalorder %v1185, %v1595
      %vm2349 = vcmp.eq.s32.totalorder %v1185, %v1609
      %vm2350 = vcmp.eq.s32.totalorder %v1185, %v1623
      %vm2351 = vcmp.eq.s32.totalorder %v1185, %v1637
      %vm2352 = vcmp.eq.s32.totalorder %v1185, %v1651
      %vm2353 = vcmp.eq.s32.totalorder %v1185, %v1665
      %vm2354 = vcmp.eq.s32.totalorder %v1185, %v1679
      %vm2355 = vcmp.eq.s32.totalorder %v1185, %v1693
      %vm2356 = vcmp.eq.s32.totalorder %v1185, %v1707
      %vm2357 = vcmp.eq.s32.totalorder %v1185, %v1721
      %vm2358 = vcmp.eq.s32.totalorder %v1185, %v1735
      %vm2359 = vcmp.eq.s32.totalorder %v1185, %v1749
      %vm2360 = vcmp.eq.s32.totalorder %v1185, %v1763
      %vm2361 = vcmp.eq.s32.totalorder %v1185, %v1777
      %vm2362 = vcmp.eq.s32.totalorder %v1185, %v1791
      %vm2363 = vcmp.eq.s32.totalorder %v1185, %v1805
      %vm2364 = vcmp.eq.s32.totalorder %v1185, %v1819
      %vm2365 = vcmp.eq.s32.totalorder %v1185, %v1833
      %vm2366 = vcmp.eq.s32.totalorder %v1185, %v1847
      %vm2367 = vcmp.eq.s32.totalorder %v1185, %v1861
      %vm2368 = vcmp.eq.s32.totalorder %v1185, %v1875
      %vm2369 = vcmp.eq.s32.totalorder %v1185, %v1889
      %vm2370 = vcmp.eq.s32.totalorder %v1185, %v1903
      %vm2371 = vcmp.eq.s32.totalorder %v1185, %v1917
      %vm2372 = vcmp.eq.s32.totalorder %v1185, %v1931
      %vm2373 = vcmp.eq.s32.totalorder %v1185, %v1945
      %vm2374 = vcmp.eq.s32.totalorder %v1185, %v1959
      %vm2375 = vcmp.eq.s32.totalorder %v1185, %v1973
      %vm2376 = vcmp.eq.s32.totalorder %v1185, %v1987
      %vm2377 = vcmp.eq.s32.totalorder %v1185, %v2001
      %vm2378 = vcmp.eq.s32.totalorder %v1185, %v2015
      %vm2379 = vcmp.eq.s32.totalorder %v1185, %v2029
      %vm2380 = vcmp.eq.s32.totalorder %v1185, %v2043
      %vm2381 = vcmp.eq.s32.totalorder %v1185, %v2057
      %vm2382 = vcmp.eq.s32.totalorder %v1185, %v2071
      %vm2383 = vcmp.eq.s32.totalorder %v1185, %v2085
      %vm2384 = vcmp.eq.s32.totalorder %v1185, %v2099
      %vm2385 = vcmp.eq.s32.totalorder %v1185, %v2113
      %vm2386 = vcmp.eq.s32.totalorder %v1185, %v2127
      %vm2387 = vcmp.eq.s32.totalorder %v1185, %v2141
      %vm2388 = vcmp.eq.s32.totalorder %v1185, %v2155
      %vm2389 = vcmp.eq.s32.totalorder %v1185, %v2169
      %vm2390 = vcmp.eq.s32.totalorder %v1185, %v2183
      %vm2391 = vcmp.eq.s32.totalorder %v1185, %v2197
      %vm2392 = vcmp.eq.s32.totalorder %v1185, %v2211
      %vm2393 = vcmp.eq.s32.totalorder %v1185, %v2225
      %vm2394 = vcmp.eq.s32.totalorder %v1185, %v2239
      %vm2395 = vcmp.eq.s32.totalorder %v1185, %v2253
      %vm2396 = vcmp.eq.s32.totalorder %v1185, %v2267
      %vm2397 = vcmp.eq.s32.totalorder %v1185, %v2281
      %vm2398 = vcmp.eq.s32.totalorder %v1185, %v2295
      %vm2399 = vcmp.eq.s32.totalorder %v1185, %v2309
      %vm2400 = vcmp.eq.s32.totalorder %v1185, %v2323
      %vm2401 = vcmp.eq.s32.totalorder %v1185, %v2337
      %v2402 = vsel %vm2338, 1, 0
      %v2403 = vsel %vm2339, 1, 0
      %v2404 = vsel %vm2340, 1, 0
      %v2405 = vsel %vm2341, 1, 0
      %v2406 = vsel %vm2342, 1, 0
      %v2407 = vsel %vm2343, 1, 0
      %v2408 = vsel %vm2344, 1, 0
      %v2409 = vsel %vm2345, 1, 0
      %v2410 = vsel %vm2346, 1, 0
      %v2411 = vsel %vm2347, 1, 0
      %v2412 = vsel %vm2348, 1, 0
      %v2413 = vsel %vm2349, 1, 0
      %v2414 = vsel %vm2350, 1, 0
      %v2415 = vsel %vm2351, 1, 0
      %v2416 = vsel %vm2352, 1, 0
      %v2417 = vsel %vm2353, 1, 0
      %v2418 = vsel %vm2354, 1, 0
      %v2419 = vsel %vm2355, 1, 0
      %v2420 = vsel %vm2356, 1, 0
      %v2421 = vsel %vm2357, 1, 0
      %v2422 = vsel %vm2358, 1, 0
      %v2423 = vsel %vm2359, 1, 0
      %v2424 = vsel %vm2360, 1, 0
      %v2425 = vsel %vm2361, 1, 0
      %v2426 = vsel %vm2362, 1, 0
      %v2427 = vsel %vm2363, 1, 0
      %v2428 = vsel %vm2364, 1, 0
      %v2429 = vsel %vm2365, 1, 0
      %v2430 = vsel %vm2366, 1, 0
      %v2431 = vsel %vm2367, 1, 0
      %v2432 = vsel %vm2368, 1, 0
      %v2433 = vsel %vm2369, 1, 0
      %v2434 = vsel %vm2370, 1, 0
      %v2435 = vsel %vm2371, 1, 0
      %v2436 = vsel %vm2372, 1, 0
      %v2437 = vsel %vm2373, 1, 0
      %v2438 = vsel %vm2374, 1, 0
      %v2439 = vsel %vm2375, 1, 0
      %v2440 = vsel %vm2376, 1, 0
      %v2441 = vsel %vm2377, 1, 0
      %v2442 = vsel %vm2378, 1, 0
      %v2443 = vsel %vm2379, 1, 0
      %v2444 = vsel %vm2380, 1, 0
      %v2445 = vsel %vm2381, 1, 0
      %v2446 = vsel %vm2382, 1, 0
      %v2447 = vsel %vm2383, 1, 0
      %v2448 = vsel %vm2384, 1, 0
      %v2449 = vsel %vm2385, 1, 0
      %v2450 = vsel %vm2386, 1, 0
      %v2451 = vsel %vm2387, 1, 0
      %v2452 = vsel %vm2388, 1, 0
      %v2453 = vsel %vm2389, 1, 0
      %v2454 = vsel %vm2390, 1, 0
      %v2455 = vsel %vm2391, 1, 0
      %v2456 = vsel %vm2392, 1, 0
      %v2457 = vsel %vm2393, 1, 0
      %v2458 = vsel %vm2394, 1, 0
      %v2459 = vsel %vm2395, 1, 0
      %v2460 = vsel %vm2396, 1, 0
      %v2461 = vsel %vm2397, 1, 0
      %v2462 = vsel %vm2398, 1, 0
      %v2463 = vsel %vm2399, 1, 0
      %v2464 = vsel %vm2400, 1, 0
      %v2465 = vsel %vm2401, 1, 0
      %v2466 = vcvt.s32.f32 %v2402
      %v2467 = vcvt.s32.f32 %v2403
      %v2468 = vcvt.s32.f32 %v2404
      %v2469 = vcvt.s32.f32 %v2405
      %v2470 = vcvt.s32.f32 %v2406
      %v2471 = vcvt.s32.f32 %v2407
      %v2472 = vcvt.s32.f32 %v2408
      %v2473 = vcvt.s32.f32 %v2409
      %v2474 = vcvt.s32.f32 %v2410
      %v2475 = vcvt.s32.f32 %v2411
      %v2476 = vcvt.s32.f32 %v2412
      %v2477 = vcvt.s32.f32 %v2413
      %v2478 = vcvt.s32.f32 %v2414
      %v2479 = vcvt.s32.f32 %v2415
      %v2480 = vcvt.s32.f32 %v2416
      %v2481 = vcvt.s32.f32 %v2417
      %v2482 = vcvt.s32.f32 %v2418
      %v2483 = vcvt.s32.f32 %v2419
      %v2484 = vcvt.s32.f32 %v2420
      %v2485 = vcvt.s32.f32 %v2421
      %v2486 = vcvt.s32.f32 %v2422
      %v2487 = vcvt.s32.f32 %v2423
      %v2488 = vcvt.s32.f32 %v2424
      %v2489 = vcvt.s32.f32 %v2425
      %v2490 = vcvt.s32.f32 %v2426
      %v2491 = vcvt.s32.f32 %v2427
      %v2492 = vcvt.s32.f32 %v2428
      %v2493 = vcvt.s32.f32 %v2429
      %v2494 = vcvt.s32.f32 %v2430
      %v2495 = vcvt.s32.f32 %v2431
      %v2496 = vcvt.s32.f32 %v2432
      %v2497 = vcvt.s32.f32 %v2433
      %v2498 = vcvt.s32.f32 %v2434
      %v2499 = vcvt.s32.f32 %v2435
      %v2500 = vcvt.s32.f32 %v2436
      %v2501 = vcvt.s32.f32 %v2437
      %v2502 = vcvt.s32.f32 %v2438
      %v2503 = vcvt.s32.f32 %v2439
      %v2504 = vcvt.s32.f32 %v2440
      %v2505 = vcvt.s32.f32 %v2441
      %v2506 = vcvt.s32.f32 %v2442
      %v2507 = vcvt.s32.f32 %v2443
      %v2508 = vcvt.s32.f32 %v2444
      %v2509 = vcvt.s32.f32 %v2445
      %v2510 = vcvt.s32.f32 %v2446
      %v2511 = vcvt.s32.f32 %v2447
      %v2512 = vcvt.s32.f32 %v2448
      %v2513 = vcvt.s32.f32 %v2449
      %v2514 = vcvt.s32.f32 %v2450
      %v2515 = vcvt.s32.f32 %v2451
      %v2516 = vcvt.s32.f32 %v2452
      %v2517 = vcvt.s32.f32 %v2453
      %v2518 = vcvt.s32.f32 %v2454
      %v2519 = vcvt.s32.f32 %v2455
      %v2520 = vcvt.s32.f32 %v2456
      %v2521 = vcvt.s32.f32 %v2457
      %v2522 = vcvt.s32.f32 %v2458
      %v2523 = vcvt.s32.f32 %v2459
      %v2524 = vcvt.s32.f32 %v2460
      %v2525 = vcvt.s32.f32 %v2461
      %v2526 = vcvt.s32.f32 %v2462
      %v2527 = vcvt.s32.f32 %v2463
      %v2528 = vcvt.s32.f32 %v2464
      %v2529 = vcvt.s32.f32 %v2465
      %2530 = vmatprep.subr.mxu0 0.0
      %2531 = vmatpush1.msra.mxu0 %v462
      %2532 = vmatprep.subr.mxu0 0.0
      %2533 = vmatpush1.msra.mxu0 %v461
      %2534 = vmatprep.subr.mxu0 0.0
      %2535 = vmatpush1.msra.mxu0 %v460
      %2536 = vmatprep.subr.mxu0 0.0
      %2537 = vmatpush1.msra.mxu0 %v459
      %2538 = vmatprep.subr.mxu0 0.0
      %2539 = vmatpush1.msra.mxu0 %v458
      %2540 = vmatprep.subr.mxu0 0.0
      %2541 = vmatpush1.msra.mxu0 %v457
      %2542 = vmatprep.subr.mxu0 0.0
      %2543 = vmatpush1.msra.mxu0 %v456
      %2544 = vmatprep.subr.mxu0 0.0
      %2545 = vmatpush1.msra.mxu0 %v455
      %2546 = vmatprep.subr.mxu0 0.0
      %2547 = vmatpush1.msra.mxu0 %v454
      %2548 = vmatprep.subr.mxu0 0.0
      %2549 = vmatpush1.msra.mxu0 %v453
      %2550 = vmatprep.subr.mxu0 0.0
      %2551 = vmatpush1.msra.mxu0 %v452
      %2552 = vmatprep.subr.mxu0 0.0
      %2553 = vmatpush1.msra.mxu0 %v451
      %2554 = vmatprep.subr.mxu0 0.0
      %2555 = vmatpush1.msra.mxu0 %v450
      %2556 = vmatprep.subr.mxu0 0.0
      %2557 = vmatpush1.msra.mxu0 %v449
      %2558 = vmatprep.subr.mxu0 0.0
      %2559 = vmatpush1.msra.mxu0 %v448
      %2560 = vmatprep.subr.mxu0 0.0
      %2561 = vmatpush1.msra.mxu0 %v447
      %2562 = vmatprep.subr.mxu0 0.0
      %2563 = vmatpush2.msra.mxu0 0.0
      %2564 = vmatprep.subr.mxu0 0.0
      %2565 = vmatpush2.msra.mxu0 0.0
      %2566 = vmatprep.subr.mxu0 0.0
      %2567 = vmatpush2.msra.mxu0 0.0
      %2568 = vmatprep.subr.mxu0 0.0
      %2569 = vmatpush2.msra.mxu0 0.0
      %2570 = vmatprep.subr.mxu0 0.0
      %2571 = vmatpush2.msra.mxu0 0.0
      %2572 = vmatprep.subr.mxu0 0.0
      %2573 = vmatpush2.msra.mxu0 0.0
      %2574 = vmatprep.subr.mxu0 0.0
      %2575 = vmatpush2.msra.mxu0 0.0
      %2576 = vmatprep.subr.mxu0 0.0
      %2577 = vmatpush2.msra.mxu0 0.0
      %2578 = vmatprep.subr.mxu0 0.0
      %2579 = vmatpush2.msra.mxu0 0.0
      %2580 = vmatprep.subr.mxu0 0.0
      %2581 = vmatpush2.msra.mxu0 0.0
      %2582 = vmatprep.subr.mxu0 0.0
      %2583 = vmatpush2.msra.mxu0 0.0
      %2584 = vmatprep.subr.mxu0 0.0
      %2585 = vmatpush2.msra.mxu0 0.0
      %2586 = vmatprep.subr.mxu0 0.0
      %2587 = vmatpush2.msra.mxu0 0.0
      %2588 = vmatprep.subr.mxu0 0.0
      %2589 = vmatpush2.msra.mxu0 0.0
      %2590 = vmatprep.subr.mxu0 0.0
      %2591 = vmatpush2.msra.mxu0 0.0
      %2592 = vmatprep.subr.mxu0 0.0
      %2593 = vmatpush2.msra.mxu0 0.0
      %2594 = vmatprep.mubr.f32.mxu0 0.0
      %2595 = vmatmul.mubr.f32.gmra.mxu0 %v2466
      %v2596 = vpop.f32.mrf.mxu0
      %v2597 = vadd.f32 0.0, %v2596
      %v2598 = vpop.f32.mrf.mxu0
      %2599 = vmatprep.mubr.f32.mxu0 0.0
      %2600 = vmatmul.mubr.f32.gmra.mxu0 %v2467
      %v2601 = vpop.f32.mrf.mxu0
      %v2602 = vadd.f32 0.0, %v2601
      %v2603 = vpop.f32.mrf.mxu0
      %2604 = vmatprep.mubr.f32.mxu0 0.0
      %2605 = vmatmul.mubr.f32.gmra.mxu0 %v2468
      %v2606 = vpop.f32.mrf.mxu0
      %v2607 = vadd.f32 0.0, %v2606
      %v2608 = vpop.f32.mrf.mxu0
      %2609 = vmatprep.mubr.f32.mxu0 0.0
      %2610 = vmatmul.mubr.f32.gmra.mxu0 %v2469
      %v2611 = vpop.f32.mrf.mxu0
      %v2612 = vadd.f32 0.0, %v2611
      %v2613 = vpop.f32.mrf.mxu0
      %2614 = vmatprep.mubr.f32.mxu0 0.0
      %2615 = vmatmul.mubr.f32.gmra.mxu0 %v2470
      %v2616 = vpop.f32.mrf.mxu0
      %v2617 = vadd.f32 0.0, %v2616
      %v2618 = vpop.f32.mrf.mxu0
      %2619 = vmatprep.mubr.f32.mxu0 0.0
      %2620 = vmatmul.mubr.f32.gmra.mxu0 %v2471
      %v2621 = vpop.f32.mrf.mxu0
      %v2622 = vadd.f32 0.0, %v2621
      %v2623 = vpop.f32.mrf.mxu0
      %2624 = vmatprep.mubr.f32.mxu0 0.0
      %2625 = vmatmul.mubr.f32.gmra.mxu0 %v2472
      %v2626 = vpop.f32.mrf.mxu0
      %v2627 = vadd.f32 0.0, %v2626
      %v2628 = vpop.f32.mrf.mxu0
      %2629 = vmatprep.mubr.f32.mxu0 0.0
      %2630 = vmatmul.mubr.f32.gmra.mxu0 %v2473
      %v2631 = vpop.f32.mrf.mxu0
      %v2632 = vadd.f32 0.0, %v2631
      %v2633 = vpop.f32.mrf.mxu0
      %2634 = vmatprep.mubr.f32.mxu0 0.0
      %2635 = vmatmul.mubr.f32.gmra.mxu0 %v2474
      %v2636 = vpop.f32.mrf.mxu0
      %v2637 = vadd.f32 0.0, %v2636
      %v2638 = vpop.f32.mrf.mxu0
      %2639 = vmatprep.mubr.f32.mxu0 0.0
      %2640 = vmatmul.mubr.f32.gmra.mxu0 %v2475
      %v2641 = vpop.f32.mrf.mxu0
      %v2642 = vadd.f32 0.0, %v2641
      %v2643 = vpop.f32.mrf.mxu0
      %2644 = vmatprep.mubr.f32.mxu0 0.0
      %2645 = vmatmul.mubr.f32.gmra.mxu0 %v2476
      %v2646 = vpop.f32.mrf.mxu0
      %v2647 = vadd.f32 0.0, %v2646
      %v2648 = vpop.f32.mrf.mxu0
      %2649 = vmatprep.mubr.f32.mxu0 0.0
      %2650 = vmatmul.mubr.f32.gmra.mxu0 %v2477
      %v2651 = vpop.f32.mrf.mxu0
      %v2652 = vadd.f32 0.0, %v2651
      %v2653 = vpop.f32.mrf.mxu0
      %2654 = vmatprep.mubr.f32.mxu0 0.0
      %2655 = vmatmul.mubr.f32.gmra.mxu0 %v2478
      %v2656 = vpop.f32.mrf.mxu0
      %v2657 = vadd.f32 0.0, %v2656
      %v2658 = vpop.f32.mrf.mxu0
      %2659 = vmatprep.mubr.f32.mxu0 0.0
      %2660 = vmatmul.mubr.f32.gmra.mxu0 %v2479
      %v2661 = vpop.f32.mrf.mxu0
      %v2662 = vadd.f32 0.0, %v2661
      %v2663 = vpop.f32.mrf.mxu0
      %2664 = vmatprep.mubr.f32.mxu0 0.0
      %2665 = vmatmul.mubr.f32.gmra.mxu0 %v2480
      %v2666 = vpop.f32.mrf.mxu0
      %v2667 = vadd.f32 0.0, %v2666
      %v2668 = vpop.f32.mrf.mxu0
      %2669 = vmatprep.mubr.f32.mxu0 0.0
      %2670 = vmatmul.mubr.f32.gmra.mxu0 %v2481
      %v2671 = vpop.f32.mrf.mxu0
      %v2672 = vadd.f32 0.0, %v2671
      %v2673 = vpop.f32.mrf.mxu0
      %2674 = vmatprep.mubr.f32.mxu0 0.0
      %2675 = vmatmul.mubr.f32.gmra.mxu0 %v2482
      %v2676 = vpop.f32.mrf.mxu0
      %v2677 = vadd.f32 0.0, %v2676
      %v2678 = vpop.f32.mrf.mxu0
      %2679 = vmatprep.mubr.f32.mxu0 0.0
      %2680 = vmatmul.mubr.f32.gmra.mxu0 %v2483
      %v2681 = vpop.f32.mrf.mxu0
      %v2682 = vadd.f32 0.0, %v2681
      %v2683 = vpop.f32.mrf.mxu0
      %2684 = vmatprep.mubr.f32.mxu0 0.0
      %2685 = vmatmul.mubr.f32.gmra.mxu0 %v2484
      %v2686 = vpop.f32.mrf.mxu0
      %v2687 = vadd.f32 0.0, %v2686
      %v2688 = vpop.f32.mrf.mxu0
      %2689 = vmatprep.mubr.f32.mxu0 0.0
      %2690 = vmatmul.mubr.f32.gmra.mxu0 %v2485
      %v2691 = vpop.f32.mrf.mxu0
      %v2692 = vadd.f32 0.0, %v2691
      %v2693 = vpop.f32.mrf.mxu0
      %2694 = vmatprep.mubr.f32.mxu0 0.0
      %2695 = vmatmul.mubr.f32.gmra.mxu0 %v2486
      %v2696 = vpop.f32.mrf.mxu0
      %v2697 = vadd.f32 0.0, %v2696
      %v2698 = vpop.f32.mrf.mxu0
      %2699 = vmatprep.mubr.f32.mxu0 0.0
      %2700 = vmatmul.mubr.f32.gmra.mxu0 %v2487
      %v2701 = vpop.f32.mrf.mxu0
      %v2702 = vadd.f32 0.0, %v2701
      %v2703 = vpop.f32.mrf.mxu0
      %2704 = vmatprep.mubr.f32.mxu0 0.0
      %2705 = vmatmul.mubr.f32.gmra.mxu0 %v2488
      %v2706 = vpop.f32.mrf.mxu0
      %v2707 = vadd.f32 0.0, %v2706
      %v2708 = vpop.f32.mrf.mxu0
      %2709 = vmatprep.mubr.f32.mxu0 0.0
      %2710 = vmatmul.mubr.f32.gmra.mxu0 %v2489
      %v2711 = vpop.f32.mrf.mxu0
      %v2712 = vadd.f32 0.0, %v2711
      %v2713 = vpop.f32.mrf.mxu0
      %2714 = vmatprep.mubr.f32.mxu0 0.0
      %2715 = vmatmul.mubr.f32.gmra.mxu0 %v2490
      %v2716 = vpop.f32.mrf.mxu0
      %v2717 = vadd.f32 0.0, %v2716
      %v2718 = vpop.f32.mrf.mxu0
      %2719 = vmatprep.mubr.f32.mxu0 0.0
      %2720 = vmatmul.mubr.f32.gmra.mxu0 %v2491
      %v2721 = vpop.f32.mrf.mxu0
      %v2722 = vadd.f32 0.0, %v2721
      %v2723 = vpop.f32.mrf.mxu0
      %2724 = vmatprep.mubr.f32.mxu0 0.0
      %2725 = vmatmul.mubr.f32.gmra.mxu0 %v2492
      %v2726 = vpop.f32.mrf.mxu0
      %v2727 = vadd.f32 0.0, %v2726
      %v2728 = vpop.f32.mrf.mxu0
      %2729 = vmatprep.mubr.f32.mxu0 0.0
      %2730 = vmatmul.mubr.f32.gmra.mxu0 %v2493
      %v2731 = vpop.f32.mrf.mxu0
      %v2732 = vadd.f32 0.0, %v2731
      %v2733 = vpop.f32.mrf.mxu0
      %2734 = vmatprep.mubr.f32.mxu0 0.0
      %2735 = vmatmul.mubr.f32.gmra.mxu0 %v2494
      %v2736 = vpop.f32.mrf.mxu0
      %v2737 = vadd.f32 0.0, %v2736
      %v2738 = vpop.f32.mrf.mxu0
      %2739 = vmatprep.mubr.f32.mxu0 0.0
      %2740 = vmatmul.mubr.f32.gmra.mxu0 %v2495
      %v2741 = vpop.f32.mrf.mxu0
      %v2742 = vadd.f32 0.0, %v2741
      %v2743 = vpop.f32.mrf.mxu0
      %2744 = vmatprep.mubr.f32.mxu0 0.0
      %2745 = vmatmul.mubr.f32.gmra.mxu0 %v2496
      %v2746 = vpop.f32.mrf.mxu0
      %v2747 = vadd.f32 0.0, %v2746
      %v2748 = vpop.f32.mrf.mxu0
      %2749 = vmatprep.mubr.f32.mxu0 0.0
      %2750 = vmatmul.mubr.f32.gmra.mxu0 %v2497
      %v2751 = vpop.f32.mrf.mxu0
      %v2752 = vadd.f32 0.0, %v2751
      %v2753 = vpop.f32.mrf.mxu0
      %2754 = vmatprep.mubr.f32.mxu0 0.0
      %2755 = vmatmul.mubr.f32.gmra.mxu0 %v2498
      %v2756 = vpop.f32.mrf.mxu0
      %v2757 = vadd.f32 0.0, %v2756
      %v2758 = vpop.f32.mrf.mxu0
      %2759 = vmatprep.mubr.f32.mxu0 0.0
      %2760 = vmatmul.mubr.f32.gmra.mxu0 %v2499
      %v2761 = vpop.f32.mrf.mxu0
      %v2762 = vadd.f32 0.0, %v2761
      %v2763 = vpop.f32.mrf.mxu0
      %2764 = vmatprep.mubr.f32.mxu0 0.0
      %2765 = vmatmul.mubr.f32.gmra.mxu0 %v2500
      %v2766 = vpop.f32.mrf.mxu0
      %v2767 = vadd.f32 0.0, %v2766
      %v2768 = vpop.f32.mrf.mxu0
      %2769 = vmatprep.mubr.f32.mxu0 0.0
      %2770 = vmatmul.mubr.f32.gmra.mxu0 %v2501
      %v2771 = vpop.f32.mrf.mxu0
      %v2772 = vadd.f32 0.0, %v2771
      %v2773 = vpop.f32.mrf.mxu0
      %2774 = vmatprep.mubr.f32.mxu0 0.0
      %2775 = vmatmul.mubr.f32.gmra.mxu0 %v2502
      %v2776 = vpop.f32.mrf.mxu0
      %v2777 = vadd.f32 0.0, %v2776
      %v2778 = vpop.f32.mrf.mxu0
      %2779 = vmatprep.mubr.f32.mxu0 0.0
      %2780 = vmatmul.mubr.f32.gmra.mxu0 %v2503
      %v2781 = vpop.f32.mrf.mxu0
      %v2782 = vadd.f32 0.0, %v2781
      %v2783 = vpop.f32.mrf.mxu0
      %2784 = vmatprep.mubr.f32.mxu0 0.0
      %2785 = vmatmul.mubr.f32.gmra.mxu0 %v2504
      %v2786 = vpop.f32.mrf.mxu0
      %v2787 = vadd.f32 0.0, %v2786
      %v2788 = vpop.f32.mrf.mxu0
      %2789 = vmatprep.mubr.f32.mxu0 0.0
      %2790 = vmatmul.mubr.f32.gmra.mxu0 %v2505
      %v2791 = vpop.f32.mrf.mxu0
      %v2792 = vadd.f32 0.0, %v2791
      %v2793 = vpop.f32.mrf.mxu0
      %2794 = vmatprep.mubr.f32.mxu0 0.0
      %2795 = vmatmul.mubr.f32.gmra.mxu0 %v2506
      %v2796 = vpop.f32.mrf.mxu0
      %v2797 = vadd.f32 0.0, %v2796
      %v2798 = vpop.f32.mrf.mxu0
      %2799 = vmatprep.mubr.f32.mxu0 0.0
      %2800 = vmatmul.mubr.f32.gmra.mxu0 %v2507
      %v2801 = vpop.f32.mrf.mxu0
      %v2802 = vadd.f32 0.0, %v2801
      %v2803 = vpop.f32.mrf.mxu0
      %2804 = vmatprep.mubr.f32.mxu0 0.0
      %2805 = vmatmul.mubr.f32.gmra.mxu0 %v2508
      %v2806 = vpop.f32.mrf.mxu0
      %v2807 = vadd.f32 0.0, %v2806
      %v2808 = vpop.f32.mrf.mxu0
      %2809 = vmatprep.mubr.f32.mxu0 0.0
      %2810 = vmatmul.mubr.f32.gmra.mxu0 %v2509
      %v2811 = vpop.f32.mrf.mxu0
      %v2812 = vadd.f32 0.0, %v2811
      %v2813 = vpop.f32.mrf.mxu0
      %2814 = vmatprep.mubr.f32.mxu0 0.0
      %2815 = vmatmul.mubr.f32.gmra.mxu0 %v2510
      %v2816 = vpop.f32.mrf.mxu0
      %v2817 = vadd.f32 0.0, %v2816
      %v2818 = vpop.f32.mrf.mxu0
      %2819 = vmatprep.mubr.f32.mxu0 0.0
      %2820 = vmatmul.mubr.f32.gmra.mxu0 %v2511
      %v2821 = vpop.f32.mrf.mxu0
      %v2822 = vadd.f32 0.0, %v2821
      %v2823 = vpop.f32.mrf.mxu0
      %2824 = vmatprep.mubr.f32.mxu0 0.0
      %2825 = vmatmul.mubr.f32.gmra.mxu0 %v2512
      %v2826 = vpop.f32.mrf.mxu0
      %v2827 = vadd.f32 0.0, %v2826
      %v2828 = vpop.f32.mrf.mxu0
      %2829 = vmatprep.mubr.f32.mxu0 0.0
      %2830 = vmatmul.mubr.f32.gmra.mxu0 %v2513
      %v2831 = vpop.f32.mrf.mxu0
      %v2832 = vadd.f32 0.0, %v2831
      %v2833 = vpop.f32.mrf.mxu0
      %2834 = vmatprep.mubr.f32.mxu0 0.0
      %2835 = vmatmul.mubr.f32.gmra.mxu0 %v2514
      %v2836 = vpop.f32.mrf.mxu0
      %v2837 = vadd.f32 0.0, %v2836
      %v2838 = vpop.f32.mrf.mxu0
      %2839 = vmatprep.mubr.f32.mxu0 0.0
      %2840 = vmatmul.mubr.f32.gmra.mxu0 %v2515
      %v2841 = vpop.f32.mrf.mxu0
      %v2842 = vadd.f32 0.0, %v2841
      %v2843 = vpop.f32.mrf.mxu0
      %2844 = vmatprep.mubr.f32.mxu0 0.0
      %2845 = vmatmul.mubr.f32.gmra.mxu0 %v2516
      %v2846 = vpop.f32.mrf.mxu0
      %v2847 = vadd.f32 0.0, %v2846
      %v2848 = vpop.f32.mrf.mxu0
      %2849 = vmatprep.mubr.f32.mxu0 0.0
      %2850 = vmatmul.mubr.f32.gmra.mxu0 %v2517
      %v2851 = vpop.f32.mrf.mxu0
      %v2852 = vadd.f32 0.0, %v2851
      %v2853 = vpop.f32.mrf.mxu0
      %2854 = vmatprep.mubr.f32.mxu0 0.0
      %2855 = vmatmul.mubr.f32.gmra.mxu0 %v2518
      %v2856 = vpop.f32.mrf.mxu0
      %v2857 = vadd.f32 0.0, %v2856
      %v2858 = vpop.f32.mrf.mxu0
      %2859 = vmatprep.mubr.f32.mxu0 0.0
      %2860 = vmatmul.mubr.f32.gmra.mxu0 %v2519
      %v2861 = vpop.f32.mrf.mxu0
      %v2862 = vadd.f32 0.0, %v2861
      %v2863 = vpop.f32.mrf.mxu0
      %2864 = vmatprep.mubr.f32.mxu0 0.0
      %2865 = vmatmul.mubr.f32.gmra.mxu0 %v2520
      %v2866 = vpop.f32.mrf.mxu0
      %v2867 = vadd.f32 0.0, %v2866
      %v2868 = vpop.f32.mrf.mxu0
      %2869 = vmatprep.mubr.f32.mxu0 0.0
      %2870 = vmatmul.mubr.f32.gmra.mxu0 %v2521
      %v2871 = vpop.f32.mrf.mxu0
      %v2872 = vadd.f32 0.0, %v2871
      %v2873 = vpop.f32.mrf.mxu0
      %2874 = vmatprep.mubr.f32.mxu0 0.0
      %2875 = vmatmul.mubr.f32.gmra.mxu0 %v2522
      %v2876 = vpop.f32.mrf.mxu0
      %v2877 = vadd.f32 0.0, %v2876
      %v2878 = vpop.f32.mrf.mxu0
      %2879 = vmatprep.mubr.f32.mxu0 0.0
      %2880 = vmatmul.mubr.f32.gmra.mxu0 %v2523
      %v2881 = vpop.f32.mrf.mxu0
      %v2882 = vadd.f32 0.0, %v2881
      %v2883 = vpop.f32.mrf.mxu0
      %2884 = vmatprep.mubr.f32.mxu0 0.0
      %2885 = vmatmul.mubr.f32.gmra.mxu0 %v2524
      %v2886 = vpop.f32.mrf.mxu0
      %v2887 = vadd.f32 0.0, %v2886
      %v2888 = vpop.f32.mrf.mxu0
      %2889 = vmatprep.mubr.f32.mxu0 0.0
      %2890 = vmatmul.mubr.f32.gmra.mxu0 %v2525
      %v2891 = vpop.f32.mrf.mxu0
      %v2892 = vadd.f32 0.0, %v2891
      %v2893 = vpop.f32.mrf.mxu0
      %2894 = vmatprep.mubr.f32.mxu0 0.0
      %2895 = vmatmul.mubr.f32.gmra.mxu0 %v2526
      %v2896 = vpop.f32.mrf.mxu0
      %v2897 = vadd.f32 0.0, %v2896
      %v2898 = vpop.f32.mrf.mxu0
      %2899 = vmatprep.mubr.f32.mxu0 0.0
      %2900 = vmatmul.mubr.f32.gmra.mxu0 %v2527
      %v2901 = vpop.f32.mrf.mxu0
      %v2902 = vadd.f32 0.0, %v2901
      %v2903 = vpop.f32.mrf.mxu0
      %2904 = vmatprep.mubr.f32.mxu0 0.0
      %2905 = vmatmul.mubr.f32.gmra.mxu0 %v2528
      %v2906 = vpop.f32.mrf.mxu0
      %v2907 = vadd.f32 0.0, %v2906
      %v2908 = vpop.f32.mrf.mxu0
      %2909 = vmatprep.mubr.f32.mxu0 0.0
      %2910 = vmatmul.mubr.f32.gmra.mxu0 %v2529
      %v2911 = vpop.f32.mrf.mxu0
      %v2912 = vadd.f32 0.0, %v2911
      %v2913 = vpop.f32.mrf.mxu0
      %2914 = vdwg.mxu0
      %v2915 = vsub.f32 %v383, %v2597
      %v2916 = vsub.f32 %v384, %v2602
      %v2917 = vsub.f32 %v385, %v2607
      %v2918 = vsub.f32 %v386, %v2612
      %v2919 = vsub.f32 %v387, %v2617
      %v2920 = vsub.f32 %v388, %v2622
      %v2921 = vsub.f32 %v389, %v2627
      %v2922 = vsub.f32 %v390, %v2632
      %v2923 = vsub.f32 %v391, %v2637
      %v2924 = vsub.f32 %v392, %v2642
      %v2925 = vsub.f32 %v393, %v2647
      %v2926 = vsub.f32 %v394, %v2652
      %v2927 = vsub.f32 %v395, %v2657
      %v2928 = vsub.f32 %v396, %v2662
      %v2929 = vsub.f32 %v397, %v2667
      %v2930 = vsub.f32 %v398, %v2672
      %v2931 = vsub.f32 %v399, %v2677
      %v2932 = vsub.f32 %v400, %v2682
      %v2933 = vsub.f32 %v401, %v2687
      %v2934 = vsub.f32 %v402, %v2692
      %v2935 = vsub.f32 %v403, %v2697
      %v2936 = vsub.f32 %v404, %v2702
      %v2937 = vsub.f32 %v405, %v2707
      %v2938 = vsub.f32 %v406, %v2712
      %v2939 = vsub.f32 %v407, %v2717
      %v2940 = vsub.f32 %v408, %v2722
      %v2941 = vsub.f32 %v409, %v2727
      %v2942 = vsub.f32 %v410, %v2732
      %v2943 = vsub.f32 %v411, %v2737
      %v2944 = vsub.f32 %v412, %v2742
      %v2945 = vsub.f32 %v413, %v2747
      %v2946 = vsub.f32 %v414, %v2752
      %v2947 = vsub.f32 %v415, %v2757
      %v2948 = vsub.f32 %v416, %v2762
      %v2949 = vsub.f32 %v417, %v2767
      %v2950 = vsub.f32 %v418, %v2772
      %v2951 = vsub.f32 %v419, %v2777
      %v2952 = vsub.f32 %v420, %v2782
      %v2953 = vsub.f32 %v421, %v2787
      %v2954 = vsub.f32 %v422, %v2792
      %v2955 = vsub.f32 %v423, %v2797
      %v2956 = vsub.f32 %v424, %v2802
      %v2957 = vsub.f32 %v425, %v2807
      %v2958 = vsub.f32 %v426, %v2812
      %v2959 = vsub.f32 %v427, %v2817
      %v2960 = vsub.f32 %v428, %v2822
      %v2961 = vsub.f32 %v429, %v2827
      %v2962 = vsub.f32 %v430, %v2832
      %v2963 = vsub.f32 %v431, %v2837
      %v2964 = vsub.f32 %v432, %v2842
      %v2965 = vsub.f32 %v433, %v2847
      %v2966 = vsub.f32 %v434, %v2852
      %v2967 = vsub.f32 %v435, %v2857
      %v2968 = vsub.f32 %v436, %v2862
      %v2969 = vsub.f32 %v437, %v2867
      %v2970 = vsub.f32 %v438, %v2872
      %v2971 = vsub.f32 %v439, %v2877
      %v2972 = vsub.f32 %v440, %v2882
      %v2973 = vsub.f32 %v441, %v2887
      %v2974 = vsub.f32 %v442, %v2892
      %v2975 = vsub.f32 %v443, %v2897
      %v2976 = vsub.f32 %v444, %v2902
      %v2977 = vsub.f32 %v445, %v2907
      %v2978 = vsub.f32 %v446, %v2912
      %2979 = vst.msk [vmem:[%s360] sm:$0xff] %vm471, %v2597
      %2980 = vst.msk [vmem:[%s360 + $0x8] sm:$0xff] %vm471, %v2602
      %2981 = vst.msk [vmem:[%s360 + $0x10] sm:$0xff] %vm471, %v2607
      %2982 = vst.msk [vmem:[%s360 + $0x18] sm:$0xff] %vm471, %v2612
      %2983 = vst.msk [vmem:[%s360 + $0x20] sm:$0xff] %vm471, %v2617
      %2984 = vst.msk [vmem:[%s360 + $0x28] sm:$0xff] %vm471, %v2622
      %2985 = vst.msk [vmem:[%s360 + $0x30] sm:$0xff] %vm471, %v2627
      %2986 = vst.msk [vmem:[%s360 + $0x38] sm:$0xff] %vm471, %v2632
      %2987 = vst.msk [vmem:[%s360 + $0x40] sm:$0xff] %vm471, %v2637
      %2988 = vst.msk [vmem:[%s360 + $0x48] sm:$0xff] %vm471, %v2642
      %2989 = vst.msk [vmem:[%s360 + $0x50] sm:$0xff] %vm471, %v2647
      %2990 = vst.msk [vmem:[%s360 + $0x58] sm:$0xff] %vm471, %v2652
      %2991 = vst.msk [vmem:[%s360 + $0x60] sm:$0xff] %vm471, %v2657
      %2992 = vst.msk [vmem:[%s360 + $0x68] sm:$0xff] %vm471, %v2662
      %2993 = vst.msk [vmem:[%s360 + $0x70] sm:$0xff] %vm471, %v2667
      %2994 = vst.msk [vmem:[%s360 + $0x78] sm:$0xff] %vm471, %v2672
      %2995 = vst.msk [vmem:[%s360 + $0x80] sm:$0xff] %vm471, %v2677
      %2996 = vst.msk [vmem:[%s360 + $0x88] sm:$0xff] %vm471, %v2682
      %2997 = vst.msk [vmem:[%s360 + $0x90] sm:$0xff] %vm471, %v2687
      %2998 = vst.msk [vmem:[%s360 + $0x98] sm:$0xff] %vm471, %v2692
      %2999 = vst.msk [vmem:[%s360 + $0xa0] sm:$0xff] %vm471, %v2697
      %3000 = vst.msk [vmem:[%s360 + $0xa8] sm:$0xff] %vm471, %v2702
      %3001 = vst.msk [vmem:[%s360 + $0xb0] sm:$0xff] %vm471, %v2707
      %3002 = vst.msk [vmem:[%s360 + $0xb8] sm:$0xff] %vm471, %v2712
      %3003 = vst.msk [vmem:[%s360 + $0xc0] sm:$0xff] %vm471, %v2717
      %3004 = vst.msk [vmem:[%s360 + $0xc8] sm:$0xff] %vm471, %v2722
      %3005 = vst.msk [vmem:[%s360 + $0xd0] sm:$0xff] %vm471, %v2727
      %3006 = vst.msk [vmem:[%s360 + $0xd8] sm:$0xff] %vm471, %v2732
      %3007 = vst.msk [vmem:[%s360 + $0xe0] sm:$0xff] %vm471, %v2737
      %3008 = vst.msk [vmem:[%s360 + $0xe8] sm:$0xff] %vm471, %v2742
      %3009 = vst.msk [vmem:[%s360 + $0xf0] sm:$0xff] %vm471, %v2747
      %3010 = vst.msk [vmem:[%s360 + $0xf8] sm:$0xff] %vm471, %v2752
      %3011 = vst.msk [vmem:[%s360 + $0x100] sm:$0xff] %vm471, %v2757
      %3012 = vst.msk [vmem:[%s360 + $0x108] sm:$0xff] %vm471, %v2762
      %3013 = vst.msk [vmem:[%s360 + $0x110] sm:$0xff] %vm471, %v2767
      %3014 = vst.msk [vmem:[%s360 + $0x118] sm:$0xff] %vm471, %v2772
      %3015 = vst.msk [vmem:[%s360 + $0x120] sm:$0xff] %vm471, %v2777
      %3016 = vst.msk [vmem:[%s360 + $0x128] sm:$0xff] %vm471, %v2782
      %3017 = vst.msk [vmem:[%s360 + $0x130] sm:$0xff] %vm471, %v2787
      %3018 = vst.msk [vmem:[%s360 + $0x138] sm:$0xff] %vm471, %v2792
      %3019 = vst.msk [vmem:[%s360 + $0x140] sm:$0xff] %vm471, %v2797
      %3020 = vst.msk [vmem:[%s360 + $0x148] sm:$0xff] %vm471, %v2802
      %3021 = vst.msk [vmem:[%s360 + $0x150] sm:$0xff] %vm471, %v2807
      %3022 = vst.msk [vmem:[%s360 + $0x158] sm:$0xff] %vm471, %v2812
      %3023 = vst.msk [vmem:[%s360 + $0x160] sm:$0xff] %vm471, %v2817
      %3024 = vst.msk [vmem:[%s360 + $0x168] sm:$0xff] %vm471, %v2822
      %3025 = vst.msk [vmem:[%s360 + $0x170] sm:$0xff] %vm471, %v2827
      %3026 = vst.msk [vmem:[%s360 + $0x178] sm:$0xff] %vm471, %v2832
      %3027 = vst.msk [vmem:[%s360 + $0x180] sm:$0xff] %vm471, %v2837
      %3028 = vst.msk [vmem:[%s360 + $0x188] sm:$0xff] %vm471, %v2842
      %3029 = vst.msk [vmem:[%s360 + $0x190] sm:$0xff] %vm471, %v2847
      %3030 = vst.msk [vmem:[%s360 + $0x198] sm:$0xff] %vm471, %v2852
      %3031 = vst.msk [vmem:[%s360 + $0x1a0] sm:$0xff] %vm471, %v2857
      %3032 = vst.msk [vmem:[%s360 + $0x1a8] sm:$0xff] %vm471, %v2862
      %3033 = vst.msk [vmem:[%s360 + $0x1b0] sm:$0xff] %vm471, %v2867
      %3034 = vst.msk [vmem:[%s360 + $0x1b8] sm:$0xff] %vm471, %v2872
      %3035 = vst.msk [vmem:[%s360 + $0x1c0] sm:$0xff] %vm471, %v2877
      %3036 = vst.msk [vmem:[%s360 + $0x1c8] sm:$0xff] %vm471, %v2882
      %3037 = vst.msk [vmem:[%s360 + $0x1d0] sm:$0xff] %vm471, %v2887
      %3038 = vst.msk [vmem:[%s360 + $0x1d8] sm:$0xff] %vm471, %v2892
      %3039 = vst.msk [vmem:[%s360 + $0x1e0] sm:$0xff] %vm471, %v2897
      %3040 = vst.msk [vmem:[%s360 + $0x1e8] sm:$0xff] %vm471, %v2902
      %3041 = vst.msk [vmem:[%s360 + $0x1f0] sm:$0xff] %vm471, %v2907
      %3042 = vst.msk [vmem:[%s360 + $0x1f8] sm:$0xff] %vm471, %v2912
      %3043 = vst.msk [vmem:[%s368] sm:$0xff] %vm471, %v2915
      %3044 = vst.msk [vmem:[%s368 + $0x8] sm:$0xff] %vm471, %v2916
      %3045 = vst.msk [vmem:[%s368 + $0x10] sm:$0xff] %vm471, %v2917
      %3046 = vst.msk [vmem:[%s368 + $0x18] sm:$0xff] %vm471, %v2918
      %3047 = vst.msk [vmem:[%s368 + $0x20] sm:$0xff] %vm471, %v2919
      %3048 = vst.msk [vmem:[%s368 + $0x28] sm:$0xff] %vm471, %v2920
      %3049 = vst.msk [vmem:[%s368 + $0x30] sm:$0xff] %vm471, %v2921
      %3050 = vst.msk [vmem:[%s368 + $0x38] sm:$0xff] %vm471, %v2922
      %3051 = vst.msk [vmem:[%s368 + $0x40] sm:$0xff] %vm471, %v2923
      %3052 = vst.msk [vmem:[%s368 + $0x48] sm:$0xff] %vm471, %v2924
      %3053 = vst.msk [vmem:[%s368 + $0x50] sm:$0xff] %vm471, %v2925
      %3054 = vst.msk [vmem:[%s368 + $0x58] sm:$0xff] %vm471, %v2926
      %3055 = vst.msk [vmem:[%s368 + $0x60] sm:$0xff] %vm471, %v2927
      %3056 = vst.msk [vmem:[%s368 + $0x68] sm:$0xff] %vm471, %v2928
      %3057 = vst.msk [vmem:[%s368 + $0x70] sm:$0xff] %vm471, %v2929
      %3058 = vst.msk [vmem:[%s368 + $0x78] sm:$0xff] %vm471, %v2930
      %3059 = vst.msk [vmem:[%s368 + $0x80] sm:$0xff] %vm471, %v2931
      %3060 = vst.msk [vmem:[%s368 + $0x88] sm:$0xff] %vm471, %v2932
      %3061 = vst.msk [vmem:[%s368 + $0x90] sm:$0xff] %vm471, %v2933
      %3062 = vst.msk [vmem:[%s368 + $0x98] sm:$0xff] %vm471, %v2934
      %3063 = vst.msk [vmem:[%s368 + $0xa0] sm:$0xff] %vm471, %v2935
      %3064 = vst.msk [vmem:[%s368 + $0xa8] sm:$0xff] %vm471, %v2936
      %3065 = vst.msk [vmem:[%s368 + $0xb0] sm:$0xff] %vm471, %v2937
      %3066 = vst.msk [vmem:[%s368 + $0xb8] sm:$0xff] %vm471, %v2938
      %3067 = vst.msk [vmem:[%s368 + $0xc0] sm:$0xff] %vm471, %v2939
      %3068 = vst.msk [vmem:[%s368 + $0xc8] sm:$0xff] %vm471, %v2940
      %3069 = vst.msk [vmem:[%s368 + $0xd0] sm:$0xff] %vm471, %v2941
      %3070 = vst.msk [vmem:[%s368 + $0xd8] sm:$0xff] %vm471, %v2942
      %3071 = vst.msk [vmem:[%s368 + $0xe0] sm:$0xff] %vm471, %v2943
      %3072 = vst.msk [vmem:[%s368 + $0xe8] sm:$0xff] %vm471, %v2944
      %3073 = vst.msk [vmem:[%s368 + $0xf0] sm:$0xff] %vm471, %v2945
      %3074 = vst.msk [vmem:[%s368 + $0xf8] sm:$0xff] %vm471, %v2946
      %3075 = vst.msk [vmem:[%s368 + $0x100] sm:$0xff] %vm471, %v2947
      %3076 = vst.msk [vmem:[%s368 + $0x108] sm:$0xff] %vm471, %v2948
      %3077 = vst.msk [vmem:[%s368 + $0x110] sm:$0xff] %vm471, %v2949
      %3078 = vst.msk [vmem:[%s368 + $0x118] sm:$0xff] %vm471, %v2950
      %3079 = vst.msk [vmem:[%s368 + $0x120] sm:$0xff] %vm471, %v2951
      %3080 = vst.msk [vmem:[%s368 + $0x128] sm:$0xff] %vm471, %v2952
      %3081 = vst.msk [vmem:[%s368 + $0x130] sm:$0xff] %vm471, %v2953
      %3082 = vst.msk [vmem:[%s368 + $0x138] sm:$0xff] %vm471, %v2954
      %3083 = vst.msk [vmem:[%s368 + $0x140] sm:$0xff] %vm471, %v2955
      %3084 = vst.msk [vmem:[%s368 + $0x148] sm:$0xff] %vm471, %v2956
      %3085 = vst.msk [vmem:[%s368 + $0x150] sm:$0xff] %vm471, %v2957
      %3086 = vst.msk [vmem:[%s368 + $0x158] sm:$0xff] %vm471, %v2958
      %3087 = vst.msk [vmem:[%s368 + $0x160] sm:$0xff] %vm471, %v2959
      %3088 = vst.msk [vmem:[%s368 + $0x168] sm:$0xff] %vm471, %v2960
      %3089 = vst.msk [vmem:[%s368 + $0x170] sm:$0xff] %vm471, %v2961
      %3090 = vst.msk [vmem:[%s368 + $0x178] sm:$0xff] %vm471, %v2962
      %3091 = vst.msk [vmem:[%s368 + $0x180] sm:$0xff] %vm471, %v2963
      %3092 = vst.msk [vmem:[%s368 + $0x188] sm:$0xff] %vm471, %v2964
      %3093 = vst.msk [vmem:[%s368 + $0x190] sm:$0xff] %vm471, %v2965
      %3094 = vst.msk [vmem:[%s368 + $0x198] sm:$0xff] %vm471, %v2966
      %3095 = vst.msk [vmem:[%s368 + $0x1a0] sm:$0xff] %vm471, %v2967
      %3096 = vst.msk [vmem:[%s368 + $0x1a8] sm:$0xff] %vm471, %v2968
      %3097 = vst.msk [vmem:[%s368 + $0x1b0] sm:$0xff] %vm471, %v2969
      %3098 = vst.msk [vmem:[%s368 + $0x1b8] sm:$0xff] %vm471, %v2970
      %3099 = vst.msk [vmem:[%s368 + $0x1c0] sm:$0xff] %vm471, %v2971
      %3100 = vst.msk [vmem:[%s368 + $0x1c8] sm:$0xff] %vm471, %v2972
      %3101 = vst.msk [vmem:[%s368 + $0x1d0] sm:$0xff] %vm471, %v2973
      %3102 = vst.msk [vmem:[%s368 + $0x1d8] sm:$0xff] %vm471, %v2974
      %3103 = vst.msk [vmem:[%s368 + $0x1e0] sm:$0xff] %vm471, %v2975
      %3104 = vst.msk [vmem:[%s368 + $0x1e8] sm:$0xff] %vm471, %v2976
      %3105 = vst.msk [vmem:[%s368 + $0x1f0] sm:$0xff] %vm471, %v2977
      %3106 = vst.msk [vmem:[%s368 + $0x1f8] sm:$0xff] %vm471, %v2978
      %v3107 = vlaneseq
      %v3108 = vshrl.u32 %v3107, 7
      %v3109 = vsub.s32 0, %v3108
      %v3110 = vrot.slane %v1455, %v3109
      %v3111 = vlaneseq
      %v3112 = vshrl.u32 %v3111, 7
      %v3113 = vsub.s32 1, %v3112
      %v3114 = vrot.slane %v1455, %v3113
      %v3115 = vlaneseq
      %v3116 = vshrl.u32 %v3115, 7
      %v3117 = vsub.s32 2, %v3116
      %v3118 = vrot.slane %v1455, %v3117
      %v3119 = vlaneseq
      %v3120 = vshrl.u32 %v3119, 7
      %v3121 = vsub.s32 3, %v3120
      %v3122 = vrot.slane %v1455, %v3121
      %v3123 = vlaneseq
      %v3124 = vshrl.u32 %v3123, 7
      %v3125 = vsub.s32 4, %v3124
      %v3126 = vrot.slane %v1455, %v3125
      %v3127 = vlaneseq
      %v3128 = vshrl.u32 %v3127, 7
      %v3129 = vsub.s32 5, %v3128
      %v3130 = vrot.slane %v1455, %v3129
      %v3131 = vlaneseq
      %v3132 = vshrl.u32 %v3131, 7
      %v3133 = vsub.s32 6, %v3132
      %v3134 = vrot.slane %v1455, %v3133
      %v3135 = vlaneseq
      %v3136 = vshrl.u32 %v3135, 7
      %v3137 = vsub.s32 7, %v3136
      %v3138 = vrot.slane %v1455, %v3137
      %v3139 = vlaneseq
      %v3140 = vshrl.u32 %v3139, 7
      %v3141 = vsub.s32 0, %v3140
      %v3142 = vrot.slane %v1469, %v3141
      %v3143 = vlaneseq
      %v3144 = vshrl.u32 %v3143, 7
      %v3145 = vsub.s32 1, %v3144
      %v3146 = vrot.slane %v1469, %v3145
      %v3147 = vlaneseq
      %v3148 = vshrl.u32 %v3147, 7
      %v3149 = vsub.s32 2, %v3148
      %v3150 = vrot.slane %v1469, %v3149
      %v3151 = vlaneseq
      %v3152 = vshrl.u32 %v3151, 7
      %v3153 = vsub.s32 3, %v3152
      %v3154 = vrot.slane %v1469, %v3153
      %v3155 = vlaneseq
      %v3156 = vshrl.u32 %v3155, 7
      %v3157 = vsub.s32 4, %v3156
      %v3158 = vrot.slane %v1469, %v3157
      %v3159 = vlaneseq
      %v3160 = vshrl.u32 %v3159, 7
      %v3161 = vsub.s32 5, %v3160
      %v3162 = vrot.slane %v1469, %v3161
      %v3163 = vlaneseq
      %v3164 = vshrl.u32 %v3163, 7
      %v3165 = vsub.s32 6, %v3164
      %v3166 = vrot.slane %v1469, %v3165
      %v3167 = vlaneseq
      %v3168 = vshrl.u32 %v3167, 7
      %v3169 = vsub.s32 7, %v3168
      %v3170 = vrot.slane %v1469, %v3169
      %v3171 = vlaneseq
      %v3172 = vshrl.u32 %v3171, 7
      %v3173 = vsub.s32 0, %v3172
      %v3174 = vrot.slane %v1483, %v3173
      %v3175 = vlaneseq
      %v3176 = vshrl.u32 %v3175, 7
      %v3177 = vsub.s32 1, %v3176
      %v3178 = vrot.slane %v1483, %v3177
      %v3179 = vlaneseq
      %v3180 = vshrl.u32 %v3179, 7
      %v3181 = vsub.s32 2, %v3180
      %v3182 = vrot.slane %v1483, %v3181
      %v3183 = vlaneseq
      %v3184 = vshrl.u32 %v3183, 7
      %v3185 = vsub.s32 3, %v3184
      %v3186 = vrot.slane %v1483, %v3185
      %v3187 = vlaneseq
      %v3188 = vshrl.u32 %v3187, 7
      %v3189 = vsub.s32 4, %v3188
      %v3190 = vrot.slane %v1483, %v3189
      %v3191 = vlaneseq
      %v3192 = vshrl.u32 %v3191, 7
      %v3193 = vsub.s32 5, %v3192
      %v3194 = vrot.slane %v1483, %v3193
      %v3195 = vlaneseq
      %v3196 = vshrl.u32 %v3195, 7
      %v3197 = vsub.s32 6, %v3196
      %v3198 = vrot.slane %v1483, %v3197
      %v3199 = vlaneseq
      %v3200 = vshrl.u32 %v3199, 7
      %v3201 = vsub.s32 7, %v3200
      %v3202 = vrot.slane %v1483, %v3201
      %v3203 = vlaneseq
      %v3204 = vshrl.u32 %v3203, 7
      %v3205 = vsub.s32 0, %v3204
      %v3206 = vrot.slane %v1497, %v3205
      %v3207 = vlaneseq
      %v3208 = vshrl.u32 %v3207, 7
      %v3209 = vsub.s32 1, %v3208
      %v3210 = vrot.slane %v1497, %v3209
      %v3211 = vlaneseq
      %v3212 = vshrl.u32 %v3211, 7
      %v3213 = vsub.s32 2, %v3212
      %v3214 = vrot.slane %v1497, %v3213
      %v3215 = vlaneseq
      %v3216 = vshrl.u32 %v3215, 7
      %v3217 = vsub.s32 3, %v3216
      %v3218 = vrot.slane %v1497, %v3217
      %v3219 = vlaneseq
      %v3220 = vshrl.u32 %v3219, 7
      %v3221 = vsub.s32 4, %v3220
      %v3222 = vrot.slane %v1497, %v3221
      %v3223 = vlaneseq
      %v3224 = vshrl.u32 %v3223, 7
      %v3225 = vsub.s32 5, %v3224
      %v3226 = vrot.slane %v1497, %v3225
      %v3227 = vlaneseq
      %v3228 = vshrl.u32 %v3227, 7
      %v3229 = vsub.s32 6, %v3228
      %v3230 = vrot.slane %v1497, %v3229
      %v3231 = vlaneseq
      %v3232 = vshrl.u32 %v3231, 7
      %v3233 = vsub.s32 7, %v3232
      %v3234 = vrot.slane %v1497, %v3233
      %v3235 = vlaneseq
      %v3236 = vshrl.u32 %v3235, 7
      %v3237 = vsub.s32 0, %v3236
      %v3238 = vrot.slane %v1511, %v3237
      %v3239 = vlaneseq
      %v3240 = vshrl.u32 %v3239, 7
      %v3241 = vsub.s32 1, %v3240
      %v3242 = vrot.slane %v1511, %v3241
      %v3243 = vlaneseq
      %v3244 = vshrl.u32 %v3243, 7
      %v3245 = vsub.s32 2, %v3244
      %v3246 = vrot.slane %v1511, %v3245
      %v3247 = vlaneseq
      %v3248 = vshrl.u32 %v3247, 7
      %v3249 = vsub.s32 3, %v3248
      %v3250 = vrot.slane %v1511, %v3249
      %v3251 = vlaneseq
      %v3252 = vshrl.u32 %v3251, 7
      %v3253 = vsub.s32 4, %v3252
      %v3254 = vrot.slane %v1511, %v3253
      %v3255 = vlaneseq
      %v3256 = vshrl.u32 %v3255, 7
      %v3257 = vsub.s32 5, %v3256
      %v3258 = vrot.slane %v1511, %v3257
      %v3259 = vlaneseq
      %v3260 = vshrl.u32 %v3259, 7
      %v3261 = vsub.s32 6, %v3260
      %v3262 = vrot.slane %v1511, %v3261
      %v3263 = vlaneseq
      %v3264 = vshrl.u32 %v3263, 7
      %v3265 = vsub.s32 7, %v3264
      %v3266 = vrot.slane %v1511, %v3265
      %v3267 = vlaneseq
      %v3268 = vshrl.u32 %v3267, 7
      %v3269 = vsub.s32 0, %v3268
      %v3270 = vrot.slane %v1525, %v3269
      %v3271 = vlaneseq
      %v3272 = vshrl.u32 %v3271, 7
      %v3273 = vsub.s32 1, %v3272
      %v3274 = vrot.slane %v1525, %v3273
      %v3275 = vlaneseq
      %v3276 = vshrl.u32 %v3275, 7
      %v3277 = vsub.s32 2, %v3276
      %v3278 = vrot.slane %v1525, %v3277
      %v3279 = vlaneseq
      %v3280 = vshrl.u32 %v3279, 7
      %v3281 = vsub.s32 3, %v3280
      %v3282 = vrot.slane %v1525, %v3281
      %v3283 = vlaneseq
      %v3284 = vshrl.u32 %v3283, 7
      %v3285 = vsub.s32 4, %v3284
      %v3286 = vrot.slane %v1525, %v3285
      %v3287 = vlaneseq
      %v3288 = vshrl.u32 %v3287, 7
      %v3289 = vsub.s32 5, %v3288
      %v3290 = vrot.slane %v1525, %v3289
      %v3291 = vlaneseq
      %v3292 = vshrl.u32 %v3291, 7
      %v3293 = vsub.s32 6, %v3292
      %v3294 = vrot.slane %v1525, %v3293
      %v3295 = vlaneseq
      %v3296 = vshrl.u32 %v3295, 7
      %v3297 = vsub.s32 7, %v3296
      %v3298 = vrot.slane %v1525, %v3297
      %v3299 = vlaneseq
      %v3300 = vshrl.u32 %v3299, 7
      %v3301 = vsub.s32 0, %v3300
      %v3302 = vrot.slane %v1539, %v3301
      %v3303 = vlaneseq
      %v3304 = vshrl.u32 %v3303, 7
      %v3305 = vsub.s32 1, %v3304
      %v3306 = vrot.slane %v1539, %v3305
      %v3307 = vlaneseq
      %v3308 = vshrl.u32 %v3307, 7
      %v3309 = vsub.s32 2, %v3308
      %v3310 = vrot.slane %v1539, %v3309
      %v3311 = vlaneseq
      %v3312 = vshrl.u32 %v3311, 7
      %v3313 = vsub.s32 3, %v3312
      %v3314 = vrot.slane %v1539, %v3313
      %v3315 = vlaneseq
      %v3316 = vshrl.u32 %v3315, 7
      %v3317 = vsub.s32 4, %v3316
      %v3318 = vrot.slane %v1539, %v3317
      %v3319 = vlaneseq
      %v3320 = vshrl.u32 %v3319, 7
      %v3321 = vsub.s32 5, %v3320
      %v3322 = vrot.slane %v1539, %v3321
      %v3323 = vlaneseq
      %v3324 = vshrl.u32 %v3323, 7
      %v3325 = vsub.s32 6, %v3324
      %v3326 = vrot.slane %v1539, %v3325
      %v3327 = vlaneseq
      %v3328 = vshrl.u32 %v3327, 7
      %v3329 = vsub.s32 7, %v3328
      %v3330 = vrot.slane %v1539, %v3329
      %v3331 = vlaneseq
      %v3332 = vshrl.u32 %v3331, 7
      %v3333 = vsub.s32 0, %v3332
      %v3334 = vrot.slane %v1553, %v3333
      %v3335 = vlaneseq
      %v3336 = vshrl.u32 %v3335, 7
      %v3337 = vsub.s32 1, %v3336
      %v3338 = vrot.slane %v1553, %v3337
      %v3339 = vlaneseq
      %v3340 = vshrl.u32 %v3339, 7
      %v3341 = vsub.s32 2, %v3340
      %v3342 = vrot.slane %v1553, %v3341
      %v3343 = vlaneseq
      %v3344 = vshrl.u32 %v3343, 7
      %v3345 = vsub.s32 3, %v3344
      %v3346 = vrot.slane %v1553, %v3345
      %v3347 = vlaneseq
      %v3348 = vshrl.u32 %v3347, 7
      %v3349 = vsub.s32 4, %v3348
      %v3350 = vrot.slane %v1553, %v3349
      %v3351 = vlaneseq
      %v3352 = vshrl.u32 %v3351, 7
      %v3353 = vsub.s32 5, %v3352
      %v3354 = vrot.slane %v1553, %v3353
      %v3355 = vlaneseq
      %v3356 = vshrl.u32 %v3355, 7
      %v3357 = vsub.s32 6, %v3356
      %v3358 = vrot.slane %v1553, %v3357
      %v3359 = vlaneseq
      %v3360 = vshrl.u32 %v3359, 7
      %v3361 = vsub.s32 7, %v3360
      %v3362 = vrot.slane %v1553, %v3361
      %v3363 = vlaneseq
      %v3364 = vshrl.u32 %v3363, 7
      %v3365 = vsub.s32 0, %v3364
      %v3366 = vrot.slane %v1567, %v3365
      %v3367 = vlaneseq
      %v3368 = vshrl.u32 %v3367, 7
      %v3369 = vsub.s32 1, %v3368
      %v3370 = vrot.slane %v1567, %v3369
      %v3371 = vlaneseq
      %v3372 = vshrl.u32 %v3371, 7
      %v3373 = vsub.s32 2, %v3372
      %v3374 = vrot.slane %v1567, %v3373
      %v3375 = vlaneseq
      %v3376 = vshrl.u32 %v3375, 7
      %v3377 = vsub.s32 3, %v3376
      %v3378 = vrot.slane %v1567, %v3377
      %v3379 = vlaneseq
      %v3380 = vshrl.u32 %v3379, 7
      %v3381 = vsub.s32 4, %v3380
      %v3382 = vrot.slane %v1567, %v3381
      %v3383 = vlaneseq
      %v3384 = vshrl.u32 %v3383, 7
      %v3385 = vsub.s32 5, %v3384
      %v3386 = vrot.slane %v1567, %v3385
      %v3387 = vlaneseq
      %v3388 = vshrl.u32 %v3387, 7
      %v3389 = vsub.s32 6, %v3388
      %v3390 = vrot.slane %v1567, %v3389
      %v3391 = vlaneseq
      %v3392 = vshrl.u32 %v3391, 7
      %v3393 = vsub.s32 7, %v3392
      %v3394 = vrot.slane %v1567, %v3393
      %v3395 = vlaneseq
      %v3396 = vshrl.u32 %v3395, 7
      %v3397 = vsub.s32 0, %v3396
      %v3398 = vrot.slane %v1581, %v3397
      %v3399 = vlaneseq
      %v3400 = vshrl.u32 %v3399, 7
      %v3401 = vsub.s32 1, %v3400
      %v3402 = vrot.slane %v1581, %v3401
      %v3403 = vlaneseq
      %v3404 = vshrl.u32 %v3403, 7
      %v3405 = vsub.s32 2, %v3404
      %v3406 = vrot.slane %v1581, %v3405
      %v3407 = vlaneseq
      %v3408 = vshrl.u32 %v3407, 7
      %v3409 = vsub.s32 3, %v3408
      %v3410 = vrot.slane %v1581, %v3409
      %v3411 = vlaneseq
      %v3412 = vshrl.u32 %v3411, 7
      %v3413 = vsub.s32 4, %v3412
      %v3414 = vrot.slane %v1581, %v3413
      %v3415 = vlaneseq
      %v3416 = vshrl.u32 %v3415, 7
      %v3417 = vsub.s32 5, %v3416
      %v3418 = vrot.slane %v1581, %v3417
      %v3419 = vlaneseq
      %v3420 = vshrl.u32 %v3419, 7
      %v3421 = vsub.s32 6, %v3420
      %v3422 = vrot.slane %v1581, %v3421
      %v3423 = vlaneseq
      %v3424 = vshrl.u32 %v3423, 7
      %v3425 = vsub.s32 7, %v3424
      %v3426 = vrot.slane %v1581, %v3425
      %v3427 = vlaneseq
      %v3428 = vshrl.u32 %v3427, 7
      %v3429 = vsub.s32 0, %v3428
      %v3430 = vrot.slane %v1595, %v3429
      %v3431 = vlaneseq
      %v3432 = vshrl.u32 %v3431, 7
      %v3433 = vsub.s32 1, %v3432
      %v3434 = vrot.slane %v1595, %v3433
      %v3435 = vlaneseq
      %v3436 = vshrl.u32 %v3435, 7
      %v3437 = vsub.s32 2, %v3436
      %v3438 = vrot.slane %v1595, %v3437
      %v3439 = vlaneseq
      %v3440 = vshrl.u32 %v3439, 7
      %v3441 = vsub.s32 3, %v3440
      %v3442 = vrot.slane %v1595, %v3441
      %v3443 = vlaneseq
      %v3444 = vshrl.u32 %v3443, 7
      %v3445 = vsub.s32 4, %v3444
      %v3446 = vrot.slane %v1595, %v3445
      %v3447 = vlaneseq
      %v3448 = vshrl.u32 %v3447, 7
      %v3449 = vsub.s32 5, %v3448
      %v3450 = vrot.slane %v1595, %v3449
      %v3451 = vlaneseq
      %v3452 = vshrl.u32 %v3451, 7
      %v3453 = vsub.s32 6, %v3452
      %v3454 = vrot.slane %v1595, %v3453
      %v3455 = vlaneseq
      %v3456 = vshrl.u32 %v3455, 7
      %v3457 = vsub.s32 7, %v3456
      %v3458 = vrot.slane %v1595, %v3457
      %v3459 = vlaneseq
      %v3460 = vshrl.u32 %v3459, 7
      %v3461 = vsub.s32 0, %v3460
      %v3462 = vrot.slane %v1609, %v3461
      %v3463 = vlaneseq
      %v3464 = vshrl.u32 %v3463, 7
      %v3465 = vsub.s32 1, %v3464
      %v3466 = vrot.slane %v1609, %v3465
      %v3467 = vlaneseq
      %v3468 = vshrl.u32 %v3467, 7
      %v3469 = vsub.s32 2, %v3468
      %v3470 = vrot.slane %v1609, %v3469
      %v3471 = vlaneseq
      %v3472 = vshrl.u32 %v3471, 7
      %v3473 = vsub.s32 3, %v3472
      %v3474 = vrot.slane %v1609, %v3473
      %v3475 = vlaneseq
      %v3476 = vshrl.u32 %v3475, 7
      %v3477 = vsub.s32 4, %v3476
      %v3478 = vrot.slane %v1609, %v3477
      %v3479 = vlaneseq
      %v3480 = vshrl.u32 %v3479, 7
      %v3481 = vsub.s32 5, %v3480
      %v3482 = vrot.slane %v1609, %v3481
      %v3483 = vlaneseq
      %v3484 = vshrl.u32 %v3483, 7
      %v3485 = vsub.s32 6, %v3484
      %v3486 = vrot.slane %v1609, %v3485
      %v3487 = vlaneseq
      %v3488 = vshrl.u32 %v3487, 7
      %v3489 = vsub.s32 7, %v3488
      %v3490 = vrot.slane %v1609, %v3489
      %v3491 = vlaneseq
      %v3492 = vshrl.u32 %v3491, 7
      %v3493 = vsub.s32 0, %v3492
      %v3494 = vrot.slane %v1623, %v3493
      %v3495 = vlaneseq
      %v3496 = vshrl.u32 %v3495, 7
      %v3497 = vsub.s32 1, %v3496
      %v3498 = vrot.slane %v1623, %v3497
      %v3499 = vlaneseq
      %v3500 = vshrl.u32 %v3499, 7
      %v3501 = vsub.s32 2, %v3500
      %v3502 = vrot.slane %v1623, %v3501
      %v3503 = vlaneseq
      %v3504 = vshrl.u32 %v3503, 7
      %v3505 = vsub.s32 3, %v3504
      %v3506 = vrot.slane %v1623, %v3505
      %v3507 = vlaneseq
      %v3508 = vshrl.u32 %v3507, 7
      %v3509 = vsub.s32 4, %v3508
      %v3510 = vrot.slane %v1623, %v3509
      %v3511 = vlaneseq
      %v3512 = vshrl.u32 %v3511, 7
      %v3513 = vsub.s32 5, %v3512
      %v3514 = vrot.slane %v1623, %v3513
      %v3515 = vlaneseq
      %v3516 = vshrl.u32 %v3515, 7
      %v3517 = vsub.s32 6, %v3516
      %v3518 = vrot.slane %v1623, %v3517
      %v3519 = vlaneseq
      %v3520 = vshrl.u32 %v3519, 7
      %v3521 = vsub.s32 7, %v3520
      %v3522 = vrot.slane %v1623, %v3521
      %v3523 = vlaneseq
      %v3524 = vshrl.u32 %v3523, 7
      %v3525 = vsub.s32 0, %v3524
      %v3526 = vrot.slane %v1637, %v3525
      %v3527 = vlaneseq
      %v3528 = vshrl.u32 %v3527, 7
      %v3529 = vsub.s32 1, %v3528
      %v3530 = vrot.slane %v1637, %v3529
      %v3531 = vlaneseq
      %v3532 = vshrl.u32 %v3531, 7
      %v3533 = vsub.s32 2, %v3532
      %v3534 = vrot.slane %v1637, %v3533
      %v3535 = vlaneseq
      %v3536 = vshrl.u32 %v3535, 7
      %v3537 = vsub.s32 3, %v3536
      %v3538 = vrot.slane %v1637, %v3537
      %v3539 = vlaneseq
      %v3540 = vshrl.u32 %v3539, 7
      %v3541 = vsub.s32 4, %v3540
      %v3542 = vrot.slane %v1637, %v3541
      %v3543 = vlaneseq
      %v3544 = vshrl.u32 %v3543, 7
      %v3545 = vsub.s32 5, %v3544
      %v3546 = vrot.slane %v1637, %v3545
      %v3547 = vlaneseq
      %v3548 = vshrl.u32 %v3547, 7
      %v3549 = vsub.s32 6, %v3548
      %v3550 = vrot.slane %v1637, %v3549
      %v3551 = vlaneseq
      %v3552 = vshrl.u32 %v3551, 7
      %v3553 = vsub.s32 7, %v3552
      %v3554 = vrot.slane %v1637, %v3553
      %v3555 = vlaneseq
      %v3556 = vshrl.u32 %v3555, 7
      %v3557 = vsub.s32 0, %v3556
      %v3558 = vrot.slane %v1651, %v3557
      %v3559 = vlaneseq
      %v3560 = vshrl.u32 %v3559, 7
      %v3561 = vsub.s32 1, %v3560
      %v3562 = vrot.slane %v1651, %v3561
      %v3563 = vlaneseq
      %v3564 = vshrl.u32 %v3563, 7
      %v3565 = vsub.s32 2, %v3564
      %v3566 = vrot.slane %v1651, %v3565
      %v3567 = vlaneseq
      %v3568 = vshrl.u32 %v3567, 7
      %v3569 = vsub.s32 3, %v3568
      %v3570 = vrot.slane %v1651, %v3569
      %v3571 = vlaneseq
      %v3572 = vshrl.u32 %v3571, 7
      %v3573 = vsub.s32 4, %v3572
      %v3574 = vrot.slane %v1651, %v3573
      %v3575 = vlaneseq
      %v3576 = vshrl.u32 %v3575, 7
      %v3577 = vsub.s32 5, %v3576
      %v3578 = vrot.slane %v1651, %v3577
      %v3579 = vlaneseq
      %v3580 = vshrl.u32 %v3579, 7
      %v3581 = vsub.s32 6, %v3580
      %v3582 = vrot.slane %v1651, %v3581
      %v3583 = vlaneseq
      %v3584 = vshrl.u32 %v3583, 7
      %v3585 = vsub.s32 7, %v3584
      %v3586 = vrot.slane %v1651, %v3585
      %v3587 = vlaneseq
      %v3588 = vshrl.u32 %v3587, 7
      %v3589 = vsub.s32 0, %v3588
      %v3590 = vrot.slane %v1665, %v3589
      %v3591 = vlaneseq
      %v3592 = vshrl.u32 %v3591, 7
      %v3593 = vsub.s32 1, %v3592
      %v3594 = vrot.slane %v1665, %v3593
      %v3595 = vlaneseq
      %v3596 = vshrl.u32 %v3595, 7
      %v3597 = vsub.s32 2, %v3596
      %v3598 = vrot.slane %v1665, %v3597
      %v3599 = vlaneseq
      %v3600 = vshrl.u32 %v3599, 7
      %v3601 = vsub.s32 3, %v3600
      %v3602 = vrot.slane %v1665, %v3601
      %v3603 = vlaneseq
      %v3604 = vshrl.u32 %v3603, 7
      %v3605 = vsub.s32 4, %v3604
      %v3606 = vrot.slane %v1665, %v3605
      %v3607 = vlaneseq
      %v3608 = vshrl.u32 %v3607, 7
      %v3609 = vsub.s32 5, %v3608
      %v3610 = vrot.slane %v1665, %v3609
      %v3611 = vlaneseq
      %v3612 = vshrl.u32 %v3611, 7
      %v3613 = vsub.s32 6, %v3612
      %v3614 = vrot.slane %v1665, %v3613
      %v3615 = vlaneseq
      %v3616 = vshrl.u32 %v3615, 7
      %v3617 = vsub.s32 7, %v3616
      %v3618 = vrot.slane %v1665, %v3617
      %v3619 = vlaneseq
      %v3620 = vshrl.u32 %v3619, 7
      %v3621 = vsub.s32 0, %v3620
      %v3622 = vrot.slane %v1679, %v3621
      %v3623 = vlaneseq
      %v3624 = vshrl.u32 %v3623, 7
      %v3625 = vsub.s32 1, %v3624
      %v3626 = vrot.slane %v1679, %v3625
      %v3627 = vlaneseq
      %v3628 = vshrl.u32 %v3627, 7
      %v3629 = vsub.s32 2, %v3628
      %v3630 = vrot.slane %v1679, %v3629
      %v3631 = vlaneseq
      %v3632 = vshrl.u32 %v3631, 7
      %v3633 = vsub.s32 3, %v3632
      %v3634 = vrot.slane %v1679, %v3633
      %v3635 = vlaneseq
      %v3636 = vshrl.u32 %v3635, 7
      %v3637 = vsub.s32 4, %v3636
      %v3638 = vrot.slane %v1679, %v3637
      %v3639 = vlaneseq
      %v3640 = vshrl.u32 %v3639, 7
      %v3641 = vsub.s32 5, %v3640
      %v3642 = vrot.slane %v1679, %v3641
      %v3643 = vlaneseq
      %v3644 = vshrl.u32 %v3643, 7
      %v3645 = vsub.s32 6, %v3644
      %v3646 = vrot.slane %v1679, %v3645
      %v3647 = vlaneseq
      %v3648 = vshrl.u32 %v3647, 7
      %v3649 = vsub.s32 7, %v3648
      %v3650 = vrot.slane %v1679, %v3649
      %v3651 = vlaneseq
      %v3652 = vshrl.u32 %v3651, 7
      %v3653 = vsub.s32 0, %v3652
      %v3654 = vrot.slane %v1693, %v3653
      %v3655 = vlaneseq
      %v3656 = vshrl.u32 %v3655, 7
      %v3657 = vsub.s32 1, %v3656
      %v3658 = vrot.slane %v1693, %v3657
      %v3659 = vlaneseq
      %v3660 = vshrl.u32 %v3659, 7
      %v3661 = vsub.s32 2, %v3660
      %v3662 = vrot.slane %v1693, %v3661
      %v3663 = vlaneseq
      %v3664 = vshrl.u32 %v3663, 7
      %v3665 = vsub.s32 3, %v3664
      %v3666 = vrot.slane %v1693, %v3665
      %v3667 = vlaneseq
      %v3668 = vshrl.u32 %v3667, 7
      %v3669 = vsub.s32 4, %v3668
      %v3670 = vrot.slane %v1693, %v3669
      %v3671 = vlaneseq
      %v3672 = vshrl.u32 %v3671, 7
      %v3673 = vsub.s32 5, %v3672
      %v3674 = vrot.slane %v1693, %v3673
      %v3675 = vlaneseq
      %v3676 = vshrl.u32 %v3675, 7
      %v3677 = vsub.s32 6, %v3676
      %v3678 = vrot.slane %v1693, %v3677
      %v3679 = vlaneseq
      %v3680 = vshrl.u32 %v3679, 7
      %v3681 = vsub.s32 7, %v3680
      %v3682 = vrot.slane %v1693, %v3681
      %v3683 = vlaneseq
      %v3684 = vshrl.u32 %v3683, 7
      %v3685 = vsub.s32 0, %v3684
      %v3686 = vrot.slane %v1707, %v3685
      %v3687 = vlaneseq
      %v3688 = vshrl.u32 %v3687, 7
      %v3689 = vsub.s32 1, %v3688
      %v3690 = vrot.slane %v1707, %v3689
      %v3691 = vlaneseq
      %v3692 = vshrl.u32 %v3691, 7
      %v3693 = vsub.s32 2, %v3692
      %v3694 = vrot.slane %v1707, %v3693
      %v3695 = vlaneseq
      %v3696 = vshrl.u32 %v3695, 7
      %v3697 = vsub.s32 3, %v3696
      %v3698 = vrot.slane %v1707, %v3697
      %v3699 = vlaneseq
      %v3700 = vshrl.u32 %v3699, 7
      %v3701 = vsub.s32 4, %v3700
      %v3702 = vrot.slane %v1707, %v3701
      %v3703 = vlaneseq
      %v3704 = vshrl.u32 %v3703, 7
      %v3705 = vsub.s32 5, %v3704
      %v3706 = vrot.slane %v1707, %v3705
      %v3707 = vlaneseq
      %v3708 = vshrl.u32 %v3707, 7
      %v3709 = vsub.s32 6, %v3708
      %v3710 = vrot.slane %v1707, %v3709
      %v3711 = vlaneseq
      %v3712 = vshrl.u32 %v3711, 7
      %v3713 = vsub.s32 7, %v3712
      %v3714 = vrot.slane %v1707, %v3713
      %v3715 = vlaneseq
      %v3716 = vshrl.u32 %v3715, 7
      %v3717 = vsub.s32 0, %v3716
      %v3718 = vrot.slane %v1721, %v3717
      %v3719 = vlaneseq
      %v3720 = vshrl.u32 %v3719, 7
      %v3721 = vsub.s32 1, %v3720
      %v3722 = vrot.slane %v1721, %v3721
      %v3723 = vlaneseq
      %v3724 = vshrl.u32 %v3723, 7
      %v3725 = vsub.s32 2, %v3724
      %v3726 = vrot.slane %v1721, %v3725
      %v3727 = vlaneseq
      %v3728 = vshrl.u32 %v3727, 7
      %v3729 = vsub.s32 3, %v3728
      %v3730 = vrot.slane %v1721, %v3729
      %v3731 = vlaneseq
      %v3732 = vshrl.u32 %v3731, 7
      %v3733 = vsub.s32 4, %v3732
      %v3734 = vrot.slane %v1721, %v3733
      %v3735 = vlaneseq
      %v3736 = vshrl.u32 %v3735, 7
      %v3737 = vsub.s32 5, %v3736
      %v3738 = vrot.slane %v1721, %v3737
      %v3739 = vlaneseq
      %v3740 = vshrl.u32 %v3739, 7
      %v3741 = vsub.s32 6, %v3740
      %v3742 = vrot.slane %v1721, %v3741
      %v3743 = vlaneseq
      %v3744 = vshrl.u32 %v3743, 7
      %v3745 = vsub.s32 7, %v3744
      %v3746 = vrot.slane %v1721, %v3745
      %v3747 = vlaneseq
      %v3748 = vshrl.u32 %v3747, 7
      %v3749 = vsub.s32 0, %v3748
      %v3750 = vrot.slane %v1735, %v3749
      %v3751 = vlaneseq
      %v3752 = vshrl.u32 %v3751, 7
      %v3753 = vsub.s32 1, %v3752
      %v3754 = vrot.slane %v1735, %v3753
      %v3755 = vlaneseq
      %v3756 = vshrl.u32 %v3755, 7
      %v3757 = vsub.s32 2, %v3756
      %v3758 = vrot.slane %v1735, %v3757
      %v3759 = vlaneseq
      %v3760 = vshrl.u32 %v3759, 7
      %v3761 = vsub.s32 3, %v3760
      %v3762 = vrot.slane %v1735, %v3761
      %v3763 = vlaneseq
      %v3764 = vshrl.u32 %v3763, 7
      %v3765 = vsub.s32 4, %v3764
      %v3766 = vrot.slane %v1735, %v3765
      %v3767 = vlaneseq
      %v3768 = vshrl.u32 %v3767, 7
      %v3769 = vsub.s32 5, %v3768
      %v3770 = vrot.slane %v1735, %v3769
      %v3771 = vlaneseq
      %v3772 = vshrl.u32 %v3771, 7
      %v3773 = vsub.s32 6, %v3772
      %v3774 = vrot.slane %v1735, %v3773
      %v3775 = vlaneseq
      %v3776 = vshrl.u32 %v3775, 7
      %v3777 = vsub.s32 7, %v3776
      %v3778 = vrot.slane %v1735, %v3777
      %v3779 = vlaneseq
      %v3780 = vshrl.u32 %v3779, 7
      %v3781 = vsub.s32 0, %v3780
      %v3782 = vrot.slane %v1749, %v3781
      %v3783 = vlaneseq
      %v3784 = vshrl.u32 %v3783, 7
      %v3785 = vsub.s32 1, %v3784
      %v3786 = vrot.slane %v1749, %v3785
      %v3787 = vlaneseq
      %v3788 = vshrl.u32 %v3787, 7
      %v3789 = vsub.s32 2, %v3788
      %v3790 = vrot.slane %v1749, %v3789
      %v3791 = vlaneseq
      %v3792 = vshrl.u32 %v3791, 7
      %v3793 = vsub.s32 3, %v3792
      %v3794 = vrot.slane %v1749, %v3793
      %v3795 = vlaneseq
      %v3796 = vshrl.u32 %v3795, 7
      %v3797 = vsub.s32 4, %v3796
      %v3798 = vrot.slane %v1749, %v3797
      %v3799 = vlaneseq
      %v3800 = vshrl.u32 %v3799, 7
      %v3801 = vsub.s32 5, %v3800
      %v3802 = vrot.slane %v1749, %v3801
      %v3803 = vlaneseq
      %v3804 = vshrl.u32 %v3803, 7
      %v3805 = vsub.s32 6, %v3804
      %v3806 = vrot.slane %v1749, %v3805
      %v3807 = vlaneseq
      %v3808 = vshrl.u32 %v3807, 7
      %v3809 = vsub.s32 7, %v3808
      %v3810 = vrot.slane %v1749, %v3809
      %v3811 = vlaneseq
      %v3812 = vshrl.u32 %v3811, 7
      %v3813 = vsub.s32 0, %v3812
      %v3814 = vrot.slane %v1763, %v3813
      %v3815 = vlaneseq
      %v3816 = vshrl.u32 %v3815, 7
      %v3817 = vsub.s32 1, %v3816
      %v3818 = vrot.slane %v1763, %v3817
      %v3819 = vlaneseq
      %v3820 = vshrl.u32 %v3819, 7
      %v3821 = vsub.s32 2, %v3820
      %v3822 = vrot.slane %v1763, %v3821
      %v3823 = vlaneseq
      %v3824 = vshrl.u32 %v3823, 7
      %v3825 = vsub.s32 3, %v3824
      %v3826 = vrot.slane %v1763, %v3825
      %v3827 = vlaneseq
      %v3828 = vshrl.u32 %v3827, 7
      %v3829 = vsub.s32 4, %v3828
      %v3830 = vrot.slane %v1763, %v3829
      %v3831 = vlaneseq
      %v3832 = vshrl.u32 %v3831, 7
      %v3833 = vsub.s32 5, %v3832
      %v3834 = vrot.slane %v1763, %v3833
      %v3835 = vlaneseq
      %v3836 = vshrl.u32 %v3835, 7
      %v3837 = vsub.s32 6, %v3836
      %v3838 = vrot.slane %v1763, %v3837
      %v3839 = vlaneseq
      %v3840 = vshrl.u32 %v3839, 7
      %v3841 = vsub.s32 7, %v3840
      %v3842 = vrot.slane %v1763, %v3841
      %v3843 = vlaneseq
      %v3844 = vshrl.u32 %v3843, 7
      %v3845 = vsub.s32 0, %v3844
      %v3846 = vrot.slane %v1777, %v3845
      %v3847 = vlaneseq
      %v3848 = vshrl.u32 %v3847, 7
      %v3849 = vsub.s32 1, %v3848
      %v3850 = vrot.slane %v1777, %v3849
      %v3851 = vlaneseq
      %v3852 = vshrl.u32 %v3851, 7
      %v3853 = vsub.s32 2, %v3852
      %v3854 = vrot.slane %v1777, %v3853
      %v3855 = vlaneseq
      %v3856 = vshrl.u32 %v3855, 7
      %v3857 = vsub.s32 3, %v3856
      %v3858 = vrot.slane %v1777, %v3857
      %v3859 = vlaneseq
      %v3860 = vshrl.u32 %v3859, 7
      %v3861 = vsub.s32 4, %v3860
      %v3862 = vrot.slane %v1777, %v3861
      %v3863 = vlaneseq
      %v3864 = vshrl.u32 %v3863, 7
      %v3865 = vsub.s32 5, %v3864
      %v3866 = vrot.slane %v1777, %v3865
      %v3867 = vlaneseq
      %v3868 = vshrl.u32 %v3867, 7
      %v3869 = vsub.s32 6, %v3868
      %v3870 = vrot.slane %v1777, %v3869
      %v3871 = vlaneseq
      %v3872 = vshrl.u32 %v3871, 7
      %v3873 = vsub.s32 7, %v3872
      %v3874 = vrot.slane %v1777, %v3873
      %v3875 = vlaneseq
      %v3876 = vshrl.u32 %v3875, 7
      %v3877 = vsub.s32 0, %v3876
      %v3878 = vrot.slane %v1791, %v3877
      %v3879 = vlaneseq
      %v3880 = vshrl.u32 %v3879, 7
      %v3881 = vsub.s32 1, %v3880
      %v3882 = vrot.slane %v1791, %v3881
      %v3883 = vlaneseq
      %v3884 = vshrl.u32 %v3883, 7
      %v3885 = vsub.s32 2, %v3884
      %v3886 = vrot.slane %v1791, %v3885
      %v3887 = vlaneseq
      %v3888 = vshrl.u32 %v3887, 7
      %v3889 = vsub.s32 3, %v3888
      %v3890 = vrot.slane %v1791, %v3889
      %v3891 = vlaneseq
      %v3892 = vshrl.u32 %v3891, 7
      %v3893 = vsub.s32 4, %v3892
      %v3894 = vrot.slane %v1791, %v3893
      %v3895 = vlaneseq
      %v3896 = vshrl.u32 %v3895, 7
      %v3897 = vsub.s32 5, %v3896
      %v3898 = vrot.slane %v1791, %v3897
      %v3899 = vlaneseq
      %v3900 = vshrl.u32 %v3899, 7
      %v3901 = vsub.s32 6, %v3900
      %v3902 = vrot.slane %v1791, %v3901
      %v3903 = vlaneseq
      %v3904 = vshrl.u32 %v3903, 7
      %v3905 = vsub.s32 7, %v3904
      %v3906 = vrot.slane %v1791, %v3905
      %v3907 = vlaneseq
      %v3908 = vshrl.u32 %v3907, 7
      %v3909 = vsub.s32 0, %v3908
      %v3910 = vrot.slane %v1805, %v3909
      %v3911 = vlaneseq
      %v3912 = vshrl.u32 %v3911, 7
      %v3913 = vsub.s32 1, %v3912
      %v3914 = vrot.slane %v1805, %v3913
      %v3915 = vlaneseq
      %v3916 = vshrl.u32 %v3915, 7
      %v3917 = vsub.s32 2, %v3916
      %v3918 = vrot.slane %v1805, %v3917
      %v3919 = vlaneseq
      %v3920 = vshrl.u32 %v3919, 7
      %v3921 = vsub.s32 3, %v3920
      %v3922 = vrot.slane %v1805, %v3921
      %v3923 = vlaneseq
      %v3924 = vshrl.u32 %v3923, 7
      %v3925 = vsub.s32 4, %v3924
      %v3926 = vrot.slane %v1805, %v3925
      %v3927 = vlaneseq
      %v3928 = vshrl.u32 %v3927, 7
      %v3929 = vsub.s32 5, %v3928
      %v3930 = vrot.slane %v1805, %v3929
      %v3931 = vlaneseq
      %v3932 = vshrl.u32 %v3931, 7
      %v3933 = vsub.s32 6, %v3932
      %v3934 = vrot.slane %v1805, %v3933
      %v3935 = vlaneseq
      %v3936 = vshrl.u32 %v3935, 7
      %v3937 = vsub.s32 7, %v3936
      %v3938 = vrot.slane %v1805, %v3937
      %v3939 = vlaneseq
      %v3940 = vshrl.u32 %v3939, 7
      %v3941 = vsub.s32 0, %v3940
      %v3942 = vrot.slane %v1819, %v3941
      %v3943 = vlaneseq
      %v3944 = vshrl.u32 %v3943, 7
      %v3945 = vsub.s32 1, %v3944
      %v3946 = vrot.slane %v1819, %v3945
      %v3947 = vlaneseq
      %v3948 = vshrl.u32 %v3947, 7
      %v3949 = vsub.s32 2, %v3948
      %v3950 = vrot.slane %v1819, %v3949
      %v3951 = vlaneseq
      %v3952 = vshrl.u32 %v3951, 7
      %v3953 = vsub.s32 3, %v3952
      %v3954 = vrot.slane %v1819, %v3953
      %v3955 = vlaneseq
      %v3956 = vshrl.u32 %v3955, 7
      %v3957 = vsub.s32 4, %v3956
      %v3958 = vrot.slane %v1819, %v3957
      %v3959 = vlaneseq
      %v3960 = vshrl.u32 %v3959, 7
      %v3961 = vsub.s32 5, %v3960
      %v3962 = vrot.slane %v1819, %v3961
      %v3963 = vlaneseq
      %v3964 = vshrl.u32 %v3963, 7
      %v3965 = vsub.s32 6, %v3964
      %v3966 = vrot.slane %v1819, %v3965
      %v3967 = vlaneseq
      %v3968 = vshrl.u32 %v3967, 7
      %v3969 = vsub.s32 7, %v3968
      %v3970 = vrot.slane %v1819, %v3969
      %v3971 = vlaneseq
      %v3972 = vshrl.u32 %v3971, 7
      %v3973 = vsub.s32 0, %v3972
      %v3974 = vrot.slane %v1833, %v3973
      %v3975 = vlaneseq
      %v3976 = vshrl.u32 %v3975, 7
      %v3977 = vsub.s32 1, %v3976
      %v3978 = vrot.slane %v1833, %v3977
      %v3979 = vlaneseq
      %v3980 = vshrl.u32 %v3979, 7
      %v3981 = vsub.s32 2, %v3980
      %v3982 = vrot.slane %v1833, %v3981
      %v3983 = vlaneseq
      %v3984 = vshrl.u32 %v3983, 7
      %v3985 = vsub.s32 3, %v3984
      %v3986 = vrot.slane %v1833, %v3985
      %v3987 = vlaneseq
      %v3988 = vshrl.u32 %v3987, 7
      %v3989 = vsub.s32 4, %v3988
      %v3990 = vrot.slane %v1833, %v3989
      %v3991 = vlaneseq
      %v3992 = vshrl.u32 %v3991, 7
      %v3993 = vsub.s32 5, %v3992
      %v3994 = vrot.slane %v1833, %v3993
      %v3995 = vlaneseq
      %v3996 = vshrl.u32 %v3995, 7
      %v3997 = vsub.s32 6, %v3996
      %v3998 = vrot.slane %v1833, %v3997
      %v3999 = vlaneseq
      %v4000 = vshrl.u32 %v3999, 7
      %v4001 = vsub.s32 7, %v4000
      %v4002 = vrot.slane %v1833, %v4001
      %v4003 = vlaneseq
      %v4004 = vshrl.u32 %v4003, 7
      %v4005 = vsub.s32 0, %v4004
      %v4006 = vrot.slane %v1847, %v4005
      %v4007 = vlaneseq
      %v4008 = vshrl.u32 %v4007, 7
      %v4009 = vsub.s32 1, %v4008
      %v4010 = vrot.slane %v1847, %v4009
      %v4011 = vlaneseq
      %v4012 = vshrl.u32 %v4011, 7
      %v4013 = vsub.s32 2, %v4012
      %v4014 = vrot.slane %v1847, %v4013
      %v4015 = vlaneseq
      %v4016 = vshrl.u32 %v4015, 7
      %v4017 = vsub.s32 3, %v4016
      %v4018 = vrot.slane %v1847, %v4017
      %v4019 = vlaneseq
      %v4020 = vshrl.u32 %v4019, 7
      %v4021 = vsub.s32 4, %v4020
      %v4022 = vrot.slane %v1847, %v4021
      %v4023 = vlaneseq
      %v4024 = vshrl.u32 %v4023, 7
      %v4025 = vsub.s32 5, %v4024
      %v4026 = vrot.slane %v1847, %v4025
      %v4027 = vlaneseq
      %v4028 = vshrl.u32 %v4027, 7
      %v4029 = vsub.s32 6, %v4028
      %v4030 = vrot.slane %v1847, %v4029
      %v4031 = vlaneseq
      %v4032 = vshrl.u32 %v4031, 7
      %v4033 = vsub.s32 7, %v4032
      %v4034 = vrot.slane %v1847, %v4033
      %v4035 = vlaneseq
      %v4036 = vshrl.u32 %v4035, 7
      %v4037 = vsub.s32 0, %v4036
      %v4038 = vrot.slane %v1861, %v4037
      %v4039 = vlaneseq
      %v4040 = vshrl.u32 %v4039, 7
      %v4041 = vsub.s32 1, %v4040
      %v4042 = vrot.slane %v1861, %v4041
      %v4043 = vlaneseq
      %v4044 = vshrl.u32 %v4043, 7
      %v4045 = vsub.s32 2, %v4044
      %v4046 = vrot.slane %v1861, %v4045
      %v4047 = vlaneseq
      %v4048 = vshrl.u32 %v4047, 7
      %v4049 = vsub.s32 3, %v4048
      %v4050 = vrot.slane %v1861, %v4049
      %v4051 = vlaneseq
      %v4052 = vshrl.u32 %v4051, 7
      %v4053 = vsub.s32 4, %v4052
      %v4054 = vrot.slane %v1861, %v4053
      %v4055 = vlaneseq
      %v4056 = vshrl.u32 %v4055, 7
      %v4057 = vsub.s32 5, %v4056
      %v4058 = vrot.slane %v1861, %v4057
      %v4059 = vlaneseq
      %v4060 = vshrl.u32 %v4059, 7
      %v4061 = vsub.s32 6, %v4060
      %v4062 = vrot.slane %v1861, %v4061
      %v4063 = vlaneseq
      %v4064 = vshrl.u32 %v4063, 7
      %v4065 = vsub.s32 7, %v4064
      %v4066 = vrot.slane %v1861, %v4065
      %v4067 = vlaneseq
      %v4068 = vshrl.u32 %v4067, 7
      %v4069 = vsub.s32 0, %v4068
      %v4070 = vrot.slane %v1875, %v4069
      %v4071 = vlaneseq
      %v4072 = vshrl.u32 %v4071, 7
      %v4073 = vsub.s32 1, %v4072
      %v4074 = vrot.slane %v1875, %v4073
      %v4075 = vlaneseq
      %v4076 = vshrl.u32 %v4075, 7
      %v4077 = vsub.s32 2, %v4076
      %v4078 = vrot.slane %v1875, %v4077
      %v4079 = vlaneseq
      %v4080 = vshrl.u32 %v4079, 7
      %v4081 = vsub.s32 3, %v4080
      %v4082 = vrot.slane %v1875, %v4081
      %v4083 = vlaneseq
      %v4084 = vshrl.u32 %v4083, 7
      %v4085 = vsub.s32 4, %v4084
      %v4086 = vrot.slane %v1875, %v4085
      %v4087 = vlaneseq
      %v4088 = vshrl.u32 %v4087, 7
      %v4089 = vsub.s32 5, %v4088
      %v4090 = vrot.slane %v1875, %v4089
      %v4091 = vlaneseq
      %v4092 = vshrl.u32 %v4091, 7
      %v4093 = vsub.s32 6, %v4092
      %v4094 = vrot.slane %v1875, %v4093
      %v4095 = vlaneseq
      %v4096 = vshrl.u32 %v4095, 7
      %v4097 = vsub.s32 7, %v4096
      %v4098 = vrot.slane %v1875, %v4097
      %v4099 = vlaneseq
      %v4100 = vshrl.u32 %v4099, 7
      %v4101 = vsub.s32 0, %v4100
      %v4102 = vrot.slane %v1889, %v4101
      %v4103 = vlaneseq
      %v4104 = vshrl.u32 %v4103, 7
      %v4105 = vsub.s32 1, %v4104
      %v4106 = vrot.slane %v1889, %v4105
      %v4107 = vlaneseq
      %v4108 = vshrl.u32 %v4107, 7
      %v4109 = vsub.s32 2, %v4108
      %v4110 = vrot.slane %v1889, %v4109
      %v4111 = vlaneseq
      %v4112 = vshrl.u32 %v4111, 7
      %v4113 = vsub.s32 3, %v4112
      %v4114 = vrot.slane %v1889, %v4113
      %v4115 = vlaneseq
      %v4116 = vshrl.u32 %v4115, 7
      %v4117 = vsub.s32 4, %v4116
      %v4118 = vrot.slane %v1889, %v4117
      %v4119 = vlaneseq
      %v4120 = vshrl.u32 %v4119, 7
      %v4121 = vsub.s32 5, %v4120
      %v4122 = vrot.slane %v1889, %v4121
      %v4123 = vlaneseq
      %v4124 = vshrl.u32 %v4123, 7
      %v4125 = vsub.s32 6, %v4124
      %v4126 = vrot.slane %v1889, %v4125
      %v4127 = vlaneseq
      %v4128 = vshrl.u32 %v4127, 7
      %v4129 = vsub.s32 7, %v4128
      %v4130 = vrot.slane %v1889, %v4129
      %v4131 = vlaneseq
      %v4132 = vshrl.u32 %v4131, 7
      %v4133 = vsub.s32 0, %v4132
      %v4134 = vrot.slane %v1903, %v4133
      %v4135 = vlaneseq
      %v4136 = vshrl.u32 %v4135, 7
      %v4137 = vsub.s32 1, %v4136
      %v4138 = vrot.slane %v1903, %v4137
      %v4139 = vlaneseq
      %v4140 = vshrl.u32 %v4139, 7
      %v4141 = vsub.s32 2, %v4140
      %v4142 = vrot.slane %v1903, %v4141
      %v4143 = vlaneseq
      %v4144 = vshrl.u32 %v4143, 7
      %v4145 = vsub.s32 3, %v4144
      %v4146 = vrot.slane %v1903, %v4145
      %v4147 = vlaneseq
      %v4148 = vshrl.u32 %v4147, 7
      %v4149 = vsub.s32 4, %v4148
      %v4150 = vrot.slane %v1903, %v4149
      %v4151 = vlaneseq
      %v4152 = vshrl.u32 %v4151, 7
      %v4153 = vsub.s32 5, %v4152
      %v4154 = vrot.slane %v1903, %v4153
      %v4155 = vlaneseq
      %v4156 = vshrl.u32 %v4155, 7
      %v4157 = vsub.s32 6, %v4156
      %v4158 = vrot.slane %v1903, %v4157
      %v4159 = vlaneseq
      %v4160 = vshrl.u32 %v4159, 7
      %v4161 = vsub.s32 7, %v4160
      %v4162 = vrot.slane %v1903, %v4161
      %v4163 = vlaneseq
      %v4164 = vshrl.u32 %v4163, 7
      %v4165 = vsub.s32 0, %v4164
      %v4166 = vrot.slane %v1917, %v4165
      %v4167 = vlaneseq
      %v4168 = vshrl.u32 %v4167, 7
      %v4169 = vsub.s32 1, %v4168
      %v4170 = vrot.slane %v1917, %v4169
      %v4171 = vlaneseq
      %v4172 = vshrl.u32 %v4171, 7
      %v4173 = vsub.s32 2, %v4172
      %v4174 = vrot.slane %v1917, %v4173
      %v4175 = vlaneseq
      %v4176 = vshrl.u32 %v4175, 7
      %v4177 = vsub.s32 3, %v4176
      %v4178 = vrot.slane %v1917, %v4177
      %v4179 = vlaneseq
      %v4180 = vshrl.u32 %v4179, 7
      %v4181 = vsub.s32 4, %v4180
      %v4182 = vrot.slane %v1917, %v4181
      %v4183 = vlaneseq
      %v4184 = vshrl.u32 %v4183, 7
      %v4185 = vsub.s32 5, %v4184
      %v4186 = vrot.slane %v1917, %v4185
      %v4187 = vlaneseq
      %v4188 = vshrl.u32 %v4187, 7
      %v4189 = vsub.s32 6, %v4188
      %v4190 = vrot.slane %v1917, %v4189
      %v4191 = vlaneseq
      %v4192 = vshrl.u32 %v4191, 7
      %v4193 = vsub.s32 7, %v4192
      %v4194 = vrot.slane %v1917, %v4193
      %v4195 = vlaneseq
      %v4196 = vshrl.u32 %v4195, 7
      %v4197 = vsub.s32 0, %v4196
      %v4198 = vrot.slane %v1931, %v4197
      %v4199 = vlaneseq
      %v4200 = vshrl.u32 %v4199, 7
      %v4201 = vsub.s32 1, %v4200
      %v4202 = vrot.slane %v1931, %v4201
      %v4203 = vlaneseq
      %v4204 = vshrl.u32 %v4203, 7
      %v4205 = vsub.s32 2, %v4204
      %v4206 = vrot.slane %v1931, %v4205
      %v4207 = vlaneseq
      %v4208 = vshrl.u32 %v4207, 7
      %v4209 = vsub.s32 3, %v4208
      %v4210 = vrot.slane %v1931, %v4209
      %v4211 = vlaneseq
      %v4212 = vshrl.u32 %v4211, 7
      %v4213 = vsub.s32 4, %v4212
      %v4214 = vrot.slane %v1931, %v4213
      %v4215 = vlaneseq
      %v4216 = vshrl.u32 %v4215, 7
      %v4217 = vsub.s32 5, %v4216
      %v4218 = vrot.slane %v1931, %v4217
      %v4219 = vlaneseq
      %v4220 = vshrl.u32 %v4219, 7
      %v4221 = vsub.s32 6, %v4220
      %v4222 = vrot.slane %v1931, %v4221
      %v4223 = vlaneseq
      %v4224 = vshrl.u32 %v4223, 7
      %v4225 = vsub.s32 7, %v4224
      %v4226 = vrot.slane %v1931, %v4225
      %v4227 = vlaneseq
      %v4228 = vshrl.u32 %v4227, 7
      %v4229 = vsub.s32 0, %v4228
      %v4230 = vrot.slane %v1945, %v4229
      %v4231 = vlaneseq
      %v4232 = vshrl.u32 %v4231, 7
      %v4233 = vsub.s32 1, %v4232
      %v4234 = vrot.slane %v1945, %v4233
      %v4235 = vlaneseq
      %v4236 = vshrl.u32 %v4235, 7
      %v4237 = vsub.s32 2, %v4236
      %v4238 = vrot.slane %v1945, %v4237
      %v4239 = vlaneseq
      %v4240 = vshrl.u32 %v4239, 7
      %v4241 = vsub.s32 3, %v4240
      %v4242 = vrot.slane %v1945, %v4241
      %v4243 = vlaneseq
      %v4244 = vshrl.u32 %v4243, 7
      %v4245 = vsub.s32 4, %v4244
      %v4246 = vrot.slane %v1945, %v4245
      %v4247 = vlaneseq
      %v4248 = vshrl.u32 %v4247, 7
      %v4249 = vsub.s32 5, %v4248
      %v4250 = vrot.slane %v1945, %v4249
      %v4251 = vlaneseq
      %v4252 = vshrl.u32 %v4251, 7
      %v4253 = vsub.s32 6, %v4252
      %v4254 = vrot.slane %v1945, %v4253
      %v4255 = vlaneseq
      %v4256 = vshrl.u32 %v4255, 7
      %v4257 = vsub.s32 7, %v4256
      %v4258 = vrot.slane %v1945, %v4257
      %v4259 = vlaneseq
      %v4260 = vshrl.u32 %v4259, 7
      %v4261 = vsub.s32 0, %v4260
      %v4262 = vrot.slane %v1959, %v4261
      %v4263 = vlaneseq
      %v4264 = vshrl.u32 %v4263, 7
      %v4265 = vsub.s32 1, %v4264
      %v4266 = vrot.slane %v1959, %v4265
      %v4267 = vlaneseq
      %v4268 = vshrl.u32 %v4267, 7
      %v4269 = vsub.s32 2, %v4268
      %v4270 = vrot.slane %v1959, %v4269
      %v4271 = vlaneseq
      %v4272 = vshrl.u32 %v4271, 7
      %v4273 = vsub.s32 3, %v4272
      %v4274 = vrot.slane %v1959, %v4273
      %v4275 = vlaneseq
      %v4276 = vshrl.u32 %v4275, 7
      %v4277 = vsub.s32 4, %v4276
      %v4278 = vrot.slane %v1959, %v4277
      %v4279 = vlaneseq
      %v4280 = vshrl.u32 %v4279, 7
      %v4281 = vsub.s32 5, %v4280
      %v4282 = vrot.slane %v1959, %v4281
      %v4283 = vlaneseq
      %v4284 = vshrl.u32 %v4283, 7
      %v4285 = vsub.s32 6, %v4284
      %v4286 = vrot.slane %v1959, %v4285
      %v4287 = vlaneseq
      %v4288 = vshrl.u32 %v4287, 7
      %v4289 = vsub.s32 7, %v4288
      %v4290 = vrot.slane %v1959, %v4289
      %v4291 = vlaneseq
      %v4292 = vshrl.u32 %v4291, 7
      %v4293 = vsub.s32 0, %v4292
      %v4294 = vrot.slane %v1973, %v4293
      %v4295 = vlaneseq
      %v4296 = vshrl.u32 %v4295, 7
      %v4297 = vsub.s32 1, %v4296
      %v4298 = vrot.slane %v1973, %v4297
      %v4299 = vlaneseq
      %v4300 = vshrl.u32 %v4299, 7
      %v4301 = vsub.s32 2, %v4300
      %v4302 = vrot.slane %v1973, %v4301
      %v4303 = vlaneseq
      %v4304 = vshrl.u32 %v4303, 7
      %v4305 = vsub.s32 3, %v4304
      %v4306 = vrot.slane %v1973, %v4305
      %v4307 = vlaneseq
      %v4308 = vshrl.u32 %v4307, 7
      %v4309 = vsub.s32 4, %v4308
      %v4310 = vrot.slane %v1973, %v4309
      %v4311 = vlaneseq
      %v4312 = vshrl.u32 %v4311, 7
      %v4313 = vsub.s32 5, %v4312
      %v4314 = vrot.slane %v1973, %v4313
      %v4315 = vlaneseq
      %v4316 = vshrl.u32 %v4315, 7
      %v4317 = vsub.s32 6, %v4316
      %v4318 = vrot.slane %v1973, %v4317
      %v4319 = vlaneseq
      %v4320 = vshrl.u32 %v4319, 7
      %v4321 = vsub.s32 7, %v4320
      %v4322 = vrot.slane %v1973, %v4321
      %v4323 = vlaneseq
      %v4324 = vshrl.u32 %v4323, 7
      %v4325 = vsub.s32 0, %v4324
      %v4326 = vrot.slane %v1987, %v4325
      %v4327 = vlaneseq
      %v4328 = vshrl.u32 %v4327, 7
      %v4329 = vsub.s32 1, %v4328
      %v4330 = vrot.slane %v1987, %v4329
      %v4331 = vlaneseq
      %v4332 = vshrl.u32 %v4331, 7
      %v4333 = vsub.s32 2, %v4332
      %v4334 = vrot.slane %v1987, %v4333
      %v4335 = vlaneseq
      %v4336 = vshrl.u32 %v4335, 7
      %v4337 = vsub.s32 3, %v4336
      %v4338 = vrot.slane %v1987, %v4337
      %v4339 = vlaneseq
      %v4340 = vshrl.u32 %v4339, 7
      %v4341 = vsub.s32 4, %v4340
      %v4342 = vrot.slane %v1987, %v4341
      %v4343 = vlaneseq
      %v4344 = vshrl.u32 %v4343, 7
      %v4345 = vsub.s32 5, %v4344
      %v4346 = vrot.slane %v1987, %v4345
      %v4347 = vlaneseq
      %v4348 = vshrl.u32 %v4347, 7
      %v4349 = vsub.s32 6, %v4348
      %v4350 = vrot.slane %v1987, %v4349
      %v4351 = vlaneseq
      %v4352 = vshrl.u32 %v4351, 7
      %v4353 = vsub.s32 7, %v4352
      %v4354 = vrot.slane %v1987, %v4353
      %v4355 = vlaneseq
      %v4356 = vshrl.u32 %v4355, 7
      %v4357 = vsub.s32 0, %v4356
      %v4358 = vrot.slane %v2001, %v4357
      %v4359 = vlaneseq
      %v4360 = vshrl.u32 %v4359, 7
      %v4361 = vsub.s32 1, %v4360
      %v4362 = vrot.slane %v2001, %v4361
      %v4363 = vlaneseq
      %v4364 = vshrl.u32 %v4363, 7
      %v4365 = vsub.s32 2, %v4364
      %v4366 = vrot.slane %v2001, %v4365
      %v4367 = vlaneseq
      %v4368 = vshrl.u32 %v4367, 7
      %v4369 = vsub.s32 3, %v4368
      %v4370 = vrot.slane %v2001, %v4369
      %v4371 = vlaneseq
      %v4372 = vshrl.u32 %v4371, 7
      %v4373 = vsub.s32 4, %v4372
      %v4374 = vrot.slane %v2001, %v4373
      %v4375 = vlaneseq
      %v4376 = vshrl.u32 %v4375, 7
      %v4377 = vsub.s32 5, %v4376
      %v4378 = vrot.slane %v2001, %v4377
      %v4379 = vlaneseq
      %v4380 = vshrl.u32 %v4379, 7
      %v4381 = vsub.s32 6, %v4380
      %v4382 = vrot.slane %v2001, %v4381
      %v4383 = vlaneseq
      %v4384 = vshrl.u32 %v4383, 7
      %v4385 = vsub.s32 7, %v4384
      %v4386 = vrot.slane %v2001, %v4385
      %v4387 = vlaneseq
      %v4388 = vshrl.u32 %v4387, 7
      %v4389 = vsub.s32 0, %v4388
      %v4390 = vrot.slane %v2015, %v4389
      %v4391 = vlaneseq
      %v4392 = vshrl.u32 %v4391, 7
      %v4393 = vsub.s32 1, %v4392
      %v4394 = vrot.slane %v2015, %v4393
      %v4395 = vlaneseq
      %v4396 = vshrl.u32 %v4395, 7
      %v4397 = vsub.s32 2, %v4396
      %v4398 = vrot.slane %v2015, %v4397
      %v4399 = vlaneseq
      %v4400 = vshrl.u32 %v4399, 7
      %v4401 = vsub.s32 3, %v4400
      %v4402 = vrot.slane %v2015, %v4401
      %v4403 = vlaneseq
      %v4404 = vshrl.u32 %v4403, 7
      %v4405 = vsub.s32 4, %v4404
      %v4406 = vrot.slane %v2015, %v4405
      %v4407 = vlaneseq
      %v4408 = vshrl.u32 %v4407, 7
      %v4409 = vsub.s32 5, %v4408
      %v4410 = vrot.slane %v2015, %v4409
      %v4411 = vlaneseq
      %v4412 = vshrl.u32 %v4411, 7
      %v4413 = vsub.s32 6, %v4412
      %v4414 = vrot.slane %v2015, %v4413
      %v4415 = vlaneseq
      %v4416 = vshrl.u32 %v4415, 7
      %v4417 = vsub.s32 7, %v4416
      %v4418 = vrot.slane %v2015, %v4417
      %v4419 = vlaneseq
      %v4420 = vshrl.u32 %v4419, 7
      %v4421 = vsub.s32 0, %v4420
      %v4422 = vrot.slane %v2029, %v4421
      %v4423 = vlaneseq
      %v4424 = vshrl.u32 %v4423, 7
      %v4425 = vsub.s32 1, %v4424
      %v4426 = vrot.slane %v2029, %v4425
      %v4427 = vlaneseq
      %v4428 = vshrl.u32 %v4427, 7
      %v4429 = vsub.s32 2, %v4428
      %v4430 = vrot.slane %v2029, %v4429
      %v4431 = vlaneseq
      %v4432 = vshrl.u32 %v4431, 7
      %v4433 = vsub.s32 3, %v4432
      %v4434 = vrot.slane %v2029, %v4433
      %v4435 = vlaneseq
      %v4436 = vshrl.u32 %v4435, 7
      %v4437 = vsub.s32 4, %v4436
      %v4438 = vrot.slane %v2029, %v4437
      %v4439 = vlaneseq
      %v4440 = vshrl.u32 %v4439, 7
      %v4441 = vsub.s32 5, %v4440
      %v4442 = vrot.slane %v2029, %v4441
      %v4443 = vlaneseq
      %v4444 = vshrl.u32 %v4443, 7
      %v4445 = vsub.s32 6, %v4444
      %v4446 = vrot.slane %v2029, %v4445
      %v4447 = vlaneseq
      %v4448 = vshrl.u32 %v4447, 7
      %v4449 = vsub.s32 7, %v4448
      %v4450 = vrot.slane %v2029, %v4449
      %v4451 = vlaneseq
      %v4452 = vshrl.u32 %v4451, 7
      %v4453 = vsub.s32 0, %v4452
      %v4454 = vrot.slane %v2043, %v4453
      %v4455 = vlaneseq
      %v4456 = vshrl.u32 %v4455, 7
      %v4457 = vsub.s32 1, %v4456
      %v4458 = vrot.slane %v2043, %v4457
      %v4459 = vlaneseq
      %v4460 = vshrl.u32 %v4459, 7
      %v4461 = vsub.s32 2, %v4460
      %v4462 = vrot.slane %v2043, %v4461
      %v4463 = vlaneseq
      %v4464 = vshrl.u32 %v4463, 7
      %v4465 = vsub.s32 3, %v4464
      %v4466 = vrot.slane %v2043, %v4465
      %v4467 = vlaneseq
      %v4468 = vshrl.u32 %v4467, 7
      %v4469 = vsub.s32 4, %v4468
      %v4470 = vrot.slane %v2043, %v4469
      %v4471 = vlaneseq
      %v4472 = vshrl.u32 %v4471, 7
      %v4473 = vsub.s32 5, %v4472
      %v4474 = vrot.slane %v2043, %v4473
      %v4475 = vlaneseq
      %v4476 = vshrl.u32 %v4475, 7
      %v4477 = vsub.s32 6, %v4476
      %v4478 = vrot.slane %v2043, %v4477
      %v4479 = vlaneseq
      %v4480 = vshrl.u32 %v4479, 7
      %v4481 = vsub.s32 7, %v4480
      %v4482 = vrot.slane %v2043, %v4481
      %v4483 = vlaneseq
      %v4484 = vshrl.u32 %v4483, 7
      %v4485 = vsub.s32 0, %v4484
      %v4486 = vrot.slane %v2057, %v4485
      %v4487 = vlaneseq
      %v4488 = vshrl.u32 %v4487, 7
      %v4489 = vsub.s32 1, %v4488
      %v4490 = vrot.slane %v2057, %v4489
      %v4491 = vlaneseq
      %v4492 = vshrl.u32 %v4491, 7
      %v4493 = vsub.s32 2, %v4492
      %v4494 = vrot.slane %v2057, %v4493
      %v4495 = vlaneseq
      %v4496 = vshrl.u32 %v4495, 7
      %v4497 = vsub.s32 3, %v4496
      %v4498 = vrot.slane %v2057, %v4497
      %v4499 = vlaneseq
      %v4500 = vshrl.u32 %v4499, 7
      %v4501 = vsub.s32 4, %v4500
      %v4502 = vrot.slane %v2057, %v4501
      %v4503 = vlaneseq
      %v4504 = vshrl.u32 %v4503, 7
      %v4505 = vsub.s32 5, %v4504
      %v4506 = vrot.slane %v2057, %v4505
      %v4507 = vlaneseq
      %v4508 = vshrl.u32 %v4507, 7
      %v4509 = vsub.s32 6, %v4508
      %v4510 = vrot.slane %v2057, %v4509
      %v4511 = vlaneseq
      %v4512 = vshrl.u32 %v4511, 7
      %v4513 = vsub.s32 7, %v4512
      %v4514 = vrot.slane %v2057, %v4513
      %v4515 = vlaneseq
      %v4516 = vshrl.u32 %v4515, 7
      %v4517 = vsub.s32 0, %v4516
      %v4518 = vrot.slane %v2071, %v4517
      %v4519 = vlaneseq
      %v4520 = vshrl.u32 %v4519, 7
      %v4521 = vsub.s32 1, %v4520
      %v4522 = vrot.slane %v2071, %v4521
      %v4523 = vlaneseq
      %v4524 = vshrl.u32 %v4523, 7
      %v4525 = vsub.s32 2, %v4524
      %v4526 = vrot.slane %v2071, %v4525
      %v4527 = vlaneseq
      %v4528 = vshrl.u32 %v4527, 7
      %v4529 = vsub.s32 3, %v4528
      %v4530 = vrot.slane %v2071, %v4529
      %v4531 = vlaneseq
      %v4532 = vshrl.u32 %v4531, 7
      %v4533 = vsub.s32 4, %v4532
      %v4534 = vrot.slane %v2071, %v4533
      %v4535 = vlaneseq
      %v4536 = vshrl.u32 %v4535, 7
      %v4537 = vsub.s32 5, %v4536
      %v4538 = vrot.slane %v2071, %v4537
      %v4539 = vlaneseq
      %v4540 = vshrl.u32 %v4539, 7
      %v4541 = vsub.s32 6, %v4540
      %v4542 = vrot.slane %v2071, %v4541
      %v4543 = vlaneseq
      %v4544 = vshrl.u32 %v4543, 7
      %v4545 = vsub.s32 7, %v4544
      %v4546 = vrot.slane %v2071, %v4545
      %v4547 = vlaneseq
      %v4548 = vshrl.u32 %v4547, 7
      %v4549 = vsub.s32 0, %v4548
      %v4550 = vrot.slane %v2085, %v4549
      %v4551 = vlaneseq
      %v4552 = vshrl.u32 %v4551, 7
      %v4553 = vsub.s32 1, %v4552
      %v4554 = vrot.slane %v2085, %v4553
      %v4555 = vlaneseq
      %v4556 = vshrl.u32 %v4555, 7
      %v4557 = vsub.s32 2, %v4556
      %v4558 = vrot.slane %v2085, %v4557
      %v4559 = vlaneseq
      %v4560 = vshrl.u32 %v4559, 7
      %v4561 = vsub.s32 3, %v4560
      %v4562 = vrot.slane %v2085, %v4561
      %v4563 = vlaneseq
      %v4564 = vshrl.u32 %v4563, 7
      %v4565 = vsub.s32 4, %v4564
      %v4566 = vrot.slane %v2085, %v4565
      %v4567 = vlaneseq
      %v4568 = vshrl.u32 %v4567, 7
      %v4569 = vsub.s32 5, %v4568
      %v4570 = vrot.slane %v2085, %v4569
      %v4571 = vlaneseq
      %v4572 = vshrl.u32 %v4571, 7
      %v4573 = vsub.s32 6, %v4572
      %v4574 = vrot.slane %v2085, %v4573
      %v4575 = vlaneseq
      %v4576 = vshrl.u32 %v4575, 7
      %v4577 = vsub.s32 7, %v4576
      %v4578 = vrot.slane %v2085, %v4577
      %v4579 = vlaneseq
      %v4580 = vshrl.u32 %v4579, 7
      %v4581 = vsub.s32 0, %v4580
      %v4582 = vrot.slane %v2099, %v4581
      %v4583 = vlaneseq
      %v4584 = vshrl.u32 %v4583, 7
      %v4585 = vsub.s32 1, %v4584
      %v4586 = vrot.slane %v2099, %v4585
      %v4587 = vlaneseq
      %v4588 = vshrl.u32 %v4587, 7
      %v4589 = vsub.s32 2, %v4588
      %v4590 = vrot.slane %v2099, %v4589
      %v4591 = vlaneseq
      %v4592 = vshrl.u32 %v4591, 7
      %v4593 = vsub.s32 3, %v4592
      %v4594 = vrot.slane %v2099, %v4593
      %v4595 = vlaneseq
      %v4596 = vshrl.u32 %v4595, 7
      %v4597 = vsub.s32 4, %v4596
      %v4598 = vrot.slane %v2099, %v4597
      %v4599 = vlaneseq
      %v4600 = vshrl.u32 %v4599, 7
      %v4601 = vsub.s32 5, %v4600
      %v4602 = vrot.slane %v2099, %v4601
      %v4603 = vlaneseq
      %v4604 = vshrl.u32 %v4603, 7
      %v4605 = vsub.s32 6, %v4604
      %v4606 = vrot.slane %v2099, %v4605
      %v4607 = vlaneseq
      %v4608 = vshrl.u32 %v4607, 7
      %v4609 = vsub.s32 7, %v4608
      %v4610 = vrot.slane %v2099, %v4609
      %v4611 = vlaneseq
      %v4612 = vshrl.u32 %v4611, 7
      %v4613 = vsub.s32 0, %v4612
      %v4614 = vrot.slane %v2113, %v4613
      %v4615 = vlaneseq
      %v4616 = vshrl.u32 %v4615, 7
      %v4617 = vsub.s32 1, %v4616
      %v4618 = vrot.slane %v2113, %v4617
      %v4619 = vlaneseq
      %v4620 = vshrl.u32 %v4619, 7
      %v4621 = vsub.s32 2, %v4620
      %v4622 = vrot.slane %v2113, %v4621
      %v4623 = vlaneseq
      %v4624 = vshrl.u32 %v4623, 7
      %v4625 = vsub.s32 3, %v4624
      %v4626 = vrot.slane %v2113, %v4625
      %v4627 = vlaneseq
      %v4628 = vshrl.u32 %v4627, 7
      %v4629 = vsub.s32 4, %v4628
      %v4630 = vrot.slane %v2113, %v4629
      %v4631 = vlaneseq
      %v4632 = vshrl.u32 %v4631, 7
      %v4633 = vsub.s32 5, %v4632
      %v4634 = vrot.slane %v2113, %v4633
      %v4635 = vlaneseq
      %v4636 = vshrl.u32 %v4635, 7
      %v4637 = vsub.s32 6, %v4636
      %v4638 = vrot.slane %v2113, %v4637
      %v4639 = vlaneseq
      %v4640 = vshrl.u32 %v4639, 7
      %v4641 = vsub.s32 7, %v4640
      %v4642 = vrot.slane %v2113, %v4641
      %v4643 = vlaneseq
      %v4644 = vshrl.u32 %v4643, 7
      %v4645 = vsub.s32 0, %v4644
      %v4646 = vrot.slane %v2127, %v4645
      %v4647 = vlaneseq
      %v4648 = vshrl.u32 %v4647, 7
      %v4649 = vsub.s32 1, %v4648
      %v4650 = vrot.slane %v2127, %v4649
      %v4651 = vlaneseq
      %v4652 = vshrl.u32 %v4651, 7
      %v4653 = vsub.s32 2, %v4652
      %v4654 = vrot.slane %v2127, %v4653
      %v4655 = vlaneseq
      %v4656 = vshrl.u32 %v4655, 7
      %v4657 = vsub.s32 3, %v4656
      %v4658 = vrot.slane %v2127, %v4657
      %v4659 = vlaneseq
      %v4660 = vshrl.u32 %v4659, 7
      %v4661 = vsub.s32 4, %v4660
      %v4662 = vrot.slane %v2127, %v4661
      %v4663 = vlaneseq
      %v4664 = vshrl.u32 %v4663, 7
      %v4665 = vsub.s32 5, %v4664
      %v4666 = vrot.slane %v2127, %v4665
      %v4667 = vlaneseq
      %v4668 = vshrl.u32 %v4667, 7
      %v4669 = vsub.s32 6, %v4668
      %v4670 = vrot.slane %v2127, %v4669
      %v4671 = vlaneseq
      %v4672 = vshrl.u32 %v4671, 7
      %v4673 = vsub.s32 7, %v4672
      %v4674 = vrot.slane %v2127, %v4673
      %v4675 = vlaneseq
      %v4676 = vshrl.u32 %v4675, 7
      %v4677 = vsub.s32 0, %v4676
      %v4678 = vrot.slane %v2141, %v4677
      %v4679 = vlaneseq
      %v4680 = vshrl.u32 %v4679, 7
      %v4681 = vsub.s32 1, %v4680
      %v4682 = vrot.slane %v2141, %v4681
      %v4683 = vlaneseq
      %v4684 = vshrl.u32 %v4683, 7
      %v4685 = vsub.s32 2, %v4684
      %v4686 = vrot.slane %v2141, %v4685
      %v4687 = vlaneseq
      %v4688 = vshrl.u32 %v4687, 7
      %v4689 = vsub.s32 3, %v4688
      %v4690 = vrot.slane %v2141, %v4689
      %v4691 = vlaneseq
      %v4692 = vshrl.u32 %v4691, 7
      %v4693 = vsub.s32 4, %v4692
      %v4694 = vrot.slane %v2141, %v4693
      %v4695 = vlaneseq
      %v4696 = vshrl.u32 %v4695, 7
      %v4697 = vsub.s32 5, %v4696
      %v4698 = vrot.slane %v2141, %v4697
      %v4699 = vlaneseq
      %v4700 = vshrl.u32 %v4699, 7
      %v4701 = vsub.s32 6, %v4700
      %v4702 = vrot.slane %v2141, %v4701
      %v4703 = vlaneseq
      %v4704 = vshrl.u32 %v4703, 7
      %v4705 = vsub.s32 7, %v4704
      %v4706 = vrot.slane %v2141, %v4705
      %v4707 = vlaneseq
      %v4708 = vshrl.u32 %v4707, 7
      %v4709 = vsub.s32 0, %v4708
      %v4710 = vrot.slane %v2155, %v4709
      %v4711 = vlaneseq
      %v4712 = vshrl.u32 %v4711, 7
      %v4713 = vsub.s32 1, %v4712
      %v4714 = vrot.slane %v2155, %v4713
      %v4715 = vlaneseq
      %v4716 = vshrl.u32 %v4715, 7
      %v4717 = vsub.s32 2, %v4716
      %v4718 = vrot.slane %v2155, %v4717
      %v4719 = vlaneseq
      %v4720 = vshrl.u32 %v4719, 7
      %v4721 = vsub.s32 3, %v4720
      %v4722 = vrot.slane %v2155, %v4721
      %v4723 = vlaneseq
      %v4724 = vshrl.u32 %v4723, 7
      %v4725 = vsub.s32 4, %v4724
      %v4726 = vrot.slane %v2155, %v4725
      %v4727 = vlaneseq
      %v4728 = vshrl.u32 %v4727, 7
      %v4729 = vsub.s32 5, %v4728
      %v4730 = vrot.slane %v2155, %v4729
      %v4731 = vlaneseq
      %v4732 = vshrl.u32 %v4731, 7
      %v4733 = vsub.s32 6, %v4732
      %v4734 = vrot.slane %v2155, %v4733
      %v4735 = vlaneseq
      %v4736 = vshrl.u32 %v4735, 7
      %v4737 = vsub.s32 7, %v4736
      %v4738 = vrot.slane %v2155, %v4737
      %v4739 = vlaneseq
      %v4740 = vshrl.u32 %v4739, 7
      %v4741 = vsub.s32 0, %v4740
      %v4742 = vrot.slane %v2169, %v4741
      %v4743 = vlaneseq
      %v4744 = vshrl.u32 %v4743, 7
      %v4745 = vsub.s32 1, %v4744
      %v4746 = vrot.slane %v2169, %v4745
      %v4747 = vlaneseq
      %v4748 = vshrl.u32 %v4747, 7
      %v4749 = vsub.s32 2, %v4748
      %v4750 = vrot.slane %v2169, %v4749
      %v4751 = vlaneseq
      %v4752 = vshrl.u32 %v4751, 7
      %v4753 = vsub.s32 3, %v4752
      %v4754 = vrot.slane %v2169, %v4753
      %v4755 = vlaneseq
      %v4756 = vshrl.u32 %v4755, 7
      %v4757 = vsub.s32 4, %v4756
      %v4758 = vrot.slane %v2169, %v4757
      %v4759 = vlaneseq
      %v4760 = vshrl.u32 %v4759, 7
      %v4761 = vsub.s32 5, %v4760
      %v4762 = vrot.slane %v2169, %v4761
      %v4763 = vlaneseq
      %v4764 = vshrl.u32 %v4763, 7
      %v4765 = vsub.s32 6, %v4764
      %v4766 = vrot.slane %v2169, %v4765
      %v4767 = vlaneseq
      %v4768 = vshrl.u32 %v4767, 7
      %v4769 = vsub.s32 7, %v4768
      %v4770 = vrot.slane %v2169, %v4769
      %v4771 = vlaneseq
      %v4772 = vshrl.u32 %v4771, 7
      %v4773 = vsub.s32 0, %v4772
      %v4774 = vrot.slane %v2183, %v4773
      %v4775 = vlaneseq
      %v4776 = vshrl.u32 %v4775, 7
      %v4777 = vsub.s32 1, %v4776
      %v4778 = vrot.slane %v2183, %v4777
      %v4779 = vlaneseq
      %v4780 = vshrl.u32 %v4779, 7
      %v4781 = vsub.s32 2, %v4780
      %v4782 = vrot.slane %v2183, %v4781
      %v4783 = vlaneseq
      %v4784 = vshrl.u32 %v4783, 7
      %v4785 = vsub.s32 3, %v4784
      %v4786 = vrot.slane %v2183, %v4785
      %v4787 = vlaneseq
      %v4788 = vshrl.u32 %v4787, 7
      %v4789 = vsub.s32 4, %v4788
      %v4790 = vrot.slane %v2183, %v4789
      %v4791 = vlaneseq
      %v4792 = vshrl.u32 %v4791, 7
      %v4793 = vsub.s32 5, %v4792
      %v4794 = vrot.slane %v2183, %v4793
      %v4795 = vlaneseq
      %v4796 = vshrl.u32 %v4795, 7
      %v4797 = vsub.s32 6, %v4796
      %v4798 = vrot.slane %v2183, %v4797
      %v4799 = vlaneseq
      %v4800 = vshrl.u32 %v4799, 7
      %v4801 = vsub.s32 7, %v4800
      %v4802 = vrot.slane %v2183, %v4801
      %v4803 = vlaneseq
      %v4804 = vshrl.u32 %v4803, 7
      %v4805 = vsub.s32 0, %v4804
      %v4806 = vrot.slane %v2197, %v4805
      %v4807 = vlaneseq
      %v4808 = vshrl.u32 %v4807, 7
      %v4809 = vsub.s32 1, %v4808
      %v4810 = vrot.slane %v2197, %v4809
      %v4811 = vlaneseq
      %v4812 = vshrl.u32 %v4811, 7
      %v4813 = vsub.s32 2, %v4812
      %v4814 = vrot.slane %v2197, %v4813
      %v4815 = vlaneseq
      %v4816 = vshrl.u32 %v4815, 7
      %v4817 = vsub.s32 3, %v4816
      %v4818 = vrot.slane %v2197, %v4817
      %v4819 = vlaneseq
      %v4820 = vshrl.u32 %v4819, 7
      %v4821 = vsub.s32 4, %v4820
      %v4822 = vrot.slane %v2197, %v4821
      %v4823 = vlaneseq
      %v4824 = vshrl.u32 %v4823, 7
      %v4825 = vsub.s32 5, %v4824
      %v4826 = vrot.slane %v2197, %v4825
      %v4827 = vlaneseq
      %v4828 = vshrl.u32 %v4827, 7
      %v4829 = vsub.s32 6, %v4828
      %v4830 = vrot.slane %v2197, %v4829
      %v4831 = vlaneseq
      %v4832 = vshrl.u32 %v4831, 7
      %v4833 = vsub.s32 7, %v4832
      %v4834 = vrot.slane %v2197, %v4833
      %v4835 = vlaneseq
      %v4836 = vshrl.u32 %v4835, 7
      %v4837 = vsub.s32 0, %v4836
      %v4838 = vrot.slane %v2211, %v4837
      %v4839 = vlaneseq
      %v4840 = vshrl.u32 %v4839, 7
      %v4841 = vsub.s32 1, %v4840
      %v4842 = vrot.slane %v2211, %v4841
      %v4843 = vlaneseq
      %v4844 = vshrl.u32 %v4843, 7
      %v4845 = vsub.s32 2, %v4844
      %v4846 = vrot.slane %v2211, %v4845
      %v4847 = vlaneseq
      %v4848 = vshrl.u32 %v4847, 7
      %v4849 = vsub.s32 3, %v4848
      %v4850 = vrot.slane %v2211, %v4849
      %v4851 = vlaneseq
      %v4852 = vshrl.u32 %v4851, 7
      %v4853 = vsub.s32 4, %v4852
      %v4854 = vrot.slane %v2211, %v4853
      %v4855 = vlaneseq
      %v4856 = vshrl.u32 %v4855, 7
      %v4857 = vsub.s32 5, %v4856
      %v4858 = vrot.slane %v2211, %v4857
      %v4859 = vlaneseq
      %v4860 = vshrl.u32 %v4859, 7
      %v4861 = vsub.s32 6, %v4860
      %v4862 = vrot.slane %v2211, %v4861
      %v4863 = vlaneseq
      %v4864 = vshrl.u32 %v4863, 7
      %v4865 = vsub.s32 7, %v4864
      %v4866 = vrot.slane %v2211, %v4865
      %v4867 = vlaneseq
      %v4868 = vshrl.u32 %v4867, 7
      %v4869 = vsub.s32 0, %v4868
      %v4870 = vrot.slane %v2225, %v4869
      %v4871 = vlaneseq
      %v4872 = vshrl.u32 %v4871, 7
      %v4873 = vsub.s32 1, %v4872
      %v4874 = vrot.slane %v2225, %v4873
      %v4875 = vlaneseq
      %v4876 = vshrl.u32 %v4875, 7
      %v4877 = vsub.s32 2, %v4876
      %v4878 = vrot.slane %v2225, %v4877
      %v4879 = vlaneseq
      %v4880 = vshrl.u32 %v4879, 7
      %v4881 = vsub.s32 3, %v4880
      %v4882 = vrot.slane %v2225, %v4881
      %v4883 = vlaneseq
      %v4884 = vshrl.u32 %v4883, 7
      %v4885 = vsub.s32 4, %v4884
      %v4886 = vrot.slane %v2225, %v4885
      %v4887 = vlaneseq
      %v4888 = vshrl.u32 %v4887, 7
      %v4889 = vsub.s32 5, %v4888
      %v4890 = vrot.slane %v2225, %v4889
      %v4891 = vlaneseq
      %v4892 = vshrl.u32 %v4891, 7
      %v4893 = vsub.s32 6, %v4892
      %v4894 = vrot.slane %v2225, %v4893
      %v4895 = vlaneseq
      %v4896 = vshrl.u32 %v4895, 7
      %v4897 = vsub.s32 7, %v4896
      %v4898 = vrot.slane %v2225, %v4897
      %v4899 = vlaneseq
      %v4900 = vshrl.u32 %v4899, 7
      %v4901 = vsub.s32 0, %v4900
      %v4902 = vrot.slane %v2239, %v4901
      %v4903 = vlaneseq
      %v4904 = vshrl.u32 %v4903, 7
      %v4905 = vsub.s32 1, %v4904
      %v4906 = vrot.slane %v2239, %v4905
      %v4907 = vlaneseq
      %v4908 = vshrl.u32 %v4907, 7
      %v4909 = vsub.s32 2, %v4908
      %v4910 = vrot.slane %v2239, %v4909
      %v4911 = vlaneseq
      %v4912 = vshrl.u32 %v4911, 7
      %v4913 = vsub.s32 3, %v4912
      %v4914 = vrot.slane %v2239, %v4913
      %v4915 = vlaneseq
      %v4916 = vshrl.u32 %v4915, 7
      %v4917 = vsub.s32 4, %v4916
      %v4918 = vrot.slane %v2239, %v4917
      %v4919 = vlaneseq
      %v4920 = vshrl.u32 %v4919, 7
      %v4921 = vsub.s32 5, %v4920
      %v4922 = vrot.slane %v2239, %v4921
      %v4923 = vlaneseq
      %v4924 = vshrl.u32 %v4923, 7
      %v4925 = vsub.s32 6, %v4924
      %v4926 = vrot.slane %v2239, %v4925
      %v4927 = vlaneseq
      %v4928 = vshrl.u32 %v4927, 7
      %v4929 = vsub.s32 7, %v4928
      %v4930 = vrot.slane %v2239, %v4929
      %v4931 = vlaneseq
      %v4932 = vshrl.u32 %v4931, 7
      %v4933 = vsub.s32 0, %v4932
      %v4934 = vrot.slane %v2253, %v4933
      %v4935 = vlaneseq
      %v4936 = vshrl.u32 %v4935, 7
      %v4937 = vsub.s32 1, %v4936
      %v4938 = vrot.slane %v2253, %v4937
      %v4939 = vlaneseq
      %v4940 = vshrl.u32 %v4939, 7
      %v4941 = vsub.s32 2, %v4940
      %v4942 = vrot.slane %v2253, %v4941
      %v4943 = vlaneseq
      %v4944 = vshrl.u32 %v4943, 7
      %v4945 = vsub.s32 3, %v4944
      %v4946 = vrot.slane %v2253, %v4945
      %v4947 = vlaneseq
      %v4948 = vshrl.u32 %v4947, 7
      %v4949 = vsub.s32 4, %v4948
      %v4950 = vrot.slane %v2253, %v4949
      %v4951 = vlaneseq
      %v4952 = vshrl.u32 %v4951, 7
      %v4953 = vsub.s32 5, %v4952
      %v4954 = vrot.slane %v2253, %v4953
      %v4955 = vlaneseq
      %v4956 = vshrl.u32 %v4955, 7
      %v4957 = vsub.s32 6, %v4956
      %v4958 = vrot.slane %v2253, %v4957
      %v4959 = vlaneseq
      %v4960 = vshrl.u32 %v4959, 7
      %v4961 = vsub.s32 7, %v4960
      %v4962 = vrot.slane %v2253, %v4961
      %v4963 = vlaneseq
      %v4964 = vshrl.u32 %v4963, 7
      %v4965 = vsub.s32 0, %v4964
      %v4966 = vrot.slane %v2267, %v4965
      %v4967 = vlaneseq
      %v4968 = vshrl.u32 %v4967, 7
      %v4969 = vsub.s32 1, %v4968
      %v4970 = vrot.slane %v2267, %v4969
      %v4971 = vlaneseq
      %v4972 = vshrl.u32 %v4971, 7
      %v4973 = vsub.s32 2, %v4972
      %v4974 = vrot.slane %v2267, %v4973
      %v4975 = vlaneseq
      %v4976 = vshrl.u32 %v4975, 7
      %v4977 = vsub.s32 3, %v4976
      %v4978 = vrot.slane %v2267, %v4977
      %v4979 = vlaneseq
      %v4980 = vshrl.u32 %v4979, 7
      %v4981 = vsub.s32 4, %v4980
      %v4982 = vrot.slane %v2267, %v4981
      %v4983 = vlaneseq
      %v4984 = vshrl.u32 %v4983, 7
      %v4985 = vsub.s32 5, %v4984
      %v4986 = vrot.slane %v2267, %v4985
      %v4987 = vlaneseq
      %v4988 = vshrl.u32 %v4987, 7
      %v4989 = vsub.s32 6, %v4988
      %v4990 = vrot.slane %v2267, %v4989
      %v4991 = vlaneseq
      %v4992 = vshrl.u32 %v4991, 7
      %v4993 = vsub.s32 7, %v4992
      %v4994 = vrot.slane %v2267, %v4993
      %v4995 = vlaneseq
      %v4996 = vshrl.u32 %v4995, 7
      %v4997 = vsub.s32 0, %v4996
      %v4998 = vrot.slane %v2281, %v4997
      %v4999 = vlaneseq
      %v5000 = vshrl.u32 %v4999, 7
      %v5001 = vsub.s32 1, %v5000
      %v5002 = vrot.slane %v2281, %v5001
      %v5003 = vlaneseq
      %v5004 = vshrl.u32 %v5003, 7
      %v5005 = vsub.s32 2, %v5004
      %v5006 = vrot.slane %v2281, %v5005
      %v5007 = vlaneseq
      %v5008 = vshrl.u32 %v5007, 7
      %v5009 = vsub.s32 3, %v5008
      %v5010 = vrot.slane %v2281, %v5009
      %v5011 = vlaneseq
      %v5012 = vshrl.u32 %v5011, 7
      %v5013 = vsub.s32 4, %v5012
      %v5014 = vrot.slane %v2281, %v5013
      %v5015 = vlaneseq
      %v5016 = vshrl.u32 %v5015, 7
      %v5017 = vsub.s32 5, %v5016
      %v5018 = vrot.slane %v2281, %v5017
      %v5019 = vlaneseq
      %v5020 = vshrl.u32 %v5019, 7
      %v5021 = vsub.s32 6, %v5020
      %v5022 = vrot.slane %v2281, %v5021
      %v5023 = vlaneseq
      %v5024 = vshrl.u32 %v5023, 7
      %v5025 = vsub.s32 7, %v5024
      %v5026 = vrot.slane %v2281, %v5025
      %v5027 = vlaneseq
      %v5028 = vshrl.u32 %v5027, 7
      %v5029 = vsub.s32 0, %v5028
      %v5030 = vrot.slane %v2295, %v5029
      %v5031 = vlaneseq
      %v5032 = vshrl.u32 %v5031, 7
      %v5033 = vsub.s32 1, %v5032
      %v5034 = vrot.slane %v2295, %v5033
      %v5035 = vlaneseq
      %v5036 = vshrl.u32 %v5035, 7
      %v5037 = vsub.s32 2, %v5036
      %v5038 = vrot.slane %v2295, %v5037
      %v5039 = vlaneseq
      %v5040 = vshrl.u32 %v5039, 7
      %v5041 = vsub.s32 3, %v5040
      %v5042 = vrot.slane %v2295, %v5041
      %v5043 = vlaneseq
      %v5044 = vshrl.u32 %v5043, 7
      %v5045 = vsub.s32 4, %v5044
      %v5046 = vrot.slane %v2295, %v5045
      %v5047 = vlaneseq
      %v5048 = vshrl.u32 %v5047, 7
      %v5049 = vsub.s32 5, %v5048
      %v5050 = vrot.slane %v2295, %v5049
      %v5051 = vlaneseq
      %v5052 = vshrl.u32 %v5051, 7
      %v5053 = vsub.s32 6, %v5052
      %v5054 = vrot.slane %v2295, %v5053
      %v5055 = vlaneseq
      %v5056 = vshrl.u32 %v5055, 7
      %v5057 = vsub.s32 7, %v5056
      %v5058 = vrot.slane %v2295, %v5057
      %v5059 = vlaneseq
      %v5060 = vshrl.u32 %v5059, 7
      %v5061 = vsub.s32 0, %v5060
      %v5062 = vrot.slane %v2309, %v5061
      %v5063 = vlaneseq
      %v5064 = vshrl.u32 %v5063, 7
      %v5065 = vsub.s32 1, %v5064
      %v5066 = vrot.slane %v2309, %v5065
      %v5067 = vlaneseq
      %v5068 = vshrl.u32 %v5067, 7
      %v5069 = vsub.s32 2, %v5068
      %v5070 = vrot.slane %v2309, %v5069
      %v5071 = vlaneseq
      %v5072 = vshrl.u32 %v5071, 7
      %v5073 = vsub.s32 3, %v5072
      %v5074 = vrot.slane %v2309, %v5073
      %v5075 = vlaneseq
      %v5076 = vshrl.u32 %v5075, 7
      %v5077 = vsub.s32 4, %v5076
      %v5078 = vrot.slane %v2309, %v5077
      %v5079 = vlaneseq
      %v5080 = vshrl.u32 %v5079, 7
      %v5081 = vsub.s32 5, %v5080
      %v5082 = vrot.slane %v2309, %v5081
      %v5083 = vlaneseq
      %v5084 = vshrl.u32 %v5083, 7
      %v5085 = vsub.s32 6, %v5084
      %v5086 = vrot.slane %v2309, %v5085
      %v5087 = vlaneseq
      %v5088 = vshrl.u32 %v5087, 7
      %v5089 = vsub.s32 7, %v5088
      %v5090 = vrot.slane %v2309, %v5089
      %v5091 = vlaneseq
      %v5092 = vshrl.u32 %v5091, 7
      %v5093 = vsub.s32 0, %v5092
      %v5094 = vrot.slane %v2323, %v5093
      %v5095 = vlaneseq
      %v5096 = vshrl.u32 %v5095, 7
      %v5097 = vsub.s32 1, %v5096
      %v5098 = vrot.slane %v2323, %v5097
      %v5099 = vlaneseq
      %v5100 = vshrl.u32 %v5099, 7
      %v5101 = vsub.s32 2, %v5100
      %v5102 = vrot.slane %v2323, %v5101
      %v5103 = vlaneseq
      %v5104 = vshrl.u32 %v5103, 7
      %v5105 = vsub.s32 3, %v5104
      %v5106 = vrot.slane %v2323, %v5105
      %v5107 = vlaneseq
      %v5108 = vshrl.u32 %v5107, 7
      %v5109 = vsub.s32 4, %v5108
      %v5110 = vrot.slane %v2323, %v5109
      %v5111 = vlaneseq
      %v5112 = vshrl.u32 %v5111, 7
      %v5113 = vsub.s32 5, %v5112
      %v5114 = vrot.slane %v2323, %v5113
      %v5115 = vlaneseq
      %v5116 = vshrl.u32 %v5115, 7
      %v5117 = vsub.s32 6, %v5116
      %v5118 = vrot.slane %v2323, %v5117
      %v5119 = vlaneseq
      %v5120 = vshrl.u32 %v5119, 7
      %v5121 = vsub.s32 7, %v5120
      %v5122 = vrot.slane %v2323, %v5121
      %v5123 = vlaneseq
      %v5124 = vshrl.u32 %v5123, 7
      %v5125 = vsub.s32 0, %v5124
      %v5126 = vrot.slane %v2337, %v5125
      %v5127 = vlaneseq
      %v5128 = vshrl.u32 %v5127, 7
      %v5129 = vsub.s32 1, %v5128
      %v5130 = vrot.slane %v2337, %v5129
      %v5131 = vlaneseq
      %v5132 = vshrl.u32 %v5131, 7
      %v5133 = vsub.s32 2, %v5132
      %v5134 = vrot.slane %v2337, %v5133
      %v5135 = vlaneseq
      %v5136 = vshrl.u32 %v5135, 7
      %v5137 = vsub.s32 3, %v5136
      %v5138 = vrot.slane %v2337, %v5137
      %v5139 = vlaneseq
      %v5140 = vshrl.u32 %v5139, 7
      %v5141 = vsub.s32 4, %v5140
      %v5142 = vrot.slane %v2337, %v5141
      %v5143 = vlaneseq
      %v5144 = vshrl.u32 %v5143, 7
      %v5145 = vsub.s32 5, %v5144
      %v5146 = vrot.slane %v2337, %v5145
      %v5147 = vlaneseq
      %v5148 = vshrl.u32 %v5147, 7
      %v5149 = vsub.s32 6, %v5148
      %v5150 = vrot.slane %v2337, %v5149
      %v5151 = vlaneseq
      %v5152 = vshrl.u32 %v5151, 7
      %v5153 = vsub.s32 7, %v5152
      %v5154 = vrot.slane %v2337, %v5153
      %v5155 = vcombine.low %v3110, %v3114
      %v5156 = vcombine.low %v3118, %v3122
      %v5157 = vcombine.low %v3126, %v3130
      %v5158 = vcombine.low %v3134, %v3138
      %v5160 = vunpack.c.l.s4 1966171168
      %v5161 = vunpack.c.0.s8 %v5160
      %v5162 = vlaneseq
      %v5163 = vshrl.u32 %v5162, 7
      %v5164 = vsub.s32 %v5161, %v5163
      %v5165 = vrot.slane %v5155, %v5164
      %v5167 = vunpack.c.l.s4 1966171168
      %v5168 = vunpack.c.0.s8 %v5167
      %v5169 = vlaneseq
      %v5170 = vshrl.u32 %v5169, 7
      %v5171 = vsub.s32 %v5168, %v5170
      %v5172 = vrot.slane %v5156, %v5171
      %v5174 = vunpack.c.l.s4 1966171168
      %v5175 = vunpack.c.0.s8 %v5174
      %v5176 = vlaneseq
      %v5177 = vshrl.u32 %v5176, 7
      %v5178 = vsub.s32 %v5175, %v5177
      %v5179 = vrot.slane %v5157, %v5178
      %v5181 = vunpack.c.l.s4 1966171168
      %v5182 = vunpack.c.0.s8 %v5181
      %v5183 = vlaneseq
      %v5184 = vshrl.u32 %v5183, 7
      %v5185 = vsub.s32 %v5182, %v5184
      %v5186 = vrot.slane %v5158, %v5185
      %v5187 = vcombine.low %v5165, %v5172
      %v5188 = vcombine.low %v5179, %v5186
      %v5190 = vunpack.c.l.s4 1966171168
      %v5191 = vunpack.c.0.s8 %v5190
      %v5192 = vlaneseq
      %v5193 = vshrl.u32 %v5192, 7
      %v5194 = vsub.s32 %v5191, %v5193
      %v5195 = vrot.slane %v5187, %v5194
      %v5197 = vunpack.c.l.s4 1966171168
      %v5198 = vunpack.c.0.s8 %v5197
      %v5199 = vlaneseq
      %v5200 = vshrl.u32 %v5199, 7
      %v5201 = vsub.s32 %v5198, %v5200
      %v5202 = vrot.slane %v5188, %v5201
      %v5203 = vcombine.low %v5195, %v5202
      %v5204 = vcombine.low %v3142, %v3146
      %v5205 = vcombine.low %v3150, %v3154
      %v5206 = vcombine.low %v3158, %v3162
      %v5207 = vcombine.low %v3166, %v3170
      %v5209 = vunpack.c.l.s4 1966171168
      %v5210 = vunpack.c.0.s8 %v5209
      %v5211 = vlaneseq
      %v5212 = vshrl.u32 %v5211, 7
      %v5213 = vsub.s32 %v5210, %v5212
      %v5214 = vrot.slane %v5204, %v5213
      %v5216 = vunpack.c.l.s4 1966171168
      %v5217 = vunpack.c.0.s8 %v5216
      %v5218 = vlaneseq
      %v5219 = vshrl.u32 %v5218, 7
      %v5220 = vsub.s32 %v5217, %v5219
      %v5221 = vrot.slane %v5205, %v5220
      %v5223 = vunpack.c.l.s4 1966171168
      %v5224 = vunpack.c.0.s8 %v5223
      %v5225 = vlaneseq
      %v5226 = vshrl.u32 %v5225, 7
      %v5227 = vsub.s32 %v5224, %v5226
      %v5228 = vrot.slane %v5206, %v5227
      %v5230 = vunpack.c.l.s4 1966171168
      %v5231 = vunpack.c.0.s8 %v5230
      %v5232 = vlaneseq
      %v5233 = vshrl.u32 %v5232, 7
      %v5234 = vsub.s32 %v5231, %v5233
      %v5235 = vrot.slane %v5207, %v5234
      %v5236 = vcombine.low %v5214, %v5221
      %v5237 = vcombine.low %v5228, %v5235
      %v5239 = vunpack.c.l.s4 1966171168
      %v5240 = vunpack.c.0.s8 %v5239
      %v5241 = vlaneseq
      %v5242 = vshrl.u32 %v5241, 7
      %v5243 = vsub.s32 %v5240, %v5242
      %v5244 = vrot.slane %v5236, %v5243
      %v5246 = vunpack.c.l.s4 1966171168
      %v5247 = vunpack.c.0.s8 %v5246
      %v5248 = vlaneseq
      %v5249 = vshrl.u32 %v5248, 7
      %v5250 = vsub.s32 %v5247, %v5249
      %v5251 = vrot.slane %v5237, %v5250
      %v5252 = vcombine.low %v5244, %v5251
      %v5253 = vcombine.low %v3174, %v3178
      %v5254 = vcombine.low %v3182, %v3186
      %v5255 = vcombine.low %v3190, %v3194
      %v5256 = vcombine.low %v3198, %v3202
      %v5258 = vunpack.c.l.s4 1966171168
      %v5259 = vunpack.c.0.s8 %v5258
      %v5260 = vlaneseq
      %v5261 = vshrl.u32 %v5260, 7
      %v5262 = vsub.s32 %v5259, %v5261
      %v5263 = vrot.slane %v5253, %v5262
      %v5265 = vunpack.c.l.s4 1966171168
      %v5266 = vunpack.c.0.s8 %v5265
      %v5267 = vlaneseq
      %v5268 = vshrl.u32 %v5267, 7
      %v5269 = vsub.s32 %v5266, %v5268
      %v5270 = vrot.slane %v5254, %v5269
      %v5272 = vunpack.c.l.s4 1966171168
      %v5273 = vunpack.c.0.s8 %v5272
      %v5274 = vlaneseq
      %v5275 = vshrl.u32 %v5274, 7
      %v5276 = vsub.s32 %v5273, %v5275
      %v5277 = vrot.slane %v5255, %v5276
      %v5279 = vunpack.c.l.s4 1966171168
      %v5280 = vunpack.c.0.s8 %v5279
      %v5281 = vlaneseq
      %v5282 = vshrl.u32 %v5281, 7
      %v5283 = vsub.s32 %v5280, %v5282
      %v5284 = vrot.slane %v5256, %v5283
      %v5285 = vcombine.low %v5263, %v5270
      %v5286 = vcombine.low %v5277, %v5284
      %v5288 = vunpack.c.l.s4 1966171168
      %v5289 = vunpack.c.0.s8 %v5288
      %v5290 = vlaneseq
      %v5291 = vshrl.u32 %v5290, 7
      %v5292 = vsub.s32 %v5289, %v5291
      %v5293 = vrot.slane %v5285, %v5292
      %v5295 = vunpack.c.l.s4 1966171168
      %v5296 = vunpack.c.0.s8 %v5295
      %v5297 = vlaneseq
      %v5298 = vshrl.u32 %v5297, 7
      %v5299 = vsub.s32 %v5296, %v5298
      %v5300 = vrot.slane %v5286, %v5299
      %v5301 = vcombine.low %v5293, %v5300
      %v5302 = vcombine.low %v3206, %v3210
      %v5303 = vcombine.low %v3214, %v3218
      %v5304 = vcombine.low %v3222, %v3226
      %v5305 = vcombine.low %v3230, %v3234
      %v5307 = vunpack.c.l.s4 1966171168
      %v5308 = vunpack.c.0.s8 %v5307
      %v5309 = vlaneseq
      %v5310 = vshrl.u32 %v5309, 7
      %v5311 = vsub.s32 %v5308, %v5310
      %v5312 = vrot.slane %v5302, %v5311
      %v5314 = vunpack.c.l.s4 1966171168
      %v5315 = vunpack.c.0.s8 %v5314
      %v5316 = vlaneseq
      %v5317 = vshrl.u32 %v5316, 7
      %v5318 = vsub.s32 %v5315, %v5317
      %v5319 = vrot.slane %v5303, %v5318
      %v5321 = vunpack.c.l.s4 1966171168
      %v5322 = vunpack.c.0.s8 %v5321
      %v5323 = vlaneseq
      %v5324 = vshrl.u32 %v5323, 7
      %v5325 = vsub.s32 %v5322, %v5324
      %v5326 = vrot.slane %v5304, %v5325
      %v5328 = vunpack.c.l.s4 1966171168
      %v5329 = vunpack.c.0.s8 %v5328
      %v5330 = vlaneseq
      %v5331 = vshrl.u32 %v5330, 7
      %v5332 = vsub.s32 %v5329, %v5331
      %v5333 = vrot.slane %v5305, %v5332
      %v5334 = vcombine.low %v5312, %v5319
      %v5335 = vcombine.low %v5326, %v5333
      %v5337 = vunpack.c.l.s4 1966171168
      %v5338 = vunpack.c.0.s8 %v5337
      %v5339 = vlaneseq
      %v5340 = vshrl.u32 %v5339, 7
      %v5341 = vsub.s32 %v5338, %v5340
      %v5342 = vrot.slane %v5334, %v5341
      %v5344 = vunpack.c.l.s4 1966171168
      %v5345 = vunpack.c.0.s8 %v5344
      %v5346 = vlaneseq
      %v5347 = vshrl.u32 %v5346, 7
      %v5348 = vsub.s32 %v5345, %v5347
      %v5349 = vrot.slane %v5335, %v5348
      %v5350 = vcombine.low %v5342, %v5349
      %v5351 = vcombine.low %v3238, %v3242
      %v5352 = vcombine.low %v3246, %v3250
      %v5353 = vcombine.low %v3254, %v3258
      %v5354 = vcombine.low %v3262, %v3266
      %v5356 = vunpack.c.l.s4 1966171168
      %v5357 = vunpack.c.0.s8 %v5356
      %v5358 = vlaneseq
      %v5359 = vshrl.u32 %v5358, 7
      %v5360 = vsub.s32 %v5357, %v5359
      %v5361 = vrot.slane %v5351, %v5360
      %v5363 = vunpack.c.l.s4 1966171168
      %v5364 = vunpack.c.0.s8 %v5363
      %v5365 = vlaneseq
      %v5366 = vshrl.u32 %v5365, 7
      %v5367 = vsub.s32 %v5364, %v5366
      %v5368 = vrot.slane %v5352, %v5367
      %v5370 = vunpack.c.l.s4 1966171168
      %v5371 = vunpack.c.0.s8 %v5370
      %v5372 = vlaneseq
      %v5373 = vshrl.u32 %v5372, 7
      %v5374 = vsub.s32 %v5371, %v5373
      %v5375 = vrot.slane %v5353, %v5374
      %v5377 = vunpack.c.l.s4 1966171168
      %v5378 = vunpack.c.0.s8 %v5377
      %v5379 = vlaneseq
      %v5380 = vshrl.u32 %v5379, 7
      %v5381 = vsub.s32 %v5378, %v5380
      %v5382 = vrot.slane %v5354, %v5381
      %v5383 = vcombine.low %v5361, %v5368
      %v5384 = vcombine.low %v5375, %v5382
      %v5386 = vunpack.c.l.s4 1966171168
      %v5387 = vunpack.c.0.s8 %v5386
      %v5388 = vlaneseq
      %v5389 = vshrl.u32 %v5388, 7
      %v5390 = vsub.s32 %v5387, %v5389
      %v5391 = vrot.slane %v5383, %v5390
      %v5393 = vunpack.c.l.s4 1966171168
      %v5394 = vunpack.c.0.s8 %v5393
      %v5395 = vlaneseq
      %v5396 = vshrl.u32 %v5395, 7
      %v5397 = vsub.s32 %v5394, %v5396
      %v5398 = vrot.slane %v5384, %v5397
      %v5399 = vcombine.low %v5391, %v5398
      %v5400 = vcombine.low %v3270, %v3274
      %v5401 = vcombine.low %v3278, %v3282
      %v5402 = vcombine.low %v3286, %v3290
      %v5403 = vcombine.low %v3294, %v3298
      %v5405 = vunpack.c.l.s4 1966171168
      %v5406 = vunpack.c.0.s8 %v5405
      %v5407 = vlaneseq
      %v5408 = vshrl.u32 %v5407, 7
      %v5409 = vsub.s32 %v5406, %v5408
      %v5410 = vrot.slane %v5400, %v5409
      %v5412 = vunpack.c.l.s4 1966171168
      %v5413 = vunpack.c.0.s8 %v5412
      %v5414 = vlaneseq
      %v5415 = vshrl.u32 %v5414, 7
      %v5416 = vsub.s32 %v5413, %v5415
      %v5417 = vrot.slane %v5401, %v5416
      %v5419 = vunpack.c.l.s4 1966171168
      %v5420 = vunpack.c.0.s8 %v5419
      %v5421 = vlaneseq
      %v5422 = vshrl.u32 %v5421, 7
      %v5423 = vsub.s32 %v5420, %v5422
      %v5424 = vrot.slane %v5402, %v5423
      %v5426 = vunpack.c.l.s4 1966171168
      %v5427 = vunpack.c.0.s8 %v5426
      %v5428 = vlaneseq
      %v5429 = vshrl.u32 %v5428, 7
      %v5430 = vsub.s32 %v5427, %v5429
      %v5431 = vrot.slane %v5403, %v5430
      %v5432 = vcombine.low %v5410, %v5417
      %v5433 = vcombine.low %v5424, %v5431
      %v5435 = vunpack.c.l.s4 1966171168
      %v5436 = vunpack.c.0.s8 %v5435
      %v5437 = vlaneseq
      %v5438 = vshrl.u32 %v5437, 7
      %v5439 = vsub.s32 %v5436, %v5438
      %v5440 = vrot.slane %v5432, %v5439
      %v5442 = vunpack.c.l.s4 1966171168
      %v5443 = vunpack.c.0.s8 %v5442
      %v5444 = vlaneseq
      %v5445 = vshrl.u32 %v5444, 7
      %v5446 = vsub.s32 %v5443, %v5445
      %v5447 = vrot.slane %v5433, %v5446
      %v5448 = vcombine.low %v5440, %v5447
      %v5449 = vcombine.low %v3302, %v3306
      %v5450 = vcombine.low %v3310, %v3314
      %v5451 = vcombine.low %v3318, %v3322
      %v5452 = vcombine.low %v3326, %v3330
      %v5454 = vunpack.c.l.s4 1966171168
      %v5455 = vunpack.c.0.s8 %v5454
      %v5456 = vlaneseq
      %v5457 = vshrl.u32 %v5456, 7
      %v5458 = vsub.s32 %v5455, %v5457
      %v5459 = vrot.slane %v5449, %v5458
      %v5461 = vunpack.c.l.s4 1966171168
      %v5462 = vunpack.c.0.s8 %v5461
      %v5463 = vlaneseq
      %v5464 = vshrl.u32 %v5463, 7
      %v5465 = vsub.s32 %v5462, %v5464
      %v5466 = vrot.slane %v5450, %v5465
      %v5468 = vunpack.c.l.s4 1966171168
      %v5469 = vunpack.c.0.s8 %v5468
      %v5470 = vlaneseq
      %v5471 = vshrl.u32 %v5470, 7
      %v5472 = vsub.s32 %v5469, %v5471
      %v5473 = vrot.slane %v5451, %v5472
      %v5475 = vunpack.c.l.s4 1966171168
      %v5476 = vunpack.c.0.s8 %v5475
      %v5477 = vlaneseq
      %v5478 = vshrl.u32 %v5477, 7
      %v5479 = vsub.s32 %v5476, %v5478
      %v5480 = vrot.slane %v5452, %v5479
      %v5481 = vcombine.low %v5459, %v5466
      %v5482 = vcombine.low %v5473, %v5480
      %v5484 = vunpack.c.l.s4 1966171168
      %v5485 = vunpack.c.0.s8 %v5484
      %v5486 = vlaneseq
      %v5487 = vshrl.u32 %v5486, 7
      %v5488 = vsub.s32 %v5485, %v5487
      %v5489 = vrot.slane %v5481, %v5488
      %v5491 = vunpack.c.l.s4 1966171168
      %v5492 = vunpack.c.0.s8 %v5491
      %v5493 = vlaneseq
      %v5494 = vshrl.u32 %v5493, 7
      %v5495 = vsub.s32 %v5492, %v5494
      %v5496 = vrot.slane %v5482, %v5495
      %v5497 = vcombine.low %v5489, %v5496
      %v5498 = vcombine.low %v3334, %v3338
      %v5499 = vcombine.low %v3342, %v3346
      %v5500 = vcombine.low %v3350, %v3354
      %v5501 = vcombine.low %v3358, %v3362
      %v5503 = vunpack.c.l.s4 1966171168
      %v5504 = vunpack.c.0.s8 %v5503
      %v5505 = vlaneseq
      %v5506 = vshrl.u32 %v5505, 7
      %v5507 = vsub.s32 %v5504, %v5506
      %v5508 = vrot.slane %v5498, %v5507
      %v5510 = vunpack.c.l.s4 1966171168
      %v5511 = vunpack.c.0.s8 %v5510
      %v5512 = vlaneseq
      %v5513 = vshrl.u32 %v5512, 7
      %v5514 = vsub.s32 %v5511, %v5513
      %v5515 = vrot.slane %v5499, %v5514
      %v5517 = vunpack.c.l.s4 1966171168
      %v5518 = vunpack.c.0.s8 %v5517
      %v5519 = vlaneseq
      %v5520 = vshrl.u32 %v5519, 7
      %v5521 = vsub.s32 %v5518, %v5520
      %v5522 = vrot.slane %v5500, %v5521
      %v5524 = vunpack.c.l.s4 1966171168
      %v5525 = vunpack.c.0.s8 %v5524
      %v5526 = vlaneseq
      %v5527 = vshrl.u32 %v5526, 7
      %v5528 = vsub.s32 %v5525, %v5527
      %v5529 = vrot.slane %v5501, %v5528
      %v5530 = vcombine.low %v5508, %v5515
      %v5531 = vcombine.low %v5522, %v5529
      %v5533 = vunpack.c.l.s4 1966171168
      %v5534 = vunpack.c.0.s8 %v5533
      %v5535 = vlaneseq
      %v5536 = vshrl.u32 %v5535, 7
      %v5537 = vsub.s32 %v5534, %v5536
      %v5538 = vrot.slane %v5530, %v5537
      %v5540 = vunpack.c.l.s4 1966171168
      %v5541 = vunpack.c.0.s8 %v5540
      %v5542 = vlaneseq
      %v5543 = vshrl.u32 %v5542, 7
      %v5544 = vsub.s32 %v5541, %v5543
      %v5545 = vrot.slane %v5531, %v5544
      %v5546 = vcombine.low %v5538, %v5545
      %v5547 = vcombine.low %v3366, %v3370
      %v5548 = vcombine.low %v3374, %v3378
      %v5549 = vcombine.low %v3382, %v3386
      %v5550 = vcombine.low %v3390, %v3394
      %v5552 = vunpack.c.l.s4 1966171168
      %v5553 = vunpack.c.0.s8 %v5552
      %v5554 = vlaneseq
      %v5555 = vshrl.u32 %v5554, 7
      %v5556 = vsub.s32 %v5553, %v5555
      %v5557 = vrot.slane %v5547, %v5556
      %v5559 = vunpack.c.l.s4 1966171168
      %v5560 = vunpack.c.0.s8 %v5559
      %v5561 = vlaneseq
      %v5562 = vshrl.u32 %v5561, 7
      %v5563 = vsub.s32 %v5560, %v5562
      %v5564 = vrot.slane %v5548, %v5563
      %v5566 = vunpack.c.l.s4 1966171168
      %v5567 = vunpack.c.0.s8 %v5566
      %v5568 = vlaneseq
      %v5569 = vshrl.u32 %v5568, 7
      %v5570 = vsub.s32 %v5567, %v5569
      %v5571 = vrot.slane %v5549, %v5570
      %v5573 = vunpack.c.l.s4 1966171168
      %v5574 = vunpack.c.0.s8 %v5573
      %v5575 = vlaneseq
      %v5576 = vshrl.u32 %v5575, 7
      %v5577 = vsub.s32 %v5574, %v5576
      %v5578 = vrot.slane %v5550, %v5577
      %v5579 = vcombine.low %v5557, %v5564
      %v5580 = vcombine.low %v5571, %v5578
      %v5582 = vunpack.c.l.s4 1966171168
      %v5583 = vunpack.c.0.s8 %v5582
      %v5584 = vlaneseq
      %v5585 = vshrl.u32 %v5584, 7
      %v5586 = vsub.s32 %v5583, %v5585
      %v5587 = vrot.slane %v5579, %v5586
      %v5589 = vunpack.c.l.s4 1966171168
      %v5590 = vunpack.c.0.s8 %v5589
      %v5591 = vlaneseq
      %v5592 = vshrl.u32 %v5591, 7
      %v5593 = vsub.s32 %v5590, %v5592
      %v5594 = vrot.slane %v5580, %v5593
      %v5595 = vcombine.low %v5587, %v5594
      %v5596 = vcombine.low %v3398, %v3402
      %v5597 = vcombine.low %v3406, %v3410
      %v5598 = vcombine.low %v3414, %v3418
      %v5599 = vcombine.low %v3422, %v3426
      %v5601 = vunpack.c.l.s4 1966171168
      %v5602 = vunpack.c.0.s8 %v5601
      %v5603 = vlaneseq
      %v5604 = vshrl.u32 %v5603, 7
      %v5605 = vsub.s32 %v5602, %v5604
      %v5606 = vrot.slane %v5596, %v5605
      %v5608 = vunpack.c.l.s4 1966171168
      %v5609 = vunpack.c.0.s8 %v5608
      %v5610 = vlaneseq
      %v5611 = vshrl.u32 %v5610, 7
      %v5612 = vsub.s32 %v5609, %v5611
      %v5613 = vrot.slane %v5597, %v5612
      %v5615 = vunpack.c.l.s4 1966171168
      %v5616 = vunpack.c.0.s8 %v5615
      %v5617 = vlaneseq
      %v5618 = vshrl.u32 %v5617, 7
      %v5619 = vsub.s32 %v5616, %v5618
      %v5620 = vrot.slane %v5598, %v5619
      %v5622 = vunpack.c.l.s4 1966171168
      %v5623 = vunpack.c.0.s8 %v5622
      %v5624 = vlaneseq
      %v5625 = vshrl.u32 %v5624, 7
      %v5626 = vsub.s32 %v5623, %v5625
      %v5627 = vrot.slane %v5599, %v5626
      %v5628 = vcombine.low %v5606, %v5613
      %v5629 = vcombine.low %v5620, %v5627
      %v5631 = vunpack.c.l.s4 1966171168
      %v5632 = vunpack.c.0.s8 %v5631
      %v5633 = vlaneseq
      %v5634 = vshrl.u32 %v5633, 7
      %v5635 = vsub.s32 %v5632, %v5634
      %v5636 = vrot.slane %v5628, %v5635
      %v5638 = vunpack.c.l.s4 1966171168
      %v5639 = vunpack.c.0.s8 %v5638
      %v5640 = vlaneseq
      %v5641 = vshrl.u32 %v5640, 7
      %v5642 = vsub.s32 %v5639, %v5641
      %v5643 = vrot.slane %v5629, %v5642
      %v5644 = vcombine.low %v5636, %v5643
      %v5645 = vcombine.low %v3430, %v3434
      %v5646 = vcombine.low %v3438, %v3442
      %v5647 = vcombine.low %v3446, %v3450
      %v5648 = vcombine.low %v3454, %v3458
      %v5650 = vunpack.c.l.s4 1966171168
      %v5651 = vunpack.c.0.s8 %v5650
      %v5652 = vlaneseq
      %v5653 = vshrl.u32 %v5652, 7
      %v5654 = vsub.s32 %v5651, %v5653
      %v5655 = vrot.slane %v5645, %v5654
      %v5657 = vunpack.c.l.s4 1966171168
      %v5658 = vunpack.c.0.s8 %v5657
      %v5659 = vlaneseq
      %v5660 = vshrl.u32 %v5659, 7
      %v5661 = vsub.s32 %v5658, %v5660
      %v5662 = vrot.slane %v5646, %v5661
      %v5664 = vunpack.c.l.s4 1966171168
      %v5665 = vunpack.c.0.s8 %v5664
      %v5666 = vlaneseq
      %v5667 = vshrl.u32 %v5666, 7
      %v5668 = vsub.s32 %v5665, %v5667
      %v5669 = vrot.slane %v5647, %v5668
      %v5671 = vunpack.c.l.s4 1966171168
      %v5672 = vunpack.c.0.s8 %v5671
      %v5673 = vlaneseq
      %v5674 = vshrl.u32 %v5673, 7
      %v5675 = vsub.s32 %v5672, %v5674
      %v5676 = vrot.slane %v5648, %v5675
      %v5677 = vcombine.low %v5655, %v5662
      %v5678 = vcombine.low %v5669, %v5676
      %v5680 = vunpack.c.l.s4 1966171168
      %v5681 = vunpack.c.0.s8 %v5680
      %v5682 = vlaneseq
      %v5683 = vshrl.u32 %v5682, 7
      %v5684 = vsub.s32 %v5681, %v5683
      %v5685 = vrot.slane %v5677, %v5684
      %v5687 = vunpack.c.l.s4 1966171168
      %v5688 = vunpack.c.0.s8 %v5687
      %v5689 = vlaneseq
      %v5690 = vshrl.u32 %v5689, 7
      %v5691 = vsub.s32 %v5688, %v5690
      %v5692 = vrot.slane %v5678, %v5691
      %v5693 = vcombine.low %v5685, %v5692
      %v5694 = vcombine.low %v3462, %v3466
      %v5695 = vcombine.low %v3470, %v3474
      %v5696 = vcombine.low %v3478, %v3482
      %v5697 = vcombine.low %v3486, %v3490
      %v5699 = vunpack.c.l.s4 1966171168
      %v5700 = vunpack.c.0.s8 %v5699
      %v5701 = vlaneseq
      %v5702 = vshrl.u32 %v5701, 7
      %v5703 = vsub.s32 %v5700, %v5702
      %v5704 = vrot.slane %v5694, %v5703
      %v5706 = vunpack.c.l.s4 1966171168
      %v5707 = vunpack.c.0.s8 %v5706
      %v5708 = vlaneseq
      %v5709 = vshrl.u32 %v5708, 7
      %v5710 = vsub.s32 %v5707, %v5709
      %v5711 = vrot.slane %v5695, %v5710
      %v5713 = vunpack.c.l.s4 1966171168
      %v5714 = vunpack.c.0.s8 %v5713
      %v5715 = vlaneseq
      %v5716 = vshrl.u32 %v5715, 7
      %v5717 = vsub.s32 %v5714, %v5716
      %v5718 = vrot.slane %v5696, %v5717
      %v5720 = vunpack.c.l.s4 1966171168
      %v5721 = vunpack.c.0.s8 %v5720
      %v5722 = vlaneseq
      %v5723 = vshrl.u32 %v5722, 7
      %v5724 = vsub.s32 %v5721, %v5723
      %v5725 = vrot.slane %v5697, %v5724
      %v5726 = vcombine.low %v5704, %v5711
      %v5727 = vcombine.low %v5718, %v5725
      %v5729 = vunpack.c.l.s4 1966171168
      %v5730 = vunpack.c.0.s8 %v5729
      %v5731 = vlaneseq
      %v5732 = vshrl.u32 %v5731, 7
      %v5733 = vsub.s32 %v5730, %v5732
      %v5734 = vrot.slane %v5726, %v5733
      %v5736 = vunpack.c.l.s4 1966171168
      %v5737 = vunpack.c.0.s8 %v5736
      %v5738 = vlaneseq
      %v5739 = vshrl.u32 %v5738, 7
      %v5740 = vsub.s32 %v5737, %v5739
      %v5741 = vrot.slane %v5727, %v5740
      %v5742 = vcombine.low %v5734, %v5741
      %v5743 = vcombine.low %v3494, %v3498
      %v5744 = vcombine.low %v3502, %v3506
      %v5745 = vcombine.low %v3510, %v3514
      %v5746 = vcombine.low %v3518, %v3522
      %v5748 = vunpack.c.l.s4 1966171168
      %v5749 = vunpack.c.0.s8 %v5748
      %v5750 = vlaneseq
      %v5751 = vshrl.u32 %v5750, 7
      %v5752 = vsub.s32 %v5749, %v5751
      %v5753 = vrot.slane %v5743, %v5752
      %v5755 = vunpack.c.l.s4 1966171168
      %v5756 = vunpack.c.0.s8 %v5755
      %v5757 = vlaneseq
      %v5758 = vshrl.u32 %v5757, 7
      %v5759 = vsub.s32 %v5756, %v5758
      %v5760 = vrot.slane %v5744, %v5759
      %v5762 = vunpack.c.l.s4 1966171168
      %v5763 = vunpack.c.0.s8 %v5762
      %v5764 = vlaneseq
      %v5765 = vshrl.u32 %v5764, 7
      %v5766 = vsub.s32 %v5763, %v5765
      %v5767 = vrot.slane %v5745, %v5766
      %v5769 = vunpack.c.l.s4 1966171168
      %v5770 = vunpack.c.0.s8 %v5769
      %v5771 = vlaneseq
      %v5772 = vshrl.u32 %v5771, 7
      %v5773 = vsub.s32 %v5770, %v5772
      %v5774 = vrot.slane %v5746, %v5773
      %v5775 = vcombine.low %v5753, %v5760
      %v5776 = vcombine.low %v5767, %v5774
      %v5778 = vunpack.c.l.s4 1966171168
      %v5779 = vunpack.c.0.s8 %v5778
      %v5780 = vlaneseq
      %v5781 = vshrl.u32 %v5780, 7
      %v5782 = vsub.s32 %v5779, %v5781
      %v5783 = vrot.slane %v5775, %v5782
      %v5785 = vunpack.c.l.s4 1966171168
      %v5786 = vunpack.c.0.s8 %v5785
      %v5787 = vlaneseq
      %v5788 = vshrl.u32 %v5787, 7
      %v5789 = vsub.s32 %v5786, %v5788
      %v5790 = vrot.slane %v5776, %v5789
      %v5791 = vcombine.low %v5783, %v5790
      %v5792 = vcombine.low %v3526, %v3530
      %v5793 = vcombine.low %v3534, %v3538
      %v5794 = vcombine.low %v3542, %v3546
      %v5795 = vcombine.low %v3550, %v3554
      %v5797 = vunpack.c.l.s4 1966171168
      %v5798 = vunpack.c.0.s8 %v5797
      %v5799 = vlaneseq
      %v5800 = vshrl.u32 %v5799, 7
      %v5801 = vsub.s32 %v5798, %v5800
      %v5802 = vrot.slane %v5792, %v5801
      %v5804 = vunpack.c.l.s4 1966171168
      %v5805 = vunpack.c.0.s8 %v5804
      %v5806 = vlaneseq
      %v5807 = vshrl.u32 %v5806, 7
      %v5808 = vsub.s32 %v5805, %v5807
      %v5809 = vrot.slane %v5793, %v5808
      %v5811 = vunpack.c.l.s4 1966171168
      %v5812 = vunpack.c.0.s8 %v5811
      %v5813 = vlaneseq
      %v5814 = vshrl.u32 %v5813, 7
      %v5815 = vsub.s32 %v5812, %v5814
      %v5816 = vrot.slane %v5794, %v5815
      %v5818 = vunpack.c.l.s4 1966171168
      %v5819 = vunpack.c.0.s8 %v5818
      %v5820 = vlaneseq
      %v5821 = vshrl.u32 %v5820, 7
      %v5822 = vsub.s32 %v5819, %v5821
      %v5823 = vrot.slane %v5795, %v5822
      %v5824 = vcombine.low %v5802, %v5809
      %v5825 = vcombine.low %v5816, %v5823
      %v5827 = vunpack.c.l.s4 1966171168
      %v5828 = vunpack.c.0.s8 %v5827
      %v5829 = vlaneseq
      %v5830 = vshrl.u32 %v5829, 7
      %v5831 = vsub.s32 %v5828, %v5830
      %v5832 = vrot.slane %v5824, %v5831
      %v5834 = vunpack.c.l.s4 1966171168
      %v5835 = vunpack.c.0.s8 %v5834
      %v5836 = vlaneseq
      %v5837 = vshrl.u32 %v5836, 7
      %v5838 = vsub.s32 %v5835, %v5837
      %v5839 = vrot.slane %v5825, %v5838
      %v5840 = vcombine.low %v5832, %v5839
      %v5841 = vcombine.low %v3558, %v3562
      %v5842 = vcombine.low %v3566, %v3570
      %v5843 = vcombine.low %v3574, %v3578
      %v5844 = vcombine.low %v3582, %v3586
      %v5846 = vunpack.c.l.s4 1966171168
      %v5847 = vunpack.c.0.s8 %v5846
      %v5848 = vlaneseq
      %v5849 = vshrl.u32 %v5848, 7
      %v5850 = vsub.s32 %v5847, %v5849
      %v5851 = vrot.slane %v5841, %v5850
      %v5853 = vunpack.c.l.s4 1966171168
      %v5854 = vunpack.c.0.s8 %v5853
      %v5855 = vlaneseq
      %v5856 = vshrl.u32 %v5855, 7
      %v5857 = vsub.s32 %v5854, %v5856
      %v5858 = vrot.slane %v5842, %v5857
      %v5860 = vunpack.c.l.s4 1966171168
      %v5861 = vunpack.c.0.s8 %v5860
      %v5862 = vlaneseq
      %v5863 = vshrl.u32 %v5862, 7
      %v5864 = vsub.s32 %v5861, %v5863
      %v5865 = vrot.slane %v5843, %v5864
      %v5867 = vunpack.c.l.s4 1966171168
      %v5868 = vunpack.c.0.s8 %v5867
      %v5869 = vlaneseq
      %v5870 = vshrl.u32 %v5869, 7
      %v5871 = vsub.s32 %v5868, %v5870
      %v5872 = vrot.slane %v5844, %v5871
      %v5873 = vcombine.low %v5851, %v5858
      %v5874 = vcombine.low %v5865, %v5872
      %v5876 = vunpack.c.l.s4 1966171168
      %v5877 = vunpack.c.0.s8 %v5876
      %v5878 = vlaneseq
      %v5879 = vshrl.u32 %v5878, 7
      %v5880 = vsub.s32 %v5877, %v5879
      %v5881 = vrot.slane %v5873, %v5880
      %v5883 = vunpack.c.l.s4 1966171168
      %v5884 = vunpack.c.0.s8 %v5883
      %v5885 = vlaneseq
      %v5886 = vshrl.u32 %v5885, 7
      %v5887 = vsub.s32 %v5884, %v5886
      %v5888 = vrot.slane %v5874, %v5887
      %v5889 = vcombine.low %v5881, %v5888
      %v5890 = vcombine.low %v3590, %v3594
      %v5891 = vcombine.low %v3598, %v3602
      %v5892 = vcombine.low %v3606, %v3610
      %v5893 = vcombine.low %v3614, %v3618
      %v5895 = vunpack.c.l.s4 1966171168
      %v5896 = vunpack.c.0.s8 %v5895
      %v5897 = vlaneseq
      %v5898 = vshrl.u32 %v5897, 7
      %v5899 = vsub.s32 %v5896, %v5898
      %v5900 = vrot.slane %v5890, %v5899
      %v5902 = vunpack.c.l.s4 1966171168
      %v5903 = vunpack.c.0.s8 %v5902
      %v5904 = vlaneseq
      %v5905 = vshrl.u32 %v5904, 7
      %v5906 = vsub.s32 %v5903, %v5905
      %v5907 = vrot.slane %v5891, %v5906
      %v5909 = vunpack.c.l.s4 1966171168
      %v5910 = vunpack.c.0.s8 %v5909
      %v5911 = vlaneseq
      %v5912 = vshrl.u32 %v5911, 7
      %v5913 = vsub.s32 %v5910, %v5912
      %v5914 = vrot.slane %v5892, %v5913
      %v5916 = vunpack.c.l.s4 1966171168
      %v5917 = vunpack.c.0.s8 %v5916
      %v5918 = vlaneseq
      %v5919 = vshrl.u32 %v5918, 7
      %v5920 = vsub.s32 %v5917, %v5919
      %v5921 = vrot.slane %v5893, %v5920
      %v5922 = vcombine.low %v5900, %v5907
      %v5923 = vcombine.low %v5914, %v5921
      %v5925 = vunpack.c.l.s4 1966171168
      %v5926 = vunpack.c.0.s8 %v5925
      %v5927 = vlaneseq
      %v5928 = vshrl.u32 %v5927, 7
      %v5929 = vsub.s32 %v5926, %v5928
      %v5930 = vrot.slane %v5922, %v5929
      %v5932 = vunpack.c.l.s4 1966171168
      %v5933 = vunpack.c.0.s8 %v5932
      %v5934 = vlaneseq
      %v5935 = vshrl.u32 %v5934, 7
      %v5936 = vsub.s32 %v5933, %v5935
      %v5937 = vrot.slane %v5923, %v5936
      %v5938 = vcombine.low %v5930, %v5937
      %v5939 = vcombine.low %v3622, %v3626
      %v5940 = vcombine.low %v3630, %v3634
      %v5941 = vcombine.low %v3638, %v3642
      %v5942 = vcombine.low %v3646, %v3650
      %v5944 = vunpack.c.l.s4 1966171168
      %v5945 = vunpack.c.0.s8 %v5944
      %v5946 = vlaneseq
      %v5947 = vshrl.u32 %v5946, 7
      %v5948 = vsub.s32 %v5945, %v5947
      %v5949 = vrot.slane %v5939, %v5948
      %v5951 = vunpack.c.l.s4 1966171168
      %v5952 = vunpack.c.0.s8 %v5951
      %v5953 = vlaneseq
      %v5954 = vshrl.u32 %v5953, 7
      %v5955 = vsub.s32 %v5952, %v5954
      %v5956 = vrot.slane %v5940, %v5955
      %v5958 = vunpack.c.l.s4 1966171168
      %v5959 = vunpack.c.0.s8 %v5958
      %v5960 = vlaneseq
      %v5961 = vshrl.u32 %v5960, 7
      %v5962 = vsub.s32 %v5959, %v5961
      %v5963 = vrot.slane %v5941, %v5962
      %v5965 = vunpack.c.l.s4 1966171168
      %v5966 = vunpack.c.0.s8 %v5965
      %v5967 = vlaneseq
      %v5968 = vshrl.u32 %v5967, 7
      %v5969 = vsub.s32 %v5966, %v5968
      %v5970 = vrot.slane %v5942, %v5969
      %v5971 = vcombine.low %v5949, %v5956
      %v5972 = vcombine.low %v5963, %v5970
      %v5974 = vunpack.c.l.s4 1966171168
      %v5975 = vunpack.c.0.s8 %v5974
      %v5976 = vlaneseq
      %v5977 = vshrl.u32 %v5976, 7
      %v5978 = vsub.s32 %v5975, %v5977
      %v5979 = vrot.slane %v5971, %v5978
      %v5981 = vunpack.c.l.s4 1966171168
      %v5982 = vunpack.c.0.s8 %v5981
      %v5983 = vlaneseq
      %v5984 = vshrl.u32 %v5983, 7
      %v5985 = vsub.s32 %v5982, %v5984
      %v5986 = vrot.slane %v5972, %v5985
      %v5987 = vcombine.low %v5979, %v5986
      %v5988 = vcombine.low %v3654, %v3658
      %v5989 = vcombine.low %v3662, %v3666
      %v5990 = vcombine.low %v3670, %v3674
      %v5991 = vcombine.low %v3678, %v3682
      %v5993 = vunpack.c.l.s4 1966171168
      %v5994 = vunpack.c.0.s8 %v5993
      %v5995 = vlaneseq
      %v5996 = vshrl.u32 %v5995, 7
      %v5997 = vsub.s32 %v5994, %v5996
      %v5998 = vrot.slane %v5988, %v5997
      %v6000 = vunpack.c.l.s4 1966171168
      %v6001 = vunpack.c.0.s8 %v6000
      %v6002 = vlaneseq
      %v6003 = vshrl.u32 %v6002, 7
      %v6004 = vsub.s32 %v6001, %v6003
      %v6005 = vrot.slane %v5989, %v6004
      %v6007 = vunpack.c.l.s4 1966171168
      %v6008 = vunpack.c.0.s8 %v6007
      %v6009 = vlaneseq
      %v6010 = vshrl.u32 %v6009, 7
      %v6011 = vsub.s32 %v6008, %v6010
      %v6012 = vrot.slane %v5990, %v6011
      %v6014 = vunpack.c.l.s4 1966171168
      %v6015 = vunpack.c.0.s8 %v6014
      %v6016 = vlaneseq
      %v6017 = vshrl.u32 %v6016, 7
      %v6018 = vsub.s32 %v6015, %v6017
      %v6019 = vrot.slane %v5991, %v6018
      %v6020 = vcombine.low %v5998, %v6005
      %v6021 = vcombine.low %v6012, %v6019
      %v6023 = vunpack.c.l.s4 1966171168
      %v6024 = vunpack.c.0.s8 %v6023
      %v6025 = vlaneseq
      %v6026 = vshrl.u32 %v6025, 7
      %v6027 = vsub.s32 %v6024, %v6026
      %v6028 = vrot.slane %v6020, %v6027
      %v6030 = vunpack.c.l.s4 1966171168
      %v6031 = vunpack.c.0.s8 %v6030
      %v6032 = vlaneseq
      %v6033 = vshrl.u32 %v6032, 7
      %v6034 = vsub.s32 %v6031, %v6033
      %v6035 = vrot.slane %v6021, %v6034
      %v6036 = vcombine.low %v6028, %v6035
      %v6037 = vcombine.low %v3686, %v3690
      %v6038 = vcombine.low %v3694, %v3698
      %v6039 = vcombine.low %v3702, %v3706
      %v6040 = vcombine.low %v3710, %v3714
      %v6042 = vunpack.c.l.s4 1966171168
      %v6043 = vunpack.c.0.s8 %v6042
      %v6044 = vlaneseq
      %v6045 = vshrl.u32 %v6044, 7
      %v6046 = vsub.s32 %v6043, %v6045
      %v6047 = vrot.slane %v6037, %v6046
      %v6049 = vunpack.c.l.s4 1966171168
      %v6050 = vunpack.c.0.s8 %v6049
      %v6051 = vlaneseq
      %v6052 = vshrl.u32 %v6051, 7
      %v6053 = vsub.s32 %v6050, %v6052
      %v6054 = vrot.slane %v6038, %v6053
      %v6056 = vunpack.c.l.s4 1966171168
      %v6057 = vunpack.c.0.s8 %v6056
      %v6058 = vlaneseq
      %v6059 = vshrl.u32 %v6058, 7
      %v6060 = vsub.s32 %v6057, %v6059
      %v6061 = vrot.slane %v6039, %v6060
      %v6063 = vunpack.c.l.s4 1966171168
      %v6064 = vunpack.c.0.s8 %v6063
      %v6065 = vlaneseq
      %v6066 = vshrl.u32 %v6065, 7
      %v6067 = vsub.s32 %v6064, %v6066
      %v6068 = vrot.slane %v6040, %v6067
      %v6069 = vcombine.low %v6047, %v6054
      %v6070 = vcombine.low %v6061, %v6068
      %v6072 = vunpack.c.l.s4 1966171168
      %v6073 = vunpack.c.0.s8 %v6072
      %v6074 = vlaneseq
      %v6075 = vshrl.u32 %v6074, 7
      %v6076 = vsub.s32 %v6073, %v6075
      %v6077 = vrot.slane %v6069, %v6076
      %v6079 = vunpack.c.l.s4 1966171168
      %v6080 = vunpack.c.0.s8 %v6079
      %v6081 = vlaneseq
      %v6082 = vshrl.u32 %v6081, 7
      %v6083 = vsub.s32 %v6080, %v6082
      %v6084 = vrot.slane %v6070, %v6083
      %v6085 = vcombine.low %v6077, %v6084
      %v6086 = vcombine.low %v3718, %v3722
      %v6087 = vcombine.low %v3726, %v3730
      %v6088 = vcombine.low %v3734, %v3738
      %v6089 = vcombine.low %v3742, %v3746
      %v6091 = vunpack.c.l.s4 1966171168
      %v6092 = vunpack.c.0.s8 %v6091
      %v6093 = vlaneseq
      %v6094 = vshrl.u32 %v6093, 7
      %v6095 = vsub.s32 %v6092, %v6094
      %v6096 = vrot.slane %v6086, %v6095
      %v6098 = vunpack.c.l.s4 1966171168
      %v6099 = vunpack.c.0.s8 %v6098
      %v6100 = vlaneseq
      %v6101 = vshrl.u32 %v6100, 7
      %v6102 = vsub.s32 %v6099, %v6101
      %v6103 = vrot.slane %v6087, %v6102
      %v6105 = vunpack.c.l.s4 1966171168
      %v6106 = vunpack.c.0.s8 %v6105
      %v6107 = vlaneseq
      %v6108 = vshrl.u32 %v6107, 7
      %v6109 = vsub.s32 %v6106, %v6108
      %v6110 = vrot.slane %v6088, %v6109
      %v6112 = vunpack.c.l.s4 1966171168
      %v6113 = vunpack.c.0.s8 %v6112
      %v6114 = vlaneseq
      %v6115 = vshrl.u32 %v6114, 7
      %v6116 = vsub.s32 %v6113, %v6115
      %v6117 = vrot.slane %v6089, %v6116
      %v6118 = vcombine.low %v6096, %v6103
      %v6119 = vcombine.low %v6110, %v6117
      %v6121 = vunpack.c.l.s4 1966171168
      %v6122 = vunpack.c.0.s8 %v6121
      %v6123 = vlaneseq
      %v6124 = vshrl.u32 %v6123, 7
      %v6125 = vsub.s32 %v6122, %v6124
      %v6126 = vrot.slane %v6118, %v6125
      %v6128 = vunpack.c.l.s4 1966171168
      %v6129 = vunpack.c.0.s8 %v6128
      %v6130 = vlaneseq
      %v6131 = vshrl.u32 %v6130, 7
      %v6132 = vsub.s32 %v6129, %v6131
      %v6133 = vrot.slane %v6119, %v6132
      %v6134 = vcombine.low %v6126, %v6133
      %v6135 = vcombine.low %v3750, %v3754
      %v6136 = vcombine.low %v3758, %v3762
      %v6137 = vcombine.low %v3766, %v3770
      %v6138 = vcombine.low %v3774, %v3778
      %v6140 = vunpack.c.l.s4 1966171168
      %v6141 = vunpack.c.0.s8 %v6140
      %v6142 = vlaneseq
      %v6143 = vshrl.u32 %v6142, 7
      %v6144 = vsub.s32 %v6141, %v6143
      %v6145 = vrot.slane %v6135, %v6144
      %v6147 = vunpack.c.l.s4 1966171168
      %v6148 = vunpack.c.0.s8 %v6147
      %v6149 = vlaneseq
      %v6150 = vshrl.u32 %v6149, 7
      %v6151 = vsub.s32 %v6148, %v6150
      %v6152 = vrot.slane %v6136, %v6151
      %v6154 = vunpack.c.l.s4 1966171168
      %v6155 = vunpack.c.0.s8 %v6154
      %v6156 = vlaneseq
      %v6157 = vshrl.u32 %v6156, 7
      %v6158 = vsub.s32 %v6155, %v6157
      %v6159 = vrot.slane %v6137, %v6158
      %v6161 = vunpack.c.l.s4 1966171168
      %v6162 = vunpack.c.0.s8 %v6161
      %v6163 = vlaneseq
      %v6164 = vshrl.u32 %v6163, 7
      %v6165 = vsub.s32 %v6162, %v6164
      %v6166 = vrot.slane %v6138, %v6165
      %v6167 = vcombine.low %v6145, %v6152
      %v6168 = vcombine.low %v6159, %v6166
      %v6170 = vunpack.c.l.s4 1966171168
      %v6171 = vunpack.c.0.s8 %v6170
      %v6172 = vlaneseq
      %v6173 = vshrl.u32 %v6172, 7
      %v6174 = vsub.s32 %v6171, %v6173
      %v6175 = vrot.slane %v6167, %v6174
      %v6177 = vunpack.c.l.s4 1966171168
      %v6178 = vunpack.c.0.s8 %v6177
      %v6179 = vlaneseq
      %v6180 = vshrl.u32 %v6179, 7
      %v6181 = vsub.s32 %v6178, %v6180
      %v6182 = vrot.slane %v6168, %v6181
      %v6183 = vcombine.low %v6175, %v6182
      %v6184 = vcombine.low %v3782, %v3786
      %v6185 = vcombine.low %v3790, %v3794
      %v6186 = vcombine.low %v3798, %v3802
      %v6187 = vcombine.low %v3806, %v3810
      %v6189 = vunpack.c.l.s4 1966171168
      %v6190 = vunpack.c.0.s8 %v6189
      %v6191 = vlaneseq
      %v6192 = vshrl.u32 %v6191, 7
      %v6193 = vsub.s32 %v6190, %v6192
      %v6194 = vrot.slane %v6184, %v6193
      %v6196 = vunpack.c.l.s4 1966171168
      %v6197 = vunpack.c.0.s8 %v6196
      %v6198 = vlaneseq
      %v6199 = vshrl.u32 %v6198, 7
      %v6200 = vsub.s32 %v6197, %v6199
      %v6201 = vrot.slane %v6185, %v6200
      %v6203 = vunpack.c.l.s4 1966171168
      %v6204 = vunpack.c.0.s8 %v6203
      %v6205 = vlaneseq
      %v6206 = vshrl.u32 %v6205, 7
      %v6207 = vsub.s32 %v6204, %v6206
      %v6208 = vrot.slane %v6186, %v6207
      %v6210 = vunpack.c.l.s4 1966171168
      %v6211 = vunpack.c.0.s8 %v6210
      %v6212 = vlaneseq
      %v6213 = vshrl.u32 %v6212, 7
      %v6214 = vsub.s32 %v6211, %v6213
      %v6215 = vrot.slane %v6187, %v6214
      %v6216 = vcombine.low %v6194, %v6201
      %v6217 = vcombine.low %v6208, %v6215
      %v6219 = vunpack.c.l.s4 1966171168
      %v6220 = vunpack.c.0.s8 %v6219
      %v6221 = vlaneseq
      %v6222 = vshrl.u32 %v6221, 7
      %v6223 = vsub.s32 %v6220, %v6222
      %v6224 = vrot.slane %v6216, %v6223
      %v6226 = vunpack.c.l.s4 1966171168
      %v6227 = vunpack.c.0.s8 %v6226
      %v6228 = vlaneseq
      %v6229 = vshrl.u32 %v6228, 7
      %v6230 = vsub.s32 %v6227, %v6229
      %v6231 = vrot.slane %v6217, %v6230
      %v6232 = vcombine.low %v6224, %v6231
      %v6233 = vcombine.low %v3814, %v3818
      %v6234 = vcombine.low %v3822, %v3826
      %v6235 = vcombine.low %v3830, %v3834
      %v6236 = vcombine.low %v3838, %v3842
      %v6238 = vunpack.c.l.s4 1966171168
      %v6239 = vunpack.c.0.s8 %v6238
      %v6240 = vlaneseq
      %v6241 = vshrl.u32 %v6240, 7
      %v6242 = vsub.s32 %v6239, %v6241
      %v6243 = vrot.slane %v6233, %v6242
      %v6245 = vunpack.c.l.s4 1966171168
      %v6246 = vunpack.c.0.s8 %v6245
      %v6247 = vlaneseq
      %v6248 = vshrl.u32 %v6247, 7
      %v6249 = vsub.s32 %v6246, %v6248
      %v6250 = vrot.slane %v6234, %v6249
      %v6252 = vunpack.c.l.s4 1966171168
      %v6253 = vunpack.c.0.s8 %v6252
      %v6254 = vlaneseq
      %v6255 = vshrl.u32 %v6254, 7
      %v6256 = vsub.s32 %v6253, %v6255
      %v6257 = vrot.slane %v6235, %v6256
      %v6259 = vunpack.c.l.s4 1966171168
      %v6260 = vunpack.c.0.s8 %v6259
      %v6261 = vlaneseq
      %v6262 = vshrl.u32 %v6261, 7
      %v6263 = vsub.s32 %v6260, %v6262
      %v6264 = vrot.slane %v6236, %v6263
      %v6265 = vcombine.low %v6243, %v6250
      %v6266 = vcombine.low %v6257, %v6264
      %v6268 = vunpack.c.l.s4 1966171168
      %v6269 = vunpack.c.0.s8 %v6268
      %v6270 = vlaneseq
      %v6271 = vshrl.u32 %v6270, 7
      %v6272 = vsub.s32 %v6269, %v6271
      %v6273 = vrot.slane %v6265, %v6272
      %v6275 = vunpack.c.l.s4 1966171168
      %v6276 = vunpack.c.0.s8 %v6275
      %v6277 = vlaneseq
      %v6278 = vshrl.u32 %v6277, 7
      %v6279 = vsub.s32 %v6276, %v6278
      %v6280 = vrot.slane %v6266, %v6279
      %v6281 = vcombine.low %v6273, %v6280
      %v6282 = vcombine.low %v3846, %v3850
      %v6283 = vcombine.low %v3854, %v3858
      %v6284 = vcombine.low %v3862, %v3866
      %v6285 = vcombine.low %v3870, %v3874
      %v6287 = vunpack.c.l.s4 1966171168
      %v6288 = vunpack.c.0.s8 %v6287
      %v6289 = vlaneseq
      %v6290 = vshrl.u32 %v6289, 7
      %v6291 = vsub.s32 %v6288, %v6290
      %v6292 = vrot.slane %v6282, %v6291
      %v6294 = vunpack.c.l.s4 1966171168
      %v6295 = vunpack.c.0.s8 %v6294
      %v6296 = vlaneseq
      %v6297 = vshrl.u32 %v6296, 7
      %v6298 = vsub.s32 %v6295, %v6297
      %v6299 = vrot.slane %v6283, %v6298
      %v6301 = vunpack.c.l.s4 1966171168
      %v6302 = vunpack.c.0.s8 %v6301
      %v6303 = vlaneseq
      %v6304 = vshrl.u32 %v6303, 7
      %v6305 = vsub.s32 %v6302, %v6304
      %v6306 = vrot.slane %v6284, %v6305
      %v6308 = vunpack.c.l.s4 1966171168
      %v6309 = vunpack.c.0.s8 %v6308
      %v6310 = vlaneseq
      %v6311 = vshrl.u32 %v6310, 7
      %v6312 = vsub.s32 %v6309, %v6311
      %v6313 = vrot.slane %v6285, %v6312
      %v6314 = vcombine.low %v6292, %v6299
      %v6315 = vcombine.low %v6306, %v6313
      %v6317 = vunpack.c.l.s4 1966171168
      %v6318 = vunpack.c.0.s8 %v6317
      %v6319 = vlaneseq
      %v6320 = vshrl.u32 %v6319, 7
      %v6321 = vsub.s32 %v6318, %v6320
      %v6322 = vrot.slane %v6314, %v6321
      %v6324 = vunpack.c.l.s4 1966171168
      %v6325 = vunpack.c.0.s8 %v6324
      %v6326 = vlaneseq
      %v6327 = vshrl.u32 %v6326, 7
      %v6328 = vsub.s32 %v6325, %v6327
      %v6329 = vrot.slane %v6315, %v6328
      %v6330 = vcombine.low %v6322, %v6329
      %v6331 = vcombine.low %v3878, %v3882
      %v6332 = vcombine.low %v3886, %v3890
      %v6333 = vcombine.low %v3894, %v3898
      %v6334 = vcombine.low %v3902, %v3906
      %v6336 = vunpack.c.l.s4 1966171168
      %v6337 = vunpack.c.0.s8 %v6336
      %v6338 = vlaneseq
      %v6339 = vshrl.u32 %v6338, 7
      %v6340 = vsub.s32 %v6337, %v6339
      %v6341 = vrot.slane %v6331, %v6340
      %v6343 = vunpack.c.l.s4 1966171168
      %v6344 = vunpack.c.0.s8 %v6343
      %v6345 = vlaneseq
      %v6346 = vshrl.u32 %v6345, 7
      %v6347 = vsub.s32 %v6344, %v6346
      %v6348 = vrot.slane %v6332, %v6347
      %v6350 = vunpack.c.l.s4 1966171168
      %v6351 = vunpack.c.0.s8 %v6350
      %v6352 = vlaneseq
      %v6353 = vshrl.u32 %v6352, 7
      %v6354 = vsub.s32 %v6351, %v6353
      %v6355 = vrot.slane %v6333, %v6354
      %v6357 = vunpack.c.l.s4 1966171168
      %v6358 = vunpack.c.0.s8 %v6357
      %v6359 = vlaneseq
      %v6360 = vshrl.u32 %v6359, 7
      %v6361 = vsub.s32 %v6358, %v6360
      %v6362 = vrot.slane %v6334, %v6361
      %v6363 = vcombine.low %v6341, %v6348
      %v6364 = vcombine.low %v6355, %v6362
      %v6366 = vunpack.c.l.s4 1966171168
      %v6367 = vunpack.c.0.s8 %v6366
      %v6368 = vlaneseq
      %v6369 = vshrl.u32 %v6368, 7
      %v6370 = vsub.s32 %v6367, %v6369
      %v6371 = vrot.slane %v6363, %v6370
      %v6373 = vunpack.c.l.s4 1966171168
      %v6374 = vunpack.c.0.s8 %v6373
      %v6375 = vlaneseq
      %v6376 = vshrl.u32 %v6375, 7
      %v6377 = vsub.s32 %v6374, %v6376
      %v6378 = vrot.slane %v6364, %v6377
      %v6379 = vcombine.low %v6371, %v6378
      %v6380 = vcombine.low %v3910, %v3914
      %v6381 = vcombine.low %v3918, %v3922
      %v6382 = vcombine.low %v3926, %v3930
      %v6383 = vcombine.low %v3934, %v3938
      %v6385 = vunpack.c.l.s4 1966171168
      %v6386 = vunpack.c.0.s8 %v6385
      %v6387 = vlaneseq
      %v6388 = vshrl.u32 %v6387, 7
      %v6389 = vsub.s32 %v6386, %v6388
      %v6390 = vrot.slane %v6380, %v6389
      %v6392 = vunpack.c.l.s4 1966171168
      %v6393 = vunpack.c.0.s8 %v6392
      %v6394 = vlaneseq
      %v6395 = vshrl.u32 %v6394, 7
      %v6396 = vsub.s32 %v6393, %v6395
      %v6397 = vrot.slane %v6381, %v6396
      %v6399 = vunpack.c.l.s4 1966171168
      %v6400 = vunpack.c.0.s8 %v6399
      %v6401 = vlaneseq
      %v6402 = vshrl.u32 %v6401, 7
      %v6403 = vsub.s32 %v6400, %v6402
      %v6404 = vrot.slane %v6382, %v6403
      %v6406 = vunpack.c.l.s4 1966171168
      %v6407 = vunpack.c.0.s8 %v6406
      %v6408 = vlaneseq
      %v6409 = vshrl.u32 %v6408, 7
      %v6410 = vsub.s32 %v6407, %v6409
      %v6411 = vrot.slane %v6383, %v6410
      %v6412 = vcombine.low %v6390, %v6397
      %v6413 = vcombine.low %v6404, %v6411
      %v6415 = vunpack.c.l.s4 1966171168
      %v6416 = vunpack.c.0.s8 %v6415
      %v6417 = vlaneseq
      %v6418 = vshrl.u32 %v6417, 7
      %v6419 = vsub.s32 %v6416, %v6418
      %v6420 = vrot.slane %v6412, %v6419
      %v6422 = vunpack.c.l.s4 1966171168
      %v6423 = vunpack.c.0.s8 %v6422
      %v6424 = vlaneseq
      %v6425 = vshrl.u32 %v6424, 7
      %v6426 = vsub.s32 %v6423, %v6425
      %v6427 = vrot.slane %v6413, %v6426
      %v6428 = vcombine.low %v6420, %v6427
      %v6429 = vcombine.low %v3942, %v3946
      %v6430 = vcombine.low %v3950, %v3954
      %v6431 = vcombine.low %v3958, %v3962
      %v6432 = vcombine.low %v3966, %v3970
      %v6434 = vunpack.c.l.s4 1966171168
      %v6435 = vunpack.c.0.s8 %v6434
      %v6436 = vlaneseq
      %v6437 = vshrl.u32 %v6436, 7
      %v6438 = vsub.s32 %v6435, %v6437
      %v6439 = vrot.slane %v6429, %v6438
      %v6441 = vunpack.c.l.s4 1966171168
      %v6442 = vunpack.c.0.s8 %v6441
      %v6443 = vlaneseq
      %v6444 = vshrl.u32 %v6443, 7
      %v6445 = vsub.s32 %v6442, %v6444
      %v6446 = vrot.slane %v6430, %v6445
      %v6448 = vunpack.c.l.s4 1966171168
      %v6449 = vunpack.c.0.s8 %v6448
      %v6450 = vlaneseq
      %v6451 = vshrl.u32 %v6450, 7
      %v6452 = vsub.s32 %v6449, %v6451
      %v6453 = vrot.slane %v6431, %v6452
      %v6455 = vunpack.c.l.s4 1966171168
      %v6456 = vunpack.c.0.s8 %v6455
      %v6457 = vlaneseq
      %v6458 = vshrl.u32 %v6457, 7
      %v6459 = vsub.s32 %v6456, %v6458
      %v6460 = vrot.slane %v6432, %v6459
      %v6461 = vcombine.low %v6439, %v6446
      %v6462 = vcombine.low %v6453, %v6460
      %v6464 = vunpack.c.l.s4 1966171168
      %v6465 = vunpack.c.0.s8 %v6464
      %v6466 = vlaneseq
      %v6467 = vshrl.u32 %v6466, 7
      %v6468 = vsub.s32 %v6465, %v6467
      %v6469 = vrot.slane %v6461, %v6468
      %v6471 = vunpack.c.l.s4 1966171168
      %v6472 = vunpack.c.0.s8 %v6471
      %v6473 = vlaneseq
      %v6474 = vshrl.u32 %v6473, 7
      %v6475 = vsub.s32 %v6472, %v6474
      %v6476 = vrot.slane %v6462, %v6475
      %v6477 = vcombine.low %v6469, %v6476
      %v6478 = vcombine.low %v3974, %v3978
      %v6479 = vcombine.low %v3982, %v3986
      %v6480 = vcombine.low %v3990, %v3994
      %v6481 = vcombine.low %v3998, %v4002
      %v6483 = vunpack.c.l.s4 1966171168
      %v6484 = vunpack.c.0.s8 %v6483
      %v6485 = vlaneseq
      %v6486 = vshrl.u32 %v6485, 7
      %v6487 = vsub.s32 %v6484, %v6486
      %v6488 = vrot.slane %v6478, %v6487
      %v6490 = vunpack.c.l.s4 1966171168
      %v6491 = vunpack.c.0.s8 %v6490
      %v6492 = vlaneseq
      %v6493 = vshrl.u32 %v6492, 7
      %v6494 = vsub.s32 %v6491, %v6493
      %v6495 = vrot.slane %v6479, %v6494
      %v6497 = vunpack.c.l.s4 1966171168
      %v6498 = vunpack.c.0.s8 %v6497
      %v6499 = vlaneseq
      %v6500 = vshrl.u32 %v6499, 7
      %v6501 = vsub.s32 %v6498, %v6500
      %v6502 = vrot.slane %v6480, %v6501
      %v6504 = vunpack.c.l.s4 1966171168
      %v6505 = vunpack.c.0.s8 %v6504
      %v6506 = vlaneseq
      %v6507 = vshrl.u32 %v6506, 7
      %v6508 = vsub.s32 %v6505, %v6507
      %v6509 = vrot.slane %v6481, %v6508
      %v6510 = vcombine.low %v6488, %v6495
      %v6511 = vcombine.low %v6502, %v6509
      %v6513 = vunpack.c.l.s4 1966171168
      %v6514 = vunpack.c.0.s8 %v6513
      %v6515 = vlaneseq
      %v6516 = vshrl.u32 %v6515, 7
      %v6517 = vsub.s32 %v6514, %v6516
      %v6518 = vrot.slane %v6510, %v6517
      %v6520 = vunpack.c.l.s4 1966171168
      %v6521 = vunpack.c.0.s8 %v6520
      %v6522 = vlaneseq
      %v6523 = vshrl.u32 %v6522, 7
      %v6524 = vsub.s32 %v6521, %v6523
      %v6525 = vrot.slane %v6511, %v6524
      %v6526 = vcombine.low %v6518, %v6525
      %v6527 = vcombine.low %v4006, %v4010
      %v6528 = vcombine.low %v4014, %v4018
      %v6529 = vcombine.low %v4022, %v4026
      %v6530 = vcombine.low %v4030, %v4034
      %v6532 = vunpack.c.l.s4 1966171168
      %v6533 = vunpack.c.0.s8 %v6532
      %v6534 = vlaneseq
      %v6535 = vshrl.u32 %v6534, 7
      %v6536 = vsub.s32 %v6533, %v6535
      %v6537 = vrot.slane %v6527, %v6536
      %v6539 = vunpack.c.l.s4 1966171168
      %v6540 = vunpack.c.0.s8 %v6539
      %v6541 = vlaneseq
      %v6542 = vshrl.u32 %v6541, 7
      %v6543 = vsub.s32 %v6540, %v6542
      %v6544 = vrot.slane %v6528, %v6543
      %v6546 = vunpack.c.l.s4 1966171168
      %v6547 = vunpack.c.0.s8 %v6546
      %v6548 = vlaneseq
      %v6549 = vshrl.u32 %v6548, 7
      %v6550 = vsub.s32 %v6547, %v6549
      %v6551 = vrot.slane %v6529, %v6550
      %v6553 = vunpack.c.l.s4 1966171168
      %v6554 = vunpack.c.0.s8 %v6553
      %v6555 = vlaneseq
      %v6556 = vshrl.u32 %v6555, 7
      %v6557 = vsub.s32 %v6554, %v6556
      %v6558 = vrot.slane %v6530, %v6557
      %v6559 = vcombine.low %v6537, %v6544
      %v6560 = vcombine.low %v6551, %v6558
      %v6562 = vunpack.c.l.s4 1966171168
      %v6563 = vunpack.c.0.s8 %v6562
      %v6564 = vlaneseq
      %v6565 = vshrl.u32 %v6564, 7
      %v6566 = vsub.s32 %v6563, %v6565
      %v6567 = vrot.slane %v6559, %v6566
      %v6569 = vunpack.c.l.s4 1966171168
      %v6570 = vunpack.c.0.s8 %v6569
      %v6571 = vlaneseq
      %v6572 = vshrl.u32 %v6571, 7
      %v6573 = vsub.s32 %v6570, %v6572
      %v6574 = vrot.slane %v6560, %v6573
      %v6575 = vcombine.low %v6567, %v6574
      %v6576 = vcombine.low %v4038, %v4042
      %v6577 = vcombine.low %v4046, %v4050
      %v6578 = vcombine.low %v4054, %v4058
      %v6579 = vcombine.low %v4062, %v4066
      %v6581 = vunpack.c.l.s4 1966171168
      %v6582 = vunpack.c.0.s8 %v6581
      %v6583 = vlaneseq
      %v6584 = vshrl.u32 %v6583, 7
      %v6585 = vsub.s32 %v6582, %v6584
      %v6586 = vrot.slane %v6576, %v6585
      %v6588 = vunpack.c.l.s4 1966171168
      %v6589 = vunpack.c.0.s8 %v6588
      %v6590 = vlaneseq
      %v6591 = vshrl.u32 %v6590, 7
      %v6592 = vsub.s32 %v6589, %v6591
      %v6593 = vrot.slane %v6577, %v6592
      %v6595 = vunpack.c.l.s4 1966171168
      %v6596 = vunpack.c.0.s8 %v6595
      %v6597 = vlaneseq
      %v6598 = vshrl.u32 %v6597, 7
      %v6599 = vsub.s32 %v6596, %v6598
      %v6600 = vrot.slane %v6578, %v6599
      %v6602 = vunpack.c.l.s4 1966171168
      %v6603 = vunpack.c.0.s8 %v6602
      %v6604 = vlaneseq
      %v6605 = vshrl.u32 %v6604, 7
      %v6606 = vsub.s32 %v6603, %v6605
      %v6607 = vrot.slane %v6579, %v6606
      %v6608 = vcombine.low %v6586, %v6593
      %v6609 = vcombine.low %v6600, %v6607
      %v6611 = vunpack.c.l.s4 1966171168
      %v6612 = vunpack.c.0.s8 %v6611
      %v6613 = vlaneseq
      %v6614 = vshrl.u32 %v6613, 7
      %v6615 = vsub.s32 %v6612, %v6614
      %v6616 = vrot.slane %v6608, %v6615
      %v6618 = vunpack.c.l.s4 1966171168
      %v6619 = vunpack.c.0.s8 %v6618
      %v6620 = vlaneseq
      %v6621 = vshrl.u32 %v6620, 7
      %v6622 = vsub.s32 %v6619, %v6621
      %v6623 = vrot.slane %v6609, %v6622
      %v6624 = vcombine.low %v6616, %v6623
      %v6625 = vcombine.low %v4070, %v4074
      %v6626 = vcombine.low %v4078, %v4082
      %v6627 = vcombine.low %v4086, %v4090
      %v6628 = vcombine.low %v4094, %v4098
      %v6630 = vunpack.c.l.s4 1966171168
      %v6631 = vunpack.c.0.s8 %v6630
      %v6632 = vlaneseq
      %v6633 = vshrl.u32 %v6632, 7
      %v6634 = vsub.s32 %v6631, %v6633
      %v6635 = vrot.slane %v6625, %v6634
      %v6637 = vunpack.c.l.s4 1966171168
      %v6638 = vunpack.c.0.s8 %v6637
      %v6639 = vlaneseq
      %v6640 = vshrl.u32 %v6639, 7
      %v6641 = vsub.s32 %v6638, %v6640
      %v6642 = vrot.slane %v6626, %v6641
      %v6644 = vunpack.c.l.s4 1966171168
      %v6645 = vunpack.c.0.s8 %v6644
      %v6646 = vlaneseq
      %v6647 = vshrl.u32 %v6646, 7
      %v6648 = vsub.s32 %v6645, %v6647
      %v6649 = vrot.slane %v6627, %v6648
      %v6651 = vunpack.c.l.s4 1966171168
      %v6652 = vunpack.c.0.s8 %v6651
      %v6653 = vlaneseq
      %v6654 = vshrl.u32 %v6653, 7
      %v6655 = vsub.s32 %v6652, %v6654
      %v6656 = vrot.slane %v6628, %v6655
      %v6657 = vcombine.low %v6635, %v6642
      %v6658 = vcombine.low %v6649, %v6656
      %v6660 = vunpack.c.l.s4 1966171168
      %v6661 = vunpack.c.0.s8 %v6660
      %v6662 = vlaneseq
      %v6663 = vshrl.u32 %v6662, 7
      %v6664 = vsub.s32 %v6661, %v6663
      %v6665 = vrot.slane %v6657, %v6664
      %v6667 = vunpack.c.l.s4 1966171168
      %v6668 = vunpack.c.0.s8 %v6667
      %v6669 = vlaneseq
      %v6670 = vshrl.u32 %v6669, 7
      %v6671 = vsub.s32 %v6668, %v6670
      %v6672 = vrot.slane %v6658, %v6671
      %v6673 = vcombine.low %v6665, %v6672
      %v6674 = vcombine.low %v4102, %v4106
      %v6675 = vcombine.low %v4110, %v4114
      %v6676 = vcombine.low %v4118, %v4122
      %v6677 = vcombine.low %v4126, %v4130
      %v6679 = vunpack.c.l.s4 1966171168
      %v6680 = vunpack.c.0.s8 %v6679
      %v6681 = vlaneseq
      %v6682 = vshrl.u32 %v6681, 7
      %v6683 = vsub.s32 %v6680, %v6682
      %v6684 = vrot.slane %v6674, %v6683
      %v6686 = vunpack.c.l.s4 1966171168
      %v6687 = vunpack.c.0.s8 %v6686
      %v6688 = vlaneseq
      %v6689 = vshrl.u32 %v6688, 7
      %v6690 = vsub.s32 %v6687, %v6689
      %v6691 = vrot.slane %v6675, %v6690
      %v6693 = vunpack.c.l.s4 1966171168
      %v6694 = vunpack.c.0.s8 %v6693
      %v6695 = vlaneseq
      %v6696 = vshrl.u32 %v6695, 7
      %v6697 = vsub.s32 %v6694, %v6696
      %v6698 = vrot.slane %v6676, %v6697
      %v6700 = vunpack.c.l.s4 1966171168
      %v6701 = vunpack.c.0.s8 %v6700
      %v6702 = vlaneseq
      %v6703 = vshrl.u32 %v6702, 7
      %v6704 = vsub.s32 %v6701, %v6703
      %v6705 = vrot.slane %v6677, %v6704
      %v6706 = vcombine.low %v6684, %v6691
      %v6707 = vcombine.low %v6698, %v6705
      %v6709 = vunpack.c.l.s4 1966171168
      %v6710 = vunpack.c.0.s8 %v6709
      %v6711 = vlaneseq
      %v6712 = vshrl.u32 %v6711, 7
      %v6713 = vsub.s32 %v6710, %v6712
      %v6714 = vrot.slane %v6706, %v6713
      %v6716 = vunpack.c.l.s4 1966171168
      %v6717 = vunpack.c.0.s8 %v6716
      %v6718 = vlaneseq
      %v6719 = vshrl.u32 %v6718, 7
      %v6720 = vsub.s32 %v6717, %v6719
      %v6721 = vrot.slane %v6707, %v6720
      %v6722 = vcombine.low %v6714, %v6721
      %v6723 = vcombine.low %v4134, %v4138
      %v6724 = vcombine.low %v4142, %v4146
      %v6725 = vcombine.low %v4150, %v4154
      %v6726 = vcombine.low %v4158, %v4162
      %v6728 = vunpack.c.l.s4 1966171168
      %v6729 = vunpack.c.0.s8 %v6728
      %v6730 = vlaneseq
      %v6731 = vshrl.u32 %v6730, 7
      %v6732 = vsub.s32 %v6729, %v6731
      %v6733 = vrot.slane %v6723, %v6732
      %v6735 = vunpack.c.l.s4 1966171168
      %v6736 = vunpack.c.0.s8 %v6735
      %v6737 = vlaneseq
      %v6738 = vshrl.u32 %v6737, 7
      %v6739 = vsub.s32 %v6736, %v6738
      %v6740 = vrot.slane %v6724, %v6739
      %v6742 = vunpack.c.l.s4 1966171168
      %v6743 = vunpack.c.0.s8 %v6742
      %v6744 = vlaneseq
      %v6745 = vshrl.u32 %v6744, 7
      %v6746 = vsub.s32 %v6743, %v6745
      %v6747 = vrot.slane %v6725, %v6746
      %v6749 = vunpack.c.l.s4 1966171168
      %v6750 = vunpack.c.0.s8 %v6749
      %v6751 = vlaneseq
      %v6752 = vshrl.u32 %v6751, 7
      %v6753 = vsub.s32 %v6750, %v6752
      %v6754 = vrot.slane %v6726, %v6753
      %v6755 = vcombine.low %v6733, %v6740
      %v6756 = vcombine.low %v6747, %v6754
      %v6758 = vunpack.c.l.s4 1966171168
      %v6759 = vunpack.c.0.s8 %v6758
      %v6760 = vlaneseq
      %v6761 = vshrl.u32 %v6760, 7
      %v6762 = vsub.s32 %v6759, %v6761
      %v6763 = vrot.slane %v6755, %v6762
      %v6765 = vunpack.c.l.s4 1966171168
      %v6766 = vunpack.c.0.s8 %v6765
      %v6767 = vlaneseq
      %v6768 = vshrl.u32 %v6767, 7
      %v6769 = vsub.s32 %v6766, %v6768
      %v6770 = vrot.slane %v6756, %v6769
      %v6771 = vcombine.low %v6763, %v6770
      %v6772 = vcombine.low %v4166, %v4170
      %v6773 = vcombine.low %v4174, %v4178
      %v6774 = vcombine.low %v4182, %v4186
      %v6775 = vcombine.low %v4190, %v4194
      %v6777 = vunpack.c.l.s4 1966171168
      %v6778 = vunpack.c.0.s8 %v6777
      %v6779 = vlaneseq
      %v6780 = vshrl.u32 %v6779, 7
      %v6781 = vsub.s32 %v6778, %v6780
      %v6782 = vrot.slane %v6772, %v6781
      %v6784 = vunpack.c.l.s4 1966171168
      %v6785 = vunpack.c.0.s8 %v6784
      %v6786 = vlaneseq
      %v6787 = vshrl.u32 %v6786, 7
      %v6788 = vsub.s32 %v6785, %v6787
      %v6789 = vrot.slane %v6773, %v6788
      %v6791 = vunpack.c.l.s4 1966171168
      %v6792 = vunpack.c.0.s8 %v6791
      %v6793 = vlaneseq
      %v6794 = vshrl.u32 %v6793, 7
      %v6795 = vsub.s32 %v6792, %v6794
      %v6796 = vrot.slane %v6774, %v6795
      %v6798 = vunpack.c.l.s4 1966171168
      %v6799 = vunpack.c.0.s8 %v6798
      %v6800 = vlaneseq
      %v6801 = vshrl.u32 %v6800, 7
      %v6802 = vsub.s32 %v6799, %v6801
      %v6803 = vrot.slane %v6775, %v6802
      %v6804 = vcombine.low %v6782, %v6789
      %v6805 = vcombine.low %v6796, %v6803
      %v6807 = vunpack.c.l.s4 1966171168
      %v6808 = vunpack.c.0.s8 %v6807
      %v6809 = vlaneseq
      %v6810 = vshrl.u32 %v6809, 7
      %v6811 = vsub.s32 %v6808, %v6810
      %v6812 = vrot.slane %v6804, %v6811
      %v6814 = vunpack.c.l.s4 1966171168
      %v6815 = vunpack.c.0.s8 %v6814
      %v6816 = vlaneseq
      %v6817 = vshrl.u32 %v6816, 7
      %v6818 = vsub.s32 %v6815, %v6817
      %v6819 = vrot.slane %v6805, %v6818
      %v6820 = vcombine.low %v6812, %v6819
      %v6821 = vcombine.low %v4198, %v4202
      %v6822 = vcombine.low %v4206, %v4210
      %v6823 = vcombine.low %v4214, %v4218
      %v6824 = vcombine.low %v4222, %v4226
      %v6826 = vunpack.c.l.s4 1966171168
      %v6827 = vunpack.c.0.s8 %v6826
      %v6828 = vlaneseq
      %v6829 = vshrl.u32 %v6828, 7
      %v6830 = vsub.s32 %v6827, %v6829
      %v6831 = vrot.slane %v6821, %v6830
      %v6833 = vunpack.c.l.s4 1966171168
      %v6834 = vunpack.c.0.s8 %v6833
      %v6835 = vlaneseq
      %v6836 = vshrl.u32 %v6835, 7
      %v6837 = vsub.s32 %v6834, %v6836
      %v6838 = vrot.slane %v6822, %v6837
      %v6840 = vunpack.c.l.s4 1966171168
      %v6841 = vunpack.c.0.s8 %v6840
      %v6842 = vlaneseq
      %v6843 = vshrl.u32 %v6842, 7
      %v6844 = vsub.s32 %v6841, %v6843
      %v6845 = vrot.slane %v6823, %v6844
      %v6847 = vunpack.c.l.s4 1966171168
      %v6848 = vunpack.c.0.s8 %v6847
      %v6849 = vlaneseq
      %v6850 = vshrl.u32 %v6849, 7
      %v6851 = vsub.s32 %v6848, %v6850
      %v6852 = vrot.slane %v6824, %v6851
      %v6853 = vcombine.low %v6831, %v6838
      %v6854 = vcombine.low %v6845, %v6852
      %v6856 = vunpack.c.l.s4 1966171168
      %v6857 = vunpack.c.0.s8 %v6856
      %v6858 = vlaneseq
      %v6859 = vshrl.u32 %v6858, 7
      %v6860 = vsub.s32 %v6857, %v6859
      %v6861 = vrot.slane %v6853, %v6860
      %v6863 = vunpack.c.l.s4 1966171168
      %v6864 = vunpack.c.0.s8 %v6863
      %v6865 = vlaneseq
      %v6866 = vshrl.u32 %v6865, 7
      %v6867 = vsub.s32 %v6864, %v6866
      %v6868 = vrot.slane %v6854, %v6867
      %v6869 = vcombine.low %v6861, %v6868
      %v6870 = vcombine.low %v4230, %v4234
      %v6871 = vcombine.low %v4238, %v4242
      %v6872 = vcombine.low %v4246, %v4250
      %v6873 = vcombine.low %v4254, %v4258
      %v6875 = vunpack.c.l.s4 1966171168
      %v6876 = vunpack.c.0.s8 %v6875
      %v6877 = vlaneseq
      %v6878 = vshrl.u32 %v6877, 7
      %v6879 = vsub.s32 %v6876, %v6878
      %v6880 = vrot.slane %v6870, %v6879
      %v6882 = vunpack.c.l.s4 1966171168
      %v6883 = vunpack.c.0.s8 %v6882
      %v6884 = vlaneseq
      %v6885 = vshrl.u32 %v6884, 7
      %v6886 = vsub.s32 %v6883, %v6885
      %v6887 = vrot.slane %v6871, %v6886
      %v6889 = vunpack.c.l.s4 1966171168
      %v6890 = vunpack.c.0.s8 %v6889
      %v6891 = vlaneseq
      %v6892 = vshrl.u32 %v6891, 7
      %v6893 = vsub.s32 %v6890, %v6892
      %v6894 = vrot.slane %v6872, %v6893
      %v6896 = vunpack.c.l.s4 1966171168
      %v6897 = vunpack.c.0.s8 %v6896
      %v6898 = vlaneseq
      %v6899 = vshrl.u32 %v6898, 7
      %v6900 = vsub.s32 %v6897, %v6899
      %v6901 = vrot.slane %v6873, %v6900
      %v6902 = vcombine.low %v6880, %v6887
      %v6903 = vcombine.low %v6894, %v6901
      %v6905 = vunpack.c.l.s4 1966171168
      %v6906 = vunpack.c.0.s8 %v6905
      %v6907 = vlaneseq
      %v6908 = vshrl.u32 %v6907, 7
      %v6909 = vsub.s32 %v6906, %v6908
      %v6910 = vrot.slane %v6902, %v6909
      %v6912 = vunpack.c.l.s4 1966171168
      %v6913 = vunpack.c.0.s8 %v6912
      %v6914 = vlaneseq
      %v6915 = vshrl.u32 %v6914, 7
      %v6916 = vsub.s32 %v6913, %v6915
      %v6917 = vrot.slane %v6903, %v6916
      %v6918 = vcombine.low %v6910, %v6917
      %v6919 = vcombine.low %v4262, %v4266
      %v6920 = vcombine.low %v4270, %v4274
      %v6921 = vcombine.low %v4278, %v4282
      %v6922 = vcombine.low %v4286, %v4290
      %v6924 = vunpack.c.l.s4 1966171168
      %v6925 = vunpack.c.0.s8 %v6924
      %v6926 = vlaneseq
      %v6927 = vshrl.u32 %v6926, 7
      %v6928 = vsub.s32 %v6925, %v6927
      %v6929 = vrot.slane %v6919, %v6928
      %v6931 = vunpack.c.l.s4 1966171168
      %v6932 = vunpack.c.0.s8 %v6931
      %v6933 = vlaneseq
      %v6934 = vshrl.u32 %v6933, 7
      %v6935 = vsub.s32 %v6932, %v6934
      %v6936 = vrot.slane %v6920, %v6935
      %v6938 = vunpack.c.l.s4 1966171168
      %v6939 = vunpack.c.0.s8 %v6938
      %v6940 = vlaneseq
      %v6941 = vshrl.u32 %v6940, 7
      %v6942 = vsub.s32 %v6939, %v6941
      %v6943 = vrot.slane %v6921, %v6942
      %v6945 = vunpack.c.l.s4 1966171168
      %v6946 = vunpack.c.0.s8 %v6945
      %v6947 = vlaneseq
      %v6948 = vshrl.u32 %v6947, 7
      %v6949 = vsub.s32 %v6946, %v6948
      %v6950 = vrot.slane %v6922, %v6949
      %v6951 = vcombine.low %v6929, %v6936
      %v6952 = vcombine.low %v6943, %v6950
      %v6954 = vunpack.c.l.s4 1966171168
      %v6955 = vunpack.c.0.s8 %v6954
      %v6956 = vlaneseq
      %v6957 = vshrl.u32 %v6956, 7
      %v6958 = vsub.s32 %v6955, %v6957
      %v6959 = vrot.slane %v6951, %v6958
      %v6961 = vunpack.c.l.s4 1966171168
      %v6962 = vunpack.c.0.s8 %v6961
      %v6963 = vlaneseq
      %v6964 = vshrl.u32 %v6963, 7
      %v6965 = vsub.s32 %v6962, %v6964
      %v6966 = vrot.slane %v6952, %v6965
      %v6967 = vcombine.low %v6959, %v6966
      %v6968 = vcombine.low %v4294, %v4298
      %v6969 = vcombine.low %v4302, %v4306
      %v6970 = vcombine.low %v4310, %v4314
      %v6971 = vcombine.low %v4318, %v4322
      %v6973 = vunpack.c.l.s4 1966171168
      %v6974 = vunpack.c.0.s8 %v6973
      %v6975 = vlaneseq
      %v6976 = vshrl.u32 %v6975, 7
      %v6977 = vsub.s32 %v6974, %v6976
      %v6978 = vrot.slane %v6968, %v6977
      %v6980 = vunpack.c.l.s4 1966171168
      %v6981 = vunpack.c.0.s8 %v6980
      %v6982 = vlaneseq
      %v6983 = vshrl.u32 %v6982, 7
      %v6984 = vsub.s32 %v6981, %v6983
      %v6985 = vrot.slane %v6969, %v6984
      %v6987 = vunpack.c.l.s4 1966171168
      %v6988 = vunpack.c.0.s8 %v6987
      %v6989 = vlaneseq
      %v6990 = vshrl.u32 %v6989, 7
      %v6991 = vsub.s32 %v6988, %v6990
      %v6992 = vrot.slane %v6970, %v6991
      %v6994 = vunpack.c.l.s4 1966171168
      %v6995 = vunpack.c.0.s8 %v6994
      %v6996 = vlaneseq
      %v6997 = vshrl.u32 %v6996, 7
      %v6998 = vsub.s32 %v6995, %v6997
      %v6999 = vrot.slane %v6971, %v6998
      %v7000 = vcombine.low %v6978, %v6985
      %v7001 = vcombine.low %v6992, %v6999
      %v7003 = vunpack.c.l.s4 1966171168
      %v7004 = vunpack.c.0.s8 %v7003
      %v7005 = vlaneseq
      %v7006 = vshrl.u32 %v7005, 7
      %v7007 = vsub.s32 %v7004, %v7006
      %v7008 = vrot.slane %v7000, %v7007
      %v7010 = vunpack.c.l.s4 1966171168
      %v7011 = vunpack.c.0.s8 %v7010
      %v7012 = vlaneseq
      %v7013 = vshrl.u32 %v7012, 7
      %v7014 = vsub.s32 %v7011, %v7013
      %v7015 = vrot.slane %v7001, %v7014
      %v7016 = vcombine.low %v7008, %v7015
      %v7017 = vcombine.low %v4326, %v4330
      %v7018 = vcombine.low %v4334, %v4338
      %v7019 = vcombine.low %v4342, %v4346
      %v7020 = vcombine.low %v4350, %v4354
      %v7022 = vunpack.c.l.s4 1966171168
      %v7023 = vunpack.c.0.s8 %v7022
      %v7024 = vlaneseq
      %v7025 = vshrl.u32 %v7024, 7
      %v7026 = vsub.s32 %v7023, %v7025
      %v7027 = vrot.slane %v7017, %v7026
      %v7029 = vunpack.c.l.s4 1966171168
      %v7030 = vunpack.c.0.s8 %v7029
      %v7031 = vlaneseq
      %v7032 = vshrl.u32 %v7031, 7
      %v7033 = vsub.s32 %v7030, %v7032
      %v7034 = vrot.slane %v7018, %v7033
      %v7036 = vunpack.c.l.s4 1966171168
      %v7037 = vunpack.c.0.s8 %v7036
      %v7038 = vlaneseq
      %v7039 = vshrl.u32 %v7038, 7
      %v7040 = vsub.s32 %v7037, %v7039
      %v7041 = vrot.slane %v7019, %v7040
      %v7043 = vunpack.c.l.s4 1966171168
      %v7044 = vunpack.c.0.s8 %v7043
      %v7045 = vlaneseq
      %v7046 = vshrl.u32 %v7045, 7
      %v7047 = vsub.s32 %v7044, %v7046
      %v7048 = vrot.slane %v7020, %v7047
      %v7049 = vcombine.low %v7027, %v7034
      %v7050 = vcombine.low %v7041, %v7048
      %v7052 = vunpack.c.l.s4 1966171168
      %v7053 = vunpack.c.0.s8 %v7052
      %v7054 = vlaneseq
      %v7055 = vshrl.u32 %v7054, 7
      %v7056 = vsub.s32 %v7053, %v7055
      %v7057 = vrot.slane %v7049, %v7056
      %v7059 = vunpack.c.l.s4 1966171168
      %v7060 = vunpack.c.0.s8 %v7059
      %v7061 = vlaneseq
      %v7062 = vshrl.u32 %v7061, 7
      %v7063 = vsub.s32 %v7060, %v7062
      %v7064 = vrot.slane %v7050, %v7063
      %v7065 = vcombine.low %v7057, %v7064
      %v7066 = vcombine.low %v4358, %v4362
      %v7067 = vcombine.low %v4366, %v4370
      %v7068 = vcombine.low %v4374, %v4378
      %v7069 = vcombine.low %v4382, %v4386
      %v7071 = vunpack.c.l.s4 1966171168
      %v7072 = vunpack.c.0.s8 %v7071
      %v7073 = vlaneseq
      %v7074 = vshrl.u32 %v7073, 7
      %v7075 = vsub.s32 %v7072, %v7074
      %v7076 = vrot.slane %v7066, %v7075
      %v7078 = vunpack.c.l.s4 1966171168
      %v7079 = vunpack.c.0.s8 %v7078
      %v7080 = vlaneseq
      %v7081 = vshrl.u32 %v7080, 7
      %v7082 = vsub.s32 %v7079, %v7081
      %v7083 = vrot.slane %v7067, %v7082
      %v7085 = vunpack.c.l.s4 1966171168
      %v7086 = vunpack.c.0.s8 %v7085
      %v7087 = vlaneseq
      %v7088 = vshrl.u32 %v7087, 7
      %v7089 = vsub.s32 %v7086, %v7088
      %v7090 = vrot.slane %v7068, %v7089
      %v7092 = vunpack.c.l.s4 1966171168
      %v7093 = vunpack.c.0.s8 %v7092
      %v7094 = vlaneseq
      %v7095 = vshrl.u32 %v7094, 7
      %v7096 = vsub.s32 %v7093, %v7095
      %v7097 = vrot.slane %v7069, %v7096
      %v7098 = vcombine.low %v7076, %v7083
      %v7099 = vcombine.low %v7090, %v7097
      %v7101 = vunpack.c.l.s4 1966171168
      %v7102 = vunpack.c.0.s8 %v7101
      %v7103 = vlaneseq
      %v7104 = vshrl.u32 %v7103, 7
      %v7105 = vsub.s32 %v7102, %v7104
      %v7106 = vrot.slane %v7098, %v7105
      %v7108 = vunpack.c.l.s4 1966171168
      %v7109 = vunpack.c.0.s8 %v7108
      %v7110 = vlaneseq
      %v7111 = vshrl.u32 %v7110, 7
      %v7112 = vsub.s32 %v7109, %v7111
      %v7113 = vrot.slane %v7099, %v7112
      %v7114 = vcombine.low %v7106, %v7113
      %v7115 = vcombine.low %v4390, %v4394
      %v7116 = vcombine.low %v4398, %v4402
      %v7117 = vcombine.low %v4406, %v4410
      %v7118 = vcombine.low %v4414, %v4418
      %v7120 = vunpack.c.l.s4 1966171168
      %v7121 = vunpack.c.0.s8 %v7120
      %v7122 = vlaneseq
      %v7123 = vshrl.u32 %v7122, 7
      %v7124 = vsub.s32 %v7121, %v7123
      %v7125 = vrot.slane %v7115, %v7124
      %v7127 = vunpack.c.l.s4 1966171168
      %v7128 = vunpack.c.0.s8 %v7127
      %v7129 = vlaneseq
      %v7130 = vshrl.u32 %v7129, 7
      %v7131 = vsub.s32 %v7128, %v7130
      %v7132 = vrot.slane %v7116, %v7131
      %v7134 = vunpack.c.l.s4 1966171168
      %v7135 = vunpack.c.0.s8 %v7134
      %v7136 = vlaneseq
      %v7137 = vshrl.u32 %v7136, 7
      %v7138 = vsub.s32 %v7135, %v7137
      %v7139 = vrot.slane %v7117, %v7138
      %v7141 = vunpack.c.l.s4 1966171168
      %v7142 = vunpack.c.0.s8 %v7141
      %v7143 = vlaneseq
      %v7144 = vshrl.u32 %v7143, 7
      %v7145 = vsub.s32 %v7142, %v7144
      %v7146 = vrot.slane %v7118, %v7145
      %v7147 = vcombine.low %v7125, %v7132
      %v7148 = vcombine.low %v7139, %v7146
      %v7150 = vunpack.c.l.s4 1966171168
      %v7151 = vunpack.c.0.s8 %v7150
      %v7152 = vlaneseq
      %v7153 = vshrl.u32 %v7152, 7
      %v7154 = vsub.s32 %v7151, %v7153
      %v7155 = vrot.slane %v7147, %v7154
      %v7157 = vunpack.c.l.s4 1966171168
      %v7158 = vunpack.c.0.s8 %v7157
      %v7159 = vlaneseq
      %v7160 = vshrl.u32 %v7159, 7
      %v7161 = vsub.s32 %v7158, %v7160
      %v7162 = vrot.slane %v7148, %v7161
      %v7163 = vcombine.low %v7155, %v7162
      %v7164 = vcombine.low %v4422, %v4426
      %v7165 = vcombine.low %v4430, %v4434
      %v7166 = vcombine.low %v4438, %v4442
      %v7167 = vcombine.low %v4446, %v4450
      %v7169 = vunpack.c.l.s4 1966171168
      %v7170 = vunpack.c.0.s8 %v7169
      %v7171 = vlaneseq
      %v7172 = vshrl.u32 %v7171, 7
      %v7173 = vsub.s32 %v7170, %v7172
      %v7174 = vrot.slane %v7164, %v7173
      %v7176 = vunpack.c.l.s4 1966171168
      %v7177 = vunpack.c.0.s8 %v7176
      %v7178 = vlaneseq
      %v7179 = vshrl.u32 %v7178, 7
      %v7180 = vsub.s32 %v7177, %v7179
      %v7181 = vrot.slane %v7165, %v7180
      %v7183 = vunpack.c.l.s4 1966171168
      %v7184 = vunpack.c.0.s8 %v7183
      %v7185 = vlaneseq
      %v7186 = vshrl.u32 %v7185, 7
      %v7187 = vsub.s32 %v7184, %v7186
      %v7188 = vrot.slane %v7166, %v7187
      %v7190 = vunpack.c.l.s4 1966171168
      %v7191 = vunpack.c.0.s8 %v7190
      %v7192 = vlaneseq
      %v7193 = vshrl.u32 %v7192, 7
      %v7194 = vsub.s32 %v7191, %v7193
      %v7195 = vrot.slane %v7167, %v7194
      %v7196 = vcombine.low %v7174, %v7181
      %v7197 = vcombine.low %v7188, %v7195
      %v7199 = vunpack.c.l.s4 1966171168
      %v7200 = vunpack.c.0.s8 %v7199
      %v7201 = vlaneseq
      %v7202 = vshrl.u32 %v7201, 7
      %v7203 = vsub.s32 %v7200, %v7202
      %v7204 = vrot.slane %v7196, %v7203
      %v7206 = vunpack.c.l.s4 1966171168
      %v7207 = vunpack.c.0.s8 %v7206
      %v7208 = vlaneseq
      %v7209 = vshrl.u32 %v7208, 7
      %v7210 = vsub.s32 %v7207, %v7209
      %v7211 = vrot.slane %v7197, %v7210
      %v7212 = vcombine.low %v7204, %v7211
      %v7213 = vcombine.low %v4454, %v4458
      %v7214 = vcombine.low %v4462, %v4466
      %v7215 = vcombine.low %v4470, %v4474
      %v7216 = vcombine.low %v4478, %v4482
      %v7218 = vunpack.c.l.s4 1966171168
      %v7219 = vunpack.c.0.s8 %v7218
      %v7220 = vlaneseq
      %v7221 = vshrl.u32 %v7220, 7
      %v7222 = vsub.s32 %v7219, %v7221
      %v7223 = vrot.slane %v7213, %v7222
      %v7225 = vunpack.c.l.s4 1966171168
      %v7226 = vunpack.c.0.s8 %v7225
      %v7227 = vlaneseq
      %v7228 = vshrl.u32 %v7227, 7
      %v7229 = vsub.s32 %v7226, %v7228
      %v7230 = vrot.slane %v7214, %v7229
      %v7232 = vunpack.c.l.s4 1966171168
      %v7233 = vunpack.c.0.s8 %v7232
      %v7234 = vlaneseq
      %v7235 = vshrl.u32 %v7234, 7
      %v7236 = vsub.s32 %v7233, %v7235
      %v7237 = vrot.slane %v7215, %v7236
      %v7239 = vunpack.c.l.s4 1966171168
      %v7240 = vunpack.c.0.s8 %v7239
      %v7241 = vlaneseq
      %v7242 = vshrl.u32 %v7241, 7
      %v7243 = vsub.s32 %v7240, %v7242
      %v7244 = vrot.slane %v7216, %v7243
      %v7245 = vcombine.low %v7223, %v7230
      %v7246 = vcombine.low %v7237, %v7244
      %v7248 = vunpack.c.l.s4 1966171168
      %v7249 = vunpack.c.0.s8 %v7248
      %v7250 = vlaneseq
      %v7251 = vshrl.u32 %v7250, 7
      %v7252 = vsub.s32 %v7249, %v7251
      %v7253 = vrot.slane %v7245, %v7252
      %v7255 = vunpack.c.l.s4 1966171168
      %v7256 = vunpack.c.0.s8 %v7255
      %v7257 = vlaneseq
      %v7258 = vshrl.u32 %v7257, 7
      %v7259 = vsub.s32 %v7256, %v7258
      %v7260 = vrot.slane %v7246, %v7259
      %v7261 = vcombine.low %v7253, %v7260
      %v7262 = vcombine.low %v4486, %v4490
      %v7263 = vcombine.low %v4494, %v4498
      %v7264 = vcombine.low %v4502, %v4506
      %v7265 = vcombine.low %v4510, %v4514
      %v7267 = vunpack.c.l.s4 1966171168
      %v7268 = vunpack.c.0.s8 %v7267
      %v7269 = vlaneseq
      %v7270 = vshrl.u32 %v7269, 7
      %v7271 = vsub.s32 %v7268, %v7270
      %v7272 = vrot.slane %v7262, %v7271
      %v7274 = vunpack.c.l.s4 1966171168
      %v7275 = vunpack.c.0.s8 %v7274
      %v7276 = vlaneseq
      %v7277 = vshrl.u32 %v7276, 7
      %v7278 = vsub.s32 %v7275, %v7277
      %v7279 = vrot.slane %v7263, %v7278
      %v7281 = vunpack.c.l.s4 1966171168
      %v7282 = vunpack.c.0.s8 %v7281
      %v7283 = vlaneseq
      %v7284 = vshrl.u32 %v7283, 7
      %v7285 = vsub.s32 %v7282, %v7284
      %v7286 = vrot.slane %v7264, %v7285
      %v7288 = vunpack.c.l.s4 1966171168
      %v7289 = vunpack.c.0.s8 %v7288
      %v7290 = vlaneseq
      %v7291 = vshrl.u32 %v7290, 7
      %v7292 = vsub.s32 %v7289, %v7291
      %v7293 = vrot.slane %v7265, %v7292
      %v7294 = vcombine.low %v7272, %v7279
      %v7295 = vcombine.low %v7286, %v7293
      %v7297 = vunpack.c.l.s4 1966171168
      %v7298 = vunpack.c.0.s8 %v7297
      %v7299 = vlaneseq
      %v7300 = vshrl.u32 %v7299, 7
      %v7301 = vsub.s32 %v7298, %v7300
      %v7302 = vrot.slane %v7294, %v7301
      %v7304 = vunpack.c.l.s4 1966171168
      %v7305 = vunpack.c.0.s8 %v7304
      %v7306 = vlaneseq
      %v7307 = vshrl.u32 %v7306, 7
      %v7308 = vsub.s32 %v7305, %v7307
      %v7309 = vrot.slane %v7295, %v7308
      %v7310 = vcombine.low %v7302, %v7309
      %v7311 = vcombine.low %v4518, %v4522
      %v7312 = vcombine.low %v4526, %v4530
      %v7313 = vcombine.low %v4534, %v4538
      %v7314 = vcombine.low %v4542, %v4546
      %v7316 = vunpack.c.l.s4 1966171168
      %v7317 = vunpack.c.0.s8 %v7316
      %v7318 = vlaneseq
      %v7319 = vshrl.u32 %v7318, 7
      %v7320 = vsub.s32 %v7317, %v7319
      %v7321 = vrot.slane %v7311, %v7320
      %v7323 = vunpack.c.l.s4 1966171168
      %v7324 = vunpack.c.0.s8 %v7323
      %v7325 = vlaneseq
      %v7326 = vshrl.u32 %v7325, 7
      %v7327 = vsub.s32 %v7324, %v7326
      %v7328 = vrot.slane %v7312, %v7327
      %v7330 = vunpack.c.l.s4 1966171168
      %v7331 = vunpack.c.0.s8 %v7330
      %v7332 = vlaneseq
      %v7333 = vshrl.u32 %v7332, 7
      %v7334 = vsub.s32 %v7331, %v7333
      %v7335 = vrot.slane %v7313, %v7334
      %v7337 = vunpack.c.l.s4 1966171168
      %v7338 = vunpack.c.0.s8 %v7337
      %v7339 = vlaneseq
      %v7340 = vshrl.u32 %v7339, 7
      %v7341 = vsub.s32 %v7338, %v7340
      %v7342 = vrot.slane %v7314, %v7341
      %v7343 = vcombine.low %v7321, %v7328
      %v7344 = vcombine.low %v7335, %v7342
      %v7346 = vunpack.c.l.s4 1966171168
      %v7347 = vunpack.c.0.s8 %v7346
      %v7348 = vlaneseq
      %v7349 = vshrl.u32 %v7348, 7
      %v7350 = vsub.s32 %v7347, %v7349
      %v7351 = vrot.slane %v7343, %v7350
      %v7353 = vunpack.c.l.s4 1966171168
      %v7354 = vunpack.c.0.s8 %v7353
      %v7355 = vlaneseq
      %v7356 = vshrl.u32 %v7355, 7
      %v7357 = vsub.s32 %v7354, %v7356
      %v7358 = vrot.slane %v7344, %v7357
      %v7359 = vcombine.low %v7351, %v7358
      %v7360 = vcombine.low %v4550, %v4554
      %v7361 = vcombine.low %v4558, %v4562
      %v7362 = vcombine.low %v4566, %v4570
      %v7363 = vcombine.low %v4574, %v4578
      %v7365 = vunpack.c.l.s4 1966171168
      %v7366 = vunpack.c.0.s8 %v7365
      %v7367 = vlaneseq
      %v7368 = vshrl.u32 %v7367, 7
      %v7369 = vsub.s32 %v7366, %v7368
      %v7370 = vrot.slane %v7360, %v7369
      %v7372 = vunpack.c.l.s4 1966171168
      %v7373 = vunpack.c.0.s8 %v7372
      %v7374 = vlaneseq
      %v7375 = vshrl.u32 %v7374, 7
      %v7376 = vsub.s32 %v7373, %v7375
      %v7377 = vrot.slane %v7361, %v7376
      %v7379 = vunpack.c.l.s4 1966171168
      %v7380 = vunpack.c.0.s8 %v7379
      %v7381 = vlaneseq
      %v7382 = vshrl.u32 %v7381, 7
      %v7383 = vsub.s32 %v7380, %v7382
      %v7384 = vrot.slane %v7362, %v7383
      %v7386 = vunpack.c.l.s4 1966171168
      %v7387 = vunpack.c.0.s8 %v7386
      %v7388 = vlaneseq
      %v7389 = vshrl.u32 %v7388, 7
      %v7390 = vsub.s32 %v7387, %v7389
      %v7391 = vrot.slane %v7363, %v7390
      %v7392 = vcombine.low %v7370, %v7377
      %v7393 = vcombine.low %v7384, %v7391
      %v7395 = vunpack.c.l.s4 1966171168
      %v7396 = vunpack.c.0.s8 %v7395
      %v7397 = vlaneseq
      %v7398 = vshrl.u32 %v7397, 7
      %v7399 = vsub.s32 %v7396, %v7398
      %v7400 = vrot.slane %v7392, %v7399
      %v7402 = vunpack.c.l.s4 1966171168
      %v7403 = vunpack.c.0.s8 %v7402
      %v7404 = vlaneseq
      %v7405 = vshrl.u32 %v7404, 7
      %v7406 = vsub.s32 %v7403, %v7405
      %v7407 = vrot.slane %v7393, %v7406
      %v7408 = vcombine.low %v7400, %v7407
      %v7409 = vcombine.low %v4582, %v4586
      %v7410 = vcombine.low %v4590, %v4594
      %v7411 = vcombine.low %v4598, %v4602
      %v7412 = vcombine.low %v4606, %v4610
      %v7414 = vunpack.c.l.s4 1966171168
      %v7415 = vunpack.c.0.s8 %v7414
      %v7416 = vlaneseq
      %v7417 = vshrl.u32 %v7416, 7
      %v7418 = vsub.s32 %v7415, %v7417
      %v7419 = vrot.slane %v7409, %v7418
      %v7421 = vunpack.c.l.s4 1966171168
      %v7422 = vunpack.c.0.s8 %v7421
      %v7423 = vlaneseq
      %v7424 = vshrl.u32 %v7423, 7
      %v7425 = vsub.s32 %v7422, %v7424
      %v7426 = vrot.slane %v7410, %v7425
      %v7428 = vunpack.c.l.s4 1966171168
      %v7429 = vunpack.c.0.s8 %v7428
      %v7430 = vlaneseq
      %v7431 = vshrl.u32 %v7430, 7
      %v7432 = vsub.s32 %v7429, %v7431
      %v7433 = vrot.slane %v7411, %v7432
      %v7435 = vunpack.c.l.s4 1966171168
      %v7436 = vunpack.c.0.s8 %v7435
      %v7437 = vlaneseq
      %v7438 = vshrl.u32 %v7437, 7
      %v7439 = vsub.s32 %v7436, %v7438
      %v7440 = vrot.slane %v7412, %v7439
      %v7441 = vcombine.low %v7419, %v7426
      %v7442 = vcombine.low %v7433, %v7440
      %v7444 = vunpack.c.l.s4 1966171168
      %v7445 = vunpack.c.0.s8 %v7444
      %v7446 = vlaneseq
      %v7447 = vshrl.u32 %v7446, 7
      %v7448 = vsub.s32 %v7445, %v7447
      %v7449 = vrot.slane %v7441, %v7448
      %v7451 = vunpack.c.l.s4 1966171168
      %v7452 = vunpack.c.0.s8 %v7451
      %v7453 = vlaneseq
      %v7454 = vshrl.u32 %v7453, 7
      %v7455 = vsub.s32 %v7452, %v7454
      %v7456 = vrot.slane %v7442, %v7455
      %v7457 = vcombine.low %v7449, %v7456
      %v7458 = vcombine.low %v4614, %v4618
      %v7459 = vcombine.low %v4622, %v4626
      %v7460 = vcombine.low %v4630, %v4634
      %v7461 = vcombine.low %v4638, %v4642
      %v7463 = vunpack.c.l.s4 1966171168
      %v7464 = vunpack.c.0.s8 %v7463
      %v7465 = vlaneseq
      %v7466 = vshrl.u32 %v7465, 7
      %v7467 = vsub.s32 %v7464, %v7466
      %v7468 = vrot.slane %v7458, %v7467
      %v7470 = vunpack.c.l.s4 1966171168
      %v7471 = vunpack.c.0.s8 %v7470
      %v7472 = vlaneseq
      %v7473 = vshrl.u32 %v7472, 7
      %v7474 = vsub.s32 %v7471, %v7473
      %v7475 = vrot.slane %v7459, %v7474
      %v7477 = vunpack.c.l.s4 1966171168
      %v7478 = vunpack.c.0.s8 %v7477
      %v7479 = vlaneseq
      %v7480 = vshrl.u32 %v7479, 7
      %v7481 = vsub.s32 %v7478, %v7480
      %v7482 = vrot.slane %v7460, %v7481
      %v7484 = vunpack.c.l.s4 1966171168
      %v7485 = vunpack.c.0.s8 %v7484
      %v7486 = vlaneseq
      %v7487 = vshrl.u32 %v7486, 7
      %v7488 = vsub.s32 %v7485, %v7487
      %v7489 = vrot.slane %v7461, %v7488
      %v7490 = vcombine.low %v7468, %v7475
      %v7491 = vcombine.low %v7482, %v7489
      %v7493 = vunpack.c.l.s4 1966171168
      %v7494 = vunpack.c.0.s8 %v7493
      %v7495 = vlaneseq
      %v7496 = vshrl.u32 %v7495, 7
      %v7497 = vsub.s32 %v7494, %v7496
      %v7498 = vrot.slane %v7490, %v7497
      %v7500 = vunpack.c.l.s4 1966171168
      %v7501 = vunpack.c.0.s8 %v7500
      %v7502 = vlaneseq
      %v7503 = vshrl.u32 %v7502, 7
      %v7504 = vsub.s32 %v7501, %v7503
      %v7505 = vrot.slane %v7491, %v7504
      %v7506 = vcombine.low %v7498, %v7505
      %v7507 = vcombine.low %v4646, %v4650
      %v7508 = vcombine.low %v4654, %v4658
      %v7509 = vcombine.low %v4662, %v4666
      %v7510 = vcombine.low %v4670, %v4674
      %v7512 = vunpack.c.l.s4 1966171168
      %v7513 = vunpack.c.0.s8 %v7512
      %v7514 = vlaneseq
      %v7515 = vshrl.u32 %v7514, 7
      %v7516 = vsub.s32 %v7513, %v7515
      %v7517 = vrot.slane %v7507, %v7516
      %v7519 = vunpack.c.l.s4 1966171168
      %v7520 = vunpack.c.0.s8 %v7519
      %v7521 = vlaneseq
      %v7522 = vshrl.u32 %v7521, 7
      %v7523 = vsub.s32 %v7520, %v7522
      %v7524 = vrot.slane %v7508, %v7523
      %v7526 = vunpack.c.l.s4 1966171168
      %v7527 = vunpack.c.0.s8 %v7526
      %v7528 = vlaneseq
      %v7529 = vshrl.u32 %v7528, 7
      %v7530 = vsub.s32 %v7527, %v7529
      %v7531 = vrot.slane %v7509, %v7530
      %v7533 = vunpack.c.l.s4 1966171168
      %v7534 = vunpack.c.0.s8 %v7533
      %v7535 = vlaneseq
      %v7536 = vshrl.u32 %v7535, 7
      %v7537 = vsub.s32 %v7534, %v7536
      %v7538 = vrot.slane %v7510, %v7537
      %v7539 = vcombine.low %v7517, %v7524
      %v7540 = vcombine.low %v7531, %v7538
      %v7542 = vunpack.c.l.s4 1966171168
      %v7543 = vunpack.c.0.s8 %v7542
      %v7544 = vlaneseq
      %v7545 = vshrl.u32 %v7544, 7
      %v7546 = vsub.s32 %v7543, %v7545
      %v7547 = vrot.slane %v7539, %v7546
      %v7549 = vunpack.c.l.s4 1966171168
      %v7550 = vunpack.c.0.s8 %v7549
      %v7551 = vlaneseq
      %v7552 = vshrl.u32 %v7551, 7
      %v7553 = vsub.s32 %v7550, %v7552
      %v7554 = vrot.slane %v7540, %v7553
      %v7555 = vcombine.low %v7547, %v7554
      %v7556 = vcombine.low %v4678, %v4682
      %v7557 = vcombine.low %v4686, %v4690
      %v7558 = vcombine.low %v4694, %v4698
      %v7559 = vcombine.low %v4702, %v4706
      %v7561 = vunpack.c.l.s4 1966171168
      %v7562 = vunpack.c.0.s8 %v7561
      %v7563 = vlaneseq
      %v7564 = vshrl.u32 %v7563, 7
      %v7565 = vsub.s32 %v7562, %v7564
      %v7566 = vrot.slane %v7556, %v7565
      %v7568 = vunpack.c.l.s4 1966171168
      %v7569 = vunpack.c.0.s8 %v7568
      %v7570 = vlaneseq
      %v7571 = vshrl.u32 %v7570, 7
      %v7572 = vsub.s32 %v7569, %v7571
      %v7573 = vrot.slane %v7557, %v7572
      %v7575 = vunpack.c.l.s4 1966171168
      %v7576 = vunpack.c.0.s8 %v7575
      %v7577 = vlaneseq
      %v7578 = vshrl.u32 %v7577, 7
      %v7579 = vsub.s32 %v7576, %v7578
      %v7580 = vrot.slane %v7558, %v7579
      %v7582 = vunpack.c.l.s4 1966171168
      %v7583 = vunpack.c.0.s8 %v7582
      %v7584 = vlaneseq
      %v7585 = vshrl.u32 %v7584, 7
      %v7586 = vsub.s32 %v7583, %v7585
      %v7587 = vrot.slane %v7559, %v7586
      %v7588 = vcombine.low %v7566, %v7573
      %v7589 = vcombine.low %v7580, %v7587
      %v7591 = vunpack.c.l.s4 1966171168
      %v7592 = vunpack.c.0.s8 %v7591
      %v7593 = vlaneseq
      %v7594 = vshrl.u32 %v7593, 7
      %v7595 = vsub.s32 %v7592, %v7594
      %v7596 = vrot.slane %v7588, %v7595
      %v7598 = vunpack.c.l.s4 1966171168
      %v7599 = vunpack.c.0.s8 %v7598
      %v7600 = vlaneseq
      %v7601 = vshrl.u32 %v7600, 7
      %v7602 = vsub.s32 %v7599, %v7601
      %v7603 = vrot.slane %v7589, %v7602
      %v7604 = vcombine.low %v7596, %v7603
      %v7605 = vcombine.low %v4710, %v4714
      %v7606 = vcombine.low %v4718, %v4722
      %v7607 = vcombine.low %v4726, %v4730
      %v7608 = vcombine.low %v4734, %v4738
      %v7610 = vunpack.c.l.s4 1966171168
      %v7611 = vunpack.c.0.s8 %v7610
      %v7612 = vlaneseq
      %v7613 = vshrl.u32 %v7612, 7
      %v7614 = vsub.s32 %v7611, %v7613
      %v7615 = vrot.slane %v7605, %v7614
      %v7617 = vunpack.c.l.s4 1966171168
      %v7618 = vunpack.c.0.s8 %v7617
      %v7619 = vlaneseq
      %v7620 = vshrl.u32 %v7619, 7
      %v7621 = vsub.s32 %v7618, %v7620
      %v7622 = vrot.slane %v7606, %v7621
      %v7624 = vunpack.c.l.s4 1966171168
      %v7625 = vunpack.c.0.s8 %v7624
      %v7626 = vlaneseq
      %v7627 = vshrl.u32 %v7626, 7
      %v7628 = vsub.s32 %v7625, %v7627
      %v7629 = vrot.slane %v7607, %v7628
      %v7631 = vunpack.c.l.s4 1966171168
      %v7632 = vunpack.c.0.s8 %v7631
      %v7633 = vlaneseq
      %v7634 = vshrl.u32 %v7633, 7
      %v7635 = vsub.s32 %v7632, %v7634
      %v7636 = vrot.slane %v7608, %v7635
      %v7637 = vcombine.low %v7615, %v7622
      %v7638 = vcombine.low %v7629, %v7636
      %v7640 = vunpack.c.l.s4 1966171168
      %v7641 = vunpack.c.0.s8 %v7640
      %v7642 = vlaneseq
      %v7643 = vshrl.u32 %v7642, 7
      %v7644 = vsub.s32 %v7641, %v7643
      %v7645 = vrot.slane %v7637, %v7644
      %v7647 = vunpack.c.l.s4 1966171168
      %v7648 = vunpack.c.0.s8 %v7647
      %v7649 = vlaneseq
      %v7650 = vshrl.u32 %v7649, 7
      %v7651 = vsub.s32 %v7648, %v7650
      %v7652 = vrot.slane %v7638, %v7651
      %v7653 = vcombine.low %v7645, %v7652
      %v7654 = vcombine.low %v4742, %v4746
      %v7655 = vcombine.low %v4750, %v4754
      %v7656 = vcombine.low %v4758, %v4762
      %v7657 = vcombine.low %v4766, %v4770
      %v7659 = vunpack.c.l.s4 1966171168
      %v7660 = vunpack.c.0.s8 %v7659
      %v7661 = vlaneseq
      %v7662 = vshrl.u32 %v7661, 7
      %v7663 = vsub.s32 %v7660, %v7662
      %v7664 = vrot.slane %v7654, %v7663
      %v7666 = vunpack.c.l.s4 1966171168
      %v7667 = vunpack.c.0.s8 %v7666
      %v7668 = vlaneseq
      %v7669 = vshrl.u32 %v7668, 7
      %v7670 = vsub.s32 %v7667, %v7669
      %v7671 = vrot.slane %v7655, %v7670
      %v7673 = vunpack.c.l.s4 1966171168
      %v7674 = vunpack.c.0.s8 %v7673
      %v7675 = vlaneseq
      %v7676 = vshrl.u32 %v7675, 7
      %v7677 = vsub.s32 %v7674, %v7676
      %v7678 = vrot.slane %v7656, %v7677
      %v7680 = vunpack.c.l.s4 1966171168
      %v7681 = vunpack.c.0.s8 %v7680
      %v7682 = vlaneseq
      %v7683 = vshrl.u32 %v7682, 7
      %v7684 = vsub.s32 %v7681, %v7683
      %v7685 = vrot.slane %v7657, %v7684
      %v7686 = vcombine.low %v7664, %v7671
      %v7687 = vcombine.low %v7678, %v7685
      %v7689 = vunpack.c.l.s4 1966171168
      %v7690 = vunpack.c.0.s8 %v7689
      %v7691 = vlaneseq
      %v7692 = vshrl.u32 %v7691, 7
      %v7693 = vsub.s32 %v7690, %v7692
      %v7694 = vrot.slane %v7686, %v7693
      %v7696 = vunpack.c.l.s4 1966171168
      %v7697 = vunpack.c.0.s8 %v7696
      %v7698 = vlaneseq
      %v7699 = vshrl.u32 %v7698, 7
      %v7700 = vsub.s32 %v7697, %v7699
      %v7701 = vrot.slane %v7687, %v7700
      %v7702 = vcombine.low %v7694, %v7701
      %v7703 = vcombine.low %v4774, %v4778
      %v7704 = vcombine.low %v4782, %v4786
      %v7705 = vcombine.low %v4790, %v4794
      %v7706 = vcombine.low %v4798, %v4802
      %v7708 = vunpack.c.l.s4 1966171168
      %v7709 = vunpack.c.0.s8 %v7708
      %v7710 = vlaneseq
      %v7711 = vshrl.u32 %v7710, 7
      %v7712 = vsub.s32 %v7709, %v7711
      %v7713 = vrot.slane %v7703, %v7712
      %v7715 = vunpack.c.l.s4 1966171168
      %v7716 = vunpack.c.0.s8 %v7715
      %v7717 = vlaneseq
      %v7718 = vshrl.u32 %v7717, 7
      %v7719 = vsub.s32 %v7716, %v7718
      %v7720 = vrot.slane %v7704, %v7719
      %v7722 = vunpack.c.l.s4 1966171168
      %v7723 = vunpack.c.0.s8 %v7722
      %v7724 = vlaneseq
      %v7725 = vshrl.u32 %v7724, 7
      %v7726 = vsub.s32 %v7723, %v7725
      %v7727 = vrot.slane %v7705, %v7726
      %v7729 = vunpack.c.l.s4 1966171168
      %v7730 = vunpack.c.0.s8 %v7729
      %v7731 = vlaneseq
      %v7732 = vshrl.u32 %v7731, 7
      %v7733 = vsub.s32 %v7730, %v7732
      %v7734 = vrot.slane %v7706, %v7733
      %v7735 = vcombine.low %v7713, %v7720
      %v7736 = vcombine.low %v7727, %v7734
      %v7738 = vunpack.c.l.s4 1966171168
      %v7739 = vunpack.c.0.s8 %v7738
      %v7740 = vlaneseq
      %v7741 = vshrl.u32 %v7740, 7
      %v7742 = vsub.s32 %v7739, %v7741
      %v7743 = vrot.slane %v7735, %v7742
      %v7745 = vunpack.c.l.s4 1966171168
      %v7746 = vunpack.c.0.s8 %v7745
      %v7747 = vlaneseq
      %v7748 = vshrl.u32 %v7747, 7
      %v7749 = vsub.s32 %v7746, %v7748
      %v7750 = vrot.slane %v7736, %v7749
      %v7751 = vcombine.low %v7743, %v7750
      %v7752 = vcombine.low %v4806, %v4810
      %v7753 = vcombine.low %v4814, %v4818
      %v7754 = vcombine.low %v4822, %v4826
      %v7755 = vcombine.low %v4830, %v4834
      %v7757 = vunpack.c.l.s4 1966171168
      %v7758 = vunpack.c.0.s8 %v7757
      %v7759 = vlaneseq
      %v7760 = vshrl.u32 %v7759, 7
      %v7761 = vsub.s32 %v7758, %v7760
      %v7762 = vrot.slane %v7752, %v7761
      %v7764 = vunpack.c.l.s4 1966171168
      %v7765 = vunpack.c.0.s8 %v7764
      %v7766 = vlaneseq
      %v7767 = vshrl.u32 %v7766, 7
      %v7768 = vsub.s32 %v7765, %v7767
      %v7769 = vrot.slane %v7753, %v7768
      %v7771 = vunpack.c.l.s4 1966171168
      %v7772 = vunpack.c.0.s8 %v7771
      %v7773 = vlaneseq
      %v7774 = vshrl.u32 %v7773, 7
      %v7775 = vsub.s32 %v7772, %v7774
      %v7776 = vrot.slane %v7754, %v7775
      %v7778 = vunpack.c.l.s4 1966171168
      %v7779 = vunpack.c.0.s8 %v7778
      %v7780 = vlaneseq
      %v7781 = vshrl.u32 %v7780, 7
      %v7782 = vsub.s32 %v7779, %v7781
      %v7783 = vrot.slane %v7755, %v7782
      %v7784 = vcombine.low %v7762, %v7769
      %v7785 = vcombine.low %v7776, %v7783
      %v7787 = vunpack.c.l.s4 1966171168
      %v7788 = vunpack.c.0.s8 %v7787
      %v7789 = vlaneseq
      %v7790 = vshrl.u32 %v7789, 7
      %v7791 = vsub.s32 %v7788, %v7790
      %v7792 = vrot.slane %v7784, %v7791
      %v7794 = vunpack.c.l.s4 1966171168
      %v7795 = vunpack.c.0.s8 %v7794
      %v7796 = vlaneseq
      %v7797 = vshrl.u32 %v7796, 7
      %v7798 = vsub.s32 %v7795, %v7797
      %v7799 = vrot.slane %v7785, %v7798
      %v7800 = vcombine.low %v7792, %v7799
      %v7801 = vcombine.low %v4838, %v4842
      %v7802 = vcombine.low %v4846, %v4850
      %v7803 = vcombine.low %v4854, %v4858
      %v7804 = vcombine.low %v4862, %v4866
      %v7806 = vunpack.c.l.s4 1966171168
      %v7807 = vunpack.c.0.s8 %v7806
      %v7808 = vlaneseq
      %v7809 = vshrl.u32 %v7808, 7
      %v7810 = vsub.s32 %v7807, %v7809
      %v7811 = vrot.slane %v7801, %v7810
      %v7813 = vunpack.c.l.s4 1966171168
      %v7814 = vunpack.c.0.s8 %v7813
      %v7815 = vlaneseq
      %v7816 = vshrl.u32 %v7815, 7
      %v7817 = vsub.s32 %v7814, %v7816
      %v7818 = vrot.slane %v7802, %v7817
      %v7820 = vunpack.c.l.s4 1966171168
      %v7821 = vunpack.c.0.s8 %v7820
      %v7822 = vlaneseq
      %v7823 = vshrl.u32 %v7822, 7
      %v7824 = vsub.s32 %v7821, %v7823
      %v7825 = vrot.slane %v7803, %v7824
      %v7827 = vunpack.c.l.s4 1966171168
      %v7828 = vunpack.c.0.s8 %v7827
      %v7829 = vlaneseq
      %v7830 = vshrl.u32 %v7829, 7
      %v7831 = vsub.s32 %v7828, %v7830
      %v7832 = vrot.slane %v7804, %v7831
      %v7833 = vcombine.low %v7811, %v7818
      %v7834 = vcombine.low %v7825, %v7832
      %v7836 = vunpack.c.l.s4 1966171168
      %v7837 = vunpack.c.0.s8 %v7836
      %v7838 = vlaneseq
      %v7839 = vshrl.u32 %v7838, 7
      %v7840 = vsub.s32 %v7837, %v7839
      %v7841 = vrot.slane %v7833, %v7840
      %v7843 = vunpack.c.l.s4 1966171168
      %v7844 = vunpack.c.0.s8 %v7843
      %v7845 = vlaneseq
      %v7846 = vshrl.u32 %v7845, 7
      %v7847 = vsub.s32 %v7844, %v7846
      %v7848 = vrot.slane %v7834, %v7847
      %v7849 = vcombine.low %v7841, %v7848
      %v7850 = vcombine.low %v4870, %v4874
      %v7851 = vcombine.low %v4878, %v4882
      %v7852 = vcombine.low %v4886, %v4890
      %v7853 = vcombine.low %v4894, %v4898
      %v7855 = vunpack.c.l.s4 1966171168
      %v7856 = vunpack.c.0.s8 %v7855
      %v7857 = vlaneseq
      %v7858 = vshrl.u32 %v7857, 7
      %v7859 = vsub.s32 %v7856, %v7858
      %v7860 = vrot.slane %v7850, %v7859
      %v7862 = vunpack.c.l.s4 1966171168
      %v7863 = vunpack.c.0.s8 %v7862
      %v7864 = vlaneseq
      %v7865 = vshrl.u32 %v7864, 7
      %v7866 = vsub.s32 %v7863, %v7865
      %v7867 = vrot.slane %v7851, %v7866
      %v7869 = vunpack.c.l.s4 1966171168
      %v7870 = vunpack.c.0.s8 %v7869
      %v7871 = vlaneseq
      %v7872 = vshrl.u32 %v7871, 7
      %v7873 = vsub.s32 %v7870, %v7872
      %v7874 = vrot.slane %v7852, %v7873
      %v7876 = vunpack.c.l.s4 1966171168
      %v7877 = vunpack.c.0.s8 %v7876
      %v7878 = vlaneseq
      %v7879 = vshrl.u32 %v7878, 7
      %v7880 = vsub.s32 %v7877, %v7879
      %v7881 = vrot.slane %v7853, %v7880
      %v7882 = vcombine.low %v7860, %v7867
      %v7883 = vcombine.low %v7874, %v7881
      %v7885 = vunpack.c.l.s4 1966171168
      %v7886 = vunpack.c.0.s8 %v7885
      %v7887 = vlaneseq
      %v7888 = vshrl.u32 %v7887, 7
      %v7889 = vsub.s32 %v7886, %v7888
      %v7890 = vrot.slane %v7882, %v7889
      %v7892 = vunpack.c.l.s4 1966171168
      %v7893 = vunpack.c.0.s8 %v7892
      %v7894 = vlaneseq
      %v7895 = vshrl.u32 %v7894, 7
      %v7896 = vsub.s32 %v7893, %v7895
      %v7897 = vrot.slane %v7883, %v7896
      %v7898 = vcombine.low %v7890, %v7897
      %v7899 = vcombine.low %v4902, %v4906
      %v7900 = vcombine.low %v4910, %v4914
      %v7901 = vcombine.low %v4918, %v4922
      %v7902 = vcombine.low %v4926, %v4930
      %v7904 = vunpack.c.l.s4 1966171168
      %v7905 = vunpack.c.0.s8 %v7904
      %v7906 = vlaneseq
      %v7907 = vshrl.u32 %v7906, 7
      %v7908 = vsub.s32 %v7905, %v7907
      %v7909 = vrot.slane %v7899, %v7908
      %v7911 = vunpack.c.l.s4 1966171168
      %v7912 = vunpack.c.0.s8 %v7911
      %v7913 = vlaneseq
      %v7914 = vshrl.u32 %v7913, 7
      %v7915 = vsub.s32 %v7912, %v7914
      %v7916 = vrot.slane %v7900, %v7915
      %v7918 = vunpack.c.l.s4 1966171168
      %v7919 = vunpack.c.0.s8 %v7918
      %v7920 = vlaneseq
      %v7921 = vshrl.u32 %v7920, 7
      %v7922 = vsub.s32 %v7919, %v7921
      %v7923 = vrot.slane %v7901, %v7922
      %v7925 = vunpack.c.l.s4 1966171168
      %v7926 = vunpack.c.0.s8 %v7925
      %v7927 = vlaneseq
      %v7928 = vshrl.u32 %v7927, 7
      %v7929 = vsub.s32 %v7926, %v7928
      %v7930 = vrot.slane %v7902, %v7929
      %v7931 = vcombine.low %v7909, %v7916
      %v7932 = vcombine.low %v7923, %v7930
      %v7934 = vunpack.c.l.s4 1966171168
      %v7935 = vunpack.c.0.s8 %v7934
      %v7936 = vlaneseq
      %v7937 = vshrl.u32 %v7936, 7
      %v7938 = vsub.s32 %v7935, %v7937
      %v7939 = vrot.slane %v7931, %v7938
      %v7941 = vunpack.c.l.s4 1966171168
      %v7942 = vunpack.c.0.s8 %v7941
      %v7943 = vlaneseq
      %v7944 = vshrl.u32 %v7943, 7
      %v7945 = vsub.s32 %v7942, %v7944
      %v7946 = vrot.slane %v7932, %v7945
      %v7947 = vcombine.low %v7939, %v7946
      %v7948 = vcombine.low %v4934, %v4938
      %v7949 = vcombine.low %v4942, %v4946
      %v7950 = vcombine.low %v4950, %v4954
      %v7951 = vcombine.low %v4958, %v4962
      %v7953 = vunpack.c.l.s4 1966171168
      %v7954 = vunpack.c.0.s8 %v7953
      %v7955 = vlaneseq
      %v7956 = vshrl.u32 %v7955, 7
      %v7957 = vsub.s32 %v7954, %v7956
      %v7958 = vrot.slane %v7948, %v7957
      %v7960 = vunpack.c.l.s4 1966171168
      %v7961 = vunpack.c.0.s8 %v7960
      %v7962 = vlaneseq
      %v7963 = vshrl.u32 %v7962, 7
      %v7964 = vsub.s32 %v7961, %v7963
      %v7965 = vrot.slane %v7949, %v7964
      %v7967 = vunpack.c.l.s4 1966171168
      %v7968 = vunpack.c.0.s8 %v7967
      %v7969 = vlaneseq
      %v7970 = vshrl.u32 %v7969, 7
      %v7971 = vsub.s32 %v7968, %v7970
      %v7972 = vrot.slane %v7950, %v7971
      %v7974 = vunpack.c.l.s4 1966171168
      %v7975 = vunpack.c.0.s8 %v7974
      %v7976 = vlaneseq
      %v7977 = vshrl.u32 %v7976, 7
      %v7978 = vsub.s32 %v7975, %v7977
      %v7979 = vrot.slane %v7951, %v7978
      %v7980 = vcombine.low %v7958, %v7965
      %v7981 = vcombine.low %v7972, %v7979
      %v7983 = vunpack.c.l.s4 1966171168
      %v7984 = vunpack.c.0.s8 %v7983
      %v7985 = vlaneseq
      %v7986 = vshrl.u32 %v7985, 7
      %v7987 = vsub.s32 %v7984, %v7986
      %v7988 = vrot.slane %v7980, %v7987
      %v7990 = vunpack.c.l.s4 1966171168
      %v7991 = vunpack.c.0.s8 %v7990
      %v7992 = vlaneseq
      %v7993 = vshrl.u32 %v7992, 7
      %v7994 = vsub.s32 %v7991, %v7993
      %v7995 = vrot.slane %v7981, %v7994
      %v7996 = vcombine.low %v7988, %v7995
      %v7997 = vcombine.low %v4966, %v4970
      %v7998 = vcombine.low %v4974, %v4978
      %v7999 = vcombine.low %v4982, %v4986
      %v8000 = vcombine.low %v4990, %v4994
      %v8002 = vunpack.c.l.s4 1966171168
      %v8003 = vunpack.c.0.s8 %v8002
      %v8004 = vlaneseq
      %v8005 = vshrl.u32 %v8004, 7
      %v8006 = vsub.s32 %v8003, %v8005
      %v8007 = vrot.slane %v7997, %v8006
      %v8009 = vunpack.c.l.s4 1966171168
      %v8010 = vunpack.c.0.s8 %v8009
      %v8011 = vlaneseq
      %v8012 = vshrl.u32 %v8011, 7
      %v8013 = vsub.s32 %v8010, %v8012
      %v8014 = vrot.slane %v7998, %v8013
      %v8016 = vunpack.c.l.s4 1966171168
      %v8017 = vunpack.c.0.s8 %v8016
      %v8018 = vlaneseq
      %v8019 = vshrl.u32 %v8018, 7
      %v8020 = vsub.s32 %v8017, %v8019
      %v8021 = vrot.slane %v7999, %v8020
      %v8023 = vunpack.c.l.s4 1966171168
      %v8024 = vunpack.c.0.s8 %v8023
      %v8025 = vlaneseq
      %v8026 = vshrl.u32 %v8025, 7
      %v8027 = vsub.s32 %v8024, %v8026
      %v8028 = vrot.slane %v8000, %v8027
      %v8029 = vcombine.low %v8007, %v8014
      %v8030 = vcombine.low %v8021, %v8028
      %v8032 = vunpack.c.l.s4 1966171168
      %v8033 = vunpack.c.0.s8 %v8032
      %v8034 = vlaneseq
      %v8035 = vshrl.u32 %v8034, 7
      %v8036 = vsub.s32 %v8033, %v8035
      %v8037 = vrot.slane %v8029, %v8036
      %v8039 = vunpack.c.l.s4 1966171168
      %v8040 = vunpack.c.0.s8 %v8039
      %v8041 = vlaneseq
      %v8042 = vshrl.u32 %v8041, 7
      %v8043 = vsub.s32 %v8040, %v8042
      %v8044 = vrot.slane %v8030, %v8043
      %v8045 = vcombine.low %v8037, %v8044
      %v8046 = vcombine.low %v4998, %v5002
      %v8047 = vcombine.low %v5006, %v5010
      %v8048 = vcombine.low %v5014, %v5018
      %v8049 = vcombine.low %v5022, %v5026
      %v8051 = vunpack.c.l.s4 1966171168
      %v8052 = vunpack.c.0.s8 %v8051
      %v8053 = vlaneseq
      %v8054 = vshrl.u32 %v8053, 7
      %v8055 = vsub.s32 %v8052, %v8054
      %v8056 = vrot.slane %v8046, %v8055
      %v8058 = vunpack.c.l.s4 1966171168
      %v8059 = vunpack.c.0.s8 %v8058
      %v8060 = vlaneseq
      %v8061 = vshrl.u32 %v8060, 7
      %v8062 = vsub.s32 %v8059, %v8061
      %v8063 = vrot.slane %v8047, %v8062
      %v8065 = vunpack.c.l.s4 1966171168
      %v8066 = vunpack.c.0.s8 %v8065
      %v8067 = vlaneseq
      %v8068 = vshrl.u32 %v8067, 7
      %v8069 = vsub.s32 %v8066, %v8068
      %v8070 = vrot.slane %v8048, %v8069
      %v8072 = vunpack.c.l.s4 1966171168
      %v8073 = vunpack.c.0.s8 %v8072
      %v8074 = vlaneseq
      %v8075 = vshrl.u32 %v8074, 7
      %v8076 = vsub.s32 %v8073, %v8075
      %v8077 = vrot.slane %v8049, %v8076
      %v8078 = vcombine.low %v8056, %v8063
      %v8079 = vcombine.low %v8070, %v8077
      %v8081 = vunpack.c.l.s4 1966171168
      %v8082 = vunpack.c.0.s8 %v8081
      %v8083 = vlaneseq
      %v8084 = vshrl.u32 %v8083, 7
      %v8085 = vsub.s32 %v8082, %v8084
      %v8086 = vrot.slane %v8078, %v8085
      %v8088 = vunpack.c.l.s4 1966171168
      %v8089 = vunpack.c.0.s8 %v8088
      %v8090 = vlaneseq
      %v8091 = vshrl.u32 %v8090, 7
      %v8092 = vsub.s32 %v8089, %v8091
      %v8093 = vrot.slane %v8079, %v8092
      %v8094 = vcombine.low %v8086, %v8093
      %v8095 = vcombine.low %v5030, %v5034
      %v8096 = vcombine.low %v5038, %v5042
      %v8097 = vcombine.low %v5046, %v5050
      %v8098 = vcombine.low %v5054, %v5058
      %v8100 = vunpack.c.l.s4 1966171168
      %v8101 = vunpack.c.0.s8 %v8100
      %v8102 = vlaneseq
      %v8103 = vshrl.u32 %v8102, 7
      %v8104 = vsub.s32 %v8101, %v8103
      %v8105 = vrot.slane %v8095, %v8104
      %v8107 = vunpack.c.l.s4 1966171168
      %v8108 = vunpack.c.0.s8 %v8107
      %v8109 = vlaneseq
      %v8110 = vshrl.u32 %v8109, 7
      %v8111 = vsub.s32 %v8108, %v8110
      %v8112 = vrot.slane %v8096, %v8111
      %v8114 = vunpack.c.l.s4 1966171168
      %v8115 = vunpack.c.0.s8 %v8114
      %v8116 = vlaneseq
      %v8117 = vshrl.u32 %v8116, 7
      %v8118 = vsub.s32 %v8115, %v8117
      %v8119 = vrot.slane %v8097, %v8118
      %v8121 = vunpack.c.l.s4 1966171168
      %v8122 = vunpack.c.0.s8 %v8121
      %v8123 = vlaneseq
      %v8124 = vshrl.u32 %v8123, 7
      %v8125 = vsub.s32 %v8122, %v8124
      %v8126 = vrot.slane %v8098, %v8125
      %v8127 = vcombine.low %v8105, %v8112
      %v8128 = vcombine.low %v8119, %v8126
      %v8130 = vunpack.c.l.s4 1966171168
      %v8131 = vunpack.c.0.s8 %v8130
      %v8132 = vlaneseq
      %v8133 = vshrl.u32 %v8132, 7
      %v8134 = vsub.s32 %v8131, %v8133
      %v8135 = vrot.slane %v8127, %v8134
      %v8137 = vunpack.c.l.s4 1966171168
      %v8138 = vunpack.c.0.s8 %v8137
      %v8139 = vlaneseq
      %v8140 = vshrl.u32 %v8139, 7
      %v8141 = vsub.s32 %v8138, %v8140
      %v8142 = vrot.slane %v8128, %v8141
      %v8143 = vcombine.low %v8135, %v8142
      %v8144 = vcombine.low %v5062, %v5066
      %v8145 = vcombine.low %v5070, %v5074
      %v8146 = vcombine.low %v5078, %v5082
      %v8147 = vcombine.low %v5086, %v5090
      %v8149 = vunpack.c.l.s4 1966171168
      %v8150 = vunpack.c.0.s8 %v8149
      %v8151 = vlaneseq
      %v8152 = vshrl.u32 %v8151, 7
      %v8153 = vsub.s32 %v8150, %v8152
      %v8154 = vrot.slane %v8144, %v8153
      %v8156 = vunpack.c.l.s4 1966171168
      %v8157 = vunpack.c.0.s8 %v8156
      %v8158 = vlaneseq
      %v8159 = vshrl.u32 %v8158, 7
      %v8160 = vsub.s32 %v8157, %v8159
      %v8161 = vrot.slane %v8145, %v8160
      %v8163 = vunpack.c.l.s4 1966171168
      %v8164 = vunpack.c.0.s8 %v8163
      %v8165 = vlaneseq
      %v8166 = vshrl.u32 %v8165, 7
      %v8167 = vsub.s32 %v8164, %v8166
      %v8168 = vrot.slane %v8146, %v8167
      %v8170 = vunpack.c.l.s4 1966171168
      %v8171 = vunpack.c.0.s8 %v8170
      %v8172 = vlaneseq
      %v8173 = vshrl.u32 %v8172, 7
      %v8174 = vsub.s32 %v8171, %v8173
      %v8175 = vrot.slane %v8147, %v8174
      %v8176 = vcombine.low %v8154, %v8161
      %v8177 = vcombine.low %v8168, %v8175
      %v8179 = vunpack.c.l.s4 1966171168
      %v8180 = vunpack.c.0.s8 %v8179
      %v8181 = vlaneseq
      %v8182 = vshrl.u32 %v8181, 7
      %v8183 = vsub.s32 %v8180, %v8182
      %v8184 = vrot.slane %v8176, %v8183
      %v8186 = vunpack.c.l.s4 1966171168
      %v8187 = vunpack.c.0.s8 %v8186
      %v8188 = vlaneseq
      %v8189 = vshrl.u32 %v8188, 7
      %v8190 = vsub.s32 %v8187, %v8189
      %v8191 = vrot.slane %v8177, %v8190
      %v8192 = vcombine.low %v8184, %v8191
      %v8193 = vcombine.low %v5094, %v5098
      %v8194 = vcombine.low %v5102, %v5106
      %v8195 = vcombine.low %v5110, %v5114
      %v8196 = vcombine.low %v5118, %v5122
      %v8198 = vunpack.c.l.s4 1966171168
      %v8199 = vunpack.c.0.s8 %v8198
      %v8200 = vlaneseq
      %v8201 = vshrl.u32 %v8200, 7
      %v8202 = vsub.s32 %v8199, %v8201
      %v8203 = vrot.slane %v8193, %v8202
      %v8205 = vunpack.c.l.s4 1966171168
      %v8206 = vunpack.c.0.s8 %v8205
      %v8207 = vlaneseq
      %v8208 = vshrl.u32 %v8207, 7
      %v8209 = vsub.s32 %v8206, %v8208
      %v8210 = vrot.slane %v8194, %v8209
      %v8212 = vunpack.c.l.s4 1966171168
      %v8213 = vunpack.c.0.s8 %v8212
      %v8214 = vlaneseq
      %v8215 = vshrl.u32 %v8214, 7
      %v8216 = vsub.s32 %v8213, %v8215
      %v8217 = vrot.slane %v8195, %v8216
      %v8219 = vunpack.c.l.s4 1966171168
      %v8220 = vunpack.c.0.s8 %v8219
      %v8221 = vlaneseq
      %v8222 = vshrl.u32 %v8221, 7
      %v8223 = vsub.s32 %v8220, %v8222
      %v8224 = vrot.slane %v8196, %v8223
      %v8225 = vcombine.low %v8203, %v8210
      %v8226 = vcombine.low %v8217, %v8224
      %v8228 = vunpack.c.l.s4 1966171168
      %v8229 = vunpack.c.0.s8 %v8228
      %v8230 = vlaneseq
      %v8231 = vshrl.u32 %v8230, 7
      %v8232 = vsub.s32 %v8229, %v8231
      %v8233 = vrot.slane %v8225, %v8232
      %v8235 = vunpack.c.l.s4 1966171168
      %v8236 = vunpack.c.0.s8 %v8235
      %v8237 = vlaneseq
      %v8238 = vshrl.u32 %v8237, 7
      %v8239 = vsub.s32 %v8236, %v8238
      %v8240 = vrot.slane %v8226, %v8239
      %v8241 = vcombine.low %v8233, %v8240
      %v8242 = vcombine.low %v5126, %v5130
      %v8243 = vcombine.low %v5134, %v5138
      %v8244 = vcombine.low %v5142, %v5146
      %v8245 = vcombine.low %v5150, %v5154
      %v8247 = vunpack.c.l.s4 1966171168
      %v8248 = vunpack.c.0.s8 %v8247
      %v8249 = vlaneseq
      %v8250 = vshrl.u32 %v8249, 7
      %v8251 = vsub.s32 %v8248, %v8250
      %v8252 = vrot.slane %v8242, %v8251
      %v8254 = vunpack.c.l.s4 1966171168
      %v8255 = vunpack.c.0.s8 %v8254
      %v8256 = vlaneseq
      %v8257 = vshrl.u32 %v8256, 7
      %v8258 = vsub.s32 %v8255, %v8257
      %v8259 = vrot.slane %v8243, %v8258
      %v8261 = vunpack.c.l.s4 1966171168
      %v8262 = vunpack.c.0.s8 %v8261
      %v8263 = vlaneseq
      %v8264 = vshrl.u32 %v8263, 7
      %v8265 = vsub.s32 %v8262, %v8264
      %v8266 = vrot.slane %v8244, %v8265
      %v8268 = vunpack.c.l.s4 1966171168
      %v8269 = vunpack.c.0.s8 %v8268
      %v8270 = vlaneseq
      %v8271 = vshrl.u32 %v8270, 7
      %v8272 = vsub.s32 %v8269, %v8271
      %v8273 = vrot.slane %v8245, %v8272
      %v8274 = vcombine.low %v8252, %v8259
      %v8275 = vcombine.low %v8266, %v8273
      %v8277 = vunpack.c.l.s4 1966171168
      %v8278 = vunpack.c.0.s8 %v8277
      %v8279 = vlaneseq
      %v8280 = vshrl.u32 %v8279, 7
      %v8281 = vsub.s32 %v8278, %v8280
      %v8282 = vrot.slane %v8274, %v8281
      %v8284 = vunpack.c.l.s4 1966171168
      %v8285 = vunpack.c.0.s8 %v8284
      %v8286 = vlaneseq
      %v8287 = vshrl.u32 %v8286, 7
      %v8288 = vsub.s32 %v8285, %v8287
      %v8289 = vrot.slane %v8275, %v8288
      %v8290 = vcombine.low %v8282, %v8289
      %8291 = vset.pattern.permute.xlu0 0
      %8292 = vperm.xlu0 %8291, %v5203
      %v8293 = vpop.permute.xlu0 %8292
      %8294 = vset.pattern.permute.xlu0 0
      %8295 = vperm.xlu0 %8294, %v5252
      %v8296 = vpop.permute.xlu0 %8295
      %8297 = vset.pattern.permute.xlu0 0
      %8298 = vperm.xlu0 %8297, %v5301
      %v8299 = vpop.permute.xlu0 %8298
      %8300 = vset.pattern.permute.xlu0 0
      %8301 = vperm.xlu0 %8300, %v5350
      %v8302 = vpop.permute.xlu0 %8301
      %8303 = vset.pattern.permute.xlu0 0
      %8304 = vperm.xlu0 %8303, %v5399
      %v8305 = vpop.permute.xlu0 %8304
      %8306 = vset.pattern.permute.xlu0 0
      %8307 = vperm.xlu0 %8306, %v5448
      %v8308 = vpop.permute.xlu0 %8307
      %8309 = vset.pattern.permute.xlu0 0
      %8310 = vperm.xlu0 %8309, %v5497
      %v8311 = vpop.permute.xlu0 %8310
      %8312 = vset.pattern.permute.xlu0 0
      %8313 = vperm.xlu0 %8312, %v5546
      %v8314 = vpop.permute.xlu0 %8313
      %8315 = vset.pattern.permute.xlu0 0
      %8316 = vperm.xlu0 %8315, %v5595
      %v8317 = vpop.permute.xlu0 %8316
      %8318 = vset.pattern.permute.xlu0 0
      %8319 = vperm.xlu0 %8318, %v5644
      %v8320 = vpop.permute.xlu0 %8319
      %8321 = vset.pattern.permute.xlu0 0
      %8322 = vperm.xlu0 %8321, %v5693
      %v8323 = vpop.permute.xlu0 %8322
      %8324 = vset.pattern.permute.xlu0 0
      %8325 = vperm.xlu0 %8324, %v5742
      %v8326 = vpop.permute.xlu0 %8325
      %8327 = vset.pattern.permute.xlu0 0
      %8328 = vperm.xlu0 %8327, %v5791
      %v8329 = vpop.permute.xlu0 %8328
      %8330 = vset.pattern.permute.xlu0 0
      %8331 = vperm.xlu0 %8330, %v5840
      %v8332 = vpop.permute.xlu0 %8331
      %8333 = vset.pattern.permute.xlu0 0
      %8334 = vperm.xlu0 %8333, %v5889
      %v8335 = vpop.permute.xlu0 %8334
      %8336 = vset.pattern.permute.xlu0 0
      %8337 = vperm.xlu0 %8336, %v5938
      %v8338 = vpop.permute.xlu0 %8337
      %8339 = vset.pattern.permute.xlu0 0
      %8340 = vperm.xlu0 %8339, %v5987
      %v8341 = vpop.permute.xlu0 %8340
      %8342 = vset.pattern.permute.xlu0 0
      %8343 = vperm.xlu0 %8342, %v6036
      %v8344 = vpop.permute.xlu0 %8343
      %8345 = vset.pattern.permute.xlu0 0
      %8346 = vperm.xlu0 %8345, %v6085
      %v8347 = vpop.permute.xlu0 %8346
      %8348 = vset.pattern.permute.xlu0 0
      %8349 = vperm.xlu0 %8348, %v6134
      %v8350 = vpop.permute.xlu0 %8349
      %8351 = vset.pattern.permute.xlu0 0
      %8352 = vperm.xlu0 %8351, %v6183
      %v8353 = vpop.permute.xlu0 %8352
      %8354 = vset.pattern.permute.xlu0 0
      %8355 = vperm.xlu0 %8354, %v6232
      %v8356 = vpop.permute.xlu0 %8355
      %8357 = vset.pattern.permute.xlu0 0
      %8358 = vperm.xlu0 %8357, %v6281
      %v8359 = vpop.permute.xlu0 %8358
      %8360 = vset.pattern.permute.xlu0 0
      %8361 = vperm.xlu0 %8360, %v6330
      %v8362 = vpop.permute.xlu0 %8361
      %8363 = vset.pattern.permute.xlu0 0
      %8364 = vperm.xlu0 %8363, %v6379
      %v8365 = vpop.permute.xlu0 %8364
      %8366 = vset.pattern.permute.xlu0 0
      %8367 = vperm.xlu0 %8366, %v6428
      %v8368 = vpop.permute.xlu0 %8367
      %8369 = vset.pattern.permute.xlu0 0
      %8370 = vperm.xlu0 %8369, %v6477
      %v8371 = vpop.permute.xlu0 %8370
      %8372 = vset.pattern.permute.xlu0 0
      %8373 = vperm.xlu0 %8372, %v6526
      %v8374 = vpop.permute.xlu0 %8373
      %8375 = vset.pattern.permute.xlu0 0
      %8376 = vperm.xlu0 %8375, %v6575
      %v8377 = vpop.permute.xlu0 %8376
      %8378 = vset.pattern.permute.xlu0 0
      %8379 = vperm.xlu0 %8378, %v6624
      %v8380 = vpop.permute.xlu0 %8379
      %8381 = vset.pattern.permute.xlu0 0
      %8382 = vperm.xlu0 %8381, %v6673
      %v8383 = vpop.permute.xlu0 %8382
      %8384 = vset.pattern.permute.xlu0 0
      %8385 = vperm.xlu0 %8384, %v6722
      %v8386 = vpop.permute.xlu0 %8385
      %8387 = vset.pattern.permute.xlu0 0
      %8388 = vperm.xlu0 %8387, %v6771
      %v8389 = vpop.permute.xlu0 %8388
      %8390 = vset.pattern.permute.xlu0 0
      %8391 = vperm.xlu0 %8390, %v6820
      %v8392 = vpop.permute.xlu0 %8391
      %8393 = vset.pattern.permute.xlu0 0
      %8394 = vperm.xlu0 %8393, %v6869
      %v8395 = vpop.permute.xlu0 %8394
      %8396 = vset.pattern.permute.xlu0 0
      %8397 = vperm.xlu0 %8396, %v6918
      %v8398 = vpop.permute.xlu0 %8397
      %8399 = vset.pattern.permute.xlu0 0
      %8400 = vperm.xlu0 %8399, %v6967
      %v8401 = vpop.permute.xlu0 %8400
      %8402 = vset.pattern.permute.xlu0 0
      %8403 = vperm.xlu0 %8402, %v7016
      %v8404 = vpop.permute.xlu0 %8403
      %8405 = vset.pattern.permute.xlu0 0
      %8406 = vperm.xlu0 %8405, %v7065
      %v8407 = vpop.permute.xlu0 %8406
      %8408 = vset.pattern.permute.xlu0 0
      %8409 = vperm.xlu0 %8408, %v7114
      %v8410 = vpop.permute.xlu0 %8409
      %8411 = vset.pattern.permute.xlu0 0
      %8412 = vperm.xlu0 %8411, %v7163
      %v8413 = vpop.permute.xlu0 %8412
      %8414 = vset.pattern.permute.xlu0 0
      %8415 = vperm.xlu0 %8414, %v7212
      %v8416 = vpop.permute.xlu0 %8415
      %8417 = vset.pattern.permute.xlu0 0
      %8418 = vperm.xlu0 %8417, %v7261
      %v8419 = vpop.permute.xlu0 %8418
      %8420 = vset.pattern.permute.xlu0 0
      %8421 = vperm.xlu0 %8420, %v7310
      %v8422 = vpop.permute.xlu0 %8421
      %8423 = vset.pattern.permute.xlu0 0
      %8424 = vperm.xlu0 %8423, %v7359
      %v8425 = vpop.permute.xlu0 %8424
      %8426 = vset.pattern.permute.xlu0 0
      %8427 = vperm.xlu0 %8426, %v7408
      %v8428 = vpop.permute.xlu0 %8427
      %8429 = vset.pattern.permute.xlu0 0
      %8430 = vperm.xlu0 %8429, %v7457
      %v8431 = vpop.permute.xlu0 %8430
      %8432 = vset.pattern.permute.xlu0 0
      %8433 = vperm.xlu0 %8432, %v7506
      %v8434 = vpop.permute.xlu0 %8433
      %8435 = vset.pattern.permute.xlu0 0
      %8436 = vperm.xlu0 %8435, %v7555
      %v8437 = vpop.permute.xlu0 %8436
      %8438 = vset.pattern.permute.xlu0 0
      %8439 = vperm.xlu0 %8438, %v7604
      %v8440 = vpop.permute.xlu0 %8439
      %8441 = vset.pattern.permute.xlu0 0
      %8442 = vperm.xlu0 %8441, %v7653
      %v8443 = vpop.permute.xlu0 %8442
      %8444 = vset.pattern.permute.xlu0 0
      %8445 = vperm.xlu0 %8444, %v7702
      %v8446 = vpop.permute.xlu0 %8445
      %8447 = vset.pattern.permute.xlu0 0
      %8448 = vperm.xlu0 %8447, %v7751
      %v8449 = vpop.permute.xlu0 %8448
      %8450 = vset.pattern.permute.xlu0 0
      %8451 = vperm.xlu0 %8450, %v7800
      %v8452 = vpop.permute.xlu0 %8451
      %8453 = vset.pattern.permute.xlu0 0
      %8454 = vperm.xlu0 %8453, %v7849
      %v8455 = vpop.permute.xlu0 %8454
      %8456 = vset.pattern.permute.xlu0 0
      %8457 = vperm.xlu0 %8456, %v7898
      %v8458 = vpop.permute.xlu0 %8457
      %8459 = vset.pattern.permute.xlu0 0
      %8460 = vperm.xlu0 %8459, %v7947
      %v8461 = vpop.permute.xlu0 %8460
      %8462 = vset.pattern.permute.xlu0 0
      %8463 = vperm.xlu0 %8462, %v7996
      %v8464 = vpop.permute.xlu0 %8463
      %8465 = vset.pattern.permute.xlu0 0
      %8466 = vperm.xlu0 %8465, %v8045
      %v8467 = vpop.permute.xlu0 %8466
      %8468 = vset.pattern.permute.xlu0 0
      %8469 = vperm.xlu0 %8468, %v8094
      %v8470 = vpop.permute.xlu0 %8469
      %8471 = vset.pattern.permute.xlu0 0
      %8472 = vperm.xlu0 %8471, %v8143
      %v8473 = vpop.permute.xlu0 %8472
      %8474 = vset.pattern.permute.xlu0 0
      %8475 = vperm.xlu0 %8474, %v8192
      %v8476 = vpop.permute.xlu0 %8475
      %8477 = vset.pattern.permute.xlu0 0
      %8478 = vperm.xlu0 %8477, %v8241
      %v8479 = vpop.permute.xlu0 %8478
      %8480 = vset.pattern.permute.xlu0 0
      %8481 = vperm.xlu0 %8480, %v8290
      %v8482 = vpop.permute.xlu0 %8481
      %v8483 = vlaneseq
      %v8484 = vshrl.u32 %v8483, 7
      %v8485 = vsub.s32 %v1185, %v8484
      %v8486 = vrot.slane %v8293, %v8485
      %v8487 = vadd.s32 %v1185, 4294967288
      %v8488 = vlaneseq
      %v8489 = vshrl.u32 %v8488, 7
      %v8490 = vsub.s32 %v8487, %v8489
      %v8491 = vrot.slane %v8296, %v8490
      %vm8492 = vcmask 130112
      %v8493 = vsel %vm8492, %v8491, %v8486
      %v8494 = vadd.s32 %v1185, 4294967280
      %v8495 = vlaneseq
      %v8496 = vshrl.u32 %v8495, 7
      %v8497 = vsub.s32 %v8494, %v8496
      %v8498 = vrot.slane %v8299, %v8497
      %vm8499 = vcmask 195712
      %v8500 = vsel %vm8499, %v8498, %v8493
      %v8501 = vadd.s32 %v1185, 4294967272
      %v8502 = vlaneseq
      %v8503 = vshrl.u32 %v8502, 7
      %v8504 = vsub.s32 %v8501, %v8503
      %v8505 = vrot.slane %v8302, %v8504
      %vm8506 = vcmask 261312
      %v8507 = vsel %vm8506, %v8505, %v8500
      %v8508 = vadd.s32 %v1185, 4294967264
      %v8509 = vlaneseq
      %v8510 = vshrl.u32 %v8509, 7
      %v8511 = vsub.s32 %v8508, %v8510
      %v8512 = vrot.slane %v8305, %v8511
      %vm8513 = vcmask 326912
      %v8514 = vsel %vm8513, %v8512, %v8507
      %v8515 = vadd.s32 %v1185, 4294967256
      %v8516 = vlaneseq
      %v8517 = vshrl.u32 %v8516, 7
      %v8518 = vsub.s32 %v8515, %v8517
      %v8519 = vrot.slane %v8308, %v8518
      %vm8520 = vcmask 392512
      %v8521 = vsel %vm8520, %v8519, %v8514
      %v8522 = vadd.s32 %v1185, 4294967248
      %v8523 = vlaneseq
      %v8524 = vshrl.u32 %v8523, 7
      %v8525 = vsub.s32 %v8522, %v8524
      %v8526 = vrot.slane %v8311, %v8525
      %vm8527 = vcmask 458112
      %v8528 = vsel %vm8527, %v8526, %v8521
      %v8529 = vadd.s32 %v1185, 4294967240
      %v8530 = vlaneseq
      %v8531 = vshrl.u32 %v8530, 7
      %v8532 = vsub.s32 %v8529, %v8531
      %v8533 = vrot.slane %v8314, %v8532
      %vm8534 = vcmask 523712
      %v8535 = vsel %vm8534, %v8533, %v8528
      %v8536 = vadd.s32 %v1185, 4294967232
      %v8537 = vlaneseq
      %v8538 = vshrl.u32 %v8537, 7
      %v8539 = vsub.s32 %v8536, %v8538
      %v8540 = vrot.slane %v8317, %v8539
      %vm8541 = vcmask 589312
      %v8542 = vsel %vm8541, %v8540, %v8535
      %v8543 = vadd.s32 %v1185, 4294967224
      %v8544 = vlaneseq
      %v8545 = vshrl.u32 %v8544, 7
      %v8546 = vsub.s32 %v8543, %v8545
      %v8547 = vrot.slane %v8320, %v8546
      %vm8548 = vcmask 654912
      %v8549 = vsel %vm8548, %v8547, %v8542
      %v8550 = vadd.s32 %v1185, 4294967216
      %v8551 = vlaneseq
      %v8552 = vshrl.u32 %v8551, 7
      %v8553 = vsub.s32 %v8550, %v8552
      %v8554 = vrot.slane %v8323, %v8553
      %vm8555 = vcmask 720512
      %v8556 = vsel %vm8555, %v8554, %v8549
      %v8557 = vadd.s32 %v1185, 4294967208
      %v8558 = vlaneseq
      %v8559 = vshrl.u32 %v8558, 7
      %v8560 = vsub.s32 %v8557, %v8559
      %v8561 = vrot.slane %v8326, %v8560
      %vm8562 = vcmask 786112
      %v8563 = vsel %vm8562, %v8561, %v8556
      %v8564 = vadd.s32 %v1185, 4294967200
      %v8565 = vlaneseq
      %v8566 = vshrl.u32 %v8565, 7
      %v8567 = vsub.s32 %v8564, %v8566
      %v8568 = vrot.slane %v8329, %v8567
      %vm8569 = vcmask 851712
      %v8570 = vsel %vm8569, %v8568, %v8563
      %v8571 = vadd.s32 %v1185, 4294967192
      %v8572 = vlaneseq
      %v8573 = vshrl.u32 %v8572, 7
      %v8574 = vsub.s32 %v8571, %v8573
      %v8575 = vrot.slane %v8332, %v8574
      %vm8576 = vcmask 917312
      %v8577 = vsel %vm8576, %v8575, %v8570
      %v8578 = vadd.s32 %v1185, 4294967184
      %v8579 = vlaneseq
      %v8580 = vshrl.u32 %v8579, 7
      %v8581 = vsub.s32 %v8578, %v8580
      %v8582 = vrot.slane %v8335, %v8581
      %vm8583 = vcmask 982912
      %v8584 = vsel %vm8583, %v8582, %v8577
      %v8585 = vadd.s32 %v1185, 4294967176
      %v8586 = vlaneseq
      %v8587 = vshrl.u32 %v8586, 7
      %v8588 = vsub.s32 %v8585, %v8587
      %v8589 = vrot.slane %v8338, %v8588
      %vm8590 = vcmask 1048512
      %v8591 = vsel %vm8590, %v8589, %v8584
      %v8592 = vlaneseq
      %v8593 = vshrl.u32 %v8592, 7
      %v8594 = vsub.s32 %v1185, %v8593
      %v8595 = vrot.slane %v8341, %v8594
      %v8596 = vlaneseq
      %v8597 = vshrl.u32 %v8596, 7
      %v8598 = vsub.s32 %v8487, %v8597
      %v8599 = vrot.slane %v8344, %v8598
      %v8600 = vsel %vm8492, %v8599, %v8595
      %v8601 = vlaneseq
      %v8602 = vshrl.u32 %v8601, 7
      %v8603 = vsub.s32 %v8494, %v8602
      %v8604 = vrot.slane %v8347, %v8603
      %v8605 = vsel %vm8499, %v8604, %v8600
      %v8606 = vlaneseq
      %v8607 = vshrl.u32 %v8606, 7
      %v8608 = vsub.s32 %v8501, %v8607
      %v8609 = vrot.slane %v8350, %v8608
      %v8610 = vsel %vm8506, %v8609, %v8605
      %v8611 = vlaneseq
      %v8612 = vshrl.u32 %v8611, 7
      %v8613 = vsub.s32 %v8508, %v8612
      %v8614 = vrot.slane %v8353, %v8613
      %v8615 = vsel %vm8513, %v8614, %v8610
      %v8616 = vlaneseq
      %v8617 = vshrl.u32 %v8616, 7
      %v8618 = vsub.s32 %v8515, %v8617
      %v8619 = vrot.slane %v8356, %v8618
      %v8620 = vsel %vm8520, %v8619, %v8615
      %v8621 = vlaneseq
      %v8622 = vshrl.u32 %v8621, 7
      %v8623 = vsub.s32 %v8522, %v8622
      %v8624 = vrot.slane %v8359, %v8623
      %v8625 = vsel %vm8527, %v8624, %v8620
      %v8626 = vlaneseq
      %v8627 = vshrl.u32 %v8626, 7
      %v8628 = vsub.s32 %v8529, %v8627
      %v8629 = vrot.slane %v8362, %v8628
      %v8630 = vsel %vm8534, %v8629, %v8625
      %v8631 = vlaneseq
      %v8632 = vshrl.u32 %v8631, 7
      %v8633 = vsub.s32 %v8536, %v8632
      %v8634 = vrot.slane %v8365, %v8633
      %v8635 = vsel %vm8541, %v8634, %v8630
      %v8636 = vlaneseq
      %v8637 = vshrl.u32 %v8636, 7
      %v8638 = vsub.s32 %v8543, %v8637
      %v8639 = vrot.slane %v8368, %v8638
      %v8640 = vsel %vm8548, %v8639, %v8635
      %v8641 = vlaneseq
      %v8642 = vshrl.u32 %v8641, 7
      %v8643 = vsub.s32 %v8550, %v8642
      %v8644 = vrot.slane %v8371, %v8643
      %v8645 = vsel %vm8555, %v8644, %v8640
      %v8646 = vlaneseq
      %v8647 = vshrl.u32 %v8646, 7
      %v8648 = vsub.s32 %v8557, %v8647
      %v8649 = vrot.slane %v8374, %v8648
      %v8650 = vsel %vm8562, %v8649, %v8645
      %v8651 = vlaneseq
      %v8652 = vshrl.u32 %v8651, 7
      %v8653 = vsub.s32 %v8564, %v8652
      %v8654 = vrot.slane %v8377, %v8653
      %v8655 = vsel %vm8569, %v8654, %v8650
      %v8656 = vlaneseq
      %v8657 = vshrl.u32 %v8656, 7
      %v8658 = vsub.s32 %v8571, %v8657
      %v8659 = vrot.slane %v8380, %v8658
      %v8660 = vsel %vm8576, %v8659, %v8655
      %v8661 = vlaneseq
      %v8662 = vshrl.u32 %v8661, 7
      %v8663 = vsub.s32 %v8578, %v8662
      %v8664 = vrot.slane %v8383, %v8663
      %v8665 = vsel %vm8583, %v8664, %v8660
      %v8666 = vlaneseq
      %v8667 = vshrl.u32 %v8666, 7
      %v8668 = vsub.s32 %v8585, %v8667
      %v8669 = vrot.slane %v8386, %v8668
      %v8670 = vsel %vm8590, %v8669, %v8665
      %v8671 = vlaneseq
      %v8672 = vshrl.u32 %v8671, 7
      %v8673 = vsub.s32 %v1185, %v8672
      %v8674 = vrot.slane %v8389, %v8673
      %v8675 = vlaneseq
      %v8676 = vshrl.u32 %v8675, 7
      %v8677 = vsub.s32 %v8487, %v8676
      %v8678 = vrot.slane %v8392, %v8677
      %v8679 = vsel %vm8492, %v8678, %v8674
      %v8680 = vlaneseq
      %v8681 = vshrl.u32 %v8680, 7
      %v8682 = vsub.s32 %v8494, %v8681
      %v8683 = vrot.slane %v8395, %v8682
      %v8684 = vsel %vm8499, %v8683, %v8679
      %v8685 = vlaneseq
      %v8686 = vshrl.u32 %v8685, 7
      %v8687 = vsub.s32 %v8501, %v8686
      %v8688 = vrot.slane %v8398, %v8687
      %v8689 = vsel %vm8506, %v8688, %v8684
      %v8690 = vlaneseq
      %v8691 = vshrl.u32 %v8690, 7
      %v8692 = vsub.s32 %v8508, %v8691
      %v8693 = vrot.slane %v8401, %v8692
      %v8694 = vsel %vm8513, %v8693, %v8689
      %v8695 = vlaneseq
      %v8696 = vshrl.u32 %v8695, 7
      %v8697 = vsub.s32 %v8515, %v8696
      %v8698 = vrot.slane %v8404, %v8697
      %v8699 = vsel %vm8520, %v8698, %v8694
      %v8700 = vlaneseq
      %v8701 = vshrl.u32 %v8700, 7
      %v8702 = vsub.s32 %v8522, %v8701
      %v8703 = vrot.slane %v8407, %v8702
      %v8704 = vsel %vm8527, %v8703, %v8699
      %v8705 = vlaneseq
      %v8706 = vshrl.u32 %v8705, 7
      %v8707 = vsub.s32 %v8529, %v8706
      %v8708 = vrot.slane %v8410, %v8707
      %v8709 = vsel %vm8534, %v8708, %v8704
      %v8710 = vlaneseq
      %v8711 = vshrl.u32 %v8710, 7
      %v8712 = vsub.s32 %v8536, %v8711
      %v8713 = vrot.slane %v8413, %v8712
      %v8714 = vsel %vm8541, %v8713, %v8709
      %v8715 = vlaneseq
      %v8716 = vshrl.u32 %v8715, 7
      %v8717 = vsub.s32 %v8543, %v8716
      %v8718 = vrot.slane %v8416, %v8717
      %v8719 = vsel %vm8548, %v8718, %v8714
      %v8720 = vlaneseq
      %v8721 = vshrl.u32 %v8720, 7
      %v8722 = vsub.s32 %v8550, %v8721
      %v8723 = vrot.slane %v8419, %v8722
      %v8724 = vsel %vm8555, %v8723, %v8719
      %v8725 = vlaneseq
      %v8726 = vshrl.u32 %v8725, 7
      %v8727 = vsub.s32 %v8557, %v8726
      %v8728 = vrot.slane %v8422, %v8727
      %v8729 = vsel %vm8562, %v8728, %v8724
      %v8730 = vlaneseq
      %v8731 = vshrl.u32 %v8730, 7
      %v8732 = vsub.s32 %v8564, %v8731
      %v8733 = vrot.slane %v8425, %v8732
      %v8734 = vsel %vm8569, %v8733, %v8729
      %v8735 = vlaneseq
      %v8736 = vshrl.u32 %v8735, 7
      %v8737 = vsub.s32 %v8571, %v8736
      %v8738 = vrot.slane %v8428, %v8737
      %v8739 = vsel %vm8576, %v8738, %v8734
      %v8740 = vlaneseq
      %v8741 = vshrl.u32 %v8740, 7
      %v8742 = vsub.s32 %v8578, %v8741
      %v8743 = vrot.slane %v8431, %v8742
      %v8744 = vsel %vm8583, %v8743, %v8739
      %v8745 = vlaneseq
      %v8746 = vshrl.u32 %v8745, 7
      %v8747 = vsub.s32 %v8585, %v8746
      %v8748 = vrot.slane %v8434, %v8747
      %v8749 = vsel %vm8590, %v8748, %v8744
      %v8750 = vlaneseq
      %v8751 = vshrl.u32 %v8750, 7
      %v8752 = vsub.s32 %v1185, %v8751
      %v8753 = vrot.slane %v8437, %v8752
      %v8754 = vlaneseq
      %v8755 = vshrl.u32 %v8754, 7
      %v8756 = vsub.s32 %v8487, %v8755
      %v8757 = vrot.slane %v8440, %v8756
      %v8758 = vsel %vm8492, %v8757, %v8753
      %v8759 = vlaneseq
      %v8760 = vshrl.u32 %v8759, 7
      %v8761 = vsub.s32 %v8494, %v8760
      %v8762 = vrot.slane %v8443, %v8761
      %v8763 = vsel %vm8499, %v8762, %v8758
      %v8764 = vlaneseq
      %v8765 = vshrl.u32 %v8764, 7
      %v8766 = vsub.s32 %v8501, %v8765
      %v8767 = vrot.slane %v8446, %v8766
      %v8768 = vsel %vm8506, %v8767, %v8763
      %v8769 = vlaneseq
      %v8770 = vshrl.u32 %v8769, 7
      %v8771 = vsub.s32 %v8508, %v8770
      %v8772 = vrot.slane %v8449, %v8771
      %v8773 = vsel %vm8513, %v8772, %v8768
      %v8774 = vlaneseq
      %v8775 = vshrl.u32 %v8774, 7
      %v8776 = vsub.s32 %v8515, %v8775
      %v8777 = vrot.slane %v8452, %v8776
      %v8778 = vsel %vm8520, %v8777, %v8773
      %v8779 = vlaneseq
      %v8780 = vshrl.u32 %v8779, 7
      %v8781 = vsub.s32 %v8522, %v8780
      %v8782 = vrot.slane %v8455, %v8781
      %v8783 = vsel %vm8527, %v8782, %v8778
      %v8784 = vlaneseq
      %v8785 = vshrl.u32 %v8784, 7
      %v8786 = vsub.s32 %v8529, %v8785
      %v8787 = vrot.slane %v8458, %v8786
      %v8788 = vsel %vm8534, %v8787, %v8783
      %v8789 = vlaneseq
      %v8790 = vshrl.u32 %v8789, 7
      %v8791 = vsub.s32 %v8536, %v8790
      %v8792 = vrot.slane %v8461, %v8791
      %v8793 = vsel %vm8541, %v8792, %v8788
      %v8794 = vlaneseq
      %v8795 = vshrl.u32 %v8794, 7
      %v8796 = vsub.s32 %v8543, %v8795
      %v8797 = vrot.slane %v8464, %v8796
      %v8798 = vsel %vm8548, %v8797, %v8793
      %v8799 = vlaneseq
      %v8800 = vshrl.u32 %v8799, 7
      %v8801 = vsub.s32 %v8550, %v8800
      %v8802 = vrot.slane %v8467, %v8801
      %v8803 = vsel %vm8555, %v8802, %v8798
      %v8804 = vlaneseq
      %v8805 = vshrl.u32 %v8804, 7
      %v8806 = vsub.s32 %v8557, %v8805
      %v8807 = vrot.slane %v8470, %v8806
      %v8808 = vsel %vm8562, %v8807, %v8803
      %v8809 = vlaneseq
      %v8810 = vshrl.u32 %v8809, 7
      %v8811 = vsub.s32 %v8564, %v8810
      %v8812 = vrot.slane %v8473, %v8811
      %v8813 = vsel %vm8569, %v8812, %v8808
      %v8814 = vlaneseq
      %v8815 = vshrl.u32 %v8814, 7
      %v8816 = vsub.s32 %v8571, %v8815
      %v8817 = vrot.slane %v8476, %v8816
      %v8818 = vsel %vm8576, %v8817, %v8813
      %v8819 = vlaneseq
      %v8820 = vshrl.u32 %v8819, 7
      %v8821 = vsub.s32 %v8578, %v8820
      %v8822 = vrot.slane %v8479, %v8821
      %v8823 = vsel %vm8583, %v8822, %v8818
      %v8824 = vlaneseq
      %v8825 = vshrl.u32 %v8824, 7
      %v8826 = vsub.s32 %v8585, %v8825
      %v8827 = vrot.slane %v8482, %v8826
      %v8828 = vsel %vm8590, %v8827, %v8823
      %v8829 = vcombine.low %v8591, %v8670
      %v8830 = vcombine.low %v8749, %v8828
      %v8832 = vunpack.c.l.s4 1966171168
      %v8833 = vunpack.c.0.s8 %v8832
      %v8834 = vlaneseq
      %v8835 = vshrl.u32 %v8834, 7
      %v8836 = vsub.s32 %v8833, %v8835
      %v8837 = vrot.slane %v8829, %v8836
      %v8839 = vunpack.c.l.s4 1966171168
      %v8840 = vunpack.c.0.s8 %v8839
      %v8841 = vlaneseq
      %v8842 = vshrl.u32 %v8841, 7
      %v8843 = vsub.s32 %v8840, %v8842
      %v8844 = vrot.slane %v8830, %v8843
      %v8845 = vcombine.low %v8837, %v8844
      %v8847 = vunpack.c.l.s4 1966171168
      %v8848 = vunpack.c.0.s8 %v8847
      %v8849 = vlaneseq
      %v8850 = vshrl.u32 %v8849, 7
      %v8851 = vsub.s32 %v8848, %v8850
      %v8852 = vrot.slane %v8845, %v8851
      %v8853 = vlaneseq
      %vm8854 = vcmp.ge.s32.totalorder %v8853, 0
      %vm8855 = vcmp.lt.s32.totalorder %v8853, 512
      %vm8856 = vmand %vm8854, %vm8855
      %8857 = vst.msk [vmem:[%s375] sm:$0xf] %vm8856, %v8852
      %v8858 = vmul.f32 %v2915, %v2915
      %v8859 = vmul.f32 %v2916, %v2916
      %v8860 = vmul.f32 %v2917, %v2917
      %v8861 = vmul.f32 %v2918, %v2918
      %v8862 = vmul.f32 %v2919, %v2919
      %v8863 = vmul.f32 %v2920, %v2920
      %v8864 = vmul.f32 %v2921, %v2921
      %v8865 = vmul.f32 %v2922, %v2922
      %v8866 = vmul.f32 %v2923, %v2923
      %v8867 = vmul.f32 %v2924, %v2924
      %v8868 = vmul.f32 %v2925, %v2925
      %v8869 = vmul.f32 %v2926, %v2926
      %v8870 = vmul.f32 %v2927, %v2927
      %v8871 = vmul.f32 %v2928, %v2928
      %v8872 = vmul.f32 %v2929, %v2929
      %v8873 = vmul.f32 %v2930, %v2930
      %v8874 = vmul.f32 %v2931, %v2931
      %v8875 = vmul.f32 %v2932, %v2932
      %v8876 = vmul.f32 %v2933, %v2933
      %v8877 = vmul.f32 %v2934, %v2934
      %v8878 = vmul.f32 %v2935, %v2935
      %v8879 = vmul.f32 %v2936, %v2936
      %v8880 = vmul.f32 %v2937, %v2937
      %v8881 = vmul.f32 %v2938, %v2938
      %v8882 = vmul.f32 %v2939, %v2939
      %v8883 = vmul.f32 %v2940, %v2940
      %v8884 = vmul.f32 %v2941, %v2941
      %v8885 = vmul.f32 %v2942, %v2942
      %v8886 = vmul.f32 %v2943, %v2943
      %v8887 = vmul.f32 %v2944, %v2944
      %v8888 = vmul.f32 %v2945, %v2945
      %v8889 = vmul.f32 %v2946, %v2946
      %v8890 = vmul.f32 %v2947, %v2947
      %v8891 = vmul.f32 %v2948, %v2948
      %v8892 = vmul.f32 %v2949, %v2949
      %v8893 = vmul.f32 %v2950, %v2950
      %v8894 = vmul.f32 %v2951, %v2951
      %v8895 = vmul.f32 %v2952, %v2952
      %v8896 = vmul.f32 %v2953, %v2953
      %v8897 = vmul.f32 %v2954, %v2954
      %v8898 = vmul.f32 %v2955, %v2955
      %v8899 = vmul.f32 %v2956, %v2956
      %v8900 = vmul.f32 %v2957, %v2957
      %v8901 = vmul.f32 %v2958, %v2958
      %v8902 = vmul.f32 %v2959, %v2959
      %v8903 = vmul.f32 %v2960, %v2960
      %v8904 = vmul.f32 %v2961, %v2961
      %v8905 = vmul.f32 %v2962, %v2962
      %v8906 = vmul.f32 %v2963, %v2963
      %v8907 = vmul.f32 %v2964, %v2964
      %v8908 = vmul.f32 %v2965, %v2965
      %v8909 = vmul.f32 %v2966, %v2966
      %v8910 = vmul.f32 %v2967, %v2967
      %v8911 = vmul.f32 %v2968, %v2968
      %v8912 = vmul.f32 %v2969, %v2969
      %v8913 = vmul.f32 %v2970, %v2970
      %v8914 = vmul.f32 %v2971, %v2971
      %v8915 = vmul.f32 %v2972, %v2972
      %v8916 = vmul.f32 %v2973, %v2973
      %v8917 = vmul.f32 %v2974, %v2974
      %v8918 = vmul.f32 %v2975, %v2975
      %v8919 = vmul.f32 %v2976, %v2976
      %v8920 = vmul.f32 %v2977, %v2977
      %v8921 = vmul.f32 %v2978, %v2978
      %p8922 = scmp.eq.s32.totalorder %s25, 0
      // Predicated region
      $region37: #{vq_embedding_ema_forward.1} parent=35 // pred_check
        %p8923 = pneg %p8922
      $region38: #{vq_embedding_ema_forward.1} parent=35 // pred_check_branch
        %8925 = sbr.rel (%p8923) target = $region40
      $region39: #{vq_embedding_ema_forward.1} parent=35 // pred_region
        %8926 = vst [vmem:[%s379] sm:$0x1] 0.0
        %8927 = vst.msk [vmem:[#allocation2] sm:$0xff] %vm471, 0.0
        %8928 = vst.msk [vmem:[#allocation2 + $0x8] sm:$0xff] %vm471, 0.0
        %8929 = vst.msk [vmem:[#allocation2 + $0x10] sm:$0xff] %vm471, 0.0
        %8930 = vst.msk [vmem:[#allocation2 + $0x18] sm:$0xff] %vm471, 0.0
        %8931 = vst.msk [vmem:[#allocation2 + $0x20] sm:$0xff] %vm471, 0.0
        %8932 = vst.msk [vmem:[#allocation2 + $0x28] sm:$0xff] %vm471, 0.0
        %8933 = vst.msk [vmem:[#allocation2 + $0x30] sm:$0xff] %vm471, 0.0
        %8934 = vst.msk [vmem:[#allocation2 + $0x38] sm:$0xff] %vm471, 0.0
        %8935 = vst.msk [vmem:[#allocation2 + $0x40] sm:$0xff] %vm471, 0.0
        %8936 = vst.msk [vmem:[#allocation2 + $0x48] sm:$0xff] %vm471, 0.0
        %8937 = vst.msk [vmem:[#allocation2 + $0x50] sm:$0xff] %vm471, 0.0
        %8938 = vst.msk [vmem:[#allocation2 + $0x58] sm:$0xff] %vm471, 0.0
        %8939 = vst.msk [vmem:[#allocation2 + $0x60] sm:$0xff] %vm471, 0.0
        %8940 = vst.msk [vmem:[#allocation2 + $0x68] sm:$0xff] %vm471, 0.0
        %8941 = vst.msk [vmem:[#allocation2 + $0x70] sm:$0xff] %vm471, 0.0
        %8942 = vst.msk [vmem:[#allocation2 + $0x78] sm:$0xff] %vm471, 0.0
        %8943 = vst.msk [vmem:[#allocation2 + $0x80] sm:$0xff] %vm471, 0.0
        %8944 = vst.msk [vmem:[#allocation2 + $0x88] sm:$0xff] %vm471, 0.0
        %8945 = vst.msk [vmem:[#allocation2 + $0x90] sm:$0xff] %vm471, 0.0
        %8946 = vst.msk [vmem:[#allocation2 + $0x98] sm:$0xff] %vm471, 0.0
        %8947 = vst.msk [vmem:[#allocation2 + $0xa0] sm:$0xff] %vm471, 0.0
        %8948 = vst.msk [vmem:[#allocation2 + $0xa8] sm:$0xff] %vm471, 0.0
        %8949 = vst.msk [vmem:[#allocation2 + $0xb0] sm:$0xff] %vm471, 0.0
        %8950 = vst.msk [vmem:[#allocation2 + $0xb8] sm:$0xff] %vm471, 0.0
        %8951 = vst.msk [vmem:[#allocation2 + $0xc0] sm:$0xff] %vm471, 0.0
        %8952 = vst.msk [vmem:[#allocation2 + $0xc8] sm:$0xff] %vm471, 0.0
        %8953 = vst.msk [vmem:[#allocation2 + $0xd0] sm:$0xff] %vm471, 0.0
        %8954 = vst.msk [vmem:[#allocation2 + $0xd8] sm:$0xff] %vm471, 0.0
        %8955 = vst.msk [vmem:[#allocation2 + $0xe0] sm:$0xff] %vm471, 0.0
        %8956 = vst.msk [vmem:[#allocation2 + $0xe8] sm:$0xff] %vm471, 0.0
        %8957 = vst.msk [vmem:[#allocation2 + $0xf0] sm:$0xff] %vm471, 0.0
        %8958 = vst.msk [vmem:[#allocation2 + $0xf8] sm:$0xff] %vm471, 0.0
        %8959 = vst.msk [vmem:[#allocation2 + $0x100] sm:$0xff] %vm471, 0.0
        %8960 = vst.msk [vmem:[#allocation2 + $0x108] sm:$0xff] %vm471, 0.0
        %8961 = vst.msk [vmem:[#allocation2 + $0x110] sm:$0xff] %vm471, 0.0
        %8962 = vst.msk [vmem:[#allocation2 + $0x118] sm:$0xff] %vm471, 0.0
        %8963 = vst.msk [vmem:[#allocation2 + $0x120] sm:$0xff] %vm471, 0.0
        %8964 = vst.msk [vmem:[#allocation2 + $0x128] sm:$0xff] %vm471, 0.0
        %8965 = vst.msk [vmem:[#allocation2 + $0x130] sm:$0xff] %vm471, 0.0
        %8966 = vst.msk [vmem:[#allocation2 + $0x138] sm:$0xff] %vm471, 0.0
        %8967 = vst.msk [vmem:[#allocation2 + $0x140] sm:$0xff] %vm471, 0.0
        %8968 = vst.msk [vmem:[#allocation2 + $0x148] sm:$0xff] %vm471, 0.0
        %8969 = vst.msk [vmem:[#allocation2 + $0x150] sm:$0xff] %vm471, 0.0
        %8970 = vst.msk [vmem:[#allocation2 + $0x158] sm:$0xff] %vm471, 0.0
        %8971 = vst.msk [vmem:[#allocation2 + $0x160] sm:$0xff] %vm471, 0.0
        %8972 = vst.msk [vmem:[#allocation2 + $0x168] sm:$0xff] %vm471, 0.0
        %8973 = vst.msk [vmem:[#allocation2 + $0x170] sm:$0xff] %vm471, 0.0
        %8974 = vst.msk [vmem:[#allocation2 + $0x178] sm:$0xff] %vm471, 0.0
        %8975 = vst.msk [vmem:[#allocation2 + $0x180] sm:$0xff] %vm471, 0.0
        %8976 = vst.msk [vmem:[#allocation2 + $0x188] sm:$0xff] %vm471, 0.0
        %8977 = vst.msk [vmem:[#allocation2 + $0x190] sm:$0xff] %vm471, 0.0
        %8978 = vst.msk [vmem:[#allocation2 + $0x198] sm:$0xff] %vm471, 0.0
        %8979 = vst.msk [vmem:[#allocation2 + $0x1a0] sm:$0xff] %vm471, 0.0
        %8980 = vst.msk [vmem:[#allocation2 + $0x1a8] sm:$0xff] %vm471, 0.0
        %8981 = vst.msk [vmem:[#allocation2 + $0x1b0] sm:$0xff] %vm471, 0.0
        %8982 = vst.msk [vmem:[#allocation2 + $0x1b8] sm:$0xff] %vm471, 0.0
        %8983 = vst.msk [vmem:[#allocation2 + $0x1c0] sm:$0xff] %vm471, 0.0
        %8984 = vst.msk [vmem:[#allocation2 + $0x1c8] sm:$0xff] %vm471, 0.0
        %8985 = vst.msk [vmem:[#allocation2 + $0x1d0] sm:$0xff] %vm471, 0.0
        %8986 = vst.msk [vmem:[#allocation2 + $0x1d8] sm:$0xff] %vm471, 0.0
        %8987 = vst.msk [vmem:[#allocation2 + $0x1e0] sm:$0xff] %vm471, 0.0
        %8988 = vst.msk [vmem:[#allocation2 + $0x1e8] sm:$0xff] %vm471, 0.0
        %8989 = vst.msk [vmem:[#allocation2 + $0x1f0] sm:$0xff] %vm471, 0.0
        %8990 = vst.msk [vmem:[#allocation2 + $0x1f8] sm:$0xff] %vm471, 0.0
      $region40: #{vq_embedding_ema_forward.1} parent=35 // pred_fallthru
        _
      %v8991 = vld [vmem:[%s379] sm:$0x1]
      %8992 = vmatprep.subr.mxu0 0.0
      %8993 = vmatpush1.msra.mxu0 %v2481
      %8994 = vmatprep.subr.mxu0 0.0
      %8995 = vmatpush1.msra.mxu0 %v2480
      %8996 = vmatprep.subr.mxu0 0.0
      %8997 = vmatpush1.msra.mxu0 %v2479
      %8998 = vmatprep.subr.mxu0 0.0
      %8999 = vmatpush1.msra.mxu0 %v2478
      %9000 = vmatprep.subr.mxu0 0.0
      %9001 = vmatpush1.msra.mxu0 %v2477
      %9002 = vmatprep.subr.mxu0 0.0
      %9003 = vmatpush1.msra.mxu0 %v2476
      %9004 = vmatprep.subr.mxu0 0.0
      %9005 = vmatpush1.msra.mxu0 %v2475
      %9006 = vmatprep.subr.mxu0 0.0
      %9007 = vmatpush1.msra.mxu0 %v2474
      %9008 = vmatprep.subr.mxu0 0.0
      %9009 = vmatpush1.msra.mxu0 %v2473
      %9010 = vmatprep.subr.mxu0 0.0
      %9011 = vmatpush1.msra.mxu0 %v2472
      %9012 = vmatprep.subr.mxu0 0.0
      %9013 = vmatpush1.msra.mxu0 %v2471
      %9014 = vmatprep.subr.mxu0 0.0
      %9015 = vmatpush1.msra.mxu0 %v2470
      %9016 = vmatprep.subr.mxu0 0.0
      %9017 = vmatpush1.msra.mxu0 %v2469
      %9018 = vmatprep.subr.mxu0 0.0
      %9019 = vmatpush1.msra.mxu0 %v2468
      %9020 = vmatprep.subr.mxu0 0.0
      %9021 = vmatpush1.msra.mxu0 %v2467
      %9022 = vmatprep.subr.mxu0 0.0
      %9023 = vmatpush1.msra.mxu0 %v2466
      %9024 = vmatprep.subr.mxu0 0.0
      %9025 = vmatpush2.msra.mxu0 %v2497
      %9026 = vmatprep.subr.mxu0 0.0
      %9027 = vmatpush2.msra.mxu0 %v2496
      %9028 = vmatprep.subr.mxu0 0.0
      %9029 = vmatpush2.msra.mxu0 %v2495
      %9030 = vmatprep.subr.mxu0 0.0
      %9031 = vmatpush2.msra.mxu0 %v2494
      %9032 = vmatprep.subr.mxu0 0.0
      %9033 = vmatpush2.msra.mxu0 %v2493
      %9034 = vmatprep.subr.mxu0 0.0
      %9035 = vmatpush2.msra.mxu0 %v2492
      %9036 = vmatprep.subr.mxu0 0.0
      %9037 = vmatpush2.msra.mxu0 %v2491
      %9038 = vmatprep.subr.mxu0 0.0
      %9039 = vmatpush2.msra.mxu0 %v2490
      %9040 = vmatprep.subr.mxu0 0.0
      %9041 = vmatpush2.msra.mxu0 %v2489
      %9042 = vmatprep.subr.mxu0 0.0
      %9043 = vmatpush2.msra.mxu0 %v2488
      %9044 = vmatprep.subr.mxu0 0.0
      %9045 = vmatpush2.msra.mxu0 %v2487
      %9046 = vmatprep.subr.mxu0 0.0
      %9047 = vmatpush2.msra.mxu0 %v2486
      %9048 = vmatprep.subr.mxu0 0.0
      %9049 = vmatpush2.msra.mxu0 %v2485
      %9050 = vmatprep.subr.mxu0 0.0
      %9051 = vmatpush2.msra.mxu0 %v2484
      %9052 = vmatprep.subr.mxu0 0.0
      %9053 = vmatpush2.msra.mxu0 %v2483
      %9054 = vmatprep.subr.mxu0 0.0
      %9055 = vmatpush2.msra.mxu0 %v2482
      %9056 = vmatprep.mubr.f32.mxu0 1.0
      %9057 = vmatmul.mubr.f32.gmra.mxu0 1.0
      %v9058 = vpop.f32.mrf.mxu0
      %v9059 = vadd.f32 0.0, %v9058
      %v9060 = vpop.f32.mrf.mxu0
      %9061 = vdwg.mxu0
      %9062 = vmatprep.subr.mxu0 0.0
      %9063 = vmatpush1.msra.mxu0 %v2513
      %9064 = vmatprep.subr.mxu0 0.0
      %9065 = vmatpush1.msra.mxu0 %v2512
      %9066 = vmatprep.subr.mxu0 0.0
      %9067 = vmatpush1.msra.mxu0 %v2511
      %9068 = vmatprep.subr.mxu0 0.0
      %9069 = vmatpush1.msra.mxu0 %v2510
      %9070 = vmatprep.subr.mxu0 0.0
      %9071 = vmatpush1.msra.mxu0 %v2509
      %9072 = vmatprep.subr.mxu0 0.0
      %9073 = vmatpush1.msra.mxu0 %v2508
      %9074 = vmatprep.subr.mxu0 0.0
      %9075 = vmatpush1.msra.mxu0 %v2507
      %9076 = vmatprep.subr.mxu0 0.0
      %9077 = vmatpush1.msra.mxu0 %v2506
      %9078 = vmatprep.subr.mxu0 0.0
      %9079 = vmatpush1.msra.mxu0 %v2505
      %9080 = vmatprep.subr.mxu0 0.0
      %9081 = vmatpush1.msra.mxu0 %v2504
      %9082 = vmatprep.subr.mxu0 0.0
      %9083 = vmatpush1.msra.mxu0 %v2503
      %9084 = vmatprep.subr.mxu0 0.0
      %9085 = vmatpush1.msra.mxu0 %v2502
      %9086 = vmatprep.subr.mxu0 0.0
      %9087 = vmatpush1.msra.mxu0 %v2501
      %9088 = vmatprep.subr.mxu0 0.0
      %9089 = vmatpush1.msra.mxu0 %v2500
      %9090 = vmatprep.subr.mxu0 0.0
      %9091 = vmatpush1.msra.mxu0 %v2499
      %9092 = vmatprep.subr.mxu0 0.0
      %9093 = vmatpush1.msra.mxu0 %v2498
      %9094 = vmatprep.subr.mxu0 0.0
      %9095 = vmatpush2.msra.mxu0 %v2529
      %9096 = vmatprep.subr.mxu0 0.0
      %9097 = vmatpush2.msra.mxu0 %v2528
      %9098 = vmatprep.subr.mxu0 0.0
      %9099 = vmatpush2.msra.mxu0 %v2527
      %9100 = vmatprep.subr.mxu0 0.0
      %9101 = vmatpush2.msra.mxu0 %v2526
      %9102 = vmatprep.subr.mxu0 0.0
      %9103 = vmatpush2.msra.mxu0 %v2525
      %9104 = vmatprep.subr.mxu0 0.0
      %9105 = vmatpush2.msra.mxu0 %v2524
      %9106 = vmatprep.subr.mxu0 0.0
      %9107 = vmatpush2.msra.mxu0 %v2523
      %9108 = vmatprep.subr.mxu0 0.0
      %9109 = vmatpush2.msra.mxu0 %v2522
      %9110 = vmatprep.subr.mxu0 0.0
      %9111 = vmatpush2.msra.mxu0 %v2521
      %9112 = vmatprep.subr.mxu0 0.0
      %9113 = vmatpush2.msra.mxu0 %v2520
      %9114 = vmatprep.subr.mxu0 0.0
      %9115 = vmatpush2.msra.mxu0 %v2519
      %9116 = vmatprep.subr.mxu0 0.0
      %9117 = vmatpush2.msra.mxu0 %v2518
      %9118 = vmatprep.subr.mxu0 0.0
      %9119 = vmatpush2.msra.mxu0 %v2517
      %9120 = vmatprep.subr.mxu0 0.0
      %9121 = vmatpush2.msra.mxu0 %v2516
      %9122 = vmatprep.subr.mxu0 0.0
      %9123 = vmatpush2.msra.mxu0 %v2515
      %9124 = vmatprep.subr.mxu0 0.0
      %9125 = vmatpush2.msra.mxu0 %v2514
      %9126 = vmatprep.mubr.f32.mxu0 1.0
      %9127 = vmatmul.mubr.f32.gmra.mxu0 1.0
      %v9128 = vpop.f32.mrf.mxu0
      %v9129 = vadd.f32 %v9059, %v9128
      %v9130 = vpop.f32.mrf.mxu0
      %9131 = vdwg.mxu0
      %v9132 = vadd.f32 %v8991, %v9129
      %9133 = vst [vmem:[%s379] sm:$0x1] %v9132
      %v9134 = vld [vmem:[#allocation2] sm:$0xff]
      %v9135 = vld [vmem:[#allocation2 + $0x8] sm:$0xff]
      %v9136 = vld [vmem:[#allocation2 + $0x10] sm:$0xff]
      %v9137 = vld [vmem:[#allocation2 + $0x18] sm:$0xff]
      %v9138 = vld [vmem:[#allocation2 + $0x20] sm:$0xff]
      %v9139 = vld [vmem:[#allocation2 + $0x28] sm:$0xff]
      %v9140 = vld [vmem:[#allocation2 + $0x30] sm:$0xff]
      %v9141 = vld [vmem:[#allocation2 + $0x38] sm:$0xff]
      %v9142 = vld [vmem:[#allocation2 + $0x40] sm:$0xff]
      %v9143 = vld [vmem:[#allocation2 + $0x48] sm:$0xff]
      %v9144 = vld [vmem:[#allocation2 + $0x50] sm:$0xff]
      %v9145 = vld [vmem:[#allocation2 + $0x58] sm:$0xff]
      %v9146 = vld [vmem:[#allocation2 + $0x60] sm:$0xff]
      %v9147 = vld [vmem:[#allocation2 + $0x68] sm:$0xff]
      %v9148 = vld [vmem:[#allocation2 + $0x70] sm:$0xff]
      %v9149 = vld [vmem:[#allocation2 + $0x78] sm:$0xff]
      %v9150 = vld [vmem:[#allocation2 + $0x80] sm:$0xff]
      %v9151 = vld [vmem:[#allocation2 + $0x88] sm:$0xff]
      %v9152 = vld [vmem:[#allocation2 + $0x90] sm:$0xff]
      %v9153 = vld [vmem:[#allocation2 + $0x98] sm:$0xff]
      %v9154 = vld [vmem:[#allocation2 + $0xa0] sm:$0xff]
      %v9155 = vld [vmem:[#allocation2 + $0xa8] sm:$0xff]
      %v9156 = vld [vmem:[#allocation2 + $0xb0] sm:$0xff]
      %v9157 = vld [vmem:[#allocation2 + $0xb8] sm:$0xff]
      %v9158 = vld [vmem:[#allocation2 + $0xc0] sm:$0xff]
      %v9159 = vld [vmem:[#allocation2 + $0xc8] sm:$0xff]
      %v9160 = vld [vmem:[#allocation2 + $0xd0] sm:$0xff]
      %v9161 = vld [vmem:[#allocation2 + $0xd8] sm:$0xff]
      %v9162 = vld [vmem:[#allocation2 + $0xe0] sm:$0xff]
      %v9163 = vld [vmem:[#allocation2 + $0xe8] sm:$0xff]
      %v9164 = vld [vmem:[#allocation2 + $0xf0] sm:$0xff]
      %v9165 = vld [vmem:[#allocation2 + $0xf8] sm:$0xff]
      %v9166 = vld [vmem:[#allocation2 + $0x100] sm:$0xff]
      %v9167 = vld [vmem:[#allocation2 + $0x108] sm:$0xff]
      %v9168 = vld [vmem:[#allocation2 + $0x110] sm:$0xff]
      %v9169 = vld [vmem:[#allocation2 + $0x118] sm:$0xff]
      %v9170 = vld [vmem:[#allocation2 + $0x120] sm:$0xff]
      %v9171 = vld [vmem:[#allocation2 + $0x128] sm:$0xff]
      %v9172 = vld [vmem:[#allocation2 + $0x130] sm:$0xff]
      %v9173 = vld [vmem:[#allocation2 + $0x138] sm:$0xff]
      %v9174 = vld [vmem:[#allocation2 + $0x140] sm:$0xff]
      %v9175 = vld [vmem:[#allocation2 + $0x148] sm:$0xff]
      %v9176 = vld [vmem:[#allocation2 + $0x150] sm:$0xff]
      %v9177 = vld [vmem:[#allocation2 + $0x158] sm:$0xff]
      %v9178 = vld [vmem:[#allocation2 + $0x160] sm:$0xff]
      %v9179 = vld [vmem:[#allocation2 + $0x168] sm:$0xff]
      %v9180 = vld [vmem:[#allocation2 + $0x170] sm:$0xff]
      %v9181 = vld [vmem:[#allocation2 + $0x178] sm:$0xff]
      %v9182 = vld [vmem:[#allocation2 + $0x180] sm:$0xff]
      %v9183 = vld [vmem:[#allocation2 + $0x188] sm:$0xff]
      %v9184 = vld [vmem:[#allocation2 + $0x190] sm:$0xff]
      %v9185 = vld [vmem:[#allocation2 + $0x198] sm:$0xff]
      %v9186 = vld [vmem:[#allocation2 + $0x1a0] sm:$0xff]
      %v9187 = vld [vmem:[#allocation2 + $0x1a8] sm:$0xff]
      %v9188 = vld [vmem:[#allocation2 + $0x1b0] sm:$0xff]
      %v9189 = vld [vmem:[#allocation2 + $0x1b8] sm:$0xff]
      %v9190 = vld [vmem:[#allocation2 + $0x1c0] sm:$0xff]
      %v9191 = vld [vmem:[#allocation2 + $0x1c8] sm:$0xff]
      %v9192 = vld [vmem:[#allocation2 + $0x1d0] sm:$0xff]
      %v9193 = vld [vmem:[#allocation2 + $0x1d8] sm:$0xff]
      %v9194 = vld [vmem:[#allocation2 + $0x1e0] sm:$0xff]
      %v9195 = vld [vmem:[#allocation2 + $0x1e8] sm:$0xff]
      %v9196 = vld [vmem:[#allocation2 + $0x1f0] sm:$0xff]
      %v9197 = vld [vmem:[#allocation2 + $0x1f8] sm:$0xff]
      %v9198 = vadd.f32 %v9134, %v8858
      %v9199 = vadd.f32 %v9135, %v8859
      %v9200 = vadd.f32 %v9136, %v8860
      %v9201 = vadd.f32 %v9137, %v8861
      %v9202 = vadd.f32 %v9138, %v8862
      %v9203 = vadd.f32 %v9139, %v8863
      %v9204 = vadd.f32 %v9140, %v8864
      %v9205 = vadd.f32 %v9141, %v8865
      %v9206 = vadd.f32 %v9142, %v8866
      %v9207 = vadd.f32 %v9143, %v8867
      %v9208 = vadd.f32 %v9144, %v8868
      %v9209 = vadd.f32 %v9145, %v8869
      %v9210 = vadd.f32 %v9146, %v8870
      %v9211 = vadd.f32 %v9147, %v8871
      %v9212 = vadd.f32 %v9148, %v8872
      %v9213 = vadd.f32 %v9149, %v8873
      %v9214 = vadd.f32 %v9150, %v8874
      %v9215 = vadd.f32 %v9151, %v8875
      %v9216 = vadd.f32 %v9152, %v8876
      %v9217 = vadd.f32 %v9153, %v8877
      %v9218 = vadd.f32 %v9154, %v8878
      %v9219 = vadd.f32 %v9155, %v8879
      %v9220 = vadd.f32 %v9156, %v8880
      %v9221 = vadd.f32 %v9157, %v8881
      %v9222 = vadd.f32 %v9158, %v8882
      %v9223 = vadd.f32 %v9159, %v8883
      %v9224 = vadd.f32 %v9160, %v8884
      %v9225 = vadd.f32 %v9161, %v8885
      %v9226 = vadd.f32 %v9162, %v8886
      %v9227 = vadd.f32 %v9163, %v8887
      %v9228 = vadd.f32 %v9164, %v8888
      %v9229 = vadd.f32 %v9165, %v8889
      %v9230 = vadd.f32 %v9166, %v8890
      %v9231 = vadd.f32 %v9167, %v8891
      %v9232 = vadd.f32 %v9168, %v8892
      %v9233 = vadd.f32 %v9169, %v8893
      %v9234 = vadd.f32 %v9170, %v8894
      %v9235 = vadd.f32 %v9171, %v8895
      %v9236 = vadd.f32 %v9172, %v8896
      %v9237 = vadd.f32 %v9173, %v8897
      %v9238 = vadd.f32 %v9174, %v8898
      %v9239 = vadd.f32 %v9175, %v8899
      %v9240 = vadd.f32 %v9176, %v8900
      %v9241 = vadd.f32 %v9177, %v8901
      %v9242 = vadd.f32 %v9178, %v8902
      %v9243 = vadd.f32 %v9179, %v8903
      %v9244 = vadd.f32 %v9180, %v8904
      %v9245 = vadd.f32 %v9181, %v8905
      %v9246 = vadd.f32 %v9182, %v8906
      %v9247 = vadd.f32 %v9183, %v8907
      %v9248 = vadd.f32 %v9184, %v8908
      %v9249 = vadd.f32 %v9185, %v8909
      %v9250 = vadd.f32 %v9186, %v8910
      %v9251 = vadd.f32 %v9187, %v8911
      %v9252 = vadd.f32 %v9188, %v8912
      %v9253 = vadd.f32 %v9189, %v8913
      %v9254 = vadd.f32 %v9190, %v8914
      %v9255 = vadd.f32 %v9191, %v8915
      %v9256 = vadd.f32 %v9192, %v8916
      %v9257 = vadd.f32 %v9193, %v8917
      %v9258 = vadd.f32 %v9194, %v8918
      %v9259 = vadd.f32 %v9195, %v8919
      %v9260 = vadd.f32 %v9196, %v8920
      %v9261 = vadd.f32 %v9197, %v8921
      %9262 = vst.msk [vmem:[#allocation2] sm:$0xff] %vm471, %v9198
      %9263 = vst.msk [vmem:[#allocation2 + $0x8] sm:$0xff] %vm471, %v9199
      %9264 = vst.msk [vmem:[#allocation2 + $0x10] sm:$0xff] %vm471, %v9200
      %9265 = vst.msk [vmem:[#allocation2 + $0x18] sm:$0xff] %vm471, %v9201
      %9266 = vst.msk [vmem:[#allocation2 + $0x20] sm:$0xff] %vm471, %v9202
      %9267 = vst.msk [vmem:[#allocation2 + $0x28] sm:$0xff] %vm471, %v9203
      %9268 = vst.msk [vmem:[#allocation2 + $0x30] sm:$0xff] %vm471, %v9204
      %9269 = vst.msk [vmem:[#allocation2 + $0x38] sm:$0xff] %vm471, %v9205
      %9270 = vst.msk [vmem:[#allocation2 + $0x40] sm:$0xff] %vm471, %v9206
      %9271 = vst.msk [vmem:[#allocation2 + $0x48] sm:$0xff] %vm471, %v9207
      %9272 = vst.msk [vmem:[#allocation2 + $0x50] sm:$0xff] %vm471, %v9208
      %9273 = vst.msk [vmem:[#allocation2 + $0x58] sm:$0xff] %vm471, %v9209
      %9274 = vst.msk [vmem:[#allocation2 + $0x60] sm:$0xff] %vm471, %v9210
      %9275 = vst.msk [vmem:[#allocation2 + $0x68] sm:$0xff] %vm471, %v9211
      %9276 = vst.msk [vmem:[#allocation2 + $0x70] sm:$0xff] %vm471, %v9212
      %9277 = vst.msk [vmem:[#allocation2 + $0x78] sm:$0xff] %vm471, %v9213
      %9278 = vst.msk [vmem:[#allocation2 + $0x80] sm:$0xff] %vm471, %v9214
      %9279 = vst.msk [vmem:[#allocation2 + $0x88] sm:$0xff] %vm471, %v9215
      %9280 = vst.msk [vmem:[#allocation2 + $0x90] sm:$0xff] %vm471, %v9216
      %9281 = vst.msk [vmem:[#allocation2 + $0x98] sm:$0xff] %vm471, %v9217
      %9282 = vst.msk [vmem:[#allocation2 + $0xa0] sm:$0xff] %vm471, %v9218
      %9283 = vst.msk [vmem:[#allocation2 + $0xa8] sm:$0xff] %vm471, %v9219
      %9284 = vst.msk [vmem:[#allocation2 + $0xb0] sm:$0xff] %vm471, %v9220
      %9285 = vst.msk [vmem:[#allocation2 + $0xb8] sm:$0xff] %vm471, %v9221
      %9286 = vst.msk [vmem:[#allocation2 + $0xc0] sm:$0xff] %vm471, %v9222
      %9287 = vst.msk [vmem:[#allocation2 + $0xc8] sm:$0xff] %vm471, %v9223
      %9288 = vst.msk [vmem:[#allocation2 + $0xd0] sm:$0xff] %vm471, %v9224
      %9289 = vst.msk [vmem:[#allocation2 + $0xd8] sm:$0xff] %vm471, %v9225
      %9290 = vst.msk [vmem:[#allocation2 + $0xe0] sm:$0xff] %vm471, %v9226
      %9291 = vst.msk [vmem:[#allocation2 + $0xe8] sm:$0xff] %vm471, %v9227
      %9292 = vst.msk [vmem:[#allocation2 + $0xf0] sm:$0xff] %vm471, %v9228
      %9293 = vst.msk [vmem:[#allocation2 + $0xf8] sm:$0xff] %vm471, %v9229
      %9294 = vst.msk [vmem:[#allocation2 + $0x100] sm:$0xff] %vm471, %v9230
      %9295 = vst.msk [vmem:[#allocation2 + $0x108] sm:$0xff] %vm471, %v9231
      %9296 = vst.msk [vmem:[#allocation2 + $0x110] sm:$0xff] %vm471, %v9232
      %9297 = vst.msk [vmem:[#allocation2 + $0x118] sm:$0xff] %vm471, %v9233
      %9298 = vst.msk [vmem:[#allocation2 + $0x120] sm:$0xff] %vm471, %v9234
      %9299 = vst.msk [vmem:[#allocation2 + $0x128] sm:$0xff] %vm471, %v9235
      %9300 = vst.msk [vmem:[#allocation2 + $0x130] sm:$0xff] %vm471, %v9236
      %9301 = vst.msk [vmem:[#allocation2 + $0x138] sm:$0xff] %vm471, %v9237
      %9302 = vst.msk [vmem:[#allocation2 + $0x140] sm:$0xff] %vm471, %v9238
      %9303 = vst.msk [vmem:[#allocation2 + $0x148] sm:$0xff] %vm471, %v9239
      %9304 = vst.msk [vmem:[#allocation2 + $0x150] sm:$0xff] %vm471, %v9240
      %9305 = vst.msk [vmem:[#allocation2 + $0x158] sm:$0xff] %vm471, %v9241
      %9306 = vst.msk [vmem:[#allocation2 + $0x160] sm:$0xff] %vm471, %v9242
      %9307 = vst.msk [vmem:[#allocation2 + $0x168] sm:$0xff] %vm471, %v9243
      %9308 = vst.msk [vmem:[#allocation2 + $0x170] sm:$0xff] %vm471, %v9244
      %9309 = vst.msk [vmem:[#allocation2 + $0x178] sm:$0xff] %vm471, %v9245
      %9310 = vst.msk [vmem:[#allocation2 + $0x180] sm:$0xff] %vm471, %v9246
      %9311 = vst.msk [vmem:[#allocation2 + $0x188] sm:$0xff] %vm471, %v9247
      %9312 = vst.msk [vmem:[#allocation2 + $0x190] sm:$0xff] %vm471, %v9248
      %9313 = vst.msk [vmem:[#allocation2 + $0x198] sm:$0xff] %vm471, %v9249
      %9314 = vst.msk [vmem:[#allocation2 + $0x1a0] sm:$0xff] %vm471, %v9250
      %9315 = vst.msk [vmem:[#allocation2 + $0x1a8] sm:$0xff] %vm471, %v9251
      %9316 = vst.msk [vmem:[#allocation2 + $0x1b0] sm:$0xff] %vm471, %v9252
      %9317 = vst.msk [vmem:[#allocation2 + $0x1b8] sm:$0xff] %vm471, %v9253
      %9318 = vst.msk [vmem:[#allocation2 + $0x1c0] sm:$0xff] %vm471, %v9254
      %9319 = vst.msk [vmem:[#allocation2 + $0x1c8] sm:$0xff] %vm471, %v9255
      %9320 = vst.msk [vmem:[#allocation2 + $0x1d0] sm:$0xff] %vm471, %v9256
      %9321 = vst.msk [vmem:[#allocation2 + $0x1d8] sm:$0xff] %vm471, %v9257
      %9322 = vst.msk [vmem:[#allocation2 + $0x1e0] sm:$0xff] %vm471, %v9258
      %9323 = vst.msk [vmem:[#allocation2 + $0x1e8] sm:$0xff] %vm471, %v9259
      %9324 = vst.msk [vmem:[#allocation2 + $0x1f0] sm:$0xff] %vm471, %v9260
      %9325 = vst.msk [vmem:[#allocation2 + $0x1f8] sm:$0xff] %vm471, %v9261
      // Predicated region
      $region41: #{vq_embedding_ema_forward.1} parent=35 // pred_check
        %p9326 = pneg %p8922
      $region42: #{vq_embedding_ema_forward.1} parent=35 // pred_check_branch
        %9328 = sbr.rel (%p9326) target = $region44
      $region43: #{vq_embedding_ema_forward.1} parent=35 // pred_region
        %v9329 = vld [vmem:[#allocation2] sm:$0xff]
        %v9330 = vld [vmem:[#allocation2 + $0x8] sm:$0xff]
        %v9331 = vld [vmem:[#allocation2 + $0x10] sm:$0xff]
        %v9332 = vld [vmem:[#allocation2 + $0x18] sm:$0xff]
        %v9333 = vld [vmem:[#allocation2 + $0x20] sm:$0xff]
        %v9334 = vld [vmem:[#allocation2 + $0x28] sm:$0xff]
        %v9335 = vld [vmem:[#allocation2 + $0x30] sm:$0xff]
        %v9336 = vld [vmem:[#allocation2 + $0x38] sm:$0xff]
        %v9337 = vld [vmem:[#allocation2 + $0x40] sm:$0xff]
        %v9338 = vld [vmem:[#allocation2 + $0x48] sm:$0xff]
        %v9339 = vld [vmem:[#allocation2 + $0x50] sm:$0xff]
        %v9340 = vld [vmem:[#allocation2 + $0x58] sm:$0xff]
        %v9341 = vld [vmem:[#allocation2 + $0x60] sm:$0xff]
        %v9342 = vld [vmem:[#allocation2 + $0x68] sm:$0xff]
        %v9343 = vld [vmem:[#allocation2 + $0x70] sm:$0xff]
        %v9344 = vld [vmem:[#allocation2 + $0x78] sm:$0xff]
        %v9345 = vld [vmem:[#allocation2 + $0x80] sm:$0xff]
        %v9346 = vld [vmem:[#allocation2 + $0x88] sm:$0xff]
        %v9347 = vld [vmem:[#allocation2 + $0x90] sm:$0xff]
        %v9348 = vld [vmem:[#allocation2 + $0x98] sm:$0xff]
        %v9349 = vld [vmem:[#allocation2 + $0xa0] sm:$0xff]
        %v9350 = vld [vmem:[#allocation2 + $0xa8] sm:$0xff]
        %v9351 = vld [vmem:[#allocation2 + $0xb0] sm:$0xff]
        %v9352 = vld [vmem:[#allocation2 + $0xb8] sm:$0xff]
        %v9353 = vld [vmem:[#allocation2 + $0xc0] sm:$0xff]
        %v9354 = vld [vmem:[#allocation2 + $0xc8] sm:$0xff]
        %v9355 = vld [vmem:[#allocation2 + $0xd0] sm:$0xff]
        %v9356 = vld [vmem:[#allocation2 + $0xd8] sm:$0xff]
        %v9357 = vld [vmem:[#allocation2 + $0xe0] sm:$0xff]
        %v9358 = vld [vmem:[#allocation2 + $0xe8] sm:$0xff]
        %v9359 = vld [vmem:[#allocation2 + $0xf0] sm:$0xff]
        %v9360 = vld [vmem:[#allocation2 + $0xf8] sm:$0xff]
        %v9361 = vld [vmem:[#allocation2 + $0x100] sm:$0xff]
        %v9362 = vld [vmem:[#allocation2 + $0x108] sm:$0xff]
        %v9363 = vld [vmem:[#allocation2 + $0x110] sm:$0xff]
        %v9364 = vld [vmem:[#allocation2 + $0x118] sm:$0xff]
        %v9365 = vld [vmem:[#allocation2 + $0x120] sm:$0xff]
        %v9366 = vld [vmem:[#allocation2 + $0x128] sm:$0xff]
        %v9367 = vld [vmem:[#allocation2 + $0x130] sm:$0xff]
        %v9368 = vld [vmem:[#allocation2 + $0x138] sm:$0xff]
        %v9369 = vld [vmem:[#allocation2 + $0x140] sm:$0xff]
        %v9370 = vld [vmem:[#allocation2 + $0x148] sm:$0xff]
        %v9371 = vld [vmem:[#allocation2 + $0x150] sm:$0xff]
        %v9372 = vld [vmem:[#allocation2 + $0x158] sm:$0xff]
        %v9373 = vld [vmem:[#allocation2 + $0x160] sm:$0xff]
        %v9374 = vld [vmem:[#allocation2 + $0x168] sm:$0xff]
        %v9375 = vld [vmem:[#allocation2 + $0x170] sm:$0xff]
        %v9376 = vld [vmem:[#allocation2 + $0x178] sm:$0xff]
        %v9377 = vld [vmem:[#allocation2 + $0x180] sm:$0xff]
        %v9378 = vld [vmem:[#allocation2 + $0x188] sm:$0xff]
        %v9379 = vld [vmem:[#allocation2 + $0x190] sm:$0xff]
        %v9380 = vld [vmem:[#allocation2 + $0x198] sm:$0xff]
        %v9381 = vld [vmem:[#allocation2 + $0x1a0] sm:$0xff]
        %v9382 = vld [vmem:[#allocation2 + $0x1a8] sm:$0xff]
        %v9383 = vld [vmem:[#allocation2 + $0x1b0] sm:$0xff]
        %v9384 = vld [vmem:[#allocation2 + $0x1b8] sm:$0xff]
        %v9385 = vld [vmem:[#allocation2 + $0x1c0] sm:$0xff]
        %v9386 = vld [vmem:[#allocation2 + $0x1c8] sm:$0xff]
        %v9387 = vld [vmem:[#allocation2 + $0x1d0] sm:$0xff]
        %v9388 = vld [vmem:[#allocation2 + $0x1d8] sm:$0xff]
        %v9389 = vld [vmem:[#allocation2 + $0x1e0] sm:$0xff]
        %v9390 = vld [vmem:[#allocation2 + $0x1e8] sm:$0xff]
        %v9391 = vld [vmem:[#allocation2 + $0x1f0] sm:$0xff]
        %v9392 = vld [vmem:[#allocation2 + $0x1f8] sm:$0xff]
        %v9393 = vsel %vm471, %v9329, 0.0
        %v9394 = vsel %vm471, %v9330, 0.0
        %v9395 = vadd.f32 %v9393, %v9394
        %v9396 = vsel %vm471, %v9331, 0.0
        %v9397 = vadd.f32 %v9395, %v9396
        %v9398 = vsel %vm471, %v9332, 0.0
        %v9399 = vadd.f32 %v9397, %v9398
        %v9400 = vsel %vm471, %v9333, 0.0
        %v9401 = vadd.f32 %v9399, %v9400
        %v9402 = vsel %vm471, %v9334, 0.0
        %v9403 = vadd.f32 %v9401, %v9402
        %v9404 = vsel %vm471, %v9335, 0.0
        %v9405 = vadd.f32 %v9403, %v9404
        %v9406 = vsel %vm471, %v9336, 0.0
        %v9407 = vadd.f32 %v9405, %v9406
        %v9408 = vsel %vm471, %v9337, 0.0
        %v9409 = vadd.f32 %v9407, %v9408
        %v9410 = vsel %vm471, %v9338, 0.0
        %v9411 = vadd.f32 %v9409, %v9410
        %v9412 = vsel %vm471, %v9339, 0.0
        %v9413 = vadd.f32 %v9411, %v9412
        %v9414 = vsel %vm471, %v9340, 0.0
        %v9415 = vadd.f32 %v9413, %v9414
        %v9416 = vsel %vm471, %v9341, 0.0
        %v9417 = vadd.f32 %v9415, %v9416
        %v9418 = vsel %vm471, %v9342, 0.0
        %v9419 = vadd.f32 %v9417, %v9418
        %v9420 = vsel %vm471, %v9343, 0.0
        %v9421 = vadd.f32 %v9419, %v9420
        %v9422 = vsel %vm471, %v9344, 0.0
        %v9423 = vadd.f32 %v9421, %v9422
        %v9424 = vsel %vm471, %v9345, 0.0
        %v9425 = vadd.f32 %v9423, %v9424
        %v9426 = vsel %vm471, %v9346, 0.0
        %v9427 = vadd.f32 %v9425, %v9426
        %v9428 = vsel %vm471, %v9347, 0.0
        %v9429 = vadd.f32 %v9427, %v9428
        %v9430 = vsel %vm471, %v9348, 0.0
        %v9431 = vadd.f32 %v9429, %v9430
        %v9432 = vsel %vm471, %v9349, 0.0
        %v9433 = vadd.f32 %v9431, %v9432
        %v9434 = vsel %vm471, %v9350, 0.0
        %v9435 = vadd.f32 %v9433, %v9434
        %v9436 = vsel %vm471, %v9351, 0.0
        %v9437 = vadd.f32 %v9435, %v9436
        %v9438 = vsel %vm471, %v9352, 0.0
        %v9439 = vadd.f32 %v9437, %v9438
        %v9440 = vsel %vm471, %v9353, 0.0
        %v9441 = vadd.f32 %v9439, %v9440
        %v9442 = vsel %vm471, %v9354, 0.0
        %v9443 = vadd.f32 %v9441, %v9442
        %v9444 = vsel %vm471, %v9355, 0.0
        %v9445 = vadd.f32 %v9443, %v9444
        %v9446 = vsel %vm471, %v9356, 0.0
        %v9447 = vadd.f32 %v9445, %v9446
        %v9448 = vsel %vm471, %v9357, 0.0
        %v9449 = vadd.f32 %v9447, %v9448
        %v9450 = vsel %vm471, %v9358, 0.0
        %v9451 = vadd.f32 %v9449, %v9450
        %v9452 = vsel %vm471, %v9359, 0.0
        %v9453 = vadd.f32 %v9451, %v9452
        %v9454 = vsel %vm471, %v9360, 0.0
        %v9455 = vadd.f32 %v9453, %v9454
        %v9456 = vsel %vm471, %v9361, 0.0
        %v9457 = vadd.f32 %v9455, %v9456
        %v9458 = vsel %vm471, %v9362, 0.0
        %v9459 = vadd.f32 %v9457, %v9458
        %v9460 = vsel %vm471, %v9363, 0.0
        %v9461 = vadd.f32 %v9459, %v9460
        %v9462 = vsel %vm471, %v9364, 0.0
        %v9463 = vadd.f32 %v9461, %v9462
        %v9464 = vsel %vm471, %v9365, 0.0
        %v9465 = vadd.f32 %v9463, %v9464
        %v9466 = vsel %vm471, %v9366, 0.0
        %v9467 = vadd.f32 %v9465, %v9466
        %v9468 = vsel %vm471, %v9367, 0.0
        %v9469 = vadd.f32 %v9467, %v9468
        %v9470 = vsel %vm471, %v9368, 0.0
        %v9471 = vadd.f32 %v9469, %v9470
        %v9472 = vsel %vm471, %v9369, 0.0
        %v9473 = vadd.f32 %v9471, %v9472
        %v9474 = vsel %vm471, %v9370, 0.0
        %v9475 = vadd.f32 %v9473, %v9474
        %v9476 = vsel %vm471, %v9371, 0.0
        %v9477 = vadd.f32 %v9475, %v9476
        %v9478 = vsel %vm471, %v9372, 0.0
        %v9479 = vadd.f32 %v9477, %v9478
        %v9480 = vsel %vm471, %v9373, 0.0
        %v9481 = vadd.f32 %v9479, %v9480
        %v9482 = vsel %vm471, %v9374, 0.0
        %v9483 = vadd.f32 %v9481, %v9482
        %v9484 = vsel %vm471, %v9375, 0.0
        %v9485 = vadd.f32 %v9483, %v9484
        %v9486 = vsel %vm471, %v9376, 0.0
        %v9487 = vadd.f32 %v9485, %v9486
        %v9488 = vsel %vm471, %v9377, 0.0
        %v9489 = vadd.f32 %v9487, %v9488
        %v9490 = vsel %vm471, %v9378, 0.0
        %v9491 = vadd.f32 %v9489, %v9490
        %v9492 = vsel %vm471, %v9379, 0.0
        %v9493 = vadd.f32 %v9491, %v9492
        %v9494 = vsel %vm471, %v9380, 0.0
        %v9495 = vadd.f32 %v9493, %v9494
        %v9496 = vsel %vm471, %v9381, 0.0
        %v9497 = vadd.f32 %v9495, %v9496
        %v9498 = vsel %vm471, %v9382, 0.0
        %v9499 = vadd.f32 %v9497, %v9498
        %v9500 = vsel %vm471, %v9383, 0.0
        %v9501 = vadd.f32 %v9499, %v9500
        %v9502 = vsel %vm471, %v9384, 0.0
        %v9503 = vadd.f32 %v9501, %v9502
        %v9504 = vsel %vm471, %v9385, 0.0
        %v9505 = vadd.f32 %v9503, %v9504
        %v9506 = vsel %vm471, %v9386, 0.0
        %v9507 = vadd.f32 %v9505, %v9506
        %v9508 = vsel %vm471, %v9387, 0.0
        %v9509 = vadd.f32 %v9507, %v9508
        %v9510 = vsel %vm471, %v9388, 0.0
        %v9511 = vadd.f32 %v9509, %v9510
        %v9512 = vsel %vm471, %v9389, 0.0
        %v9513 = vadd.f32 %v9511, %v9512
        %v9514 = vsel %vm471, %v9390, 0.0
        %v9515 = vadd.f32 %v9513, %v9514
        %v9516 = vsel %vm471, %v9391, 0.0
        %v9517 = vadd.f32 %v9515, %v9516
        %v9518 = vsel %vm471, %v9392, 0.0
        %v9519 = vadd.f32 %v9517, %v9518
        %9520 = vadd.xlane.f32.xlu0 %v9519
        %v9521 = vpop.xlane.xlu0 %9520
        %v9522 = vrot.slane %v9521, 4
        %v9523 = vadd.f32 %v9521, %v9522
        %v9524 = vrot.slane %v9523, 2
        %v9525 = vadd.f32 %v9523, %v9524
        %v9526 = vrot.slane %v9525, 1
        %v9527 = vadd.f32 %v9525, %v9526
        %s9528 = vtos %v9527
        %v9529 = vstv %s9528
        %vm9530 = vcmask 0
        %9531 = vst.msk [vmem:[%s382] sm:$0x1] %vm9530, %v9529
      $region44: #{vq_embedding_ema_forward.1} parent=35 // pred_fallthru
        _
      %s9532 = sadd.s32 %s24, %s25
      %s9533 = smul.u32 64, %s9532
      %p9534 = scmp.lt.s32.totalorder %s9533, 127
      %s9535 = scalar_select %p9534, %s9533, 127
      %s9536 = smul.addr %s9535, 8
      %s9537 = scalar_lea.vmem %s4, %s9536
      %s9538 = sadd.s32 %s24, %s25
      %s9539 = smul.u32 64, %s9538
      %p9540 = scmp.lt.s32.totalorder %s9539, 127
      %s9541 = scalar_select %p9540, %s9539, 127
      %s9542 = smul.addr %s9541, 8
      %s9543 = scalar_lea.vmem %s5, %s9542
      %s9544 = sadd.s32 %s24, %s25
      %p9545 = scmp.lt.s32.totalorder %s9544, 1
      %s9546 = scalar_select %p9545, %s9544, 1
      %s9547 = smul.addr %s9546, 4
      %s9548 = scalar_lea.vmem %s6, %s9547
      %p9549 = scmp.lt.s32.totalorder %s24, 1
      %s9550 = scalar_select %p9549, %s24, 1
      %s9551 = scalar_lea.vmem %s7, %s9550
      %p9552 = scmp.lt.s32.totalorder %s24, 1
      %s9553 = scalar_select %p9552, %s24, 1
      %s9554 = scalar_lea.vmem %s8, %s9553
      // Predicated region
      $region45: #{vq_embedding_ema_forward.1} parent=35 // pred_check
        %p9555 = pneg %p143
      $region46: #{vq_embedding_ema_forward.1} parent=35 // pred_check_branch
        %9557 = sbr.rel (%p9555) target = $region48
      $region47: #{vq_embedding_ema_forward.1} parent=35 // pred_region
        %s9558 = sadd.s32 %s24, %s25
        %s9559 = smul.u32 64, %s9558
      $region48: #{vq_embedding_ema_forward.1} parent=35 // pred_fallthru
        _
      // Predicated region
      $region49: #{vq_embedding_ema_forward.1} parent=35 // pred_check
        %p9560 = pneg %p171
      $region50: #{vq_embedding_ema_forward.1} parent=35 // pred_check_branch
        %9562 = sbr.rel (%p9560) target = $region52
      $region51: #{vq_embedding_ema_forward.1} parent=35 // pred_region
        %s9563 = sadd.s32 %s24, %s25
        %s9564 = smul.u32 64, %s9563
      $region52: #{vq_embedding_ema_forward.1} parent=35 // pred_fallthru
        _
      // Predicated region
      $region53: #{vq_embedding_ema_forward.1} parent=35 // pred_check
        %p9565 = pneg %p199
      $region54: #{vq_embedding_ema_forward.1} parent=35 // pred_check_branch
        %9567 = sbr.rel (%p9565) target = $region56
      $region55: #{vq_embedding_ema_forward.1} parent=35 // pred_region
        %s9568 = sadd.s32 %s24, %s25
      $region56: #{vq_embedding_ema_forward.1} parent=35 // pred_fallthru
        _
      // Predicated region
      $region57: #{vq_embedding_ema_forward.1} parent=35 // pred_check
        %p9569 = pneg %p225
      $region58: #{vq_embedding_ema_forward.1} parent=35 // pred_check_branch
        %9571 = sbr.rel (%p9569) target = $region60
      $region59: #{vq_embedding_ema_forward.1} parent=35 // pred_region
        _
      $region60: #{vq_embedding_ema_forward.1} parent=35 // pred_fallthru
        _
      // Predicated region
      $region61: #{vq_embedding_ema_forward.1} parent=35 // pred_check
        %p9572 = pneg %p251
      $region62: #{vq_embedding_ema_forward.1} parent=35 // pred_check_branch
        %9574 = sbr.rel (%p9572) target = $region64
      $region63: #{vq_embedding_ema_forward.1} parent=35 // pred_region
        _
      $region64: #{vq_embedding_ema_forward.1} parent=35 // pred_fallthru
        _
    $region36: #{vq_embedding_ema_forward.1} parent=5 // pred_fallthru
      _
    %p9575 = scmp.le.s32.totalorder 2, %s15
    // Predicated region
    $region65: #{vq_embedding_ema_forward.1} parent=5 // pred_check
      %p9576 = pneg %p9575
    $region66: #{vq_embedding_ema_forward.1} parent=5 // pred_check_branch
      %9578 = sbr.rel (%p9576) target = $region68
    $region67: #{vq_embedding_ema_forward.1} parent=5 // pred_region
      %s9579 = ssub.s32 %s15, 2
      // Predicated region
      $region69: #{vq_embedding_ema_forward.1} parent=67 // pred_check
        %p9580 = pneg %p149
      $region70: #{vq_embedding_ema_forward.1} parent=67 // pred_check_branch
        %9582 = sbr.rel (%p9580) target = $region72
      $region71: #{vq_embedding_ema_forward.1} parent=67 // pred_region
        %s9583 = sadd.s32 %s26, %s27
        %s9584 = smul.u32 64, %s9583
        %p9585 = scmp.lt.s32.totalorder %s9584, 127
        %s9586 = scalar_select %p9585, %s9584, 127
        %s9587 = smul.addr %s9586, 8
        %s9588 = scalar_lea.vmem %s4, %s9587
      $region72: #{vq_embedding_ema_forward.1} parent=67 // pred_fallthru
        _
      // Predicated region
      $region73: #{vq_embedding_ema_forward.1} parent=67 // pred_check
        %p9589 = pneg %p177
      $region74: #{vq_embedding_ema_forward.1} parent=67 // pred_check_branch
        %9591 = sbr.rel (%p9589) target = $region76
      $region75: #{vq_embedding_ema_forward.1} parent=67 // pred_region
        %s9592 = sadd.s32 %s26, %s27
        %s9593 = smul.u32 64, %s9592
        %p9594 = scmp.lt.s32.totalorder %s9593, 127
        %s9595 = scalar_select %p9594, %s9593, 127
        %s9596 = smul.addr %s9595, 8
        %s9597 = scalar_lea.vmem %s5, %s9596
      $region76: #{vq_embedding_ema_forward.1} parent=67 // pred_fallthru
        _
      // Predicated region
      $region77: #{vq_embedding_ema_forward.1} parent=67 // pred_check
        %p9598 = pneg %p205
      $region78: #{vq_embedding_ema_forward.1} parent=67 // pred_check_branch
        %9600 = sbr.rel (%p9598) target = $region80
      $region79: #{vq_embedding_ema_forward.1} parent=67 // pred_region
        %s9601 = sadd.s32 %s26, %s27
        %p9602 = scmp.lt.s32.totalorder %s9601, 1
        %s9603 = scalar_select %p9602, %s9601, 1
        %s9604 = smul.addr %s9603, 4
        %s9605 = scalar_lea.vmem %s6, %s9604
      $region80: #{vq_embedding_ema_forward.1} parent=67 // pred_fallthru
        _
      // Predicated region
      $region81: #{vq_embedding_ema_forward.1} parent=67 // pred_check
        %p9606 = pneg %p231
      $region82: #{vq_embedding_ema_forward.1} parent=67 // pred_check_branch
        %9608 = sbr.rel (%p9606) target = $region84
      $region83: #{vq_embedding_ema_forward.1} parent=67 // pred_region
        %p9609 = scmp.lt.s32.totalorder %s26, 1
        %s9610 = scalar_select %p9609, %s26, 1
        %s9611 = scalar_lea.vmem %s7, %s9610
      $region84: #{vq_embedding_ema_forward.1} parent=67 // pred_fallthru
        _
      // Predicated region
      $region85: #{vq_embedding_ema_forward.1} parent=67 // pred_check
        %p9612 = pneg %p257
      $region86: #{vq_embedding_ema_forward.1} parent=67 // pred_check_branch
        %9614 = sbr.rel (%p9612) target = $region88
      $region87: #{vq_embedding_ema_forward.1} parent=67 // pred_region
        %p9615 = scmp.lt.s32.totalorder %s26, 1
        %s9616 = scalar_select %p9615, %s26, 1
        %s9617 = scalar_lea.vmem %s8, %s9616
      $region88: #{vq_embedding_ema_forward.1} parent=67 // pred_fallthru
        _
    $region68: #{vq_embedding_ema_forward.1} parent=5 // pred_fallthru
      _
  $region6: #{vq_embedding_ema_forward.1} parent=0 // loop_footer
    %s19 = sadd.s32 1, %s15
  $region7: #{vq_embedding_ema_forward.1} parent=0 // loop_footer_branch
    %14 = sbr.rel target = $region3
  $region8: #{vq_embedding_ema_forward.1} parent=0 // loop_exit
    _

</llo_original>
